<compile_context>
chip_gen: v6e
topology: v6e:2x2x1
jax: 0.10.0
libtpu: 0.0.40
codegen_flags: <defaults>
</compile_context>

<pallas_src>
import functools

import jax
import jax.numpy as jnp
from jax.experimental import pallas as pl
from jax.experimental.pallas import tpu as pltpu

# Set both to jnp.bfloat16 on v6e/v7x for ~2x MXU throughput and ~2x less
# inter-pass HBM traffic (accumulation + BN statistics stay f32 via
# preferred_element_type / in-kernel f32 partials).  Kept f32 by default so
# the numerical check below is tight and v5e (no bf16 VPU) is unaffected.
CONV_COMPUTE_DTYPE = jnp.float32
INTERMEDIATE_DTYPE = jnp.float32

_BN_EPS = 1e-5


@functools.lru_cache(maxsize=None)
def _vmem_limit_bytes():
    """Generation-aware VMEM request (~60% of capacity, headroom for Mosaic)."""
    cap = 128 * 1024 * 1024
    try:
        cap = int(pltpu.get_tpu_info().vmem_capacity_bytes)
    except Exception:
        pass
    return max(32 * 1024 * 1024, min(int(cap * 0.6), 100 * 1024 * 1024))


def _round_up(x, m):
    return ((x + m - 1) // m) * m


def _largest_divisor_leq(n, cap):
    cap = max(1, min(n, cap))
    for d in range(cap, 0, -1):
        if n % d == 0:
            return d
    return 1


def _conv_row_tile(h, w):
    # ~128 output rows per MXU call (M = TH*W), TH always divides H.
    return _largest_divisor_leq(h, max(1, 128 // max(1, w)))


def _ew_row_tile(h, w, cp, itemsize=4, target_bytes=2 * 1024 * 1024):
    # Elementwise pass: ~2 MB tiles so per-grid-step overhead is amortized.
    return _largest_divisor_leq(h, max(1, target_bytes // max(1, w * cp * itemsize)))


def _run_subtile_loop(body, nsub, init):
    # Fully unroll small trip counts (max LLO visibility); fori_loop(unroll=2)
    # keeps compile time bounded for large images.
    if nsub <= 8:
        carry = init
        for t in range(nsub):
            carry = body(t, carry)
        return carry
    return jax.lax.fori_loop(0, nsub, body, init, unroll=2)


# ----------------------------------------------------------------------------
# Pass 1/2: [fused prev-stage BN+ReLU] -> conv3x3 -> per-channel sum / sumsq
# ----------------------------------------------------------------------------
def _make_conv_stats_kernel(apply_act, H, W, Cp, TH):
    nsub = H // TH
    pad_w = W + 2

    def kernel(*refs):
        if apply_act:
            x_ref, w_ref, scale_ref, shift_ref, y_ref, stats_ref, pad_ref = refs
        else:
            x_ref, w_ref, y_ref, stats_ref, pad_ref = refs
            scale_ref = shift_ref = None
        pad_dt = pad_ref.dtype

        # Zero only the 1-pixel halo ring (interior is fully overwritten).
        zrow = jnp.zeros((1, pad_w, Cp), pad_dt)
        pad_ref[pl.ds(0, 1), :, :] = zrow
        pad_ref[pl.ds(H + 1, 1), :, :] = zrow
        zcol = jnp.zeros((H + 2, 1, Cp), pad_dt)
        pad_ref[:, pl.ds(0, 1), :] = zcol
        pad_ref[:, pl.ds(W + 1, 1), :] = zcol

        if apply_act:
            sc = scale_ref[...].reshape(1, 1, Cp).astype(jnp.float32)
            sh = shift_ref[...].reshape(1, 1, Cp).astype(jnp.float32)

        # Stage the (optionally BN+ReLU'd) tile into the zero-ringed scratch.
        def fill(t, carry):
            h0 = t * TH if isinstance(t, int) else pl.multiple_of(t * TH, TH)
            xin = x_ref[0, pl.ds(h0, TH), :, :].astype(jnp.float32)
            if apply_act:
                xin = jnp.maximum(xin * sc + sh, 0.0)
            pad_ref[pl.ds(h0 + 1, TH), pl.ds(1, W), :] = xin.astype(pad_dt)
            return carry

        _run_subtile_loop(fill, nsub, 0)

        # Conv: per row sub-tile, 3 accumulated matmuls of K = 3*Cp.
        def body(t, carry):
            s, ss = carry
            h0 = t * TH if isinstance(t, int) else pl.multiple_of(t * TH, TH)
            acc = jnp.zeros((TH * W, Cp), jnp.float32)
            for ky in range(3):
                xv = pad_ref[pl.ds(h0 + ky, TH), :, :]          # (TH, W+2, Cp)
                patches = jnp.concatenate(
                    [xv[:, kx:kx + W, :] for kx in range(3)], axis=-1
                ).reshape(TH * W, 3 * Cp)
                wk = w_ref[ky * 3 * Cp:(ky + 1) * 3 * Cp, :]    # (3*Cp, Cp)
                acc = acc + jax.lax.dot_general(
                    patches, wk,
                    dimension_numbers=(((1,), (0,)), ((), ())),
                    preferred_element_type=jnp.float32)
            y_ref[0, pl.ds(h0, TH), :, :] = (
                acc.reshape(TH, W, Cp).astype(y_ref.dtype))
            s = s + jnp.sum(acc, axis=0, keepdims=True)
            ss = ss + jnp.sum(acc * acc, axis=0, keepdims=True)
            return (s, ss)

        init = (jnp.zeros((1, Cp), jnp.float32), jnp.zeros((1, Cp), jnp.float32))
        s, ss = _run_subtile_loop(body, nsub, init)
        # Full-block (1, 2, Cp) write: row 0 = sum, row 1 = sum of squares.
        stats_ref[...] = jnp.concatenate([s, ss], axis=0).reshape(1, 2, Cp)

    return kernel


def _conv_stats(x, wmat, scale=None, shift=None):
    """x: (N,H,W,Cp). Returns (y=(N,H,W,Cp) pre-BN conv out, stats=(N,2,Cp))."""
    N, H, W, Cp = x.shape
    TH = _conv_row_tile(H, W)
    apply_act = scale is not None
    kernel = _make_conv_stats_kernel(apply_act, H, W, Cp, TH)

    in_specs = [
        pl.BlockSpec((1, H, W, Cp), lambda n: (n, 0, 0, 0)),
        pl.BlockSpec((9 * Cp, Cp), lambda n: (0, 0)),
    ]
    args = [x, wmat]
    if apply_act:
        vec_spec = pl.BlockSpec((1, Cp), lambda n: (0, 0))
        in_specs += [vec_spec, vec_spec]
        args += [scale, shift]

    y_itemsize = jnp.dtype(INTERMEDIATE_DTYPE).itemsize
    cost = pl.CostEstimate(
        flops=2 * N * H * W * (9 * Cp) * Cp,
        transcendentals=0,
        bytes_accessed=(x.size * x.dtype.itemsize
                        + wmat.size * wmat.dtype.itemsize
                        + N * H * W * Cp * y_itemsize + N * 2 * Cp * 4))

    return pl.pallas_call(
        kernel,
        grid=(N,),
        in_specs=in_specs,
        out_specs=(
            pl.BlockSpec((1, H, W, Cp), lambda n: (n, 0, 0, 0)),
            pl.BlockSpec((1, 2, Cp), lambda n: (n, 0, 0)),
        ),
        out_shape=(
            jax.ShapeDtypeStruct((N, H, W, Cp), INTERMEDIATE_DTYPE),
            jax.ShapeDtypeStruct((N, 2, Cp), jnp.float32),
        ),
        scratch_shapes=[pltpu.VMEM((H + 2, W + 2, Cp), CONV_COMPUTE_DTYPE)],
        compiler_params=pltpu.CompilerParams(
            dimension_semantics=("parallel",),
            vmem_limit_bytes=_vmem_limit_bytes()),
        cost_estimate=cost,
    )(*args)


# ----------------------------------------------------------------------------
# Final pass: y*scale + shift + residual -> ReLU  (large tiles, memory-bound)
# ----------------------------------------------------------------------------
def _bn_relu_residual_kernel(y_ref, scale_ref, shift_ref, res_ref, o_ref):
    y = y_ref[...].astype(jnp.float32)
    sc = scale_ref[...].reshape(1, 1, 1, -1)
    sh = shift_ref[...].reshape(1, 1, 1, -1)
    out = y * sc + sh + res_ref[...].astype(jnp.float32)
    o_ref[...] = jnp.maximum(out, 0.0).astype(o_ref.dtype)


def _bn_relu_residual(y, scale, shift, residual):
    N, H, W, Cp = y.shape
    TH = _ew_row_tile(H, W, Cp)
    nH = H // TH
    tile = pl.BlockSpec((1, TH, W, Cp), lambda n, j: (n, j, 0, 0))
    vec = pl.BlockSpec((1, Cp), lambda n, j: (0, 0))
    return pl.pallas_call(
        _bn_relu_residual_kernel,
        grid=(N, nH),
        in_specs=[tile, vec, vec, tile],
        out_specs=tile,
        out_shape=jax.ShapeDtypeStruct((N, H, W, Cp), residual.dtype),
        compiler_params=pltpu.CompilerParams(
            dimension_semantics=("parallel", "parallel"),
            vmem_limit_bytes=_vmem_limit_bytes()),
    )(y, scale, shift, residual)


# ----------------------------------------------------------------------------
# Glue (plain JAX): layout, channel padding, BN affine folding
# ----------------------------------------------------------------------------
def _prep_weight(w_hwio, Cp):
    kh, kw, cin, cout = w_hwio.shape
    wp = jnp.pad(w_hwio, ((0, 0), (0, 0), (0, Cp - cin), (0, Cp - cout)))
    # row block (ky*3 + kx) = tap (ky, kx)
    return wp.reshape(kh * kw * Cp, Cp).astype(CONV_COMPUTE_DTYPE)


def _bn_affine(stats, gamma_p, beta_p, count):
    """Fold batch statistics into per-channel scale/shift (f32).

    NOTE: var = E[x^2] - E[x]^2 in f32 can lose precision for very large
    activations / counts; fine at these sizes (Welford combine would fix it).
    """
    total = jnp.sum(stats, axis=0)                     # (2, Cp)
    s, ss = total[0], total[1]
    mean = s / count
    var = jnp.maximum(ss / count - mean * mean, 0.0)   # biased variance
    scale = gamma_p * jax.lax.rsqrt(var + _BN_EPS)
    shift = beta_p - mean * scale
    return (scale.reshape(1, -1).astype(jnp.float32),
            shift.reshape(1, -1).astype(jnp.float32))


@jax.jit
def residual_block_forward(x_nchw, params):
    x = jnp.transpose(x_nchw, (0, 2, 3, 1)).astype(jnp.float32)   # NCHW -> NHWC
    N, H, W, C = x.shape
    Cp = _round_up(C, 128)
    cpad = Cp - C
    xp = jnp.pad(x, ((0, 0), (0, 0), (0, 0), (0, cpad)))          # lane-dense
    count = N * H * W

    w1 = _prep_weight(params["w1"], Cp)
    w2 = _prep_weight(params["w2"], Cp)
    g1 = jnp.pad(params["g1"].reshape(-1), (0, cpad))
    b1 = jnp.pad(params["beta1"].reshape(-1), (0, cpad))
    g2 = jnp.pad(params["g2"].reshape(-1), (0, cpad))
    b2 = jnp.pad(params["beta2"].reshape(-1), (0, cpad))

    # Stage 1: conv1 + batch stats (no fused pre-activation).
    y1, st1 = _conv_stats(xp, w1)
    sc1, sh1 = _bn_affine(st1, g1, b1, count)

    # Stage 2: BN1 + ReLU fused into the conv2 kernel's tile load.
    y2, st2 = _conv_stats(y1, w2, scale=sc1, shift=sh1)
    sc2, sh2 = _bn_affine(st2, g2, b2, count)

    # Final: BN2 + residual + ReLU.
    out = _bn_relu_residual(y2, sc2, sh2, xp)
    return jnp.transpose(out[..., :C], (0, 3, 1, 2)).astype(x_nchw.dtype)


# ----------------------------------------------------------------------------
# Parameters and pure-JAX reference (PyTorch semantics, training-mode BN)
# ----------------------------------------------------------------------------
def init_params(key, channels):
    k1, k2, k3, k4 = jax.random.split(key, 4)
    fan_in = channels * 3 * 3
    bound = 1.0 / float(jnp.sqrt(fan_in))

    def conv_w(k):
        # PyTorch layout (Cout, Cin, 3, 3) -> HWIO (3, 3, Cin, Cout)
        w = jax.random.uniform(k, (channels, channels, 3, 3), jnp.float32,
                               -bound, bound)
        return jnp.transpose(w, (2, 3, 1, 0))

    def conv_b(k):
        return jax.random.uniform(k, (1, channels), jnp.float32, -bound, bound)

    return dict(
        w1=conv_w(k1), b1=conv_b(k2),
        g1=jnp.ones((1, channels), jnp.float32),
        beta1=jnp.zeros((1, channels), jnp.float32),
        w2=conv_w(k3), b2=conv_b(k4),
        g2=jnp.ones((1, channels), jnp.float32),
        beta2=jnp.zeros((1, channels), jnp.float32),
    )


def reference_forward(x_nchw, params):
    def conv(x, w_hwio, b):
        out = jax.lax.conv_general_dilated(
            x, w_hwio, window_strides=(1, 1), padding="SAME",
            dimension_numbers=("NHWC", "HWIO", "NHWC"),
            precision=jax.lax.Precision.HIGHEST)
        return out + b.reshape(1, 1, 1, -1)

    def bn(x, g, beta):
        mean = jnp.mean(x, axis=(0, 1, 2), keepdims=True)
        var = jnp.mean(jnp.square(x - mean), axis=(0, 1, 2), keepdims=True)
        return (x - mean) * jax.lax.rsqrt(var + _BN_EPS) \
               * g.reshape(1, 1, 1, -1) + beta.reshape(1, 1, 1, -1)

    x = jnp.transpose(x_nchw, (0, 2, 3, 1))
    out = jax.nn.relu(bn(conv(x, params["w1"], params["b1"]),
                         params["g1"], params["beta1"]))
    out = bn(conv(out, params["w2"], params["b2"]), params["g2"], params["beta2"])
    out = jax.nn.relu(out + x)
    return jnp.transpose(out, (0, 3, 1, 2))


if __name__ == "__main__":
    key = jax.random.PRNGKey(0)
    kx_, kp = jax.random.split(key)
    channels = 4
    x = jax.random.normal(kx_, (2, channels, 16, 16), jnp.float32)
    params = init_params(kp, channels)

    out = jax.block_until_ready(residual_block_forward(x, params))
    ref = jax.block_until_ready(reference_forward(x, params))

    assert out.shape == x.shape and out.dtype == x.dtype
    max_err = float(jnp.max(jnp.abs(out - ref)))
    assert max_err < 1e-2, f"max abs err {max_err}"
    print("KERNEL_OK")
</pallas_src>

<mosaic_0001>
module attributes {stable_mosaic.version = 11 : i64} {
  func.func @kernel(%arg0: i32, %arg1: memref<1x16x16x128xf32, #tpu.memory_space<vmem>>, %arg2: memref<1152x128xf32, #tpu.memory_space<vmem>>, %arg3: memref<1x16x16x128xf32, #tpu.memory_space<vmem>>, %arg4: memref<1x2x128xf32, #tpu.memory_space<vmem>>, %arg5: memref<18x18x128xf32, #tpu.memory_space<vmem>>) attributes {dimension_semantics = [#tpu.dimension_semantics<parallel>], iteration_bounds = array<i64: 2>, scalar_prefetch = 0 : i64, scratch_operands = 1 : i64, tpu.core_type = #tpu.core_type<tc>, window_params = [{transform_indices = @transform_0, window_bounds = array<i64: 1, 16, 16, 128>}, {pipeline_mode = #tpu.pipeline_mode<synchronous>, transform_indices = @transform_1, window_bounds = array<i64: 1152, 128>}, {transform_indices = @transform_2, window_bounds = array<i64: 1, 16, 16, 128>}, {transform_indices = @transform_3, window_bounds = array<i64: 1, 2, 128>}]} {
    %cst = arith.constant 0.000000e+00 : f32
    %0 = vector.broadcast %cst : f32 to vector<1x18x128xf32>
    %c0 = arith.constant 0 : index
    %c0_0 = arith.constant 0 : index
    %c0_1 = arith.constant 0 : index
    %1 = vector.load %arg5[%c0, %c0_0, %c0_1] : memref<18x18x128xf32, #tpu.memory_space<vmem>>, vector<1x18x128xf32>
    tpu.vector_store %arg5[%c0, %c0_0, %c0_1], %0 {strides = array<i32>} : memref<18x18x128xf32, #tpu.memory_space<vmem>>, vector<1x18x128xf32>,
    %c17 = arith.constant 17 : index
    %c0_2 = arith.constant 0 : index
    %c0_3 = arith.constant 0 : index
    %2 = vector.load %arg5[%c17, %c0_2, %c0_3] : memref<18x18x128xf32, #tpu.memory_space<vmem>>, vector<1x18x128xf32>
    tpu.vector_store %arg5[%c17, %c0_2, %c0_3], %0 {strides = array<i32>} : memref<18x18x128xf32, #tpu.memory_space<vmem>>, vector<1x18x128xf32>,
    %cst_4 = arith.constant 0.000000e+00 : f32
    %3 = vector.broadcast %cst_4 : f32 to vector<18x1x128xf32>
    %c0_5 = arith.constant 0 : index
    %c0_6 = arith.constant 0 : index
    %c0_7 = arith.constant 0 : index
    %4 = vector.load %arg5[%c0_5, %c0_6, %c0_7] : memref<18x18x128xf32, #tpu.memory_space<vmem>>, vector<18x1x128xf32>
    tpu.vector_store %arg5[%c0_5, %c0_6, %c0_7], %3 {strides = array<i32>} : memref<18x18x128xf32, #tpu.memory_space<vmem>>, vector<18x1x128xf32>,
    %c0_8 = arith.constant 0 : index
    %c17_9 = arith.constant 17 : index
    %c0_10 = arith.constant 0 : index
    %5 = vector.load %arg5[%c0_8, %c17_9, %c0_10] : memref<18x18x128xf32, #tpu.memory_space<vmem>>, vector<18x1x128xf32>
    tpu.vector_store %arg5[%c0_8, %c17_9, %c0_10], %3 {strides = array<i32>} : memref<18x18x128xf32, #tpu.memory_space<vmem>>, vector<18x1x128xf32>,
    %c0_11 = arith.constant 0 : index
    %c0_12 = arith.constant 0 : index
    %c0_13 = arith.constant 0 : index
    %c0_14 = arith.constant 0 : index
    %6 = vector.load %arg1[%c0_11, %c0_12, %c0_13, %c0_14] : memref<1x16x16x128xf32, #tpu.memory_space<vmem>>, vector<1x8x16x128xf32>
    %7 = vector.shape_cast %6 : vector<1x8x16x128xf32> to vector<8x16x128xf32>
    %c1 = arith.constant 1 : index
    %c1_15 = arith.constant 1 : index
    %c0_16 = arith.constant 0 : index
    %8 = vector.load %arg5[%c1, %c1_15, %c0_16] : memref<18x18x128xf32, #tpu.memory_space<vmem>>, vector<8x16x128xf32>
    tpu.vector_store %arg5[%c1, %c1_15, %c0_16], %7 {strides = array<i32>} : memref<18x18x128xf32, #tpu.memory_space<vmem>>, vector<8x16x128xf32>,
    %c0_17 = arith.constant 0 : index
    %c8 = arith.constant 8 : index
    %c0_18 = arith.constant 0 : index
    %c0_19 = arith.constant 0 : index
    %9 = vector.load %arg1[%c0_17, %c8, %c0_18, %c0_19] : memref<1x16x16x128xf32, #tpu.memory_space<vmem>>, vector<1x8x16x128xf32>
    %10 = vector.shape_cast %9 : vector<1x8x16x128xf32> to vector<8x16x128xf32>
    %c9 = arith.constant 9 : index
    %c1_20 = arith.constant 1 : index
    %c0_21 = arith.constant 0 : index
    %11 = vector.load %arg5[%c9, %c1_20, %c0_21] : memref<18x18x128xf32, #tpu.memory_space<vmem>>, vector<8x16x128xf32>
    tpu.vector_store %arg5[%c9, %c1_20, %c0_21], %10 {strides = array<i32>} : memref<18x18x128xf32, #tpu.memory_space<vmem>>, vector<8x16x128xf32>,
    %cst_22 = arith.constant 0.000000e+00 : f32
    %12 = vector.broadcast %cst_22 : f32 to vector<1x128xf32>
    %cst_23 = arith.constant 0.000000e+00 : f32
    %13 = vector.broadcast %cst_23 : f32 to vector<1x128xf32>
    %cst_24 = arith.constant 0.000000e+00 : f32
    %14 = vector.broadcast %cst_24 : f32 to vector<128x128xf32>
    %c0_25 = arith.constant 0 : index
    %c0_26 = arith.constant 0 : index
    %c0_27 = arith.constant 0 : index
    %15 = vector.load %arg5[%c0_25, %c0_26, %c0_27] : memref<18x18x128xf32, #tpu.memory_space<vmem>>, vector<8x18x128xf32>
    %16 = vector.extract_strided_slice %15 {offsets = [0, 0, 0], sizes = [8, 16, 128], strides = [1, 1, 1]} : vector<8x18x128xf32> to vector<8x16x128xf32>
    %17 = vector.extract_strided_slice %15 {offsets = [0, 1, 0], sizes = [8, 16, 128], strides = [1, 1, 1]} : vector<8x18x128xf32> to vector<8x16x128xf32>
    %18 = vector.extract_strided_slice %15 {offsets = [0, 2, 0], sizes = [8, 16, 128], strides = [1, 1, 1]} : vector<8x18x128xf32> to vector<8x16x128xf32>
    %19 = tpu.concatenate %16, %17, %18 in 2 : vector<8x16x128xf32>, vector<8x16x128xf32>, vector<8x16x128xf32> -> vector<8x16x384xf32>
    %20 = vector.shape_cast %19 : vector<8x16x384xf32> to vector<128x384xf32>
    %c0_28 = arith.constant 0 : index
    %c0_29 = arith.constant 0 : index
    %21 = vector.load %arg2[%c0_28, %c0_29] : memref<1152x128xf32, #tpu.memory_space<vmem>>, vector<384x128xf32>
    %cst_30 = arith.constant dense<0.000000e+00> : vector<128x128xf32>
    %22 = tpu.matmul %20, %21, %cst_30 {dimension_numbers = #tpu.dot_dimension_numbers<[1], [0], [0], [1], [0, 0, 1, 1], [], []>} : vector<128x384xf32>, vector<384x128xf32>, vector<128x128xf32> -> vector<128x128xf32>
    %23 = arith.addf %14, %22 : vector<128x128xf32>
    %c1_31 = arith.constant 1 : index
    %c0_32 = arith.constant 0 : index
    %c0_33 = arith.constant 0 : index
    %24 = vector.load %arg5[%c1_31, %c0_32, %c0_33] : memref<18x18x128xf32, #tpu.memory_space<vmem>>, vector<8x18x128xf32>
    %25 = vector.extract_strided_slice %24 {offsets = [0, 0, 0], sizes = [8, 16, 128], strides = [1, 1, 1]} : vector<8x18x128xf32> to vector<8x16x128xf32>
    %26 = vector.extract_strided_slice %24 {offsets = [0, 1, 0], sizes = [8, 16, 128], strides = [1, 1, 1]} : vector<8x18x128xf32> to vector<8x16x128xf32>
    %27 = vector.extract_strided_slice %24 {offsets = [0, 2, 0], sizes = [8, 16, 128], strides = [1, 1, 1]} : vector<8x18x128xf32> to vector<8x16x128xf32>
    %28 = tpu.concatenate %25, %26, %27 in 2 : vector<8x16x128xf32>, vector<8x16x128xf32>, vector<8x16x128xf32> -> vector<8x16x384xf32>
    %29 = vector.shape_cast %28 : vector<8x16x384xf32> to vector<128x384xf32>
    %c384 = arith.constant 384 : index
    %c0_34 = arith.constant 0 : index
    %30 = vector.load %arg2[%c384, %c0_34] : memref<1152x128xf32, #tpu.memory_space<vmem>>, vector<384x128xf32>
    %cst_35 = arith.constant dense<0.000000e+00> : vector<128x128xf32>
    %31 = tpu.matmul %29, %30, %cst_35 {dimension_numbers = #tpu.dot_dimension_numbers<[1], [0], [0], [1], [0, 0, 1, 1], [], []>} : vector<128x384xf32>, vector<384x128xf32>, vector<128x128xf32> -> vector<128x128xf32>
    %32 = arith.addf %23, %31 : vector<128x128xf32>
    %c2 = arith.constant 2 : index
    %c0_36 = arith.constant 0 : index
    %c0_37 = arith.constant 0 : index
    %33 = vector.load %arg5[%c2, %c0_36, %c0_37] : memref<18x18x128xf32, #tpu.memory_space<vmem>>, vector<8x18x128xf32>
    %34 = vector.extract_strided_slice %33 {offsets = [0, 0, 0], sizes = [8, 16, 128], strides = [1, 1, 1]} : vector<8x18x128xf32> to vector<8x16x128xf32>
    %35 = vector.extract_strided_slice %33 {offsets = [0, 1, 0], sizes = [8, 16, 128], strides = [1, 1, 1]} : vector<8x18x128xf32> to vector<8x16x128xf32>
    %36 = vector.extract_strided_slice %33 {offsets = [0, 2, 0], sizes = [8, 16, 128], strides = [1, 1, 1]} : vector<8x18x128xf32> to vector<8x16x128xf32>
    %37 = tpu.concatenate %34, %35, %36 in 2 : vector<8x16x128xf32>, vector<8x16x128xf32>, vector<8x16x128xf32> -> vector<8x16x384xf32>
    %38 = vector.shape_cast %37 : vector<8x16x384xf32> to vector<128x384xf32>
    %c768 = arith.constant 768 : index
    %c0_38 = arith.constant 0 : index
    %39 = vector.load %arg2[%c768, %c0_38] : memref<1152x128xf32, #tpu.memory_space<vmem>>, vector<384x128xf32>
    %cst_39 = arith.constant dense<0.000000e+00> : vector<128x128xf32>
    %40 = tpu.matmul %38, %39, %cst_39 {dimension_numbers = #tpu.dot_dimension_numbers<[1], [0], [0], [1], [0, 0, 1, 1], [], []>} : vector<128x384xf32>, vector<384x128xf32>, vector<128x128xf32> -> vector<128x128xf32>
    %41 = arith.addf %32, %40 : vector<128x128xf32>
    %42 = vector.shape_cast %41 : vector<128x128xf32> to vector<8x16x128xf32>
    %c0_40 = arith.constant 0 : index
    %c0_41 = arith.constant 0 : index
    %c0_42 = arith.constant 0 : index
    %c0_43 = arith.constant 0 : index
    %43 = vector.load %arg3[%c0_40, %c0_41, %c0_42, %c0_43] : memref<1x16x16x128xf32, #tpu.memory_space<vmem>>, vector<1x8x16x128xf32>
    %44 = vector.shape_cast %43 : vector<1x8x16x128xf32> to vector<8x16x128xf32>
    %45 = vector.shape_cast %42 : vector<8x16x128xf32> to vector<1x8x16x128xf32>
    tpu.vector_store %arg3[%c0_40, %c0_41, %c0_42, %c0_43], %45 {strides = array<i32>} : memref<1x16x16x128xf32, #tpu.memory_space<vmem>>, vector<1x8x16x128xf32>,
    %cst_44 = arith.constant dense<0.000000e+00> : vector<128xf32>
    %46 = vector.multi_reduction <add>, %41, %cst_44 [0] : vector<128x128xf32> to vector<128xf32>
    %47 = vector.shape_cast %46 : vector<128xf32> to vector<1x128xf32>
    %48 = arith.addf %12, %47 : vector<1x128xf32>
    %49 = arith.mulf %41, %41 : vector<128x128xf32>
    %cst_45 = arith.constant dense<0.000000e+00> : vector<128xf32>
    %50 = vector.multi_reduction <add>, %49, %cst_45 [0] : vector<128x128xf32> to vector<128xf32>
    %51 = vector.shape_cast %50 : vector<128xf32> to vector<1x128xf32>
    %52 = arith.addf %13, %51 : vector<1x128xf32>
    %cst_46 = arith.constant 0.000000e+00 : f32
    %53 = vector.broadcast %cst_46 : f32 to vector<128x128xf32>
    %c8_47 = arith.constant 8 : index
    %c0_48 = arith.constant 0 : index
    %c0_49 = arith.constant 0 : index
    %54 = vector.load %arg5[%c8_47, %c0_48, %c0_49] : memref<18x18x128xf32, #tpu.memory_space<vmem>>, vector<8x18x128xf32>
    %55 = vector.extract_strided_slice %54 {offsets = [0, 0, 0], sizes = [8, 16, 128], strides = [1, 1, 1]} : vector<8x18x128xf32> to vector<8x16x128xf32>
    %56 = vector.extract_strided_slice %54 {offsets = [0, 1, 0], sizes = [8, 16, 128], strides = [1, 1, 1]} : vector<8x18x128xf32> to vector<8x16x128xf32>
    %57 = vector.extract_strided_slice %54 {offsets = [0, 2, 0], sizes = [8, 16, 128], strides = [1, 1, 1]} : vector<8x18x128xf32> to vector<8x16x128xf32>
    %58 = tpu.concatenate %55, %56, %57 in 2 : vector<8x16x128xf32>, vector<8x16x128xf32>, vector<8x16x128xf32> -> vector<8x16x384xf32>
    %59 = vector.shape_cast %58 : vector<8x16x384xf32> to vector<128x384xf32>
    %c0_50 = arith.constant 0 : index
    %c0_51 = arith.constant 0 : index
    %60 = vector.load %arg2[%c0_50, %c0_51] : memref<1152x128xf32, #tpu.memory_space<vmem>>, vector<384x128xf32>
    %cst_52 = arith.constant dense<0.000000e+00> : vector<128x128xf32>
    %61 = tpu.matmul %59, %60, %cst_52 {dimension_numbers = #tpu.dot_dimension_numbers<[1], [0], [0], [1], [0, 0, 1, 1], [], []>} : vector<128x384xf32>, vector<384x128xf32>, vector<128x128xf32> -> vector<128x128xf32>
    %62 = arith.addf %53, %61 : vector<128x128xf32>
    %c9_53 = arith.constant 9 : index
    %c0_54 = arith.constant 0 : index
    %c0_55 = arith.constant 0 : index
    %63 = vector.load %arg5[%c9_53, %c0_54, %c0_55] : memref<18x18x128xf32, #tpu.memory_space<vmem>>, vector<8x18x128xf32>
    %64 = vector.extract_strided_slice %63 {offsets = [0, 0, 0], sizes = [8, 16, 128], strides = [1, 1, 1]} : vector<8x18x128xf32> to vector<8x16x128xf32>
    %65 = vector.extract_strided_slice %63 {offsets = [0, 1, 0], sizes = [8, 16, 128], strides = [1, 1, 1]} : vector<8x18x128xf32> to vector<8x16x128xf32>
    %66 = vector.extract_strided_slice %63 {offsets = [0, 2, 0], sizes = [8, 16, 128], strides = [1, 1, 1]} : vector<8x18x128xf32> to vector<8x16x128xf32>
    %67 = tpu.concatenate %64, %65, %66 in 2 : vector<8x16x128xf32>, vector<8x16x128xf32>, vector<8x16x128xf32> -> vector<8x16x384xf32>
    %68 = vector.shape_cast %67 : vector<8x16x384xf32> to vector<128x384xf32>
    %c384_56 = arith.constant 384 : index
    %c0_57 = arith.constant 0 : index
    %69 = vector.load %arg2[%c384_56, %c0_57] : memref<1152x128xf32, #tpu.memory_space<vmem>>, vector<384x128xf32>
    %cst_58 = arith.constant dense<0.000000e+00> : vector<128x128xf32>
    %70 = tpu.matmul %68, %69, %cst_58 {dimension_numbers = #tpu.dot_dimension_numbers<[1], [0], [0], [1], [0, 0, 1, 1], [], []>} : vector<128x384xf32>, vector<384x128xf32>, vector<128x128xf32> -> vector<128x128xf32>
    %71 = arith.addf %62, %70 : vector<128x128xf32>
    %c10 = arith.constant 10 : index
    %c0_59 = arith.constant 0 : index
    %c0_60 = arith.constant 0 : index
    %72 = vector.load %arg5[%c10, %c0_59, %c0_60] : memref<18x18x128xf32, #tpu.memory_space<vmem>>, vector<8x18x128xf32>
    %73 = vector.extract_strided_slice %72 {offsets = [0, 0, 0], sizes = [8, 16, 128], strides = [1, 1, 1]} : vector<8x18x128xf32> to vector<8x16x128xf32>
    %74 = vector.extract_strided_slice %72 {offsets = [0, 1, 0], sizes = [8, 16, 128], strides = [1, 1, 1]} : vector<8x18x128xf32> to vector<8x16x128xf32>
    %75 = vector.extract_strided_slice %72 {offsets = [0, 2, 0], sizes = [8, 16, 128], strides = [1, 1, 1]} : vector<8x18x128xf32> to vector<8x16x128xf32>
    %76 = tpu.concatenate %73, %74, %75 in 2 : vector<8x16x128xf32>, vector<8x16x128xf32>, vector<8x16x128xf32> -> vector<8x16x384xf32>
    %77 = vector.shape_cast %76 : vector<8x16x384xf32> to vector<128x384xf32>
    %c768_61 = arith.constant 768 : index
    %c0_62 = arith.constant 0 : index
    %78 = vector.load %arg2[%c768_61, %c0_62] : memref<1152x128xf32, #tpu.memory_space<vmem>>, vector<384x128xf32>
    %cst_63 = arith.constant dense<0.000000e+00> : vector<128x128xf32>
    %79 = tpu.matmul %77, %78, %cst_63 {dimension_numbers = #tpu.dot_dimension_numbers<[1], [0], [0], [1], [0, 0, 1, 1], [], []>} : vector<128x384xf32>, vector<384x128xf32>, vector<128x128xf32> -> vector<128x128xf32>
    %80 = arith.addf %71, %79 : vector<128x128xf32>
    %81 = vector.shape_cast %80 : vector<128x128xf32> to vector<8x16x128xf32>
    %c0_64 = arith.constant 0 : index
    %c8_65 = arith.constant 8 : index
    %c0_66 = arith.constant 0 : index
    %c0_67 = arith.constant 0 : index
    %82 = vector.load %arg3[%c0_64, %c8_65, %c0_66, %c0_67] : memref<1x16x16x128xf32, #tpu.memory_space<vmem>>, vector<1x8x16x128xf32>
    %83 = vector.shape_cast %82 : vector<1x8x16x128xf32> to vector<8x16x128xf32>
    %84 = vector.shape_cast %81 : vector<8x16x128xf32> to vector<1x8x16x128xf32>
    tpu.vector_store %arg3[%c0_64, %c8_65, %c0_66, %c0_67], %84 {strides = array<i32>} : memref<1x16x16x128xf32, #tpu.memory_space<vmem>>, vector<1x8x16x128xf32>,
    %cst_68 = arith.constant dense<0.000000e+00> : vector<128xf32>
    %85 = vector.multi_reduction <add>, %80, %cst_68 [0] : vector<128x128xf32> to vector<128xf32>
    %86 = vector.shape_cast %85 : vector<128xf32> to vector<1x128xf32>
    %87 = arith.addf %48, %86 : vector<1x128xf32>
    %88 = arith.mulf %80, %80 : vector<128x128xf32>
    %cst_69 = arith.constant dense<0.000000e+00> : vector<128xf32>
    %89 = vector.multi_reduction <add>, %88, %cst_69 [0] : vector<128x128xf32> to vector<128xf32>
    %90 = vector.shape_cast %89 : vector<128xf32> to vector<1x128xf32>
    %91 = arith.addf %52, %90 : vector<1x128xf32>
    %92 = tpu.concatenate %87, %91 in 0 : vector<1x128xf32>, vector<1x128xf32> -> vector<2x128xf32>
    %93 = vector.shape_cast %92 : vector<2x128xf32> to vector<1x2x128xf32>
    %c0_70 = arith.constant 0 : index
    %c0_71 = arith.constant 0 : index
    %c0_72 = arith.constant 0 : index
    %94 = vector.load %arg4[%c0_70, %c0_71, %c0_72] : memref<1x2x128xf32, #tpu.memory_space<vmem>>, vector<1x2x128xf32>
    tpu.vector_store %arg4[%c0_70, %c0_71, %c0_72], %93 {strides = array<i32>} : memref<1x2x128xf32, #tpu.memory_space<vmem>>, vector<1x2x128xf32>,
    return
  }
  func.func @transform_0(%arg0: i32) -> (i32, i32, i32, i32) {
    %c0_i32 = arith.constant 0 : i32
    %c0_i32_0 = arith.constant 0 : i32
    %c0_i32_1 = arith.constant 0 : i32
    %c0_i32_2 = arith.constant 0 : i32
    return %arg0, %c0_i32, %c0_i32_0, %c0_i32_1 : i32, i32, i32, i32
  }
  func.func @transform_1(%arg0: i32) -> (i32, i32) {
    %c0_i32 = arith.constant 0 : i32
    %c0_i32_0 = arith.constant 0 : i32
    %c0_i32_1 = arith.constant 0 : i32
    return %c0_i32, %c0_i32_0 : i32, i32
  }
  func.func @transform_2(%arg0: i32) -> (i32, i32, i32, i32) {
    %c0_i32 = arith.constant 0 : i32
    %c0_i32_0 = arith.constant 0 : i32
    %c0_i32_1 = arith.constant 0 : i32
    %c0_i32_2 = arith.constant 0 : i32
    return %arg0, %c0_i32, %c0_i32_0, %c0_i32_1 : i32, i32, i32, i32
  }
  func.func @transform_3(%arg0: i32) -> (i32, i32, i32) {
    %c0_i32 = arith.constant 0 : i32
    %c0_i32_0 = arith.constant 0 : i32
    %c0_i32_1 = arith.constant 0 : i32
    return %arg0, %c0_i32, %c0_i32_0 : i32, i32, i32
  }
}

module attributes {stable_mosaic.version = 11 : i64} {
  func.func @_bn_relu_residual_kernel(%arg0: i32, %arg1: i32, %arg2: memref<1x16x16x128xf32, #tpu.memory_space<vmem>>, %arg3: memref<1x128xf32, #tpu.memory_space<vmem>>, %arg4: memref<1x128xf32, #tpu.memory_space<vmem>>, %arg5: memref<1x16x16x128xf32, #tpu.memory_space<vmem>>, %arg6: memref<1x16x16x128xf32, #tpu.memory_space<vmem>>) attributes {dimension_semantics = [#tpu.dimension_semantics<parallel>, #tpu.dimension_semantics<parallel>], iteration_bounds = array<i64: 2, 1>, scalar_prefetch = 0 : i64, scratch_operands = 0 : i64, tpu.core_type = #tpu.core_type<tc>, window_params = [{transform_indices = @transform_0, window_bounds = array<i64: 1, 16, 16, 128>}, {pipeline_mode = #tpu.pipeline_mode<synchronous>, transform_indices = @transform_1, window_bounds = array<i64: 1, 128>}, {pipeline_mode = #tpu.pipeline_mode<synchronous>, transform_indices = @transform_2, window_bounds = array<i64: 1, 128>}, {transform_indices = @transform_3, window_bounds = array<i64: 1, 16, 16, 128>}, {transform_indices = @transform_4, window_bounds = array<i64: 1, 16, 16, 128>}]} {
    %c0 = arith.constant 0 : index
    %c0_0 = arith.constant 0 : index
    %c0_1 = arith.constant 0 : index
    %c0_2 = arith.constant 0 : index
    %0 = vector.load %arg2[%c0, %c0_0, %c0_1, %c0_2] : memref<1x16x16x128xf32, #tpu.memory_space<vmem>>, vector<1x16x16x128xf32>
    %c0_3 = arith.constant 0 : index
    %c0_4 = arith.constant 0 : index
    %1 = vector.load %arg3[%c0_3, %c0_4] : memref<1x128xf32, #tpu.memory_space<vmem>>, vector<1x128xf32>
    %2 = vector.shape_cast %1 : vector<1x128xf32> to vector<1x1x1x128xf32>
    %c0_5 = arith.constant 0 : index
    %c0_6 = arith.constant 0 : index
    %3 = vector.load %arg4[%c0_5, %c0_6] : memref<1x128xf32, #tpu.memory_space<vmem>>, vector<1x128xf32>
    %4 = vector.shape_cast %3 : vector<1x128xf32> to vector<1x1x1x128xf32>
    %5 = vector.broadcast %2 : vector<1x1x1x128xf32> to vector<1x16x16x128xf32>
    %6 = arith.mulf %0, %5 : vector<1x16x16x128xf32>
    %7 = vector.broadcast %4 : vector<1x1x1x128xf32> to vector<1x16x16x128xf32>
    %8 = arith.addf %6, %7 : vector<1x16x16x128xf32>
    %c0_7 = arith.constant 0 : index
    %c0_8 = arith.constant 0 : index
    %c0_9 = arith.constant 0 : index
    %c0_10 = arith.constant 0 : index
    %9 = vector.load %arg5[%c0_7, %c0_8, %c0_9, %c0_10] : memref<1x16x16x128xf32, #tpu.memory_space<vmem>>, vector<1x16x16x128xf32>
    %10 = arith.addf %8, %9 : vector<1x16x16x128xf32>
    %cst = arith.constant 0.000000e+00 : f32
    %11 = vector.broadcast %cst : f32 to vector<1x16x16x128xf32>
    %12 = arith.maximumf %10, %11 : vector<1x16x16x128xf32>
    %c0_11 = arith.constant 0 : index
    %c0_12 = arith.constant 0 : index
    %c0_13 = arith.constant 0 : index
    %c0_14 = arith.constant 0 : index
    %13 = vector.load %arg6[%c0_11, %c0_12, %c0_13, %c0_14] : memref<1x16x16x128xf32, #tpu.memory_space<vmem>>, vector<1x16x16x128xf32>
    tpu.vector_store %arg6[%c0_11, %c0_12, %c0_13, %c0_14], %12 {strides = array<i32>} : memref<1x16x16x128xf32, #tpu.memory_space<vmem>>, vector<1x16x16x128xf32>,
    return
  }
  func.func @transform_0(%arg0: i32, %arg1: i32) -> (i32, i32, i32, i32) {
    %c0_i32 = arith.constant 0 : i32
    %c0_i32_0 = arith.constant 0 : i32
    %c0_i32_1 = arith.constant 0 : i32
    return %arg0, %arg1, %c0_i32, %c0_i32_0 : i32, i32, i32, i32
  }
  func.func @transform_1(%arg0: i32, %arg1: i32) -> (i32, i32) {
    %c0_i32 = arith.constant 0 : i32
    %c0_i32_0 = arith.constant 0 : i32
    %c0_i32_1 = arith.constant 0 : i32
    return %c0_i32, %c0_i32_0 : i32, i32
  }
  func.func @transform_2(%arg0: i32, %arg1: i32) -> (i32, i32) {
    %c0_i32 = arith.constant 0 : i32
    %c0_i32_0 = arith.constant 0 : i32
    %c0_i32_1 = arith.constant 0 : i32
    return %c0_i32, %c0_i32_0 : i32, i32
  }
  func.func @transform_3(%arg0: i32, %arg1: i32) -> (i32, i32, i32, i32) {
    %c0_i32 = arith.constant 0 : i32
    %c0_i32_0 = arith.constant 0 : i32
    %c0_i32_1 = arith.constant 0 : i32
    return %arg0, %arg1, %c0_i32, %c0_i32_0 : i32, i32, i32, i32
  }
  func.func @transform_4(%arg0: i32, %arg1: i32) -> (i32, i32, i32, i32) {
    %c0_i32 = arith.constant 0 : i32
    %c0_i32_0 = arith.constant 0 : i32
    %c0_i32_1 = arith.constant 0 : i32
    return %arg0, %arg1, %c0_i32, %c0_i32_0 : i32, i32, i32, i32
  }
}

module attributes {stable_mosaic.version = 11 : i64} {
  func.func @kernel(%arg0: i32, %arg1: memref<1x16x16x128xf32, #tpu.memory_space<vmem>>, %arg2: memref<1152x128xf32, #tpu.memory_space<vmem>>, %arg3: memref<1x128xf32, #tpu.memory_space<vmem>>, %arg4: memref<1x128xf32, #tpu.memory_space<vmem>>, %arg5: memref<1x16x16x128xf32, #tpu.memory_space<vmem>>, %arg6: memref<1x2x128xf32, #tpu.memory_space<vmem>>, %arg7: memref<18x18x128xf32, #tpu.memory_space<vmem>>) attributes {dimension_semantics = [#tpu.dimension_semantics<parallel>], iteration_bounds = array<i64: 2>, scalar_prefetch = 0 : i64, scratch_operands = 1 : i64, tpu.core_type = #tpu.core_type<tc>, window_params = [{transform_indices = @transform_0, window_bounds = array<i64: 1, 16, 16, 128>}, {pipeline_mode = #tpu.pipeline_mode<synchronous>, transform_indices = @transform_1, window_bounds = array<i64: 1152, 128>}, {pipeline_mode = #tpu.pipeline_mode<synchronous>, transform_indices = @transform_2, window_bounds = array<i64: 1, 128>}, {pipeline_mode = #tpu.pipeline_mode<synchronous>, transform_indices = @transform_3, window_bounds = array<i64: 1, 128>}, {transform_indices = @transform_4, window_bounds = array<i64: 1, 16, 16, 128>}, {transform_indices = @transform_5, window_bounds = array<i64: 1, 2, 128>}]} {
    %cst = arith.constant 0.000000e+00 : f32
    %0 = vector.broadcast %cst : f32 to vector<1x18x128xf32>
    %c0 = arith.constant 0 : index
    %c0_0 = arith.constant 0 : index
    %c0_1 = arith.constant 0 : index
    %1 = vector.load %arg7[%c0, %c0_0, %c0_1] : memref<18x18x128xf32, #tpu.memory_space<vmem>>, vector<1x18x128xf32>
    tpu.vector_store %arg7[%c0, %c0_0, %c0_1], %0 {strides = array<i32>} : memref<18x18x128xf32, #tpu.memory_space<vmem>>, vector<1x18x128xf32>,
    %c17 = arith.constant 17 : index
    %c0_2 = arith.constant 0 : index
    %c0_3 = arith.constant 0 : index
    %2 = vector.load %arg7[%c17, %c0_2, %c0_3] : memref<18x18x128xf32, #tpu.memory_space<vmem>>, vector<1x18x128xf32>
    tpu.vector_store %arg7[%c17, %c0_2, %c0_3], %0 {strides = array<i32>} : memref<18x18x128xf32, #tpu.memory_space<vmem>>, vector<1x18x128xf32>,
    %cst_4 = arith.constant 0.000000e+00 : f32
    %3 = vector.broadcast %cst_4 : f32 to vector<18x1x128xf32>
    %c0_5 = arith.constant 0 : index
    %c0_6 = arith.constant 0 : index
    %c0_7 = arith.constant 0 : index
    %4 = vector.load %arg7[%c0_5, %c0_6, %c0_7] : memref<18x18x128xf32, #tpu.memory_space<vmem>>, vector<18x1x128xf32>
    tpu.vector_store %arg7[%c0_5, %c0_6, %c0_7], %3 {strides = array<i32>} : memref<18x18x128xf32, #tpu.memory_space<vmem>>, vector<18x1x128xf32>,
    %c0_8 = arith.constant 0 : index
    %c17_9 = arith.constant 17 : index
    %c0_10 = arith.constant 0 : index
    %5 = vector.load %arg7[%c0_8, %c17_9, %c0_10] : memref<18x18x128xf32, #tpu.memory_space<vmem>>, vector<18x1x128xf32>
    tpu.vector_store %arg7[%c0_8, %c17_9, %c0_10], %3 {strides = array<i32>} : memref<18x18x128xf32, #tpu.memory_space<vmem>>, vector<18x1x128xf32>,
    %c0_11 = arith.constant 0 : index
    %c0_12 = arith.constant 0 : index
    %6 = vector.load %arg3[%c0_11, %c0_12] : memref<1x128xf32, #tpu.memory_space<vmem>>, vector<1x128xf32>
    %7 = vector.shape_cast %6 : vector<1x128xf32> to vector<1x1x128xf32>
    %c0_13 = arith.constant 0 : index
    %c0_14 = arith.constant 0 : index
    %8 = vector.load %arg4[%c0_13, %c0_14] : memref<1x128xf32, #tpu.memory_space<vmem>>, vector<1x128xf32>
    %9 = vector.shape_cast %8 : vector<1x128xf32> to vector<1x1x128xf32>
    %c0_15 = arith.constant 0 : index
    %c0_16 = arith.constant 0 : index
    %c0_17 = arith.constant 0 : index
    %c0_18 = arith.constant 0 : index
    %10 = vector.load %arg1[%c0_15, %c0_16, %c0_17, %c0_18] : memref<1x16x16x128xf32, #tpu.memory_space<vmem>>, vector<1x8x16x128xf32>
    %11 = vector.shape_cast %10 : vector<1x8x16x128xf32> to vector<8x16x128xf32>
    %12 = vector.broadcast %7 : vector<1x1x128xf32> to vector<8x16x128xf32>
    %13 = arith.mulf %11, %12 : vector<8x16x128xf32>
    %14 = vector.broadcast %9 : vector<1x1x128xf32> to vector<8x16x128xf32>
    %15 = arith.addf %13, %14 : vector<8x16x128xf32>
    %cst_19 = arith.constant 0.000000e+00 : f32
    %16 = vector.broadcast %cst_19 : f32 to vector<8x16x128xf32>
    %17 = arith.maximumf %15, %16 : vector<8x16x128xf32>
    %c1 = arith.constant 1 : index
    %c1_20 = arith.constant 1 : index
    %c0_21 = arith.constant 0 : index
    %18 = vector.load %arg7[%c1, %c1_20, %c0_21] : memref<18x18x128xf32, #tpu.memory_space<vmem>>, vector<8x16x128xf32>
    tpu.vector_store %arg7[%c1, %c1_20, %c0_21], %17 {strides = array<i32>} : memref<18x18x128xf32, #tpu.memory_space<vmem>>, vector<8x16x128xf32>,
    %c0_22 = arith.constant 0 : index
    %c8 = arith.constant 8 : index
    %c0_23 = arith.constant 0 : index
    %c0_24 = arith.constant 0 : index
    %19 = vector.load %arg1[%c0_22, %c8, %c0_23, %c0_24] : memref<1x16x16x128xf32, #tpu.memory_space<vmem>>, vector<1x8x16x128xf32>
    %20 = vector.shape_cast %19 : vector<1x8x16x128xf32> to vector<8x16x128xf32>
    %21 = vector.broadcast %7 : vector<1x1x128xf32> to vector<8x16x128xf32>
    %22 = arith.mulf %20, %21 : vector<8x16x128xf32>
    %23 = vector.broadcast %9 : vector<1x1x128xf32> to vector<8x16x128xf32>
    %24 = arith.addf %22, %23 : vector<8x16x128xf32>
    %cst_25 = arith.constant 0.000000e+00 : f32
    %25 = vector.broadcast %cst_25 : f32 to vector<8x16x128xf32>
    %26 = arith.maximumf %24, %25 : vector<8x16x128xf32>
    %c9 = arith.constant 9 : index
    %c1_26 = arith.constant 1 : index
    %c0_27 = arith.constant 0 : index
    %27 = vector.load %arg7[%c9, %c1_26, %c0_27] : memref<18x18x128xf32, #tpu.memory_space<vmem>>, vector<8x16x128xf32>
    tpu.vector_store %arg7[%c9, %c1_26, %c0_27], %26 {strides = array<i32>} : memref<18x18x128xf32, #tpu.memory_space<vmem>>, vector<8x16x128xf32>,
    %cst_28 = arith.constant 0.000000e+00 : f32
    %28 = vector.broadcast %cst_28 : f32 to vector<1x128xf32>
    %cst_29 = arith.constant 0.000000e+00 : f32
    %29 = vector.broadcast %cst_29 : f32 to vector<1x128xf32>
    %cst_30 = arith.constant 0.000000e+00 : f32
    %30 = vector.broadcast %cst_30 : f32 to vector<128x128xf32>
    %c0_31 = arith.constant 0 : index
    %c0_32 = arith.constant 0 : index
    %c0_33 = arith.constant 0 : index
    %31 = vector.load %arg7[%c0_31, %c0_32, %c0_33] : memref<18x18x128xf32, #tpu.memory_space<vmem>>, vector<8x18x128xf32>
    %32 = vector.extract_strided_slice %31 {offsets = [0, 0, 0], sizes = [8, 16, 128], strides = [1, 1, 1]} : vector<8x18x128xf32> to vector<8x16x128xf32>
    %33 = vector.extract_strided_slice %31 {offsets = [0, 1, 0], sizes = [8, 16, 128], strides = [1, 1, 1]} : vector<8x18x128xf32> to vector<8x16x128xf32>
    %34 = vector.extract_strided_slice %31 {offsets = [0, 2, 0], sizes = [8, 16, 128], strides = [1, 1, 1]} : vector<8x18x128xf32> to vector<8x16x128xf32>
    %35 = tpu.concatenate %32, %33, %34 in 2 : vector<8x16x128xf32>, vector<8x16x128xf32>, vector<8x16x128xf32> -> vector<8x16x384xf32>
    %36 = vector.shape_cast %35 : vector<8x16x384xf32> to vector<128x384xf32>
    %c0_34 = arith.constant 0 : index
    %c0_35 = arith.constant 0 : index
    %37 = vector.load %arg2[%c0_34, %c0_35] : memref<1152x128xf32, #tpu.memory_space<vmem>>, vector<384x128xf32>
    %cst_36 = arith.constant dense<0.000000e+00> : vector<128x128xf32>
    %38 = tpu.matmul %36, %37, %cst_36 {dimension_numbers = #tpu.dot_dimension_numbers<[1], [0], [0], [1], [0, 0, 1, 1], [], []>} : vector<128x384xf32>, vector<384x128xf32>, vector<128x128xf32> -> vector<128x128xf32>
    %39 = arith.addf %30, %38 : vector<128x128xf32>
    %c1_37 = arith.constant 1 : index
    %c0_38 = arith.constant 0 : index
    %c0_39 = arith.constant 0 : index
    %40 = vector.load %arg7[%c1_37, %c0_38, %c0_39] : memref<18x18x128xf32, #tpu.memory_space<vmem>>, vector<8x18x128xf32>
    %41 = vector.extract_strided_slice %40 {offsets = [0, 0, 0], sizes = [8, 16, 128], strides = [1, 1, 1]} : vector<8x18x128xf32> to vector<8x16x128xf32>
    %42 = vector.extract_strided_slice %40 {offsets = [0, 1, 0], sizes = [8, 16, 128], strides = [1, 1, 1]} : vector<8x18x128xf32> to vector<8x16x128xf32>
    %43 = vector.extract_strided_slice %40 {offsets = [0, 2, 0], sizes = [8, 16, 128], strides = [1, 1, 1]} : vector<8x18x128xf32> to vector<8x16x128xf32>
    %44 = tpu.concatenate %41, %42, %43 in 2 : vector<8x16x128xf32>, vector<8x16x128xf32>, vector<8x16x128xf32> -> vector<8x16x384xf32>
    %45 = vector.shape_cast %44 : vector<8x16x384xf32> to vector<128x384xf32>
    %c384 = arith.constant 384 : index
    %c0_40 = arith.constant 0 : index
    %46 = vector.load %arg2[%c384, %c0_40] : memref<1152x128xf32, #tpu.memory_space<vmem>>, vector<384x128xf32>
    %cst_41 = arith.constant dense<0.000000e+00> : vector<128x128xf32>
    %47 = tpu.matmul %45, %46, %cst_41 {dimension_numbers = #tpu.dot_dimension_numbers<[1], [0], [0], [1], [0, 0, 1, 1], [], []>} : vector<128x384xf32>, vector<384x128xf32>, vector<128x128xf32> -> vector<128x128xf32>
    %48 = arith.addf %39, %47 : vector<128x128xf32>
    %c2 = arith.constant 2 : index
    %c0_42 = arith.constant 0 : index
    %c0_43 = arith.constant 0 : index
    %49 = vector.load %arg7[%c2, %c0_42, %c0_43] : memref<18x18x128xf32, #tpu.memory_space<vmem>>, vector<8x18x128xf32>
    %50 = vector.extract_strided_slice %49 {offsets = [0, 0, 0], sizes = [8, 16, 128], strides = [1, 1, 1]} : vector<8x18x128xf32> to vector<8x16x128xf32>
    %51 = vector.extract_strided_slice %49 {offsets = [0, 1, 0], sizes = [8, 16, 128], strides = [1, 1, 1]} : vector<8x18x128xf32> to vector<8x16x128xf32>
    %52 = vector.extract_strided_slice %49 {offsets = [0, 2, 0], sizes = [8, 16, 128], strides = [1, 1, 1]} : vector<8x18x128xf32> to vector<8x16x128xf32>
    %53 = tpu.concatenate %50, %51, %52 in 2 : vector<8x16x128xf32>, vector<8x16x128xf32>, vector<8x16x128xf32> -> vector<8x16x384xf32>
    %54 = vector.shape_cast %53 : vector<8x16x384xf32> to vector<128x384xf32>
    %c768 = arith.constant 768 : index
    %c0_44 = arith.constant 0 : index
    %55 = vector.load %arg2[%c768, %c0_44] : memref<1152x128xf32, #tpu.memory_space<vmem>>, vector<384x128xf32>
    %cst_45 = arith.constant dense<0.000000e+00> : vector<128x128xf32>
    %56 = tpu.matmul %54, %55, %cst_45 {dimension_numbers = #tpu.dot_dimension_numbers<[1], [0], [0], [1], [0, 0, 1, 1], [], []>} : vector<128x384xf32>, vector<384x128xf32>, vector<128x128xf32> -> vector<128x128xf32>
    %57 = arith.addf %48, %56 : vector<128x128xf32>
    %58 = vector.shape_cast %57 : vector<128x128xf32> to vector<8x16x128xf32>
    %c0_46 = arith.constant 0 : index
    %c0_47 = arith.constant 0 : index
    %c0_48 = arith.constant 0 : index
    %c0_49 = arith.constant 0 : index
    %59 = vector.load %arg5[%c0_46, %c0_47, %c0_48, %c0_49] : memref<1x16x16x128xf32, #tpu.memory_space<vmem>>, vector<1x8x16x128xf32>
    %60 = vector.shape_cast %59 : vector<1x8x16x128xf32> to vector<8x16x128xf32>
    %61 = vector.shape_cast %58 : vector<8x16x128xf32> to vector<1x8x16x128xf32>
    tpu.vector_store %arg5[%c0_46, %c0_47, %c0_48, %c0_49], %61 {strides = array<i32>} : memref<1x16x16x128xf32, #tpu.memory_space<vmem>>, vector<1x8x16x128xf32>,
    %cst_50 = arith.constant dense<0.000000e+00> : vector<128xf32>
    %62 = vector.multi_reduction <add>, %57, %cst_50 [0] : vector<128x128xf32> to vector<128xf32>
    %63 = vector.shape_cast %62 : vector<128xf32> to vector<1x128xf32>
    %64 = arith.addf %28, %63 : vector<1x128xf32>
    %65 = arith.mulf %57, %57 : vector<128x128xf32>
    %cst_51 = arith.constant dense<0.000000e+00> : vector<128xf32>
    %66 = vector.multi_reduction <add>, %65, %cst_51 [0] : vector<128x128xf32> to vector<128xf32>
    %67 = vector.shape_cast %66 : vector<128xf32> to vector<1x128xf32>
    %68 = arith.addf %29, %67 : vector<1x128xf32>
    %cst_52 = arith.constant 0.000000e+00 : f32
    %69 = vector.broadcast %cst_52 : f32 to vector<128x128xf32>
    %c8_53 = arith.constant 8 : index
    %c0_54 = arith.constant 0 : index
    %c0_55 = arith.constant 0 : index
    %70 = vector.load %arg7[%c8_53, %c0_54, %c0_55] : memref<18x18x128xf32, #tpu.memory_space<vmem>>, vector<8x18x128xf32>
    %71 = vector.extract_strided_slice %70 {offsets = [0, 0, 0], sizes = [8, 16, 128], strides = [1, 1, 1]} : vector<8x18x128xf32> to vector<8x16x128xf32>
    %72 = vector.extract_strided_slice %70 {offsets = [0, 1, 0], sizes = [8, 16, 128], strides = [1, 1, 1]} : vector<8x18x128xf32> to vector<8x16x128xf32>
    %73 = vector.extract_strided_slice %70 {offsets = [0, 2, 0], sizes = [8, 16, 128], strides = [1, 1, 1]} : vector<8x18x128xf32> to vector<8x16x128xf32>
    %74 = tpu.concatenate %71, %72, %73 in 2 : vector<8x16x128xf32>, vector<8x16x128xf32>, vector<8x16x128xf32> -> vector<8x16x384xf32>
    %75 = vector.shape_cast %74 : vector<8x16x384xf32> to vector<128x384xf32>
    %c0_56 = arith.constant 0 : index
    %c0_57 = arith.constant 0 : index
    %76 = vector.load %arg2[%c0_56, %c0_57] : memref<1152x128xf32, #tpu.memory_space<vmem>>, vector<384x128xf32>
    %cst_58 = arith.constant dense<0.000000e+00> : vector<128x128xf32>
    %77 = tpu.matmul %75, %76, %cst_58 {dimension_numbers = #tpu.dot_dimension_numbers<[1], [0], [0], [1], [0, 0, 1, 1], [], []>} : vector<128x384xf32>, vector<384x128xf32>, vector<128x128xf32> -> vector<128x128xf32>
    %78 = arith.addf %69, %77 : vector<128x128xf32>
    %c9_59 = arith.constant 9 : index
    %c0_60 = arith.constant 0 : index
    %c0_61 = arith.constant 0 : index
    %79 = vector.load %arg7[%c9_59, %c0_60, %c0_61] : memref<18x18x128xf32, #tpu.memory_space<vmem>>, vector<8x18x128xf32>
    %80 = vector.extract_strided_slice %79 {offsets = [0, 0, 0], sizes = [8, 16, 128], strides = [1, 1, 1]} : vector<8x18x128xf32> to vector<8x16x128xf32>
    %81 = vector.extract_strided_slice %79 {offsets = [0, 1, 0], sizes = [8, 16, 128], strides = [1, 1, 1]} : vector<8x18x128xf32> to vector<8x16x128xf32>
    %82 = vector.extract_strided_slice %79 {offsets = [0, 2, 0], sizes = [8, 16, 128], strides = [1, 1, 1]} : vector<8x18x128xf32> to vector<8x16x128xf32>
    %83 = tpu.concatenate %80, %81, %82 in 2 : vector<8x16x128xf32>, vector<8x16x128xf32>, vector<8x16x128xf32> -> vector<8x16x384xf32>
    %84 = vector.shape_cast %83 : vector<8x16x384xf32> to vector<128x384xf32>
    %c384_62 = arith.constant 384 : index
    %c0_63 = arith.constant 0 : index
    %85 = vector.load %arg2[%c384_62, %c0_63] : memref<1152x128xf32, #tpu.memory_space<vmem>>, vector<384x128xf32>
    %cst_64 = arith.constant dense<0.000000e+00> : vector<128x128xf32>
    %86 = tpu.matmul %84, %85, %cst_64 {dimension_numbers = #tpu.dot_dimension_numbers<[1], [0], [0], [1], [0, 0, 1, 1], [], []>} : vector<128x384xf32>, vector<384x128xf32>, vector<128x128xf32> -> vector<128x128xf32>
    %87 = arith.addf %78, %86 : vector<128x128xf32>
    %c10 = arith.constant 10 : index
    %c0_65 = arith.constant 0 : index
    %c0_66 = arith.constant 0 : index
    %88 = vector.load %arg7[%c10, %c0_65, %c0_66] : memref<18x18x128xf32, #tpu.memory_space<vmem>>, vector<8x18x128xf32>
    %89 = vector.extract_strided_slice %88 {offsets = [0, 0, 0], sizes = [8, 16, 128], strides = [1, 1, 1]} : vector<8x18x128xf32> to vector<8x16x128xf32>
    %90 = vector.extract_strided_slice %88 {offsets = [0, 1, 0], sizes = [8, 16, 128], strides = [1, 1, 1]} : vector<8x18x128xf32> to vector<8x16x128xf32>
    %91 = vector.extract_strided_slice %88 {offsets = [0, 2, 0], sizes = [8, 16, 128], strides = [1, 1, 1]} : vector<8x18x128xf32> to vector<8x16x128xf32>
    %92 = tpu.concatenate %89, %90, %91 in 2 : vector<8x16x128xf32>, vector<8x16x128xf32>, vector<8x16x128xf32> -> vector<8x16x384xf32>
    %93 = vector.shape_cast %92 : vector<8x16x384xf32> to vector<128x384xf32>
    %c768_67 = arith.constant 768 : index
    %c0_68 = arith.constant 0 : index
    %94 = vector.load %arg2[%c768_67, %c0_68] : memref<1152x128xf32, #tpu.memory_space<vmem>>, vector<384x128xf32>
    %cst_69 = arith.constant dense<0.000000e+00> : vector<128x128xf32>
    %95 = tpu.matmul %93, %94, %cst_69 {dimension_numbers = #tpu.dot_dimension_numbers<[1], [0], [0], [1], [0, 0, 1, 1], [], []>} : vector<128x384xf32>, vector<384x128xf32>, vector<128x128xf32> -> vector<128x128xf32>
    %96 = arith.addf %87, %95 : vector<128x128xf32>
    %97 = vector.shape_cast %96 : vector<128x128xf32> to vector<8x16x128xf32>
    %c0_70 = arith.constant 0 : index
    %c8_71 = arith.constant 8 : index
    %c0_72 = arith.constant 0 : index
    %c0_73 = arith.constant 0 : index
    %98 = vector.load %arg5[%c0_70, %c8_71, %c0_72, %c0_73] : memref<1x16x16x128xf32, #tpu.memory_space<vmem>>, vector<1x8x16x128xf32>
    %99 = vector.shape_cast %98 : vector<1x8x16x128xf32> to vector<8x16x128xf32>
    %100 = vector.shape_cast %97 : vector<8x16x128xf32> to vector<1x8x16x128xf32>
    tpu.vector_store %arg5[%c0_70, %c8_71, %c0_72, %c0_73], %100 {strides = array<i32>} : memref<1x16x16x128xf32, #tpu.memory_space<vmem>>, vector<1x8x16x128xf32>,
    %cst_74 = arith.constant dense<0.000000e+00> : vector<128xf32>
    %101 = vector.multi_reduction <add>, %96, %cst_74 [0] : vector<128x128xf32> to vector<128xf32>
    %102 = vector.shape_cast %101 : vector<128xf32> to vector<1x128xf32>
    %103 = arith.addf %64, %102 : vector<1x128xf32>
    %104 = arith.mulf %96, %96 : vector<128x128xf32>
    %cst_75 = arith.constant dense<0.000000e+00> : vector<128xf32>
    %105 = vector.multi_reduction <add>, %104, %cst_75 [0] : vector<128x128xf32> to vector<128xf32>
    %106 = vector.shape_cast %105 : vector<128xf32> to vector<1x128xf32>
    %107 = arith.addf %68, %106 : vector<1x128xf32>
    %108 = tpu.concatenate %103, %107 in 0 : vector<1x128xf32>, vector<1x128xf32> -> vector<2x128xf32>
    %109 = vector.shape_cast %108 : vector<2x128xf32> to vector<1x2x128xf32>
    %c0_76 = arith.constant 0 : index
    %c0_77 = arith.constant 0 : index
    %c0_78 = arith.constant 0 : index
    %110 = vector.load %arg6[%c0_76, %c0_77, %c0_78] : memref<1x2x128xf32, #tpu.memory_space<vmem>>, vector<1x2x128xf32>
    tpu.vector_store %arg6[%c0_76, %c0_77, %c0_78], %109 {strides = array<i32>} : memref<1x2x128xf32, #tpu.memory_space<vmem>>, vector<1x2x128xf32>,
    return
  }
  func.func @transform_0(%arg0: i32) -> (i32, i32, i32, i32) {
    %c0_i32 = arith.constant 0 : i32
    %c0_i32_0 = arith.constant 0 : i32
    %c0_i32_1 = arith.constant 0 : i32
    %c0_i32_2 = arith.constant 0 : i32
    return %arg0, %c0_i32, %c0_i32_0, %c0_i32_1 : i32, i32, i32, i32
  }
  func.func @transform_1(%arg0: i32) -> (i32, i32) {
    %c0_i32 = arith.constant 0 : i32
    %c0_i32_0 = arith.constant 0 : i32
    %c0_i32_1 = arith.constant 0 : i32
    return %c0_i32, %c0_i32_0 : i32, i32
  }
  func.func @transform_2(%arg0: i32) -> (i32, i32) {
    %c0_i32 = arith.constant 0 : i32
    %c0_i32_0 = arith.constant 0 : i32
    %c0_i32_1 = arith.constant 0 : i32
    return %c0_i32, %c0_i32_0 : i32, i32
  }
  func.func @transform_3(%arg0: i32) -> (i32, i32) {
    %c0_i32 = arith.constant 0 : i32
    %c0_i32_0 = arith.constant 0 : i32
    %c0_i32_1 = arith.constant 0 : i32
    return %c0_i32, %c0_i32_0 : i32, i32
  }
  func.func @transform_4(%arg0: i32) -> (i32, i32, i32, i32) {
    %c0_i32 = arith.constant 0 : i32
    %c0_i32_0 = arith.constant 0 : i32
    %c0_i32_1 = arith.constant 0 : i32
    %c0_i32_2 = arith.constant 0 : i32
    return %arg0, %c0_i32, %c0_i32_0, %c0_i32_1 : i32, i32, i32, i32
  }
  func.func @transform_5(%arg0: i32) -> (i32, i32, i32) {
    %c0_i32 = arith.constant 0 : i32
    %c0_i32_0 = arith.constant 0 : i32
    %c0_i32_1 = arith.constant 0 : i32
    return %arg0, %c0_i32, %c0_i32_0 : i32, i32, i32
  }
}

</mosaic_0001>

<llo_original>
// kernel: residual_block_forward.5
$region0: #{residual_block_forward.5}
  #allocation0 [shape = 'u32[]', space=smem, size = 0x4, offset = 0x4, fixed_abs, tag = 'smem constant byte address 0x4 - core index']
  #allocation1 [shape = 'u32[144,128]{1,0:T(1,128)}', space=vmem, size = 0x12000, scoped, tag = 'internal scratch']
  %s0 = inlined_call_operand.vmem [shape: f32[2,16,16,128], index: 0, kind: input, shape index: {}]
  %s1 = inlined_call_operand.vmem [shape: f32[1,128], index: 1, kind: input, shape index: {}]
  %s2 = inlined_call_operand.vmem [shape: f32[1,128], index: 2, kind: input, shape index: {}]
  %s3 = inlined_call_operand.vmem [shape: f32[2,16,16,128], index: 3, kind: input, shape index: {}]
  %s4 = inlined_call_operand.vmem [shape: f32[2,16,16,128], index: 4, kind: output, shape index: {}]
  %s5 = sld [smem:[#allocation0]]
  $region49: #{residual_block_forward.5} parent=0
    _
  %s7 = ssub.s32 1, %s5
  %s8 = scalar_select 0, %s7, %s5
  loop: start=0, step=1, limit=4
  $region2: #{residual_block_forward.5} parent=0 // loop_pre_header
    _
  $region3: #{residual_block_forward.5} parent=0 // loop_header
    %s10 = sphi 0, %s14
    %p11 = scmp.ge.s32.totalorder %s10, 4
    %s17 = sphi 0, %s29
    %s18 = sphi 0, %s25
    %s19 = sphi 0, %s17
    %s20 = sphi 0, %s18
    %s21 = sphi 0, %s19
    %s22 = sphi 0, %s20
    %s34 = sphi 0, %s36
    %s37 = sphi 0, %s34
    %s38 = sphi 0, %s37
    %s54 = sphi 0, %s38
    %s58 = sphi 0, %s58
    %s60 = sphi 0, %s58
    %s61 = sphi 0, %s60
    %s75 = sphi 0, %s61
    %s79 = sphi 0, %s79
    %s81 = sphi 0, %s79
    %s82 = sphi 0, %s81
    %s96 = sphi 0, %s82
    %s104 = sphi 0, %s106
    %s107 = sphi 0, %s104
    %s108 = sphi 0, %s107
    %s124 = sphi 0, %s108
    %s132 = sphi 0, %s134
    %s135 = sphi 0, %s132
    %s136 = sphi 0, %s135
    %s152 = sphi 0, %s136
  $region4: #{residual_block_forward.5} parent=0 // loop_header_branch
    %13 = sbr.rel (%p11) target = $region8
  $region5: #{residual_block_forward.5} parent=0 // loop_body
    %s15 = ssub.s32 %s10, 1
    %s16 = ssub.s32 %s10, 2
    %s23 = sadd.s32 1, %s18
    %p24 = scmp.ge.s32.totalorder %s23, 1
    %s25 = scalar_select %p24, 0, %s23
    %s26 = sadd.s32 1, %s17
    %s27 = scalar_select %p24, %s26, %s17
    %p28 = scmp.ge.s32.totalorder %s27, 2
    %s29 = scalar_select %p28, 0, %s27
    %s30 = ssub.s32 %s17, %s29
    %s31 = ssub.s32 %s18, %s25
    %s32 = sor.u32 %s30, %s31
    %p33 = scmp.eq.s32.totalorder %s32, 0
    %s35 = sadd.s32 %s34, 1
    %s36 = scalar_select %p33, %s34, %s35
    %p39 = pneg %p33
    %p40 = scmp.eq.s32.totalorder %s10, 1
    %p41 = por %p39, %p40
    %p42 = scmp.ne.s32.totalorder %s34, %s37
    %p43 = scmp.eq.s32.totalorder %s10, 0
    %p44 = por %p42, %p43
    %p45 = scmp.ne.s32.totalorder %s34, %s37
    %p46 = scmp.eq.s32.totalorder %s15, 1
    %p47 = por %p45, %p46
    %p48 = scmp.ne.s32.totalorder %s37, %s38
    %p49 = scmp.eq.s32.totalorder %s15, 0
    %p50 = por %p48, %p49
    %p51 = scmp.ne.s32.totalorder %s37, %s38
    %p52 = scmp.eq.s32.totalorder %s16, 1
    %p53 = por %p51, %p52
    %p55 = scmp.ne.s32.totalorder %s38, %s54
    %p56 = scmp.eq.s32.totalorder %s16, 0
    %p57 = por %p55, %p56
    %s59 = sadd.s32 %s58, 1
    %p62 = scmp.eq.s32.totalorder %s10, 1
    %p63 = scmp.ne.s32.totalorder %s58, %s60
    %p64 = scmp.eq.s32.totalorder %s10, 0
    %p65 = por %p63, %p64
    %p66 = scmp.ne.s32.totalorder %s58, %s60
    %p67 = scmp.eq.s32.totalorder %s15, 1
    %p68 = por %p66, %p67
    %p69 = scmp.ne.s32.totalorder %s60, %s61
    %p70 = scmp.eq.s32.totalorder %s15, 0
    %p71 = por %p69, %p70
    %p72 = scmp.ne.s32.totalorder %s60, %s61
    %p73 = scmp.eq.s32.totalorder %s16, 1
    %p74 = por %p72, %p73
    %p76 = scmp.ne.s32.totalorder %s61, %s75
    %p77 = scmp.eq.s32.totalorder %s16, 0
    %p78 = por %p76, %p77
    %s80 = sadd.s32 %s79, 1
    %p83 = scmp.eq.s32.totalorder %s10, 1
    %p84 = scmp.ne.s32.totalorder %s79, %s81
    %p85 = scmp.eq.s32.totalorder %s10, 0
    %p86 = por %p84, %p85
    %p87 = scmp.ne.s32.totalorder %s79, %s81
    %p88 = scmp.eq.s32.totalorder %s15, 1
    %p89 = por %p87, %p88
    %p90 = scmp.ne.s32.totalorder %s81, %s82
    %p91 = scmp.eq.s32.totalorder %s15, 0
    %p92 = por %p90, %p91
    %p93 = scmp.ne.s32.totalorder %s81, %s82
    %p94 = scmp.eq.s32.totalorder %s16, 1
    %p95 = por %p93, %p94
    %p97 = scmp.ne.s32.totalorder %s82, %s96
    %p98 = scmp.eq.s32.totalorder %s16, 0
    %p99 = por %p97, %p98
    %s100 = ssub.s32 %s17, %s29
    %s101 = ssub.s32 %s18, %s25
    %s102 = sor.u32 %s100, %s101
    %p103 = scmp.eq.s32.totalorder %s102, 0
    %s105 = sadd.s32 %s104, 1
    %s106 = scalar_select %p103, %s104, %s105
    %p109 = pneg %p103
    %p110 = scmp.eq.s32.totalorder %s10, 1
    %p111 = por %p109, %p110
    %p112 = scmp.ne.s32.totalorder %s104, %s107
    %p113 = scmp.eq.s32.totalorder %s10, 0
    %p114 = por %p112, %p113
    %p115 = scmp.ne.s32.totalorder %s104, %s107
    %p116 = scmp.eq.s32.totalorder %s15, 1
    %p117 = por %p115, %p116
    %p118 = scmp.ne.s32.totalorder %s107, %s108
    %p119 = scmp.eq.s32.totalorder %s15, 0
    %p120 = por %p118, %p119
    %p121 = scmp.ne.s32.totalorder %s107, %s108
    %p122 = scmp.eq.s32.totalorder %s16, 1
    %p123 = por %p121, %p122
    %p125 = scmp.ne.s32.totalorder %s108, %s124
    %p126 = scmp.eq.s32.totalorder %s16, 0
    %p127 = por %p125, %p126
    %s128 = ssub.s32 %s17, %s29
    %s129 = ssub.s32 %s18, %s25
    %s130 = sor.u32 %s128, %s129
    %p131 = scmp.eq.s32.totalorder %s130, 0
    %s133 = sadd.s32 %s132, 1
    %s134 = scalar_select %p131, %s132, %s133
    %p137 = pneg %p131
    %p138 = scmp.eq.s32.totalorder %s10, 1
    %p139 = por %p137, %p138
    %p140 = scmp.ne.s32.totalorder %s132, %s135
    %p141 = scmp.eq.s32.totalorder %s10, 0
    %p142 = por %p140, %p141
    %p143 = scmp.ne.s32.totalorder %s132, %s135
    %p144 = scmp.eq.s32.totalorder %s15, 1
    %p145 = por %p143, %p144
    %p146 = scmp.ne.s32.totalorder %s135, %s136
    %p147 = scmp.eq.s32.totalorder %s15, 0
    %p148 = por %p146, %p147
    %p149 = scmp.ne.s32.totalorder %s135, %s136
    %p150 = scmp.eq.s32.totalorder %s16, 1
    %p151 = por %p149, %p150
    %p153 = scmp.ne.s32.totalorder %s136, %s152
    %p154 = scmp.eq.s32.totalorder %s16, 0
    %p155 = por %p153, %p154
    %p156 = scmp.le.s32.totalorder 1, %s10
    %p157 = scmp.lt.s32.totalorder %s10, 3
    %p158 = pnand %p156, %p157
    %p159 = pneg %p158
    // Predicated region
    $region9: #{residual_block_forward.5} parent=5 // pred_check
      _
    $region10: #{residual_block_forward.5} parent=5 // pred_check_branch
      %161 = sbr.rel (%p158) target = $region12
    $region11: #{residual_block_forward.5} parent=5 // pred_region
      %s162 = ssub.s32 %s10, 1
      // Predicated region
      $region13: #{residual_block_forward.5} parent=11 // pred_check
        %p163 = pneg %p71
      $region14: #{residual_block_forward.5} parent=11 // pred_check_branch
        %165 = sbr.rel (%p163) target = $region16
      $region15: #{residual_block_forward.5} parent=11 // pred_region
        _
      $region16: #{residual_block_forward.5} parent=11 // pred_fallthru
        _
      // Predicated region
      $region17: #{residual_block_forward.5} parent=11 // pred_check
        %p166 = pneg %p92
      $region18: #{residual_block_forward.5} parent=11 // pred_check_branch
        %168 = sbr.rel (%p166) target = $region20
      $region19: #{residual_block_forward.5} parent=11 // pred_region
        _
      $region20: #{residual_block_forward.5} parent=11 // pred_fallthru
        _
    $region12: #{residual_block_forward.5} parent=5 // pred_fallthru
      _
    %p169 = scmp.lt.s32.totalorder %s10, 2
    // Predicated region
    $region21: #{residual_block_forward.5} parent=5 // pred_check
      %p170 = pneg %p169
    $region22: #{residual_block_forward.5} parent=5 // pred_check_branch
      %172 = sbr.rel (%p170) target = $region24
    $region23: #{residual_block_forward.5} parent=5 // pred_region
      // Predicated region
      $region25: #{residual_block_forward.5} parent=23 // pred_check
        %p173 = pneg %p44
      $region26: #{residual_block_forward.5} parent=23 // pred_check_branch
        %175 = sbr.rel (%p173) target = $region28
      $region27: #{residual_block_forward.5} parent=23 // pred_region
        %s176 = smul.u32 16, %s18
        %p177 = scmp.lt.s32.totalorder %s17, 1
        %s178 = scalar_select %p177, %s17, 1
        %p179 = scmp.lt.s32.totalorder %s176, 15
        %s180 = scalar_select %p179, %s176, 15
        %s181 = smul.addr %s180, 2
        %s182 = smul.addr %s178, 32
        %s183 = sadd.s32 %s181, %s182
        %s184 = smul.addr %s183, 8
        %s185 = scalar_lea.vmem %s0, %s184
        %s186 = smul.u32 16, %s18
      $region28: #{residual_block_forward.5} parent=23 // pred_fallthru
        _
      // Predicated region
      $region29: #{residual_block_forward.5} parent=23 // pred_check
        %p187 = pneg %p114
      $region30: #{residual_block_forward.5} parent=23 // pred_check_branch
        %189 = sbr.rel (%p187) target = $region32
      $region31: #{residual_block_forward.5} parent=23 // pred_region
        %s190 = smul.u32 16, %s18
        %p191 = scmp.lt.s32.totalorder %s17, 1
        %s192 = scalar_select %p191, %s17, 1
        %p193 = scmp.lt.s32.totalorder %s190, 15
        %s194 = scalar_select %p193, %s190, 15
        %s195 = smul.addr %s194, 2
        %s196 = smul.addr %s192, 32
        %s197 = sadd.s32 %s195, %s196
        %s198 = smul.addr %s197, 8
        %s199 = scalar_lea.vmem %s3, %s198
        %s200 = smul.u32 16, %s18
      $region32: #{residual_block_forward.5} parent=23 // pred_fallthru
        _
    $region24: #{residual_block_forward.5} parent=5 // pred_fallthru
      _
    %p201 = scmp.le.s32.totalorder 1, %s10
    %p202 = scmp.lt.s32.totalorder %s10, 3
    %p203 = pnand %p201, %p202
    %p204 = pneg %p203
    // Predicated region
    $region33: #{residual_block_forward.5} parent=5 // pred_check
      _
    $region34: #{residual_block_forward.5} parent=5 // pred_check_branch
      %206 = sbr.rel (%p203) target = $region36
    $region35: #{residual_block_forward.5} parent=5 // pred_region
      %s207 = ssub.s32 %s10, 1
      %s208 = smul.u32 16, %s20
      %p209 = scmp.lt.s32.totalorder %s19, 1
      %s210 = scalar_select %p209, %s19, 1
      %p211 = scmp.lt.s32.totalorder %s208, 15
      %s212 = scalar_select %p211, %s208, 15
      %s213 = smul.addr %s212, 2
      %s214 = smul.addr %s210, 32
      %s215 = sadd.s32 %s213, %s214
      %s216 = smul.addr %s215, 8
      %s217 = scalar_lea.vmem %s0, %s216
      %p218 = pneg %p50
      %p219 = pneg %p47
      %p220 = pneg %p71
      %p221 = pneg %p68
      %p222 = pneg %p92
      %p223 = pneg %p89
      %s224 = smul.u32 16, %s20
      %p225 = scmp.lt.s32.totalorder %s19, 1
      %s226 = scalar_select %p225, %s19, 1
      %p227 = scmp.lt.s32.totalorder %s224, 15
      %s228 = scalar_select %p227, %s224, 15
      %s229 = smul.addr %s228, 2
      %s230 = smul.addr %s226, 32
      %s231 = sadd.s32 %s229, %s230
      %s232 = smul.addr %s231, 8
      %s233 = scalar_lea.vmem %s3, %s232
      %p234 = pneg %p120
      %p235 = pneg %p117
      %p236 = pneg %p148
      %p237 = pneg %p145
      %s238 = smul.u32 16, %s20
      %p239 = scmp.lt.s32.totalorder %s19, 1
      %s240 = scalar_select %p239, %s19, 1
      %p241 = scmp.lt.s32.totalorder %s238, 15
      %s242 = scalar_select %p241, %s238, 15
      %s243 = smul.addr %s242, 2
      %s244 = smul.addr %s240, 32
      %s245 = sadd.s32 %s243, %s244
      %s246 = smul.addr %s245, 8
      %s247 = scalar_lea.vmem %s4, %s246
      %s248 = smul.u32 16, %s20
      %p249 = scmp.lt.s32.totalorder %s19, 1
      %s250 = scalar_select %p249, %s19, 1
      %p251 = scmp.lt.s32.totalorder %s248, 15
      %s252 = scalar_select %p251, %s248, 15
      %s253 = smul.addr %s252, 2
      %s254 = smul.addr %s250, 32
      %s255 = sadd.s32 %s253, %s254
      %s256 = smul.addr %s255, 8
      %s257 = scalar_lea.vmem %s0, %s256
      %s258 = smul.u32 16, %s20
      %s259 = smul.u32 16, %s20
      %p260 = scmp.lt.s32.totalorder %s19, 1
      %s261 = scalar_select %p260, %s19, 1
      %p262 = scmp.lt.s32.totalorder %s259, 15
      %s263 = scalar_select %p262, %s259, 15
      %s264 = smul.addr %s263, 2
      %s265 = smul.addr %s261, 32
      %s266 = sadd.s32 %s264, %s265
      %s267 = smul.addr %s266, 8
      %s268 = scalar_lea.vmem %s3, %s267
      %s269 = smul.u32 16, %s20
      %s270 = smul.u32 16, %s20
      %p271 = scmp.lt.s32.totalorder %s19, 1
      %s272 = scalar_select %p271, %s19, 1
      %p273 = scmp.lt.s32.totalorder %s270, 15
      %s274 = scalar_select %p273, %s270, 15
      %s275 = smul.addr %s274, 2
      %s276 = smul.addr %s272, 32
      %s277 = sadd.s32 %s275, %s276
      %s278 = smul.addr %s277, 8
      %s279 = scalar_lea.vmem %s4, %s278
      %s280 = smul.u32 16, %s20
      %v281 = vld [vmem:[%s257] sm:$0xff]
      %v282 = vld [vmem:[%s257 + $0x8] sm:$0xff]
      %v283 = vld [vmem:[%s257 + $0x10] sm:$0xff]
      %v284 = vld [vmem:[%s257 + $0x18] sm:$0xff]
      %v285 = vld [vmem:[%s257 + $0x20] sm:$0xff]
      %v286 = vld [vmem:[%s257 + $0x28] sm:$0xff]
      %v287 = vld [vmem:[%s257 + $0x30] sm:$0xff]
      %v288 = vld [vmem:[%s257 + $0x38] sm:$0xff]
      %v289 = vld [vmem:[%s257 + $0x40] sm:$0xff]
      %v290 = vld [vmem:[%s257 + $0x48] sm:$0xff]
      %v291 = vld [vmem:[%s257 + $0x50] sm:$0xff]
      %v292 = vld [vmem:[%s257 + $0x58] sm:$0xff]
      %v293 = vld [vmem:[%s257 + $0x60] sm:$0xff]
      %v294 = vld [vmem:[%s257 + $0x68] sm:$0xff]
      %v295 = vld [vmem:[%s257 + $0x70] sm:$0xff]
      %v296 = vld [vmem:[%s257 + $0x78] sm:$0xff]
      %v297 = vld [vmem:[%s257 + $0x80] sm:$0xff]
      %v298 = vld [vmem:[%s257 + $0x88] sm:$0xff]
      %v299 = vld [vmem:[%s257 + $0x90] sm:$0xff]
      %v300 = vld [vmem:[%s257 + $0x98] sm:$0xff]
      %v301 = vld [vmem:[%s257 + $0xa0] sm:$0xff]
      %v302 = vld [vmem:[%s257 + $0xa8] sm:$0xff]
      %v303 = vld [vmem:[%s257 + $0xb0] sm:$0xff]
      %v304 = vld [vmem:[%s257 + $0xb8] sm:$0xff]
      %v305 = vld [vmem:[%s257 + $0xc0] sm:$0xff]
      %v306 = vld [vmem:[%s257 + $0xc8] sm:$0xff]
      %v307 = vld [vmem:[%s257 + $0xd0] sm:$0xff]
      %v308 = vld [vmem:[%s257 + $0xd8] sm:$0xff]
      %v309 = vld [vmem:[%s257 + $0xe0] sm:$0xff]
      %v310 = vld [vmem:[%s257 + $0xe8] sm:$0xff]
      %v311 = vld [vmem:[%s257 + $0xf0] sm:$0xff]
      %v312 = vld [vmem:[%s257 + $0xf8] sm:$0xff]
      %v313 = vld [vmem:[%s1] sm:$0x1]
      %v314 = vld [vmem:[%s2] sm:$0x1]
      %v316 = vlaneseq
      %v317 = vshrl.u32 %v316, 7
      %v318 = vsub.s32 0, %v317
      %v319 = vrot.slane %v313, %v318
      %v321 = vmul.f32 %v281, %v319
      %v322 = vmul.f32 %v282, %v319
      %v323 = vmul.f32 %v283, %v319
      %v324 = vmul.f32 %v284, %v319
      %v325 = vmul.f32 %v285, %v319
      %v326 = vmul.f32 %v286, %v319
      %v327 = vmul.f32 %v287, %v319
      %v328 = vmul.f32 %v288, %v319
      %v329 = vmul.f32 %v289, %v319
      %v330 = vmul.f32 %v290, %v319
      %v331 = vmul.f32 %v291, %v319
      %v332 = vmul.f32 %v292, %v319
      %v333 = vmul.f32 %v293, %v319
      %v334 = vmul.f32 %v294, %v319
      %v335 = vmul.f32 %v295, %v319
      %v336 = vmul.f32 %v296, %v319
      %v337 = vmul.f32 %v297, %v319
      %v338 = vmul.f32 %v298, %v319
      %v339 = vmul.f32 %v299, %v319
      %v340 = vmul.f32 %v300, %v319
      %v341 = vmul.f32 %v301, %v319
      %v342 = vmul.f32 %v302, %v319
      %v343 = vmul.f32 %v303, %v319
      %v344 = vmul.f32 %v304, %v319
      %v345 = vmul.f32 %v305, %v319
      %v346 = vmul.f32 %v306, %v319
      %v347 = vmul.f32 %v307, %v319
      %v348 = vmul.f32 %v308, %v319
      %v349 = vmul.f32 %v309, %v319
      %v350 = vmul.f32 %v310, %v319
      %v351 = vmul.f32 %v311, %v319
      %v352 = vmul.f32 %v312, %v319
      %v354 = vlaneseq
      %v355 = vshrl.u32 %v354, 7
      %v356 = vsub.s32 0, %v355
      %v357 = vrot.slane %v314, %v356
      %v359 = vadd.f32 %v321, %v357
      %v360 = vadd.f32 %v322, %v357
      %v361 = vadd.f32 %v323, %v357
      %v362 = vadd.f32 %v324, %v357
      %v363 = vadd.f32 %v325, %v357
      %v364 = vadd.f32 %v326, %v357
      %v365 = vadd.f32 %v327, %v357
      %v366 = vadd.f32 %v328, %v357
      %v367 = vadd.f32 %v329, %v357
      %v368 = vadd.f32 %v330, %v357
      %v369 = vadd.f32 %v331, %v357
      %v370 = vadd.f32 %v332, %v357
      %v371 = vadd.f32 %v333, %v357
      %v372 = vadd.f32 %v334, %v357
      %v373 = vadd.f32 %v335, %v357
      %v374 = vadd.f32 %v336, %v357
      %v375 = vadd.f32 %v337, %v357
      %v376 = vadd.f32 %v338, %v357
      %v377 = vadd.f32 %v339, %v357
      %v378 = vadd.f32 %v340, %v357
      %v379 = vadd.f32 %v341, %v357
      %v380 = vadd.f32 %v342, %v357
      %v381 = vadd.f32 %v343, %v357
      %v382 = vadd.f32 %v344, %v357
      %v383 = vadd.f32 %v345, %v357
      %v384 = vadd.f32 %v346, %v357
      %v385 = vadd.f32 %v347, %v357
      %v386 = vadd.f32 %v348, %v357
      %v387 = vadd.f32 %v349, %v357
      %v388 = vadd.f32 %v350, %v357
      %v389 = vadd.f32 %v351, %v357
      %v390 = vadd.f32 %v352, %v357
      %v391 = vld [vmem:[%s268] sm:$0xff]
      %v392 = vld [vmem:[%s268 + $0x8] sm:$0xff]
      %v393 = vld [vmem:[%s268 + $0x10] sm:$0xff]
      %v394 = vld [vmem:[%s268 + $0x18] sm:$0xff]
      %v395 = vld [vmem:[%s268 + $0x20] sm:$0xff]
      %v396 = vld [vmem:[%s268 + $0x28] sm:$0xff]
      %v397 = vld [vmem:[%s268 + $0x30] sm:$0xff]
      %v398 = vld [vmem:[%s268 + $0x38] sm:$0xff]
      %v399 = vld [vmem:[%s268 + $0x40] sm:$0xff]
      %v400 = vld [vmem:[%s268 + $0x48] sm:$0xff]
      %v401 = vld [vmem:[%s268 + $0x50] sm:$0xff]
      %v402 = vld [vmem:[%s268 + $0x58] sm:$0xff]
      %v403 = vld [vmem:[%s268 + $0x60] sm:$0xff]
      %v404 = vld [vmem:[%s268 + $0x68] sm:$0xff]
      %v405 = vld [vmem:[%s268 + $0x70] sm:$0xff]
      %v406 = vld [vmem:[%s268 + $0x78] sm:$0xff]
      %v407 = vld [vmem:[%s268 + $0x80] sm:$0xff]
      %v408 = vld [vmem:[%s268 + $0x88] sm:$0xff]
      %v409 = vld [vmem:[%s268 + $0x90] sm:$0xff]
      %v410 = vld [vmem:[%s268 + $0x98] sm:$0xff]
      %v411 = vld [vmem:[%s268 + $0xa0] sm:$0xff]
      %v412 = vld [vmem:[%s268 + $0xa8] sm:$0xff]
      %v413 = vld [vmem:[%s268 + $0xb0] sm:$0xff]
      %v414 = vld [vmem:[%s268 + $0xb8] sm:$0xff]
      %v415 = vld [vmem:[%s268 + $0xc0] sm:$0xff]
      %v416 = vld [vmem:[%s268 + $0xc8] sm:$0xff]
      %v417 = vld [vmem:[%s268 + $0xd0] sm:$0xff]
      %v418 = vld [vmem:[%s268 + $0xd8] sm:$0xff]
      %v419 = vld [vmem:[%s268 + $0xe0] sm:$0xff]
      %v420 = vld [vmem:[%s268 + $0xe8] sm:$0xff]
      %v421 = vld [vmem:[%s268 + $0xf0] sm:$0xff]
      %v422 = vld [vmem:[%s268 + $0xf8] sm:$0xff]
      %v423 = vadd.f32 %v359, %v391
      %v424 = vadd.f32 %v360, %v392
      %v425 = vadd.f32 %v361, %v393
      %v426 = vadd.f32 %v362, %v394
      %v427 = vadd.f32 %v363, %v395
      %v428 = vadd.f32 %v364, %v396
      %v429 = vadd.f32 %v365, %v397
      %v430 = vadd.f32 %v366, %v398
      %v431 = vadd.f32 %v367, %v399
      %v432 = vadd.f32 %v368, %v400
      %v433 = vadd.f32 %v369, %v401
      %v434 = vadd.f32 %v370, %v402
      %v435 = vadd.f32 %v371, %v403
      %v436 = vadd.f32 %v372, %v404
      %v437 = vadd.f32 %v373, %v405
      %v438 = vadd.f32 %v374, %v406
      %v439 = vadd.f32 %v375, %v407
      %v440 = vadd.f32 %v376, %v408
      %v441 = vadd.f32 %v377, %v409
      %v442 = vadd.f32 %v378, %v410
      %v443 = vadd.f32 %v379, %v411
      %v444 = vadd.f32 %v380, %v412
      %v445 = vadd.f32 %v381, %v413
      %v446 = vadd.f32 %v382, %v414
      %v447 = vadd.f32 %v383, %v415
      %v448 = vadd.f32 %v384, %v416
      %v449 = vadd.f32 %v385, %v417
      %v450 = vadd.f32 %v386, %v418
      %v451 = vadd.f32 %v387, %v419
      %v452 = vadd.f32 %v388, %v420
      %v453 = vadd.f32 %v389, %v421
      %v454 = vadd.f32 %v390, %v422
      %v455 = vmax.f32 %v423, 0.0
      %v456 = vmax.f32 %v424, 0.0
      %v457 = vmax.f32 %v425, 0.0
      %v458 = vmax.f32 %v426, 0.0
      %v459 = vmax.f32 %v427, 0.0
      %v460 = vmax.f32 %v428, 0.0
      %v461 = vmax.f32 %v429, 0.0
      %v462 = vmax.f32 %v430, 0.0
      %v463 = vmax.f32 %v431, 0.0
      %v464 = vmax.f32 %v432, 0.0
      %v465 = vmax.f32 %v433, 0.0
      %v466 = vmax.f32 %v434, 0.0
      %v467 = vmax.f32 %v435, 0.0
      %v468 = vmax.f32 %v436, 0.0
      %v469 = vmax.f32 %v437, 0.0
      %v470 = vmax.f32 %v438, 0.0
      %v471 = vmax.f32 %v439, 0.0
      %v472 = vmax.f32 %v440, 0.0
      %v473 = vmax.f32 %v441, 0.0
      %v474 = vmax.f32 %v442, 0.0
      %v475 = vmax.f32 %v443, 0.0
      %v476 = vmax.f32 %v444, 0.0
      %v477 = vmax.f32 %v445, 0.0
      %v478 = vmax.f32 %v446, 0.0
      %v479 = vmax.f32 %v447, 0.0
      %v480 = vmax.f32 %v448, 0.0
      %v481 = vmax.f32 %v449, 0.0
      %v482 = vmax.f32 %v450, 0.0
      %v483 = vmax.f32 %v451, 0.0
      %v484 = vmax.f32 %v452, 0.0
      %v485 = vmax.f32 %v453, 0.0
      %v486 = vmax.f32 %v454, 0.0
      %487 = vst [vmem:[%s279] sm:$0xff] %v455
      %488 = vst [vmem:[%s279 + $0x8] sm:$0xff] %v456
      %489 = vst [vmem:[%s279 + $0x10] sm:$0xff] %v457
      %490 = vst [vmem:[%s279 + $0x18] sm:$0xff] %v458
      %491 = vst [vmem:[%s279 + $0x20] sm:$0xff] %v459
      %492 = vst [vmem:[%s279 + $0x28] sm:$0xff] %v460
      %493 = vst [vmem:[%s279 + $0x30] sm:$0xff] %v461
      %494 = vst [vmem:[%s279 + $0x38] sm:$0xff] %v462
      %495 = vst [vmem:[%s279 + $0x40] sm:$0xff] %v463
      %496 = vst [vmem:[%s279 + $0x48] sm:$0xff] %v464
      %497 = vst [vmem:[%s279 + $0x50] sm:$0xff] %v465
      %498 = vst [vmem:[%s279 + $0x58] sm:$0xff] %v466
      %499 = vst [vmem:[%s279 + $0x60] sm:$0xff] %v467
      %500 = vst [vmem:[%s279 + $0x68] sm:$0xff] %v468
      %501 = vst [vmem:[%s279 + $0x70] sm:$0xff] %v469
      %502 = vst [vmem:[%s279 + $0x78] sm:$0xff] %v470
      %503 = vst [vmem:[%s279 + $0x80] sm:$0xff] %v471
      %504 = vst [vmem:[%s279 + $0x88] sm:$0xff] %v472
      %505 = vst [vmem:[%s279 + $0x90] sm:$0xff] %v473
      %506 = vst [vmem:[%s279 + $0x98] sm:$0xff] %v474
      %507 = vst [vmem:[%s279 + $0xa0] sm:$0xff] %v475
      %508 = vst [vmem:[%s279 + $0xa8] sm:$0xff] %v476
      %509 = vst [vmem:[%s279 + $0xb0] sm:$0xff] %v477
      %510 = vst [vmem:[%s279 + $0xb8] sm:$0xff] %v478
      %511 = vst [vmem:[%s279 + $0xc0] sm:$0xff] %v479
      %512 = vst [vmem:[%s279 + $0xc8] sm:$0xff] %v480
      %513 = vst [vmem:[%s279 + $0xd0] sm:$0xff] %v481
      %514 = vst [vmem:[%s279 + $0xd8] sm:$0xff] %v482
      %515 = vst [vmem:[%s279 + $0xe0] sm:$0xff] %v483
      %516 = vst [vmem:[%s279 + $0xe8] sm:$0xff] %v484
      %517 = vst [vmem:[%s279 + $0xf0] sm:$0xff] %v485
      %518 = vst [vmem:[%s279 + $0xf8] sm:$0xff] %v486
      %s519 = smul.u32 16, %s20
      %p520 = scmp.lt.s32.totalorder %s19, 1
      %s521 = scalar_select %p520, %s19, 1
      %p522 = scmp.lt.s32.totalorder %s519, 15
      %s523 = scalar_select %p522, %s519, 15
      %s524 = smul.addr %s523, 2
      %s525 = smul.addr %s521, 32
      %s526 = sadd.s32 %s524, %s525
      %s527 = smul.addr %s526, 8
      %s528 = scalar_lea.vmem %s4, %s527
      // Predicated region
      $region37: #{residual_block_forward.5} parent=35 // pred_check
        %p529 = pneg %p145
      $region38: #{residual_block_forward.5} parent=35 // pred_check_branch
        %531 = sbr.rel (%p529) target = $region40
      $region39: #{residual_block_forward.5} parent=35 // pred_region
        %s532 = smul.u32 16, %s20
      $region40: #{residual_block_forward.5} parent=35 // pred_fallthru
        _
    $region36: #{residual_block_forward.5} parent=5 // pred_fallthru
      _
    %p533 = scmp.le.s32.totalorder 2, %s10
    // Predicated region
    $region41: #{residual_block_forward.5} parent=5 // pred_check
      %p534 = pneg %p533
    $region42: #{residual_block_forward.5} parent=5 // pred_check_branch
      %536 = sbr.rel (%p534) target = $region44
    $region43: #{residual_block_forward.5} parent=5 // pred_region
      %s537 = ssub.s32 %s10, 2
      // Predicated region
      $region45: #{residual_block_forward.5} parent=43 // pred_check
        %p538 = pneg %p151
      $region46: #{residual_block_forward.5} parent=43 // pred_check_branch
        %540 = sbr.rel (%p538) target = $region48
      $region47: #{residual_block_forward.5} parent=43 // pred_region
        %s541 = smul.u32 16, %s22
        %p542 = scmp.lt.s32.totalorder %s21, 1
        %s543 = scalar_select %p542, %s21, 1
        %p544 = scmp.lt.s32.totalorder %s541, 15
        %s545 = scalar_select %p544, %s541, 15
        %s546 = smul.addr %s545, 2
        %s547 = smul.addr %s543, 32
        %s548 = sadd.s32 %s546, %s547
        %s549 = smul.addr %s548, 8
        %s550 = scalar_lea.vmem %s4, %s549
      $region48: #{residual_block_forward.5} parent=43 // pred_fallthru
        _
    $region44: #{residual_block_forward.5} parent=5 // pred_fallthru
      _
  $region6: #{residual_block_forward.5} parent=0 // loop_footer
    %s14 = sadd.s32 1, %s10
  $region7: #{residual_block_forward.5} parent=0 // loop_footer_branch
    %9 = sbr.rel target = $region3
  $region8: #{residual_block_forward.5} parent=0 // loop_exit
    _

// kernel: residual_block_forward.3
$region0: #{residual_block_forward.3}
  #allocation0 [shape = 'u32[]', space=smem, size = 0x4, offset = 0x4, fixed_abs, tag = 'smem constant byte address 0x4 - core index']
  #allocation1 [shape = 'u32[144,128]{1,0:T(1,128)}', space=vmem, size = 0x12000, scoped, tag = 'internal scratch']
  #allocation2 [shape = 'f32[18,18,128]{2,1,0:T(8,128)}', space=vmem, size = 0x36000, scoped, tag = 'scratch operand']
  %s0 = inlined_call_operand.vmem [shape: f32[2,16,16,128], index: 0, kind: input, shape index: {}]
  %s1 = inlined_call_operand.vmem [shape: f32[1152,128], index: 1, kind: input, shape index: {}]
  %s2 = inlined_call_operand.vmem [shape: f32[2,16,16,128], index: 2, kind: output, shape index: {0}]
  %s3 = inlined_call_operand.vmem [shape: f32[2,2,128], index: 3, kind: output, shape index: {1}]
  %4 = xla_tuple %s2, %s3
  %s5 = sld [smem:[#allocation0]]
  $region49: #{residual_block_forward.3} parent=0
    _
  %s7 = ssub.s32 1, %s5
  %s8 = scalar_select 0, %s7, %s5
  loop: start=0, step=1, limit=4
  $region2: #{residual_block_forward.3} parent=0 // loop_pre_header
    _
  $region3: #{residual_block_forward.3} parent=0 // loop_header
    %s10 = sphi 0, %s14
    %p11 = scmp.ge.s32.totalorder %s10, 4
    %s20 = sphi 0, %s22
    %s23 = sphi 0, %s20
    %s24 = sphi 0, %s23
    %s40 = sphi 0, %s24
    %s44 = sphi 0, %s44
    %s46 = sphi 0, %s44
    %s47 = sphi 0, %s46
    %s61 = sphi 0, %s47
    %s67 = sphi 0, %s69
    %s70 = sphi 0, %s67
    %s71 = sphi 0, %s70
    %s87 = sphi 0, %s71
    %s93 = sphi 0, %s95
    %s96 = sphi 0, %s93
    %s97 = sphi 0, %s96
    %s113 = sphi 0, %s97
  $region4: #{residual_block_forward.3} parent=0 // loop_header_branch
    %13 = sbr.rel (%p11) target = $region8
  $region5: #{residual_block_forward.3} parent=0 // loop_body
    %s15 = ssub.s32 %s10, 1
    %s16 = ssub.s32 %s10, 2
    %s17 = sadd.s32 %s10, 1
    %s18 = ssub.s32 %s10, %s17
    %p19 = scmp.eq.s32.totalorder %s18, 0
    %s21 = sadd.s32 %s20, 1
    %s22 = scalar_select %p19, %s20, %s21
    %p25 = pneg %p19
    %p26 = scmp.eq.s32.totalorder %s10, 1
    %p27 = por %p25, %p26
    %p28 = scmp.ne.s32.totalorder %s20, %s23
    %p29 = scmp.eq.s32.totalorder %s10, 0
    %p30 = por %p28, %p29
    %p31 = scmp.ne.s32.totalorder %s20, %s23
    %p32 = scmp.eq.s32.totalorder %s15, 1
    %p33 = por %p31, %p32
    %p34 = scmp.ne.s32.totalorder %s23, %s24
    %p35 = scmp.eq.s32.totalorder %s15, 0
    %p36 = por %p34, %p35
    %p37 = scmp.ne.s32.totalorder %s23, %s24
    %p38 = scmp.eq.s32.totalorder %s16, 1
    %p39 = por %p37, %p38
    %p41 = scmp.ne.s32.totalorder %s24, %s40
    %p42 = scmp.eq.s32.totalorder %s16, 0
    %p43 = por %p41, %p42
    %s45 = sadd.s32 %s44, 1
    %p48 = scmp.eq.s32.totalorder %s10, 1
    %p49 = scmp.ne.s32.totalorder %s44, %s46
    %p50 = scmp.eq.s32.totalorder %s10, 0
    %p51 = por %p49, %p50
    %p52 = scmp.ne.s32.totalorder %s44, %s46
    %p53 = scmp.eq.s32.totalorder %s15, 1
    %p54 = por %p52, %p53
    %p55 = scmp.ne.s32.totalorder %s46, %s47
    %p56 = scmp.eq.s32.totalorder %s15, 0
    %p57 = por %p55, %p56
    %p58 = scmp.ne.s32.totalorder %s46, %s47
    %p59 = scmp.eq.s32.totalorder %s16, 1
    %p60 = por %p58, %p59
    %p62 = scmp.ne.s32.totalorder %s47, %s61
    %p63 = scmp.eq.s32.totalorder %s16, 0
    %p64 = por %p62, %p63
    %s65 = ssub.s32 %s10, %s17
    %p66 = scmp.eq.s32.totalorder %s65, 0
    %s68 = sadd.s32 %s67, 1
    %s69 = scalar_select %p66, %s67, %s68
    %p72 = pneg %p66
    %p73 = scmp.eq.s32.totalorder %s10, 1
    %p74 = por %p72, %p73
    %p75 = scmp.ne.s32.totalorder %s67, %s70
    %p76 = scmp.eq.s32.totalorder %s10, 0
    %p77 = por %p75, %p76
    %p78 = scmp.ne.s32.totalorder %s67, %s70
    %p79 = scmp.eq.s32.totalorder %s15, 1
    %p80 = por %p78, %p79
    %p81 = scmp.ne.s32.totalorder %s70, %s71
    %p82 = scmp.eq.s32.totalorder %s15, 0
    %p83 = por %p81, %p82
    %p84 = scmp.ne.s32.totalorder %s70, %s71
    %p85 = scmp.eq.s32.totalorder %s16, 1
    %p86 = por %p84, %p85
    %p88 = scmp.ne.s32.totalorder %s71, %s87
    %p89 = scmp.eq.s32.totalorder %s16, 0
    %p90 = por %p88, %p89
    %s91 = ssub.s32 %s10, %s17
    %p92 = scmp.eq.s32.totalorder %s91, 0
    %s94 = sadd.s32 %s93, 1
    %s95 = scalar_select %p92, %s93, %s94
    %p98 = pneg %p92
    %p99 = scmp.eq.s32.totalorder %s10, 1
    %p100 = por %p98, %p99
    %p101 = scmp.ne.s32.totalorder %s93, %s96
    %p102 = scmp.eq.s32.totalorder %s10, 0
    %p103 = por %p101, %p102
    %p104 = scmp.ne.s32.totalorder %s93, %s96
    %p105 = scmp.eq.s32.totalorder %s15, 1
    %p106 = por %p104, %p105
    %p107 = scmp.ne.s32.totalorder %s96, %s97
    %p108 = scmp.eq.s32.totalorder %s15, 0
    %p109 = por %p107, %p108
    %p110 = scmp.ne.s32.totalorder %s96, %s97
    %p111 = scmp.eq.s32.totalorder %s16, 1
    %p112 = por %p110, %p111
    %p114 = scmp.ne.s32.totalorder %s97, %s113
    %p115 = scmp.eq.s32.totalorder %s16, 0
    %p116 = por %p114, %p115
    %p117 = scmp.le.s32.totalorder 1, %s10
    %p118 = scmp.lt.s32.totalorder %s10, 3
    %p119 = pnand %p117, %p118
    %p120 = pneg %p119
    // Predicated region
    $region9: #{residual_block_forward.3} parent=5 // pred_check
      _
    $region10: #{residual_block_forward.3} parent=5 // pred_check_branch
      %122 = sbr.rel (%p119) target = $region12
    $region11: #{residual_block_forward.3} parent=5 // pred_region
      %s123 = ssub.s32 %s10, 1
      // Predicated region
      $region13: #{residual_block_forward.3} parent=11 // pred_check
        %p124 = pneg %p57
      $region14: #{residual_block_forward.3} parent=11 // pred_check_branch
        %126 = sbr.rel (%p124) target = $region16
      $region15: #{residual_block_forward.3} parent=11 // pred_region
        _
      $region16: #{residual_block_forward.3} parent=11 // pred_fallthru
        _
    $region12: #{residual_block_forward.3} parent=5 // pred_fallthru
      _
    %p127 = scmp.lt.s32.totalorder %s10, 2
    // Predicated region
    $region17: #{residual_block_forward.3} parent=5 // pred_check
      %p128 = pneg %p127
    $region18: #{residual_block_forward.3} parent=5 // pred_check_branch
      %130 = sbr.rel (%p128) target = $region20
    $region19: #{residual_block_forward.3} parent=5 // pred_region
      // Predicated region
      $region21: #{residual_block_forward.3} parent=19 // pred_check
        %p131 = pneg %p30
      $region22: #{residual_block_forward.3} parent=19 // pred_check_branch
        %133 = sbr.rel (%p131) target = $region24
      $region23: #{residual_block_forward.3} parent=19 // pred_region
        %p134 = scmp.lt.s32.totalorder %s10, 1
        %s135 = scalar_select %p134, %s10, 1
        %s136 = smul.addr %s135, 32
        %s137 = smul.addr %s136, 8
        %s138 = scalar_lea.vmem %s0, %s137
      $region24: #{residual_block_forward.3} parent=19 // pred_fallthru
        _
    $region20: #{residual_block_forward.3} parent=5 // pred_fallthru
      _
    %p139 = scmp.le.s32.totalorder 1, %s10
    %p140 = scmp.lt.s32.totalorder %s10, 3
    %p141 = pnand %p139, %p140
    %p142 = pneg %p141
    // Predicated region
    $region25: #{residual_block_forward.3} parent=5 // pred_check
      _
    $region26: #{residual_block_forward.3} parent=5 // pred_check_branch
      %144 = sbr.rel (%p141) target = $region28
    $region27: #{residual_block_forward.3} parent=5 // pred_region
      %s145 = ssub.s32 %s10, 1
      %p146 = scmp.lt.s32.totalorder %s15, 1
      %s147 = scalar_select %p146, %s15, 1
      %s148 = smul.addr %s147, 32
      %s149 = smul.addr %s148, 8
      %s150 = scalar_lea.vmem %s0, %s149
      %p151 = pneg %p36
      %p152 = pneg %p33
      %p153 = pneg %p57
      %p154 = pneg %p54
      %p155 = pneg %p83
      %p156 = pneg %p80
      %p157 = scmp.lt.s32.totalorder %s15, 1
      %s158 = scalar_select %p157, %s15, 1
      %s159 = smul.addr %s158, 32
      %s160 = smul.addr %s159, 8
      %s161 = scalar_lea.vmem %s2, %s160
      %p162 = pneg %p109
      %p163 = pneg %p106
      %p164 = scmp.lt.s32.totalorder %s15, 1
      %s165 = scalar_select %p164, %s15, 1
      %s166 = smul.addr %s165, 2
      %s167 = scalar_lea.vmem %s3, %s166
      %p168 = scmp.lt.s32.totalorder %s15, 1
      %s169 = scalar_select %p168, %s15, 1
      %s170 = smul.addr %s169, 32
      %s171 = smul.addr %s170, 8
      %s172 = scalar_lea.vmem %s0, %s171
      %p173 = scmp.lt.s32.totalorder %s15, 1
      %s174 = scalar_select %p173, %s15, 1
      %s175 = smul.addr %s174, 32
      %s176 = smul.addr %s175, 8
      %s177 = scalar_lea.vmem %s2, %s176
      %p178 = scmp.lt.s32.totalorder %s15, 1
      %s179 = scalar_select %p178, %s15, 1
      %s180 = smul.addr %s179, 2
      %s181 = scalar_lea.vmem %s3, %s180
      %182 = vst [vmem:[#allocation2] sm:$0xff] 0.0
      %183 = vst [vmem:[#allocation2 + $0x8] sm:$0xff] 0.0
      %184 = vst [vmem:[#allocation2 + $0x10] sm:$0x3] 0.0
      %s185 = scalar_lea.vmem [#allocation2], 408
      %186 = vst [vmem:[%s185] sm:$0xff] 0.0
      %187 = vst [vmem:[%s185 + $0x8] sm:$0xff] 0.0
      %188 = vst [vmem:[%s185 + $0x10] sm:$0x3] 0.0
      %189 = vst [vmem:[#allocation2] sm:$0x1] 0.0
      %190 = vst [vmem:[#allocation2 + $0x18] sm:$0x1] 0.0
      %191 = vst [vmem:[#allocation2 + $0x30] sm:$0x1] 0.0
      %192 = vst [vmem:[#allocation2 + $0x48] sm:$0x1] 0.0
      %193 = vst [vmem:[#allocation2 + $0x60] sm:$0x1] 0.0
      %194 = vst [vmem:[#allocation2 + $0x78] sm:$0x1] 0.0
      %195 = vst [vmem:[#allocation2 + $0x90] sm:$0x1] 0.0
      %196 = vst [vmem:[#allocation2 + $0xa8] sm:$0x1] 0.0
      %197 = vst [vmem:[#allocation2 + $0xc0] sm:$0x1] 0.0
      %198 = vst [vmem:[#allocation2 + $0xd8] sm:$0x1] 0.0
      %199 = vst [vmem:[#allocation2 + $0xf0] sm:$0x1] 0.0
      %200 = vst [vmem:[#allocation2 + $0x108] sm:$0x1] 0.0
      %201 = vst [vmem:[#allocation2 + $0x120] sm:$0x1] 0.0
      %202 = vst [vmem:[#allocation2 + $0x138] sm:$0x1] 0.0
      %203 = vst [vmem:[#allocation2 + $0x150] sm:$0x1] 0.0
      %204 = vst [vmem:[#allocation2 + $0x168] sm:$0x1] 0.0
      %205 = vst [vmem:[#allocation2 + $0x180] sm:$0x1] 0.0
      %206 = vst [vmem:[#allocation2 + $0x198] sm:$0x1] 0.0
      %207 = vst [vmem:[#allocation2 + $0x11] sm:$0x1] 0.0
      %208 = vst [vmem:[#allocation2 + $0x29] sm:$0x1] 0.0
      %209 = vst [vmem:[#allocation2 + $0x41] sm:$0x1] 0.0
      %210 = vst [vmem:[#allocation2 + $0x59] sm:$0x1] 0.0
      %211 = vst [vmem:[#allocation2 + $0x71] sm:$0x1] 0.0
      %212 = vst [vmem:[#allocation2 + $0x89] sm:$0x1] 0.0
      %213 = vst [vmem:[#allocation2 + $0xa1] sm:$0x1] 0.0
      %214 = vst [vmem:[#allocation2 + $0xb9] sm:$0x1] 0.0
      %215 = vst [vmem:[#allocation2 + $0xd1] sm:$0x1] 0.0
      %216 = vst [vmem:[#allocation2 + $0xe9] sm:$0x1] 0.0
      %217 = vst [vmem:[#allocation2 + $0x101] sm:$0x1] 0.0
      %218 = vst [vmem:[#allocation2 + $0x119] sm:$0x1] 0.0
      %219 = vst [vmem:[#allocation2 + $0x131] sm:$0x1] 0.0
      %220 = vst [vmem:[#allocation2 + $0x149] sm:$0x1] 0.0
      %221 = vst [vmem:[#allocation2 + $0x161] sm:$0x1] 0.0
      %222 = vst [vmem:[#allocation2 + $0x179] sm:$0x1] 0.0
      %223 = vst [vmem:[#allocation2 + $0x191] sm:$0x1] 0.0
      %224 = vst [vmem:[#allocation2 + $0x1a9] sm:$0x1] 0.0
      %v225 = vld [vmem:[%s172] sm:$0xff]
      %v226 = vld [vmem:[%s172 + $0x8] sm:$0xff]
      %v227 = vld [vmem:[%s172 + $0x10] sm:$0xff]
      %v228 = vld [vmem:[%s172 + $0x18] sm:$0xff]
      %v229 = vld [vmem:[%s172 + $0x20] sm:$0xff]
      %v230 = vld [vmem:[%s172 + $0x28] sm:$0xff]
      %v231 = vld [vmem:[%s172 + $0x30] sm:$0xff]
      %v232 = vld [vmem:[%s172 + $0x38] sm:$0xff]
      %v233 = vld [vmem:[%s172 + $0x40] sm:$0xff]
      %v234 = vld [vmem:[%s172 + $0x48] sm:$0xff]
      %v235 = vld [vmem:[%s172 + $0x50] sm:$0xff]
      %v236 = vld [vmem:[%s172 + $0x58] sm:$0xff]
      %v237 = vld [vmem:[%s172 + $0x60] sm:$0xff]
      %v238 = vld [vmem:[%s172 + $0x68] sm:$0xff]
      %v239 = vld [vmem:[%s172 + $0x70] sm:$0xff]
      %v240 = vld [vmem:[%s172 + $0x78] sm:$0xff]
      %s241 = scalar_lea.vmem [#allocation2], 24
      %242 = vst [vmem:[%s241 + $0x1] sm:$0xff] %v225
      %243 = vst [vmem:[%s241 + $0x9] sm:$0xff] %v226
      %244 = vst [vmem:[%s241 + $0x19] sm:$0xff] %v227
      %245 = vst [vmem:[%s241 + $0x21] sm:$0xff] %v228
      %246 = vst [vmem:[%s241 + $0x31] sm:$0xff] %v229
      %247 = vst [vmem:[%s241 + $0x39] sm:$0xff] %v230
      %248 = vst [vmem:[%s241 + $0x49] sm:$0xff] %v231
      %249 = vst [vmem:[%s241 + $0x51] sm:$0xff] %v232
      %250 = vst [vmem:[%s241 + $0x61] sm:$0xff] %v233
      %251 = vst [vmem:[%s241 + $0x69] sm:$0xff] %v234
      %252 = vst [vmem:[%s241 + $0x79] sm:$0xff] %v235
      %253 = vst [vmem:[%s241 + $0x81] sm:$0xff] %v236
      %254 = vst [vmem:[%s241 + $0x91] sm:$0xff] %v237
      %255 = vst [vmem:[%s241 + $0x99] sm:$0xff] %v238
      %256 = vst [vmem:[%s241 + $0xa9] sm:$0xff] %v239
      %257 = vst [vmem:[%s241 + $0xb1] sm:$0xff] %v240
      %s258 = scalar_lea.vmem %s172, 128
      %v259 = vld [vmem:[%s258] sm:$0xff]
      %v260 = vld [vmem:[%s258 + $0x8] sm:$0xff]
      %v261 = vld [vmem:[%s258 + $0x10] sm:$0xff]
      %v262 = vld [vmem:[%s258 + $0x18] sm:$0xff]
      %v263 = vld [vmem:[%s258 + $0x20] sm:$0xff]
      %v264 = vld [vmem:[%s258 + $0x28] sm:$0xff]
      %v265 = vld [vmem:[%s258 + $0x30] sm:$0xff]
      %v266 = vld [vmem:[%s258 + $0x38] sm:$0xff]
      %v267 = vld [vmem:[%s258 + $0x40] sm:$0xff]
      %v268 = vld [vmem:[%s258 + $0x48] sm:$0xff]
      %v269 = vld [vmem:[%s258 + $0x50] sm:$0xff]
      %v270 = vld [vmem:[%s258 + $0x58] sm:$0xff]
      %v271 = vld [vmem:[%s258 + $0x60] sm:$0xff]
      %v272 = vld [vmem:[%s258 + $0x68] sm:$0xff]
      %v273 = vld [vmem:[%s258 + $0x70] sm:$0xff]
      %v274 = vld [vmem:[%s258 + $0x78] sm:$0xff]
      %s275 = scalar_lea.vmem [#allocation2], 216
      %276 = vst [vmem:[%s275 + $0x1] sm:$0xff] %v259
      %277 = vst [vmem:[%s275 + $0x9] sm:$0xff] %v260
      %278 = vst [vmem:[%s275 + $0x19] sm:$0xff] %v261
      %279 = vst [vmem:[%s275 + $0x21] sm:$0xff] %v262
      %280 = vst [vmem:[%s275 + $0x31] sm:$0xff] %v263
      %281 = vst [vmem:[%s275 + $0x39] sm:$0xff] %v264
      %282 = vst [vmem:[%s275 + $0x49] sm:$0xff] %v265
      %283 = vst [vmem:[%s275 + $0x51] sm:$0xff] %v266
      %284 = vst [vmem:[%s275 + $0x61] sm:$0xff] %v267
      %285 = vst [vmem:[%s275 + $0x69] sm:$0xff] %v268
      %286 = vst [vmem:[%s275 + $0x79] sm:$0xff] %v269
      %287 = vst [vmem:[%s275 + $0x81] sm:$0xff] %v270
      %288 = vst [vmem:[%s275 + $0x91] sm:$0xff] %v271
      %289 = vst [vmem:[%s275 + $0x99] sm:$0xff] %v272
      %290 = vst [vmem:[%s275 + $0xa9] sm:$0xff] %v273
      %291 = vst [vmem:[%s275 + $0xb1] sm:$0xff] %v274
      %v292 = vld [vmem:[#allocation2] sm:$0xff]
      %v293 = vld [vmem:[#allocation2 + $0x8] sm:$0xff]
      %v294 = vld [vmem:[#allocation2 + $0x10] sm:$0x3]
      %v295 = vld [vmem:[#allocation2 + $0x18] sm:$0xff]
      %v296 = vld [vmem:[#allocation2 + $0x20] sm:$0xff]
      %v297 = vld [vmem:[#allocation2 + $0x28] sm:$0x3]
      %v298 = vld [vmem:[#allocation2 + $0x30] sm:$0xff]
      %v299 = vld [vmem:[#allocation2 + $0x38] sm:$0xff]
      %v300 = vld [vmem:[#allocation2 + $0x40] sm:$0x3]
      %v301 = vld [vmem:[#allocation2 + $0x48] sm:$0xff]
      %v302 = vld [vmem:[#allocation2 + $0x50] sm:$0xff]
      %v303 = vld [vmem:[#allocation2 + $0x58] sm:$0x3]
      %v304 = vld [vmem:[#allocation2 + $0x60] sm:$0xff]
      %v305 = vld [vmem:[#allocation2 + $0x68] sm:$0xff]
      %v306 = vld [vmem:[#allocation2 + $0x70] sm:$0x3]
      %v307 = vld [vmem:[#allocation2 + $0x78] sm:$0xff]
      %v308 = vld [vmem:[#allocation2 + $0x80] sm:$0xff]
      %v309 = vld [vmem:[#allocation2 + $0x88] sm:$0x3]
      %v310 = vld [vmem:[#allocation2 + $0x90] sm:$0xff]
      %v311 = vld [vmem:[#allocation2 + $0x98] sm:$0xff]
      %v312 = vld [vmem:[#allocation2 + $0xa0] sm:$0x3]
      %v313 = vld [vmem:[#allocation2 + $0xa8] sm:$0xff]
      %v314 = vld [vmem:[#allocation2 + $0xb0] sm:$0xff]
      %v315 = vld [vmem:[#allocation2 + $0xb8] sm:$0x3]
      %vm340 = vcmask 1046528
      %v341 = vrot.slane %v292, 1
      %v342 = vrot.slane %v293, 1
      %v343 = vsel %vm340, %v341, %v342
      %v344 = vrot.slane %v294, 1
      %v345 = vsel %vm340, %v342, %v344
      %v346 = vrot.slane %v295, 1
      %v347 = vrot.slane %v296, 1
      %v348 = vsel %vm340, %v346, %v347
      %v349 = vrot.slane %v297, 1
      %v350 = vsel %vm340, %v347, %v349
      %v351 = vrot.slane %v298, 1
      %v352 = vrot.slane %v299, 1
      %v353 = vsel %vm340, %v351, %v352
      %v354 = vrot.slane %v300, 1
      %v355 = vsel %vm340, %v352, %v354
      %v356 = vrot.slane %v301, 1
      %v357 = vrot.slane %v302, 1
      %v358 = vsel %vm340, %v356, %v357
      %v359 = vrot.slane %v303, 1
      %v360 = vsel %vm340, %v357, %v359
      %v361 = vrot.slane %v304, 1
      %v362 = vrot.slane %v305, 1
      %v363 = vsel %vm340, %v361, %v362
      %v364 = vrot.slane %v306, 1
      %v365 = vsel %vm340, %v362, %v364
      %v366 = vrot.slane %v307, 1
      %v367 = vrot.slane %v308, 1
      %v368 = vsel %vm340, %v366, %v367
      %v369 = vrot.slane %v309, 1
      %v370 = vsel %vm340, %v367, %v369
      %v371 = vrot.slane %v310, 1
      %v372 = vrot.slane %v311, 1
      %v373 = vsel %vm340, %v371, %v372
      %v374 = vrot.slane %v312, 1
      %v375 = vsel %vm340, %v372, %v374
      %v376 = vrot.slane %v313, 1
      %v377 = vrot.slane %v314, 1
      %v378 = vsel %vm340, %v376, %v377
      %v379 = vrot.slane %v315, 1
      %v380 = vsel %vm340, %v377, %v379
      %vm397 = vcmask 1045504
      %v398 = vrot.slane %v292, 2
      %v399 = vrot.slane %v293, 2
      %v400 = vsel %vm397, %v398, %v399
      %v401 = vrot.slane %v294, 2
      %v402 = vsel %vm397, %v399, %v401
      %v403 = vrot.slane %v295, 2
      %v404 = vrot.slane %v296, 2
      %v405 = vsel %vm397, %v403, %v404
      %v406 = vrot.slane %v297, 2
      %v407 = vsel %vm397, %v404, %v406
      %v408 = vrot.slane %v298, 2
      %v409 = vrot.slane %v299, 2
      %v410 = vsel %vm397, %v408, %v409
      %v411 = vrot.slane %v300, 2
      %v412 = vsel %vm397, %v409, %v411
      %v413 = vrot.slane %v301, 2
      %v414 = vrot.slane %v302, 2
      %v415 = vsel %vm397, %v413, %v414
      %v416 = vrot.slane %v303, 2
      %v417 = vsel %vm397, %v414, %v416
      %v418 = vrot.slane %v304, 2
      %v419 = vrot.slane %v305, 2
      %v420 = vsel %vm397, %v418, %v419
      %v421 = vrot.slane %v306, 2
      %v422 = vsel %vm397, %v419, %v421
      %v423 = vrot.slane %v307, 2
      %v424 = vrot.slane %v308, 2
      %v425 = vsel %vm397, %v423, %v424
      %v426 = vrot.slane %v309, 2
      %v427 = vsel %vm397, %v424, %v426
      %v428 = vrot.slane %v310, 2
      %v429 = vrot.slane %v311, 2
      %v430 = vsel %vm397, %v428, %v429
      %v431 = vrot.slane %v312, 2
      %v432 = vsel %vm397, %v429, %v431
      %v433 = vrot.slane %v313, 2
      %v434 = vrot.slane %v314, 2
      %v435 = vsel %vm397, %v433, %v434
      %v436 = vrot.slane %v315, 2
      %v437 = vsel %vm397, %v434, %v436
      %v454 = vld [vmem:[%s1] sm:$0xff]
      %v455 = vld [vmem:[%s1 + $0x8] sm:$0xff]
      %v456 = vld [vmem:[%s1 + $0x10] sm:$0xff]
      %v457 = vld [vmem:[%s1 + $0x18] sm:$0xff]
      %v458 = vld [vmem:[%s1 + $0x20] sm:$0xff]
      %v459 = vld [vmem:[%s1 + $0x28] sm:$0xff]
      %v460 = vld [vmem:[%s1 + $0x30] sm:$0xff]
      %v461 = vld [vmem:[%s1 + $0x38] sm:$0xff]
      %v462 = vld [vmem:[%s1 + $0x40] sm:$0xff]
      %v463 = vld [vmem:[%s1 + $0x48] sm:$0xff]
      %v464 = vld [vmem:[%s1 + $0x50] sm:$0xff]
      %v465 = vld [vmem:[%s1 + $0x58] sm:$0xff]
      %v466 = vld [vmem:[%s1 + $0x60] sm:$0xff]
      %v467 = vld [vmem:[%s1 + $0x68] sm:$0xff]
      %v468 = vld [vmem:[%s1 + $0x70] sm:$0xff]
      %v469 = vld [vmem:[%s1 + $0x78] sm:$0xff]
      %v470 = vld [vmem:[%s1 + $0x80] sm:$0xff]
      %v471 = vld [vmem:[%s1 + $0x88] sm:$0xff]
      %v472 = vld [vmem:[%s1 + $0x90] sm:$0xff]
      %v473 = vld [vmem:[%s1 + $0x98] sm:$0xff]
      %v474 = vld [vmem:[%s1 + $0xa0] sm:$0xff]
      %v475 = vld [vmem:[%s1 + $0xa8] sm:$0xff]
      %v476 = vld [vmem:[%s1 + $0xb0] sm:$0xff]
      %v477 = vld [vmem:[%s1 + $0xb8] sm:$0xff]
      %v478 = vld [vmem:[%s1 + $0xc0] sm:$0xff]
      %v479 = vld [vmem:[%s1 + $0xc8] sm:$0xff]
      %v480 = vld [vmem:[%s1 + $0xd0] sm:$0xff]
      %v481 = vld [vmem:[%s1 + $0xd8] sm:$0xff]
      %v482 = vld [vmem:[%s1 + $0xe0] sm:$0xff]
      %v483 = vld [vmem:[%s1 + $0xe8] sm:$0xff]
      %v484 = vld [vmem:[%s1 + $0xf0] sm:$0xff]
      %v485 = vld [vmem:[%s1 + $0xf8] sm:$0xff]
      %v486 = vld [vmem:[%s1 + $0x100] sm:$0xff]
      %v487 = vld [vmem:[%s1 + $0x108] sm:$0xff]
      %v488 = vld [vmem:[%s1 + $0x110] sm:$0xff]
      %v489 = vld [vmem:[%s1 + $0x118] sm:$0xff]
      %v490 = vld [vmem:[%s1 + $0x120] sm:$0xff]
      %v491 = vld [vmem:[%s1 + $0x128] sm:$0xff]
      %v492 = vld [vmem:[%s1 + $0x130] sm:$0xff]
      %v493 = vld [vmem:[%s1 + $0x138] sm:$0xff]
      %v494 = vld [vmem:[%s1 + $0x140] sm:$0xff]
      %v495 = vld [vmem:[%s1 + $0x148] sm:$0xff]
      %v496 = vld [vmem:[%s1 + $0x150] sm:$0xff]
      %v497 = vld [vmem:[%s1 + $0x158] sm:$0xff]
      %v498 = vld [vmem:[%s1 + $0x160] sm:$0xff]
      %v499 = vld [vmem:[%s1 + $0x168] sm:$0xff]
      %v500 = vld [vmem:[%s1 + $0x170] sm:$0xff]
      %v501 = vld [vmem:[%s1 + $0x178] sm:$0xff]
      %v502 = vld [vmem:[%s241] sm:$0xff]
      %v503 = vld [vmem:[%s241 + $0x8] sm:$0xff]
      %v504 = vld [vmem:[%s241 + $0x10] sm:$0x3]
      %v505 = vld [vmem:[%s241 + $0x18] sm:$0xff]
      %v506 = vld [vmem:[%s241 + $0x20] sm:$0xff]
      %v507 = vld [vmem:[%s241 + $0x28] sm:$0x3]
      %v508 = vld [vmem:[%s241 + $0x30] sm:$0xff]
      %v509 = vld [vmem:[%s241 + $0x38] sm:$0xff]
      %v510 = vld [vmem:[%s241 + $0x40] sm:$0x3]
      %v511 = vld [vmem:[%s241 + $0x48] sm:$0xff]
      %v512 = vld [vmem:[%s241 + $0x50] sm:$0xff]
      %v513 = vld [vmem:[%s241 + $0x58] sm:$0x3]
      %v514 = vld [vmem:[%s241 + $0x60] sm:$0xff]
      %v515 = vld [vmem:[%s241 + $0x68] sm:$0xff]
      %v516 = vld [vmem:[%s241 + $0x70] sm:$0x3]
      %v517 = vld [vmem:[%s241 + $0x78] sm:$0xff]
      %v518 = vld [vmem:[%s241 + $0x80] sm:$0xff]
      %v519 = vld [vmem:[%s241 + $0x88] sm:$0x3]
      %v520 = vld [vmem:[%s241 + $0x90] sm:$0xff]
      %v521 = vld [vmem:[%s241 + $0x98] sm:$0xff]
      %v522 = vld [vmem:[%s241 + $0xa0] sm:$0x3]
      %v523 = vld [vmem:[%s241 + $0xa8] sm:$0xff]
      %v524 = vld [vmem:[%s241 + $0xb0] sm:$0xff]
      %v525 = vld [vmem:[%s241 + $0xb8] sm:$0x3]
      %v550 = vrot.slane %v502, 1
      %v551 = vrot.slane %v503, 1
      %v552 = vsel %vm340, %v550, %v551
      %v553 = vrot.slane %v504, 1
      %v554 = vsel %vm340, %v551, %v553
      %v555 = vrot.slane %v505, 1
      %v556 = vrot.slane %v506, 1
      %v557 = vsel %vm340, %v555, %v556
      %v558 = vrot.slane %v507, 1
      %v559 = vsel %vm340, %v556, %v558
      %v560 = vrot.slane %v508, 1
      %v561 = vrot.slane %v509, 1
      %v562 = vsel %vm340, %v560, %v561
      %v563 = vrot.slane %v510, 1
      %v564 = vsel %vm340, %v561, %v563
      %v565 = vrot.slane %v511, 1
      %v566 = vrot.slane %v512, 1
      %v567 = vsel %vm340, %v565, %v566
      %v568 = vrot.slane %v513, 1
      %v569 = vsel %vm340, %v566, %v568
      %v570 = vrot.slane %v514, 1
      %v571 = vrot.slane %v515, 1
      %v572 = vsel %vm340, %v570, %v571
      %v573 = vrot.slane %v516, 1
      %v574 = vsel %vm340, %v571, %v573
      %v575 = vrot.slane %v517, 1
      %v576 = vrot.slane %v518, 1
      %v577 = vsel %vm340, %v575, %v576
      %v578 = vrot.slane %v519, 1
      %v579 = vsel %vm340, %v576, %v578
      %v580 = vrot.slane %v520, 1
      %v581 = vrot.slane %v521, 1
      %v582 = vsel %vm340, %v580, %v581
      %v583 = vrot.slane %v522, 1
      %v584 = vsel %vm340, %v581, %v583
      %v585 = vrot.slane %v523, 1
      %v586 = vrot.slane %v524, 1
      %v587 = vsel %vm340, %v585, %v586
      %v588 = vrot.slane %v525, 1
      %v589 = vsel %vm340, %v586, %v588
      %v606 = vrot.slane %v502, 2
      %v607 = vrot.slane %v503, 2
      %v608 = vsel %vm397, %v606, %v607
      %v609 = vrot.slane %v504, 2
      %v610 = vsel %vm397, %v607, %v609
      %v611 = vrot.slane %v505, 2
      %v612 = vrot.slane %v506, 2
      %v613 = vsel %vm397, %v611, %v612
      %v614 = vrot.slane %v507, 2
      %v615 = vsel %vm397, %v612, %v614
      %v616 = vrot.slane %v508, 2
      %v617 = vrot.slane %v509, 2
      %v618 = vsel %vm397, %v616, %v617
      %v619 = vrot.slane %v510, 2
      %v620 = vsel %vm397, %v617, %v619
      %v621 = vrot.slane %v511, 2
      %v622 = vrot.slane %v512, 2
      %v623 = vsel %vm397, %v621, %v622
      %v624 = vrot.slane %v513, 2
      %v625 = vsel %vm397, %v622, %v624
      %v626 = vrot.slane %v514, 2
      %v627 = vrot.slane %v515, 2
      %v628 = vsel %vm397, %v626, %v627
      %v629 = vrot.slane %v516, 2
      %v630 = vsel %vm397, %v627, %v629
      %v631 = vrot.slane %v517, 2
      %v632 = vrot.slane %v518, 2
      %v633 = vsel %vm397, %v631, %v632
      %v634 = vrot.slane %v519, 2
      %v635 = vsel %vm397, %v632, %v634
      %v636 = vrot.slane %v520, 2
      %v637 = vrot.slane %v521, 2
      %v638 = vsel %vm397, %v636, %v637
      %v639 = vrot.slane %v522, 2
      %v640 = vsel %vm397, %v637, %v639
      %v641 = vrot.slane %v523, 2
      %v642 = vrot.slane %v524, 2
      %v643 = vsel %vm397, %v641, %v642
      %v644 = vrot.slane %v525, 2
      %v645 = vsel %vm397, %v642, %v644
      %v662 = vld [vmem:[%s1 + $0x180] sm:$0xff]
      %v663 = vld [vmem:[%s1 + $0x188] sm:$0xff]
      %v664 = vld [vmem:[%s1 + $0x190] sm:$0xff]
      %v665 = vld [vmem:[%s1 + $0x198] sm:$0xff]
      %v666 = vld [vmem:[%s1 + $0x1a0] sm:$0xff]
      %v667 = vld [vmem:[%s1 + $0x1a8] sm:$0xff]
      %v668 = vld [vmem:[%s1 + $0x1b0] sm:$0xff]
      %v669 = vld [vmem:[%s1 + $0x1b8] sm:$0xff]
      %v670 = vld [vmem:[%s1 + $0x1c0] sm:$0xff]
      %v671 = vld [vmem:[%s1 + $0x1c8] sm:$0xff]
      %v672 = vld [vmem:[%s1 + $0x1d0] sm:$0xff]
      %v673 = vld [vmem:[%s1 + $0x1d8] sm:$0xff]
      %v674 = vld [vmem:[%s1 + $0x1e0] sm:$0xff]
      %v675 = vld [vmem:[%s1 + $0x1e8] sm:$0xff]
      %v676 = vld [vmem:[%s1 + $0x1f0] sm:$0xff]
      %v677 = vld [vmem:[%s1 + $0x1f8] sm:$0xff]
      %v678 = vld [vmem:[%s1 + $0x200] sm:$0xff]
      %v679 = vld [vmem:[%s1 + $0x208] sm:$0xff]
      %v680 = vld [vmem:[%s1 + $0x210] sm:$0xff]
      %v681 = vld [vmem:[%s1 + $0x218] sm:$0xff]
      %v682 = vld [vmem:[%s1 + $0x220] sm:$0xff]
      %v683 = vld [vmem:[%s1 + $0x228] sm:$0xff]
      %v684 = vld [vmem:[%s1 + $0x230] sm:$0xff]
      %v685 = vld [vmem:[%s1 + $0x238] sm:$0xff]
      %v686 = vld [vmem:[%s1 + $0x240] sm:$0xff]
      %v687 = vld [vmem:[%s1 + $0x248] sm:$0xff]
      %v688 = vld [vmem:[%s1 + $0x250] sm:$0xff]
      %v689 = vld [vmem:[%s1 + $0x258] sm:$0xff]
      %v690 = vld [vmem:[%s1 + $0x260] sm:$0xff]
      %v691 = vld [vmem:[%s1 + $0x268] sm:$0xff]
      %v692 = vld [vmem:[%s1 + $0x270] sm:$0xff]
      %v693 = vld [vmem:[%s1 + $0x278] sm:$0xff]
      %v694 = vld [vmem:[%s1 + $0x280] sm:$0xff]
      %v695 = vld [vmem:[%s1 + $0x288] sm:$0xff]
      %v696 = vld [vmem:[%s1 + $0x290] sm:$0xff]
      %v697 = vld [vmem:[%s1 + $0x298] sm:$0xff]
      %v698 = vld [vmem:[%s1 + $0x2a0] sm:$0xff]
      %v699 = vld [vmem:[%s1 + $0x2a8] sm:$0xff]
      %v700 = vld [vmem:[%s1 + $0x2b0] sm:$0xff]
      %v701 = vld [vmem:[%s1 + $0x2b8] sm:$0xff]
      %v702 = vld [vmem:[%s1 + $0x2c0] sm:$0xff]
      %v703 = vld [vmem:[%s1 + $0x2c8] sm:$0xff]
      %v704 = vld [vmem:[%s1 + $0x2d0] sm:$0xff]
      %v705 = vld [vmem:[%s1 + $0x2d8] sm:$0xff]
      %v706 = vld [vmem:[%s1 + $0x2e0] sm:$0xff]
      %v707 = vld [vmem:[%s1 + $0x2e8] sm:$0xff]
      %v708 = vld [vmem:[%s1 + $0x2f0] sm:$0xff]
      %v709 = vld [vmem:[%s1 + $0x2f8] sm:$0xff]
      %710 = vmatprep.subr.mxu0 0.0
      %711 = vmatpush1.msra.mxu0 %v677
      %712 = vmatprep.subr.mxu0 0.0
      %713 = vmatpush1.msra.mxu0 %v676
      %714 = vmatprep.subr.mxu0 0.0
      %715 = vmatpush1.msra.mxu0 %v675
      %716 = vmatprep.subr.mxu0 0.0
      %717 = vmatpush1.msra.mxu0 %v674
      %718 = vmatprep.subr.mxu0 0.0
      %719 = vmatpush1.msra.mxu0 %v673
      %720 = vmatprep.subr.mxu0 0.0
      %721 = vmatpush1.msra.mxu0 %v672
      %722 = vmatprep.subr.mxu0 0.0
      %723 = vmatpush1.msra.mxu0 %v671
      %724 = vmatprep.subr.mxu0 0.0
      %725 = vmatpush1.msra.mxu0 %v670
      %726 = vmatprep.subr.mxu0 0.0
      %727 = vmatpush1.msra.mxu0 %v669
      %728 = vmatprep.subr.mxu0 0.0
      %729 = vmatpush1.msra.mxu0 %v668
      %730 = vmatprep.subr.mxu0 0.0
      %731 = vmatpush1.msra.mxu0 %v667
      %732 = vmatprep.subr.mxu0 0.0
      %733 = vmatpush1.msra.mxu0 %v666
      %734 = vmatprep.subr.mxu0 0.0
      %735 = vmatpush1.msra.mxu0 %v665
      %736 = vmatprep.subr.mxu0 0.0
      %737 = vmatpush1.msra.mxu0 %v664
      %738 = vmatprep.subr.mxu0 0.0
      %739 = vmatpush1.msra.mxu0 %v663
      %740 = vmatprep.subr.mxu0 0.0
      %741 = vmatpush1.msra.mxu0 %v662
      %742 = vmatprep.subr.mxu0 0.0
      %743 = vmatpush2.msra.mxu0 %v693
      %744 = vmatprep.subr.mxu0 0.0
      %745 = vmatpush2.msra.mxu0 %v692
      %746 = vmatprep.subr.mxu0 0.0
      %747 = vmatpush2.msra.mxu0 %v691
      %748 = vmatprep.subr.mxu0 0.0
      %749 = vmatpush2.msra.mxu0 %v690
      %750 = vmatprep.subr.mxu0 0.0
      %751 = vmatpush2.msra.mxu0 %v689
      %752 = vmatprep.subr.mxu0 0.0
      %753 = vmatpush2.msra.mxu0 %v688
      %754 = vmatprep.subr.mxu0 0.0
      %755 = vmatpush2.msra.mxu0 %v687
      %756 = vmatprep.subr.mxu0 0.0
      %757 = vmatpush2.msra.mxu0 %v686
      %758 = vmatprep.subr.mxu0 0.0
      %759 = vmatpush2.msra.mxu0 %v685
      %760 = vmatprep.subr.mxu0 0.0
      %761 = vmatpush2.msra.mxu0 %v684
      %762 = vmatprep.subr.mxu0 0.0
      %763 = vmatpush2.msra.mxu0 %v683
      %764 = vmatprep.subr.mxu0 0.0
      %765 = vmatpush2.msra.mxu0 %v682
      %766 = vmatprep.subr.mxu0 0.0
      %767 = vmatpush2.msra.mxu0 %v681
      %768 = vmatprep.subr.mxu0 0.0
      %769 = vmatpush2.msra.mxu0 %v680
      %770 = vmatprep.subr.mxu0 0.0
      %771 = vmatpush2.msra.mxu0 %v679
      %772 = vmatprep.subr.mxu0 0.0
      %773 = vmatpush2.msra.mxu0 %v678
      %774 = vmatprep.mubr.f32.mxu0 %v552
      %775 = vmatmul.mubr.f32.gmra.mxu0 %v502
      %v776 = vpop.f32.mrf.mxu0
      %v777 = vadd.f32 0.0, %v776
      %v778 = vpop.f32.mrf.mxu0
      %779 = vmatprep.mubr.f32.mxu0 %v554
      %780 = vmatmul.mubr.f32.gmra.mxu0 %v503
      %v781 = vpop.f32.mrf.mxu0
      %v782 = vadd.f32 0.0, %v781
      %v783 = vpop.f32.mrf.mxu0
      %784 = vmatprep.mubr.f32.mxu0 %v557
      %785 = vmatmul.mubr.f32.gmra.mxu0 %v505
      %v786 = vpop.f32.mrf.mxu0
      %v787 = vadd.f32 0.0, %v786
      %v788 = vpop.f32.mrf.mxu0
      %789 = vmatprep.mubr.f32.mxu0 %v559
      %790 = vmatmul.mubr.f32.gmra.mxu0 %v506
      %v791 = vpop.f32.mrf.mxu0
      %v792 = vadd.f32 0.0, %v791
      %v793 = vpop.f32.mrf.mxu0
      %794 = vmatprep.mubr.f32.mxu0 %v562
      %795 = vmatmul.mubr.f32.gmra.mxu0 %v508
      %v796 = vpop.f32.mrf.mxu0
      %v797 = vadd.f32 0.0, %v796
      %v798 = vpop.f32.mrf.mxu0
      %799 = vmatprep.mubr.f32.mxu0 %v564
      %800 = vmatmul.mubr.f32.gmra.mxu0 %v509
      %v801 = vpop.f32.mrf.mxu0
      %v802 = vadd.f32 0.0, %v801
      %v803 = vpop.f32.mrf.mxu0
      %804 = vmatprep.mubr.f32.mxu0 %v567
      %805 = vmatmul.mubr.f32.gmra.mxu0 %v511
      %v806 = vpop.f32.mrf.mxu0
      %v807 = vadd.f32 0.0, %v806
      %v808 = vpop.f32.mrf.mxu0
      %809 = vmatprep.mubr.f32.mxu0 %v569
      %810 = vmatmul.mubr.f32.gmra.mxu0 %v512
      %v811 = vpop.f32.mrf.mxu0
      %v812 = vadd.f32 0.0, %v811
      %v813 = vpop.f32.mrf.mxu0
      %814 = vmatprep.mubr.f32.mxu0 %v572
      %815 = vmatmul.mubr.f32.gmra.mxu0 %v514
      %v816 = vpop.f32.mrf.mxu0
      %v817 = vadd.f32 0.0, %v816
      %v818 = vpop.f32.mrf.mxu0
      %819 = vmatprep.mubr.f32.mxu0 %v574
      %820 = vmatmul.mubr.f32.gmra.mxu0 %v515
      %v821 = vpop.f32.mrf.mxu0
      %v822 = vadd.f32 0.0, %v821
      %v823 = vpop.f32.mrf.mxu0
      %824 = vmatprep.mubr.f32.mxu0 %v577
      %825 = vmatmul.mubr.f32.gmra.mxu0 %v517
      %v826 = vpop.f32.mrf.mxu0
      %v827 = vadd.f32 0.0, %v826
      %v828 = vpop.f32.mrf.mxu0
      %829 = vmatprep.mubr.f32.mxu0 %v579
      %830 = vmatmul.mubr.f32.gmra.mxu0 %v518
      %v831 = vpop.f32.mrf.mxu0
      %v832 = vadd.f32 0.0, %v831
      %v833 = vpop.f32.mrf.mxu0
      %834 = vmatprep.mubr.f32.mxu0 %v582
      %835 = vmatmul.mubr.f32.gmra.mxu0 %v520
      %v836 = vpop.f32.mrf.mxu0
      %v837 = vadd.f32 0.0, %v836
      %v838 = vpop.f32.mrf.mxu0
      %839 = vmatprep.mubr.f32.mxu0 %v584
      %840 = vmatmul.mubr.f32.gmra.mxu0 %v521
      %v841 = vpop.f32.mrf.mxu0
      %v842 = vadd.f32 0.0, %v841
      %v843 = vpop.f32.mrf.mxu0
      %844 = vmatprep.mubr.f32.mxu0 %v587
      %845 = vmatmul.mubr.f32.gmra.mxu0 %v523
      %v846 = vpop.f32.mrf.mxu0
      %v847 = vadd.f32 0.0, %v846
      %v848 = vpop.f32.mrf.mxu0
      %849 = vmatprep.mubr.f32.mxu0 %v589
      %850 = vmatmul.mubr.f32.gmra.mxu0 %v524
      %v851 = vpop.f32.mrf.mxu0
      %v852 = vadd.f32 0.0, %v851
      %v853 = vpop.f32.mrf.mxu0
      %854 = vdwg.mxu0
      %855 = vmatprep.subr.mxu0 0.0
      %856 = vmatpush1.msra.mxu0 %v709
      %857 = vmatprep.subr.mxu0 0.0
      %858 = vmatpush1.msra.mxu0 %v708
      %859 = vmatprep.subr.mxu0 0.0
      %860 = vmatpush1.msra.mxu0 %v707
      %861 = vmatprep.subr.mxu0 0.0
      %862 = vmatpush1.msra.mxu0 %v706
      %863 = vmatprep.subr.mxu0 0.0
      %864 = vmatpush1.msra.mxu0 %v705
      %865 = vmatprep.subr.mxu0 0.0
      %866 = vmatpush1.msra.mxu0 %v704
      %867 = vmatprep.subr.mxu0 0.0
      %868 = vmatpush1.msra.mxu0 %v703
      %869 = vmatprep.subr.mxu0 0.0
      %870 = vmatpush1.msra.mxu0 %v702
      %871 = vmatprep.subr.mxu0 0.0
      %872 = vmatpush1.msra.mxu0 %v701
      %873 = vmatprep.subr.mxu0 0.0
      %874 = vmatpush1.msra.mxu0 %v700
      %875 = vmatprep.subr.mxu0 0.0
      %876 = vmatpush1.msra.mxu0 %v699
      %877 = vmatprep.subr.mxu0 0.0
      %878 = vmatpush1.msra.mxu0 %v698
      %879 = vmatprep.subr.mxu0 0.0
      %880 = vmatpush1.msra.mxu0 %v697
      %881 = vmatprep.subr.mxu0 0.0
      %882 = vmatpush1.msra.mxu0 %v696
      %883 = vmatprep.subr.mxu0 0.0
      %884 = vmatpush1.msra.mxu0 %v695
      %885 = vmatprep.subr.mxu0 0.0
      %886 = vmatpush1.msra.mxu0 %v694
      %887 = vmatprep.subr.mxu0 0.0
      %888 = vmatpush2.msra.mxu0 0.0
      %889 = vmatprep.subr.mxu0 0.0
      %890 = vmatpush2.msra.mxu0 0.0
      %891 = vmatprep.subr.mxu0 0.0
      %892 = vmatpush2.msra.mxu0 0.0
      %893 = vmatprep.subr.mxu0 0.0
      %894 = vmatpush2.msra.mxu0 0.0
      %895 = vmatprep.subr.mxu0 0.0
      %896 = vmatpush2.msra.mxu0 0.0
      %897 = vmatprep.subr.mxu0 0.0
      %898 = vmatpush2.msra.mxu0 0.0
      %899 = vmatprep.subr.mxu0 0.0
      %900 = vmatpush2.msra.mxu0 0.0
      %901 = vmatprep.subr.mxu0 0.0
      %902 = vmatpush2.msra.mxu0 0.0
      %903 = vmatprep.subr.mxu0 0.0
      %904 = vmatpush2.msra.mxu0 0.0
      %905 = vmatprep.subr.mxu0 0.0
      %906 = vmatpush2.msra.mxu0 0.0
      %907 = vmatprep.subr.mxu0 0.0
      %908 = vmatpush2.msra.mxu0 0.0
      %909 = vmatprep.subr.mxu0 0.0
      %910 = vmatpush2.msra.mxu0 0.0
      %911 = vmatprep.subr.mxu0 0.0
      %912 = vmatpush2.msra.mxu0 0.0
      %913 = vmatprep.subr.mxu0 0.0
      %914 = vmatpush2.msra.mxu0 0.0
      %915 = vmatprep.subr.mxu0 0.0
      %916 = vmatpush2.msra.mxu0 0.0
      %917 = vmatprep.subr.mxu0 0.0
      %918 = vmatpush2.msra.mxu0 0.0
      %919 = vmatprep.mubr.f32.mxu0 0.0
      %920 = vmatmul.mubr.f32.gmra.mxu0 %v608
      %v921 = vpop.f32.mrf.mxu0
      %v922 = vadd.f32 %v777, %v921
      %v923 = vpop.f32.mrf.mxu0
      %924 = vmatprep.mubr.f32.mxu0 0.0
      %925 = vmatmul.mubr.f32.gmra.mxu0 %v610
      %v926 = vpop.f32.mrf.mxu0
      %v927 = vadd.f32 %v782, %v926
      %v928 = vpop.f32.mrf.mxu0
      %929 = vmatprep.mubr.f32.mxu0 0.0
      %930 = vmatmul.mubr.f32.gmra.mxu0 %v613
      %v931 = vpop.f32.mrf.mxu0
      %v932 = vadd.f32 %v787, %v931
      %v933 = vpop.f32.mrf.mxu0
      %934 = vmatprep.mubr.f32.mxu0 0.0
      %935 = vmatmul.mubr.f32.gmra.mxu0 %v615
      %v936 = vpop.f32.mrf.mxu0
      %v937 = vadd.f32 %v792, %v936
      %v938 = vpop.f32.mrf.mxu0
      %939 = vmatprep.mubr.f32.mxu0 0.0
      %940 = vmatmul.mubr.f32.gmra.mxu0 %v618
      %v941 = vpop.f32.mrf.mxu0
      %v942 = vadd.f32 %v797, %v941
      %v943 = vpop.f32.mrf.mxu0
      %944 = vmatprep.mubr.f32.mxu0 0.0
      %945 = vmatmul.mubr.f32.gmra.mxu0 %v620
      %v946 = vpop.f32.mrf.mxu0
      %v947 = vadd.f32 %v802, %v946
      %v948 = vpop.f32.mrf.mxu0
      %949 = vmatprep.mubr.f32.mxu0 0.0
      %950 = vmatmul.mubr.f32.gmra.mxu0 %v623
      %v951 = vpop.f32.mrf.mxu0
      %v952 = vadd.f32 %v807, %v951
      %v953 = vpop.f32.mrf.mxu0
      %954 = vmatprep.mubr.f32.mxu0 0.0
      %955 = vmatmul.mubr.f32.gmra.mxu0 %v625
      %v956 = vpop.f32.mrf.mxu0
      %v957 = vadd.f32 %v812, %v956
      %v958 = vpop.f32.mrf.mxu0
      %959 = vmatprep.mubr.f32.mxu0 0.0
      %960 = vmatmul.mubr.f32.gmra.mxu0 %v628
      %v961 = vpop.f32.mrf.mxu0
      %v962 = vadd.f32 %v817, %v961
      %v963 = vpop.f32.mrf.mxu0
      %964 = vmatprep.mubr.f32.mxu0 0.0
      %965 = vmatmul.mubr.f32.gmra.mxu0 %v630
      %v966 = vpop.f32.mrf.mxu0
      %v967 = vadd.f32 %v822, %v966
      %v968 = vpop.f32.mrf.mxu0
      %969 = vmatprep.mubr.f32.mxu0 0.0
      %970 = vmatmul.mubr.f32.gmra.mxu0 %v633
      %v971 = vpop.f32.mrf.mxu0
      %v972 = vadd.f32 %v827, %v971
      %v973 = vpop.f32.mrf.mxu0
      %974 = vmatprep.mubr.f32.mxu0 0.0
      %975 = vmatmul.mubr.f32.gmra.mxu0 %v635
      %v976 = vpop.f32.mrf.mxu0
      %v977 = vadd.f32 %v832, %v976
      %v978 = vpop.f32.mrf.mxu0
      %979 = vmatprep.mubr.f32.mxu0 0.0
      %980 = vmatmul.mubr.f32.gmra.mxu0 %v638
      %v981 = vpop.f32.mrf.mxu0
      %v982 = vadd.f32 %v837, %v981
      %v983 = vpop.f32.mrf.mxu0
      %984 = vmatprep.mubr.f32.mxu0 0.0
      %985 = vmatmul.mubr.f32.gmra.mxu0 %v640
      %v986 = vpop.f32.mrf.mxu0
      %v987 = vadd.f32 %v842, %v986
      %v988 = vpop.f32.mrf.mxu0
      %989 = vmatprep.mubr.f32.mxu0 0.0
      %990 = vmatmul.mubr.f32.gmra.mxu0 %v643
      %v991 = vpop.f32.mrf.mxu0
      %v992 = vadd.f32 %v847, %v991
      %v993 = vpop.f32.mrf.mxu0
      %994 = vmatprep.mubr.f32.mxu0 0.0
      %995 = vmatmul.mubr.f32.gmra.mxu0 %v645
      %v996 = vpop.f32.mrf.mxu0
      %v997 = vadd.f32 %v852, %v996
      %v998 = vpop.f32.mrf.mxu0
      %999 = vdwg.mxu0
      %1000 = vmatprep.subr.mxu0 0.0
      %1001 = vmatpush1.msra.mxu0 %v469
      %1002 = vmatprep.subr.mxu0 0.0
      %1003 = vmatpush1.msra.mxu0 %v468
      %1004 = vmatprep.subr.mxu0 0.0
      %1005 = vmatpush1.msra.mxu0 %v467
      %1006 = vmatprep.subr.mxu0 0.0
      %1007 = vmatpush1.msra.mxu0 %v466
      %1008 = vmatprep.subr.mxu0 0.0
      %1009 = vmatpush1.msra.mxu0 %v465
      %1010 = vmatprep.subr.mxu0 0.0
      %1011 = vmatpush1.msra.mxu0 %v464
      %1012 = vmatprep.subr.mxu0 0.0
      %1013 = vmatpush1.msra.mxu0 %v463
      %1014 = vmatprep.subr.mxu0 0.0
      %1015 = vmatpush1.msra.mxu0 %v462
      %1016 = vmatprep.subr.mxu0 0.0
      %1017 = vmatpush1.msra.mxu0 %v461
      %1018 = vmatprep.subr.mxu0 0.0
      %1019 = vmatpush1.msra.mxu0 %v460
      %1020 = vmatprep.subr.mxu0 0.0
      %1021 = vmatpush1.msra.mxu0 %v459
      %1022 = vmatprep.subr.mxu0 0.0
      %1023 = vmatpush1.msra.mxu0 %v458
      %1024 = vmatprep.subr.mxu0 0.0
      %1025 = vmatpush1.msra.mxu0 %v457
      %1026 = vmatprep.subr.mxu0 0.0
      %1027 = vmatpush1.msra.mxu0 %v456
      %1028 = vmatprep.subr.mxu0 0.0
      %1029 = vmatpush1.msra.mxu0 %v455
      %1030 = vmatprep.subr.mxu0 0.0
      %1031 = vmatpush1.msra.mxu0 %v454
      %1032 = vmatprep.subr.mxu0 0.0
      %1033 = vmatpush2.msra.mxu0 %v485
      %1034 = vmatprep.subr.mxu0 0.0
      %1035 = vmatpush2.msra.mxu0 %v484
      %1036 = vmatprep.subr.mxu0 0.0
      %1037 = vmatpush2.msra.mxu0 %v483
      %1038 = vmatprep.subr.mxu0 0.0
      %1039 = vmatpush2.msra.mxu0 %v482
      %1040 = vmatprep.subr.mxu0 0.0
      %1041 = vmatpush2.msra.mxu0 %v481
      %1042 = vmatprep.subr.mxu0 0.0
      %1043 = vmatpush2.msra.mxu0 %v480
      %1044 = vmatprep.subr.mxu0 0.0
      %1045 = vmatpush2.msra.mxu0 %v479
      %1046 = vmatprep.subr.mxu0 0.0
      %1047 = vmatpush2.msra.mxu0 %v478
      %1048 = vmatprep.subr.mxu0 0.0
      %1049 = vmatpush2.msra.mxu0 %v477
      %1050 = vmatprep.subr.mxu0 0.0
      %1051 = vmatpush2.msra.mxu0 %v476
      %1052 = vmatprep.subr.mxu0 0.0
      %1053 = vmatpush2.msra.mxu0 %v475
      %1054 = vmatprep.subr.mxu0 0.0
      %1055 = vmatpush2.msra.mxu0 %v474
      %1056 = vmatprep.subr.mxu0 0.0
      %1057 = vmatpush2.msra.mxu0 %v473
      %1058 = vmatprep.subr.mxu0 0.0
      %1059 = vmatpush2.msra.mxu0 %v472
      %1060 = vmatprep.subr.mxu0 0.0
      %1061 = vmatpush2.msra.mxu0 %v471
      %1062 = vmatprep.subr.mxu0 0.0
      %1063 = vmatpush2.msra.mxu0 %v470
      %1064 = vmatprep.mubr.f32.mxu0 %v343
      %1065 = vmatmul.mubr.f32.gmra.mxu0 %v292
      %v1066 = vpop.f32.mrf.mxu0
      %v1067 = vadd.f32 %v922, %v1066
      %v1068 = vpop.f32.mrf.mxu0
      %1069 = vmatprep.mubr.f32.mxu0 %v345
      %1070 = vmatmul.mubr.f32.gmra.mxu0 %v293
      %v1071 = vpop.f32.mrf.mxu0
      %v1072 = vadd.f32 %v927, %v1071
      %v1073 = vpop.f32.mrf.mxu0
      %1074 = vmatprep.mubr.f32.mxu0 %v348
      %1075 = vmatmul.mubr.f32.gmra.mxu0 %v295
      %v1076 = vpop.f32.mrf.mxu0
      %v1077 = vadd.f32 %v932, %v1076
      %v1078 = vpop.f32.mrf.mxu0
      %1079 = vmatprep.mubr.f32.mxu0 %v350
      %1080 = vmatmul.mubr.f32.gmra.mxu0 %v296
      %v1081 = vpop.f32.mrf.mxu0
      %v1082 = vadd.f32 %v937, %v1081
      %v1083 = vpop.f32.mrf.mxu0
      %1084 = vmatprep.mubr.f32.mxu0 %v353
      %1085 = vmatmul.mubr.f32.gmra.mxu0 %v298
      %v1086 = vpop.f32.mrf.mxu0
      %v1087 = vadd.f32 %v942, %v1086
      %v1088 = vpop.f32.mrf.mxu0
      %1089 = vmatprep.mubr.f32.mxu0 %v355
      %1090 = vmatmul.mubr.f32.gmra.mxu0 %v299
      %v1091 = vpop.f32.mrf.mxu0
      %v1092 = vadd.f32 %v947, %v1091
      %v1093 = vpop.f32.mrf.mxu0
      %1094 = vmatprep.mubr.f32.mxu0 %v358
      %1095 = vmatmul.mubr.f32.gmra.mxu0 %v301
      %v1096 = vpop.f32.mrf.mxu0
      %v1097 = vadd.f32 %v952, %v1096
      %v1098 = vpop.f32.mrf.mxu0
      %1099 = vmatprep.mubr.f32.mxu0 %v360
      %1100 = vmatmul.mubr.f32.gmra.mxu0 %v302
      %v1101 = vpop.f32.mrf.mxu0
      %v1102 = vadd.f32 %v957, %v1101
      %v1103 = vpop.f32.mrf.mxu0
      %1104 = vmatprep.mubr.f32.mxu0 %v363
      %1105 = vmatmul.mubr.f32.gmra.mxu0 %v304
      %v1106 = vpop.f32.mrf.mxu0
      %v1107 = vadd.f32 %v962, %v1106
      %v1108 = vpop.f32.mrf.mxu0
      %1109 = vmatprep.mubr.f32.mxu0 %v365
      %1110 = vmatmul.mubr.f32.gmra.mxu0 %v305
      %v1111 = vpop.f32.mrf.mxu0
      %v1112 = vadd.f32 %v967, %v1111
      %v1113 = vpop.f32.mrf.mxu0
      %1114 = vmatprep.mubr.f32.mxu0 %v368
      %1115 = vmatmul.mubr.f32.gmra.mxu0 %v307
      %v1116 = vpop.f32.mrf.mxu0
      %v1117 = vadd.f32 %v972, %v1116
      %v1118 = vpop.f32.mrf.mxu0
      %1119 = vmatprep.mubr.f32.mxu0 %v370
      %1120 = vmatmul.mubr.f32.gmra.mxu0 %v308
      %v1121 = vpop.f32.mrf.mxu0
      %v1122 = vadd.f32 %v977, %v1121
      %v1123 = vpop.f32.mrf.mxu0
      %1124 = vmatprep.mubr.f32.mxu0 %v373
      %1125 = vmatmul.mubr.f32.gmra.mxu0 %v310
      %v1126 = vpop.f32.mrf.mxu0
      %v1127 = vadd.f32 %v982, %v1126
      %v1128 = vpop.f32.mrf.mxu0
      %1129 = vmatprep.mubr.f32.mxu0 %v375
      %1130 = vmatmul.mubr.f32.gmra.mxu0 %v311
      %v1131 = vpop.f32.mrf.mxu0
      %v1132 = vadd.f32 %v987, %v1131
      %v1133 = vpop.f32.mrf.mxu0
      %1134 = vmatprep.mubr.f32.mxu0 %v378
      %1135 = vmatmul.mubr.f32.gmra.mxu0 %v313
      %v1136 = vpop.f32.mrf.mxu0
      %v1137 = vadd.f32 %v992, %v1136
      %v1138 = vpop.f32.mrf.mxu0
      %1139 = vmatprep.mubr.f32.mxu0 %v380
      %1140 = vmatmul.mubr.f32.gmra.mxu0 %v314
      %v1141 = vpop.f32.mrf.mxu0
      %v1142 = vadd.f32 %v997, %v1141
      %v1143 = vpop.f32.mrf.mxu0
      %1144 = vdwg.mxu0
      %1145 = vmatprep.subr.mxu0 0.0
      %1146 = vmatpush1.msra.mxu0 %v501
      %1147 = vmatprep.subr.mxu0 0.0
      %1148 = vmatpush1.msra.mxu0 %v500
      %1149 = vmatprep.subr.mxu0 0.0
      %1150 = vmatpush1.msra.mxu0 %v499
      %1151 = vmatprep.subr.mxu0 0.0
      %1152 = vmatpush1.msra.mxu0 %v498
      %1153 = vmatprep.subr.mxu0 0.0
      %1154 = vmatpush1.msra.mxu0 %v497
      %1155 = vmatprep.subr.mxu0 0.0
      %1156 = vmatpush1.msra.mxu0 %v496
      %1157 = vmatprep.subr.mxu0 0.0
      %1158 = vmatpush1.msra.mxu0 %v495
      %1159 = vmatprep.subr.mxu0 0.0
      %1160 = vmatpush1.msra.mxu0 %v494
      %1161 = vmatprep.subr.mxu0 0.0
      %1162 = vmatpush1.msra.mxu0 %v493
      %1163 = vmatprep.subr.mxu0 0.0
      %1164 = vmatpush1.msra.mxu0 %v492
      %1165 = vmatprep.subr.mxu0 0.0
      %1166 = vmatpush1.msra.mxu0 %v491
      %1167 = vmatprep.subr.mxu0 0.0
      %1168 = vmatpush1.msra.mxu0 %v490
      %1169 = vmatprep.subr.mxu0 0.0
      %1170 = vmatpush1.msra.mxu0 %v489
      %1171 = vmatprep.subr.mxu0 0.0
      %1172 = vmatpush1.msra.mxu0 %v488
      %1173 = vmatprep.subr.mxu0 0.0
      %1174 = vmatpush1.msra.mxu0 %v487
      %1175 = vmatprep.subr.mxu0 0.0
      %1176 = vmatpush1.msra.mxu0 %v486
      %1177 = vmatprep.subr.mxu0 0.0
      %1178 = vmatpush2.msra.mxu0 0.0
      %1179 = vmatprep.subr.mxu0 0.0
      %1180 = vmatpush2.msra.mxu0 0.0
      %1181 = vmatprep.subr.mxu0 0.0
      %1182 = vmatpush2.msra.mxu0 0.0
      %1183 = vmatprep.subr.mxu0 0.0
      %1184 = vmatpush2.msra.mxu0 0.0
      %1185 = vmatprep.subr.mxu0 0.0
      %1186 = vmatpush2.msra.mxu0 0.0
      %1187 = vmatprep.subr.mxu0 0.0
      %1188 = vmatpush2.msra.mxu0 0.0
      %1189 = vmatprep.subr.mxu0 0.0
      %1190 = vmatpush2.msra.mxu0 0.0
      %1191 = vmatprep.subr.mxu0 0.0
      %1192 = vmatpush2.msra.mxu0 0.0
      %1193 = vmatprep.subr.mxu0 0.0
      %1194 = vmatpush2.msra.mxu0 0.0
      %1195 = vmatprep.subr.mxu0 0.0
      %1196 = vmatpush2.msra.mxu0 0.0
      %1197 = vmatprep.subr.mxu0 0.0
      %1198 = vmatpush2.msra.mxu0 0.0
      %1199 = vmatprep.subr.mxu0 0.0
      %1200 = vmatpush2.msra.mxu0 0.0
      %1201 = vmatprep.subr.mxu0 0.0
      %1202 = vmatpush2.msra.mxu0 0.0
      %1203 = vmatprep.subr.mxu0 0.0
      %1204 = vmatpush2.msra.mxu0 0.0
      %1205 = vmatprep.subr.mxu0 0.0
      %1206 = vmatpush2.msra.mxu0 0.0
      %1207 = vmatprep.subr.mxu0 0.0
      %1208 = vmatpush2.msra.mxu0 0.0
      %1209 = vmatprep.mubr.f32.mxu0 0.0
      %1210 = vmatmul.mubr.f32.gmra.mxu0 %v400
      %v1211 = vpop.f32.mrf.mxu0
      %v1212 = vadd.f32 %v1067, %v1211
      %v1213 = vpop.f32.mrf.mxu0
      %1214 = vmatprep.mubr.f32.mxu0 0.0
      %1215 = vmatmul.mubr.f32.gmra.mxu0 %v402
      %v1216 = vpop.f32.mrf.mxu0
      %v1217 = vadd.f32 %v1072, %v1216
      %v1218 = vpop.f32.mrf.mxu0
      %1219 = vmatprep.mubr.f32.mxu0 0.0
      %1220 = vmatmul.mubr.f32.gmra.mxu0 %v405
      %v1221 = vpop.f32.mrf.mxu0
      %v1222 = vadd.f32 %v1077, %v1221
      %v1223 = vpop.f32.mrf.mxu0
      %1224 = vmatprep.mubr.f32.mxu0 0.0
      %1225 = vmatmul.mubr.f32.gmra.mxu0 %v407
      %v1226 = vpop.f32.mrf.mxu0
      %v1227 = vadd.f32 %v1082, %v1226
      %v1228 = vpop.f32.mrf.mxu0
      %1229 = vmatprep.mubr.f32.mxu0 0.0
      %1230 = vmatmul.mubr.f32.gmra.mxu0 %v410
      %v1231 = vpop.f32.mrf.mxu0
      %v1232 = vadd.f32 %v1087, %v1231
      %v1233 = vpop.f32.mrf.mxu0
      %1234 = vmatprep.mubr.f32.mxu0 0.0
      %1235 = vmatmul.mubr.f32.gmra.mxu0 %v412
      %v1236 = vpop.f32.mrf.mxu0
      %v1237 = vadd.f32 %v1092, %v1236
      %v1238 = vpop.f32.mrf.mxu0
      %1239 = vmatprep.mubr.f32.mxu0 0.0
      %1240 = vmatmul.mubr.f32.gmra.mxu0 %v415
      %v1241 = vpop.f32.mrf.mxu0
      %v1242 = vadd.f32 %v1097, %v1241
      %v1243 = vpop.f32.mrf.mxu0
      %1244 = vmatprep.mubr.f32.mxu0 0.0
      %1245 = vmatmul.mubr.f32.gmra.mxu0 %v417
      %v1246 = vpop.f32.mrf.mxu0
      %v1247 = vadd.f32 %v1102, %v1246
      %v1248 = vpop.f32.mrf.mxu0
      %1249 = vmatprep.mubr.f32.mxu0 0.0
      %1250 = vmatmul.mubr.f32.gmra.mxu0 %v420
      %v1251 = vpop.f32.mrf.mxu0
      %v1252 = vadd.f32 %v1107, %v1251
      %v1253 = vpop.f32.mrf.mxu0
      %1254 = vmatprep.mubr.f32.mxu0 0.0
      %1255 = vmatmul.mubr.f32.gmra.mxu0 %v422
      %v1256 = vpop.f32.mrf.mxu0
      %v1257 = vadd.f32 %v1112, %v1256
      %v1258 = vpop.f32.mrf.mxu0
      %1259 = vmatprep.mubr.f32.mxu0 0.0
      %1260 = vmatmul.mubr.f32.gmra.mxu0 %v425
      %v1261 = vpop.f32.mrf.mxu0
      %v1262 = vadd.f32 %v1117, %v1261
      %v1263 = vpop.f32.mrf.mxu0
      %1264 = vmatprep.mubr.f32.mxu0 0.0
      %1265 = vmatmul.mubr.f32.gmra.mxu0 %v427
      %v1266 = vpop.f32.mrf.mxu0
      %v1267 = vadd.f32 %v1122, %v1266
      %v1268 = vpop.f32.mrf.mxu0
      %1269 = vmatprep.mubr.f32.mxu0 0.0
      %1270 = vmatmul.mubr.f32.gmra.mxu0 %v430
      %v1271 = vpop.f32.mrf.mxu0
      %v1272 = vadd.f32 %v1127, %v1271
      %v1273 = vpop.f32.mrf.mxu0
      %1274 = vmatprep.mubr.f32.mxu0 0.0
      %1275 = vmatmul.mubr.f32.gmra.mxu0 %v432
      %v1276 = vpop.f32.mrf.mxu0
      %v1277 = vadd.f32 %v1132, %v1276
      %v1278 = vpop.f32.mrf.mxu0
      %1279 = vmatprep.mubr.f32.mxu0 0.0
      %1280 = vmatmul.mubr.f32.gmra.mxu0 %v435
      %v1281 = vpop.f32.mrf.mxu0
      %v1282 = vadd.f32 %v1137, %v1281
      %v1283 = vpop.f32.mrf.mxu0
      %1284 = vmatprep.mubr.f32.mxu0 0.0
      %1285 = vmatmul.mubr.f32.gmra.mxu0 %v437
      %v1286 = vpop.f32.mrf.mxu0
      %v1287 = vadd.f32 %v1142, %v1286
      %v1288 = vpop.f32.mrf.mxu0
      %1289 = vdwg.mxu0
      %s1290 = scalar_lea.vmem [#allocation2], 48
      %v1291 = vld [vmem:[%s1290] sm:$0xff]
      %v1292 = vld [vmem:[%s1290 + $0x8] sm:$0xff]
      %v1293 = vld [vmem:[%s1290 + $0x10] sm:$0x3]
      %v1294 = vld [vmem:[%s1290 + $0x18] sm:$0xff]
      %v1295 = vld [vmem:[%s1290 + $0x20] sm:$0xff]
      %v1296 = vld [vmem:[%s1290 + $0x28] sm:$0x3]
      %v1297 = vld [vmem:[%s1290 + $0x30] sm:$0xff]
      %v1298 = vld [vmem:[%s1290 + $0x38] sm:$0xff]
      %v1299 = vld [vmem:[%s1290 + $0x40] sm:$0x3]
      %v1300 = vld [vmem:[%s1290 + $0x48] sm:$0xff]
      %v1301 = vld [vmem:[%s1290 + $0x50] sm:$0xff]
      %v1302 = vld [vmem:[%s1290 + $0x58] sm:$0x3]
      %v1303 = vld [vmem:[%s1290 + $0x60] sm:$0xff]
      %v1304 = vld [vmem:[%s1290 + $0x68] sm:$0xff]
      %v1305 = vld [vmem:[%s1290 + $0x70] sm:$0x3]
      %v1306 = vld [vmem:[%s1290 + $0x78] sm:$0xff]
      %v1307 = vld [vmem:[%s1290 + $0x80] sm:$0xff]
      %v1308 = vld [vmem:[%s1290 + $0x88] sm:$0x3]
      %v1309 = vld [vmem:[%s1290 + $0x90] sm:$0xff]
      %v1310 = vld [vmem:[%s1290 + $0x98] sm:$0xff]
      %v1311 = vld [vmem:[%s1290 + $0xa0] sm:$0x3]
      %v1312 = vld [vmem:[%s1290 + $0xa8] sm:$0xff]
      %v1313 = vld [vmem:[%s1290 + $0xb0] sm:$0xff]
      %v1314 = vld [vmem:[%s1290 + $0xb8] sm:$0x3]
      %v1339 = vrot.slane %v1291, 1
      %v1340 = vrot.slane %v1292, 1
      %v1341 = vsel %vm340, %v1339, %v1340
      %v1342 = vrot.slane %v1293, 1
      %v1343 = vsel %vm340, %v1340, %v1342
      %v1344 = vrot.slane %v1294, 1
      %v1345 = vrot.slane %v1295, 1
      %v1346 = vsel %vm340, %v1344, %v1345
      %v1347 = vrot.slane %v1296, 1
      %v1348 = vsel %vm340, %v1345, %v1347
      %v1349 = vrot.slane %v1297, 1
      %v1350 = vrot.slane %v1298, 1
      %v1351 = vsel %vm340, %v1349, %v1350
      %v1352 = vrot.slane %v1299, 1
      %v1353 = vsel %vm340, %v1350, %v1352
      %v1354 = vrot.slane %v1300, 1
      %v1355 = vrot.slane %v1301, 1
      %v1356 = vsel %vm340, %v1354, %v1355
      %v1357 = vrot.slane %v1302, 1
      %v1358 = vsel %vm340, %v1355, %v1357
      %v1359 = vrot.slane %v1303, 1
      %v1360 = vrot.slane %v1304, 1
      %v1361 = vsel %vm340, %v1359, %v1360
      %v1362 = vrot.slane %v1305, 1
      %v1363 = vsel %vm340, %v1360, %v1362
      %v1364 = vrot.slane %v1306, 1
      %v1365 = vrot.slane %v1307, 1
      %v1366 = vsel %vm340, %v1364, %v1365
      %v1367 = vrot.slane %v1308, 1
      %v1368 = vsel %vm340, %v1365, %v1367
      %v1369 = vrot.slane %v1309, 1
      %v1370 = vrot.slane %v1310, 1
      %v1371 = vsel %vm340, %v1369, %v1370
      %v1372 = vrot.slane %v1311, 1
      %v1373 = vsel %vm340, %v1370, %v1372
      %v1374 = vrot.slane %v1312, 1
      %v1375 = vrot.slane %v1313, 1
      %v1376 = vsel %vm340, %v1374, %v1375
      %v1377 = vrot.slane %v1314, 1
      %v1378 = vsel %vm340, %v1375, %v1377
      %v1395 = vrot.slane %v1291, 2
      %v1396 = vrot.slane %v1292, 2
      %v1397 = vsel %vm397, %v1395, %v1396
      %v1398 = vrot.slane %v1293, 2
      %v1399 = vsel %vm397, %v1396, %v1398
      %v1400 = vrot.slane %v1294, 2
      %v1401 = vrot.slane %v1295, 2
      %v1402 = vsel %vm397, %v1400, %v1401
      %v1403 = vrot.slane %v1296, 2
      %v1404 = vsel %vm397, %v1401, %v1403
      %v1405 = vrot.slane %v1297, 2
      %v1406 = vrot.slane %v1298, 2
      %v1407 = vsel %vm397, %v1405, %v1406
      %v1408 = vrot.slane %v1299, 2
      %v1409 = vsel %vm397, %v1406, %v1408
      %v1410 = vrot.slane %v1300, 2
      %v1411 = vrot.slane %v1301, 2
      %v1412 = vsel %vm397, %v1410, %v1411
      %v1413 = vrot.slane %v1302, 2
      %v1414 = vsel %vm397, %v1411, %v1413
      %v1415 = vrot.slane %v1303, 2
      %v1416 = vrot.slane %v1304, 2
      %v1417 = vsel %vm397, %v1415, %v1416
      %v1418 = vrot.slane %v1305, 2
      %v1419 = vsel %vm397, %v1416, %v1418
      %v1420 = vrot.slane %v1306, 2
      %v1421 = vrot.slane %v1307, 2
      %v1422 = vsel %vm397, %v1420, %v1421
      %v1423 = vrot.slane %v1308, 2
      %v1424 = vsel %vm397, %v1421, %v1423
      %v1425 = vrot.slane %v1309, 2
      %v1426 = vrot.slane %v1310, 2
      %v1427 = vsel %vm397, %v1425, %v1426
      %v1428 = vrot.slane %v1311, 2
      %v1429 = vsel %vm397, %v1426, %v1428
      %v1430 = vrot.slane %v1312, 2
      %v1431 = vrot.slane %v1313, 2
      %v1432 = vsel %vm397, %v1430, %v1431
      %v1433 = vrot.slane %v1314, 2
      %v1434 = vsel %vm397, %v1431, %v1433
      %v1451 = vld [vmem:[%s1 + $0x300] sm:$0xff]
      %v1452 = vld [vmem:[%s1 + $0x308] sm:$0xff]
      %v1453 = vld [vmem:[%s1 + $0x310] sm:$0xff]
      %v1454 = vld [vmem:[%s1 + $0x318] sm:$0xff]
      %v1455 = vld [vmem:[%s1 + $0x320] sm:$0xff]
      %v1456 = vld [vmem:[%s1 + $0x328] sm:$0xff]
      %v1457 = vld [vmem:[%s1 + $0x330] sm:$0xff]
      %v1458 = vld [vmem:[%s1 + $0x338] sm:$0xff]
      %v1459 = vld [vmem:[%s1 + $0x340] sm:$0xff]
      %v1460 = vld [vmem:[%s1 + $0x348] sm:$0xff]
      %v1461 = vld [vmem:[%s1 + $0x350] sm:$0xff]
      %v1462 = vld [vmem:[%s1 + $0x358] sm:$0xff]
      %v1463 = vld [vmem:[%s1 + $0x360] sm:$0xff]
      %v1464 = vld [vmem:[%s1 + $0x368] sm:$0xff]
      %v1465 = vld [vmem:[%s1 + $0x370] sm:$0xff]
      %v1466 = vld [vmem:[%s1 + $0x378] sm:$0xff]
      %v1467 = vld [vmem:[%s1 + $0x380] sm:$0xff]
      %v1468 = vld [vmem:[%s1 + $0x388] sm:$0xff]
      %v1469 = vld [vmem:[%s1 + $0x390] sm:$0xff]
      %v1470 = vld [vmem:[%s1 + $0x398] sm:$0xff]
      %v1471 = vld [vmem:[%s1 + $0x3a0] sm:$0xff]
      %v1472 = vld [vmem:[%s1 + $0x3a8] sm:$0xff]
      %v1473 = vld [vmem:[%s1 + $0x3b0] sm:$0xff]
      %v1474 = vld [vmem:[%s1 + $0x3b8] sm:$0xff]
      %v1475 = vld [vmem:[%s1 + $0x3c0] sm:$0xff]
      %v1476 = vld [vmem:[%s1 + $0x3c8] sm:$0xff]
      %v1477 = vld [vmem:[%s1 + $0x3d0] sm:$0xff]
      %v1478 = vld [vmem:[%s1 + $0x3d8] sm:$0xff]
      %v1479 = vld [vmem:[%s1 + $0x3e0] sm:$0xff]
      %v1480 = vld [vmem:[%s1 + $0x3e8] sm:$0xff]
      %v1481 = vld [vmem:[%s1 + $0x3f0] sm:$0xff]
      %v1482 = vld [vmem:[%s1 + $0x3f8] sm:$0xff]
      %v1483 = vld [vmem:[%s1 + $0x400] sm:$0xff]
      %v1484 = vld [vmem:[%s1 + $0x408] sm:$0xff]
      %v1485 = vld [vmem:[%s1 + $0x410] sm:$0xff]
      %v1486 = vld [vmem:[%s1 + $0x418] sm:$0xff]
      %v1487 = vld [vmem:[%s1 + $0x420] sm:$0xff]
      %v1488 = vld [vmem:[%s1 + $0x428] sm:$0xff]
      %v1489 = vld [vmem:[%s1 + $0x430] sm:$0xff]
      %v1490 = vld [vmem:[%s1 + $0x438] sm:$0xff]
      %v1491 = vld [vmem:[%s1 + $0x440] sm:$0xff]
      %v1492 = vld [vmem:[%s1 + $0x448] sm:$0xff]
      %v1493 = vld [vmem:[%s1 + $0x450] sm:$0xff]
      %v1494 = vld [vmem:[%s1 + $0x458] sm:$0xff]
      %v1495 = vld [vmem:[%s1 + $0x460] sm:$0xff]
      %v1496 = vld [vmem:[%s1 + $0x468] sm:$0xff]
      %v1497 = vld [vmem:[%s1 + $0x470] sm:$0xff]
      %v1498 = vld [vmem:[%s1 + $0x478] sm:$0xff]
      %1499 = vmatprep.subr.mxu0 0.0
      %1500 = vmatpush1.msra.mxu0 %v1466
      %1501 = vmatprep.subr.mxu0 0.0
      %1502 = vmatpush1.msra.mxu0 %v1465
      %1503 = vmatprep.subr.mxu0 0.0
      %1504 = vmatpush1.msra.mxu0 %v1464
      %1505 = vmatprep.subr.mxu0 0.0
      %1506 = vmatpush1.msra.mxu0 %v1463
      %1507 = vmatprep.subr.mxu0 0.0
      %1508 = vmatpush1.msra.mxu0 %v1462
      %1509 = vmatprep.subr.mxu0 0.0
      %1510 = vmatpush1.msra.mxu0 %v1461
      %1511 = vmatprep.subr.mxu0 0.0
      %1512 = vmatpush1.msra.mxu0 %v1460
      %1513 = vmatprep.subr.mxu0 0.0
      %1514 = vmatpush1.msra.mxu0 %v1459
      %1515 = vmatprep.subr.mxu0 0.0
      %1516 = vmatpush1.msra.mxu0 %v1458
      %1517 = vmatprep.subr.mxu0 0.0
      %1518 = vmatpush1.msra.mxu0 %v1457
      %1519 = vmatprep.subr.mxu0 0.0
      %1520 = vmatpush1.msra.mxu0 %v1456
      %1521 = vmatprep.subr.mxu0 0.0
      %1522 = vmatpush1.msra.mxu0 %v1455
      %1523 = vmatprep.subr.mxu0 0.0
      %1524 = vmatpush1.msra.mxu0 %v1454
      %1525 = vmatprep.subr.mxu0 0.0
      %1526 = vmatpush1.msra.mxu0 %v1453
      %1527 = vmatprep.subr.mxu0 0.0
      %1528 = vmatpush1.msra.mxu0 %v1452
      %1529 = vmatprep.subr.mxu0 0.0
      %1530 = vmatpush1.msra.mxu0 %v1451
      %1531 = vmatprep.subr.mxu0 0.0
      %1532 = vmatpush2.msra.mxu0 %v1482
      %1533 = vmatprep.subr.mxu0 0.0
      %1534 = vmatpush2.msra.mxu0 %v1481
      %1535 = vmatprep.subr.mxu0 0.0
      %1536 = vmatpush2.msra.mxu0 %v1480
      %1537 = vmatprep.subr.mxu0 0.0
      %1538 = vmatpush2.msra.mxu0 %v1479
      %1539 = vmatprep.subr.mxu0 0.0
      %1540 = vmatpush2.msra.mxu0 %v1478
      %1541 = vmatprep.subr.mxu0 0.0
      %1542 = vmatpush2.msra.mxu0 %v1477
      %1543 = vmatprep.subr.mxu0 0.0
      %1544 = vmatpush2.msra.mxu0 %v1476
      %1545 = vmatprep.subr.mxu0 0.0
      %1546 = vmatpush2.msra.mxu0 %v1475
      %1547 = vmatprep.subr.mxu0 0.0
      %1548 = vmatpush2.msra.mxu0 %v1474
      %1549 = vmatprep.subr.mxu0 0.0
      %1550 = vmatpush2.msra.mxu0 %v1473
      %1551 = vmatprep.subr.mxu0 0.0
      %1552 = vmatpush2.msra.mxu0 %v1472
      %1553 = vmatprep.subr.mxu0 0.0
      %1554 = vmatpush2.msra.mxu0 %v1471
      %1555 = vmatprep.subr.mxu0 0.0
      %1556 = vmatpush2.msra.mxu0 %v1470
      %1557 = vmatprep.subr.mxu0 0.0
      %1558 = vmatpush2.msra.mxu0 %v1469
      %1559 = vmatprep.subr.mxu0 0.0
      %1560 = vmatpush2.msra.mxu0 %v1468
      %1561 = vmatprep.subr.mxu0 0.0
      %1562 = vmatpush2.msra.mxu0 %v1467
      %1563 = vmatprep.mubr.f32.mxu0 %v1341
      %1564 = vmatmul.mubr.f32.gmra.mxu0 %v1291
      %v1565 = vpop.f32.mrf.mxu0
      %v1566 = vadd.f32 0.0, %v1565
      %v1567 = vpop.f32.mrf.mxu0
      %1568 = vmatprep.mubr.f32.mxu0 %v1343
      %1569 = vmatmul.mubr.f32.gmra.mxu0 %v1292
      %v1570 = vpop.f32.mrf.mxu0
      %v1571 = vadd.f32 0.0, %v1570
      %v1572 = vpop.f32.mrf.mxu0
      %1573 = vmatprep.mubr.f32.mxu0 %v1346
      %1574 = vmatmul.mubr.f32.gmra.mxu0 %v1294
      %v1575 = vpop.f32.mrf.mxu0
      %v1576 = vadd.f32 0.0, %v1575
      %v1577 = vpop.f32.mrf.mxu0
      %1578 = vmatprep.mubr.f32.mxu0 %v1348
      %1579 = vmatmul.mubr.f32.gmra.mxu0 %v1295
      %v1580 = vpop.f32.mrf.mxu0
      %v1581 = vadd.f32 0.0, %v1580
      %v1582 = vpop.f32.mrf.mxu0
      %1583 = vmatprep.mubr.f32.mxu0 %v1351
      %1584 = vmatmul.mubr.f32.gmra.mxu0 %v1297
      %v1585 = vpop.f32.mrf.mxu0
      %v1586 = vadd.f32 0.0, %v1585
      %v1587 = vpop.f32.mrf.mxu0
      %1588 = vmatprep.mubr.f32.mxu0 %v1353
      %1589 = vmatmul.mubr.f32.gmra.mxu0 %v1298
      %v1590 = vpop.f32.mrf.mxu0
      %v1591 = vadd.f32 0.0, %v1590
      %v1592 = vpop.f32.mrf.mxu0
      %1593 = vmatprep.mubr.f32.mxu0 %v1356
      %1594 = vmatmul.mubr.f32.gmra.mxu0 %v1300
      %v1595 = vpop.f32.mrf.mxu0
      %v1596 = vadd.f32 0.0, %v1595
      %v1597 = vpop.f32.mrf.mxu0
      %1598 = vmatprep.mubr.f32.mxu0 %v1358
      %1599 = vmatmul.mubr.f32.gmra.mxu0 %v1301
      %v1600 = vpop.f32.mrf.mxu0
      %v1601 = vadd.f32 0.0, %v1600
      %v1602 = vpop.f32.mrf.mxu0
      %1603 = vmatprep.mubr.f32.mxu0 %v1361
      %1604 = vmatmul.mubr.f32.gmra.mxu0 %v1303
      %v1605 = vpop.f32.mrf.mxu0
      %v1606 = vadd.f32 0.0, %v1605
      %v1607 = vpop.f32.mrf.mxu0
      %1608 = vmatprep.mubr.f32.mxu0 %v1363
      %1609 = vmatmul.mubr.f32.gmra.mxu0 %v1304
      %v1610 = vpop.f32.mrf.mxu0
      %v1611 = vadd.f32 0.0, %v1610
      %v1612 = vpop.f32.mrf.mxu0
      %1613 = vmatprep.mubr.f32.mxu0 %v1366
      %1614 = vmatmul.mubr.f32.gmra.mxu0 %v1306
      %v1615 = vpop.f32.mrf.mxu0
      %v1616 = vadd.f32 0.0, %v1615
      %v1617 = vpop.f32.mrf.mxu0
      %1618 = vmatprep.mubr.f32.mxu0 %v1368
      %1619 = vmatmul.mubr.f32.gmra.mxu0 %v1307
      %v1620 = vpop.f32.mrf.mxu0
      %v1621 = vadd.f32 0.0, %v1620
      %v1622 = vpop.f32.mrf.mxu0
      %1623 = vmatprep.mubr.f32.mxu0 %v1371
      %1624 = vmatmul.mubr.f32.gmra.mxu0 %v1309
      %v1625 = vpop.f32.mrf.mxu0
      %v1626 = vadd.f32 0.0, %v1625
      %v1627 = vpop.f32.mrf.mxu0
      %1628 = vmatprep.mubr.f32.mxu0 %v1373
      %1629 = vmatmul.mubr.f32.gmra.mxu0 %v1310
      %v1630 = vpop.f32.mrf.mxu0
      %v1631 = vadd.f32 0.0, %v1630
      %v1632 = vpop.f32.mrf.mxu0
      %1633 = vmatprep.mubr.f32.mxu0 %v1376
      %1634 = vmatmul.mubr.f32.gmra.mxu0 %v1312
      %v1635 = vpop.f32.mrf.mxu0
      %v1636 = vadd.f32 0.0, %v1635
      %v1637 = vpop.f32.mrf.mxu0
      %1638 = vmatprep.mubr.f32.mxu0 %v1378
      %1639 = vmatmul.mubr.f32.gmra.mxu0 %v1313
      %v1640 = vpop.f32.mrf.mxu0
      %v1641 = vadd.f32 0.0, %v1640
      %v1642 = vpop.f32.mrf.mxu0
      %1643 = vdwg.mxu0
      %1644 = vmatprep.subr.mxu0 0.0
      %1645 = vmatpush1.msra.mxu0 %v1498
      %1646 = vmatprep.subr.mxu0 0.0
      %1647 = vmatpush1.msra.mxu0 %v1497
      %1648 = vmatprep.subr.mxu0 0.0
      %1649 = vmatpush1.msra.mxu0 %v1496
      %1650 = vmatprep.subr.mxu0 0.0
      %1651 = vmatpush1.msra.mxu0 %v1495
      %1652 = vmatprep.subr.mxu0 0.0
      %1653 = vmatpush1.msra.mxu0 %v1494
      %1654 = vmatprep.subr.mxu0 0.0
      %1655 = vmatpush1.msra.mxu0 %v1493
      %1656 = vmatprep.subr.mxu0 0.0
      %1657 = vmatpush1.msra.mxu0 %v1492
      %1658 = vmatprep.subr.mxu0 0.0
      %1659 = vmatpush1.msra.mxu0 %v1491
      %1660 = vmatprep.subr.mxu0 0.0
      %1661 = vmatpush1.msra.mxu0 %v1490
      %1662 = vmatprep.subr.mxu0 0.0
      %1663 = vmatpush1.msra.mxu0 %v1489
      %1664 = vmatprep.subr.mxu0 0.0
      %1665 = vmatpush1.msra.mxu0 %v1488
      %1666 = vmatprep.subr.mxu0 0.0
      %1667 = vmatpush1.msra.mxu0 %v1487
      %1668 = vmatprep.subr.mxu0 0.0
      %1669 = vmatpush1.msra.mxu0 %v1486
      %1670 = vmatprep.subr.mxu0 0.0
      %1671 = vmatpush1.msra.mxu0 %v1485
      %1672 = vmatprep.subr.mxu0 0.0
      %1673 = vmatpush1.msra.mxu0 %v1484
      %1674 = vmatprep.subr.mxu0 0.0
      %1675 = vmatpush1.msra.mxu0 %v1483
      %1676 = vmatprep.subr.mxu0 0.0
      %1677 = vmatpush2.msra.mxu0 0.0
      %1678 = vmatprep.subr.mxu0 0.0
      %1679 = vmatpush2.msra.mxu0 0.0
      %1680 = vmatprep.subr.mxu0 0.0
      %1681 = vmatpush2.msra.mxu0 0.0
      %1682 = vmatprep.subr.mxu0 0.0
      %1683 = vmatpush2.msra.mxu0 0.0
      %1684 = vmatprep.subr.mxu0 0.0
      %1685 = vmatpush2.msra.mxu0 0.0
      %1686 = vmatprep.subr.mxu0 0.0
      %1687 = vmatpush2.msra.mxu0 0.0
      %1688 = vmatprep.subr.mxu0 0.0
      %1689 = vmatpush2.msra.mxu0 0.0
      %1690 = vmatprep.subr.mxu0 0.0
      %1691 = vmatpush2.msra.mxu0 0.0
      %1692 = vmatprep.subr.mxu0 0.0
      %1693 = vmatpush2.msra.mxu0 0.0
      %1694 = vmatprep.subr.mxu0 0.0
      %1695 = vmatpush2.msra.mxu0 0.0
      %1696 = vmatprep.subr.mxu0 0.0
      %1697 = vmatpush2.msra.mxu0 0.0
      %1698 = vmatprep.subr.mxu0 0.0
      %1699 = vmatpush2.msra.mxu0 0.0
      %1700 = vmatprep.subr.mxu0 0.0
      %1701 = vmatpush2.msra.mxu0 0.0
      %1702 = vmatprep.subr.mxu0 0.0
      %1703 = vmatpush2.msra.mxu0 0.0
      %1704 = vmatprep.subr.mxu0 0.0
      %1705 = vmatpush2.msra.mxu0 0.0
      %1706 = vmatprep.subr.mxu0 0.0
      %1707 = vmatpush2.msra.mxu0 0.0
      %1708 = vmatprep.mubr.f32.mxu0 0.0
      %1709 = vmatmul.mubr.f32.gmra.mxu0 %v1397
      %v1710 = vpop.f32.mrf.mxu0
      %v1711 = vadd.f32 %v1566, %v1710
      %v1712 = vpop.f32.mrf.mxu0
      %1713 = vmatprep.mubr.f32.mxu0 0.0
      %1714 = vmatmul.mubr.f32.gmra.mxu0 %v1399
      %v1715 = vpop.f32.mrf.mxu0
      %v1716 = vadd.f32 %v1571, %v1715
      %v1717 = vpop.f32.mrf.mxu0
      %1718 = vmatprep.mubr.f32.mxu0 0.0
      %1719 = vmatmul.mubr.f32.gmra.mxu0 %v1402
      %v1720 = vpop.f32.mrf.mxu0
      %v1721 = vadd.f32 %v1576, %v1720
      %v1722 = vpop.f32.mrf.mxu0
      %1723 = vmatprep.mubr.f32.mxu0 0.0
      %1724 = vmatmul.mubr.f32.gmra.mxu0 %v1404
      %v1725 = vpop.f32.mrf.mxu0
      %v1726 = vadd.f32 %v1581, %v1725
      %v1727 = vpop.f32.mrf.mxu0
      %1728 = vmatprep.mubr.f32.mxu0 0.0
      %1729 = vmatmul.mubr.f32.gmra.mxu0 %v1407
      %v1730 = vpop.f32.mrf.mxu0
      %v1731 = vadd.f32 %v1586, %v1730
      %v1732 = vpop.f32.mrf.mxu0
      %1733 = vmatprep.mubr.f32.mxu0 0.0
      %1734 = vmatmul.mubr.f32.gmra.mxu0 %v1409
      %v1735 = vpop.f32.mrf.mxu0
      %v1736 = vadd.f32 %v1591, %v1735
      %v1737 = vpop.f32.mrf.mxu0
      %1738 = vmatprep.mubr.f32.mxu0 0.0
      %1739 = vmatmul.mubr.f32.gmra.mxu0 %v1412
      %v1740 = vpop.f32.mrf.mxu0
      %v1741 = vadd.f32 %v1596, %v1740
      %v1742 = vpop.f32.mrf.mxu0
      %1743 = vmatprep.mubr.f32.mxu0 0.0
      %1744 = vmatmul.mubr.f32.gmra.mxu0 %v1414
      %v1745 = vpop.f32.mrf.mxu0
      %v1746 = vadd.f32 %v1601, %v1745
      %v1747 = vpop.f32.mrf.mxu0
      %1748 = vmatprep.mubr.f32.mxu0 0.0
      %1749 = vmatmul.mubr.f32.gmra.mxu0 %v1417
      %v1750 = vpop.f32.mrf.mxu0
      %v1751 = vadd.f32 %v1606, %v1750
      %v1752 = vpop.f32.mrf.mxu0
      %1753 = vmatprep.mubr.f32.mxu0 0.0
      %1754 = vmatmul.mubr.f32.gmra.mxu0 %v1419
      %v1755 = vpop.f32.mrf.mxu0
      %v1756 = vadd.f32 %v1611, %v1755
      %v1757 = vpop.f32.mrf.mxu0
      %1758 = vmatprep.mubr.f32.mxu0 0.0
      %1759 = vmatmul.mubr.f32.gmra.mxu0 %v1422
      %v1760 = vpop.f32.mrf.mxu0
      %v1761 = vadd.f32 %v1616, %v1760
      %v1762 = vpop.f32.mrf.mxu0
      %1763 = vmatprep.mubr.f32.mxu0 0.0
      %1764 = vmatmul.mubr.f32.gmra.mxu0 %v1424
      %v1765 = vpop.f32.mrf.mxu0
      %v1766 = vadd.f32 %v1621, %v1765
      %v1767 = vpop.f32.mrf.mxu0
      %1768 = vmatprep.mubr.f32.mxu0 0.0
      %1769 = vmatmul.mubr.f32.gmra.mxu0 %v1427
      %v1770 = vpop.f32.mrf.mxu0
      %v1771 = vadd.f32 %v1626, %v1770
      %v1772 = vpop.f32.mrf.mxu0
      %1773 = vmatprep.mubr.f32.mxu0 0.0
      %1774 = vmatmul.mubr.f32.gmra.mxu0 %v1429
      %v1775 = vpop.f32.mrf.mxu0
      %v1776 = vadd.f32 %v1631, %v1775
      %v1777 = vpop.f32.mrf.mxu0
      %1778 = vmatprep.mubr.f32.mxu0 0.0
      %1779 = vmatmul.mubr.f32.gmra.mxu0 %v1432
      %v1780 = vpop.f32.mrf.mxu0
      %v1781 = vadd.f32 %v1636, %v1780
      %v1782 = vpop.f32.mrf.mxu0
      %1783 = vmatprep.mubr.f32.mxu0 0.0
      %1784 = vmatmul.mubr.f32.gmra.mxu0 %v1434
      %v1785 = vpop.f32.mrf.mxu0
      %v1786 = vadd.f32 %v1641, %v1785
      %v1787 = vpop.f32.mrf.mxu0
      %1788 = vdwg.mxu0
      %v1789 = vadd.f32 %v1212, %v1711
      %v1790 = vadd.f32 %v1217, %v1716
      %v1791 = vadd.f32 %v1222, %v1721
      %v1792 = vadd.f32 %v1227, %v1726
      %v1793 = vadd.f32 %v1232, %v1731
      %v1794 = vadd.f32 %v1237, %v1736
      %v1795 = vadd.f32 %v1242, %v1741
      %v1796 = vadd.f32 %v1247, %v1746
      %v1797 = vadd.f32 %v1252, %v1751
      %v1798 = vadd.f32 %v1257, %v1756
      %v1799 = vadd.f32 %v1262, %v1761
      %v1800 = vadd.f32 %v1267, %v1766
      %v1801 = vadd.f32 %v1272, %v1771
      %v1802 = vadd.f32 %v1277, %v1776
      %v1803 = vadd.f32 %v1282, %v1781
      %v1804 = vadd.f32 %v1287, %v1786
      %1805 = vst [vmem:[%s177] sm:$0xff] %v1789
      %1806 = vst [vmem:[%s177 + $0x8] sm:$0xff] %v1790
      %1807 = vst [vmem:[%s177 + $0x10] sm:$0xff] %v1791
      %1808 = vst [vmem:[%s177 + $0x18] sm:$0xff] %v1792
      %1809 = vst [vmem:[%s177 + $0x20] sm:$0xff] %v1793
      %1810 = vst [vmem:[%s177 + $0x28] sm:$0xff] %v1794
      %1811 = vst [vmem:[%s177 + $0x30] sm:$0xff] %v1795
      %1812 = vst [vmem:[%s177 + $0x38] sm:$0xff] %v1796
      %1813 = vst [vmem:[%s177 + $0x40] sm:$0xff] %v1797
      %1814 = vst [vmem:[%s177 + $0x48] sm:$0xff] %v1798
      %1815 = vst [vmem:[%s177 + $0x50] sm:$0xff] %v1799
      %1816 = vst [vmem:[%s177 + $0x58] sm:$0xff] %v1800
      %1817 = vst [vmem:[%s177 + $0x60] sm:$0xff] %v1801
      %1818 = vst [vmem:[%s177 + $0x68] sm:$0xff] %v1802
      %1819 = vst [vmem:[%s177 + $0x70] sm:$0xff] %v1803
      %1820 = vst [vmem:[%s177 + $0x78] sm:$0xff] %v1804
      %v1821 = vadd.f32 %v1789, %v1790
      %v1822 = vadd.f32 %v1821, %v1791
      %v1823 = vadd.f32 %v1822, %v1792
      %v1824 = vadd.f32 %v1823, %v1793
      %v1825 = vadd.f32 %v1824, %v1794
      %v1826 = vadd.f32 %v1825, %v1795
      %v1827 = vadd.f32 %v1826, %v1796
      %v1828 = vadd.f32 %v1827, %v1797
      %v1829 = vadd.f32 %v1828, %v1798
      %v1830 = vadd.f32 %v1829, %v1799
      %v1831 = vadd.f32 %v1830, %v1800
      %v1832 = vadd.f32 %v1831, %v1801
      %v1833 = vadd.f32 %v1832, %v1802
      %v1834 = vadd.f32 %v1833, %v1803
      %v1835 = vadd.f32 %v1834, %v1804
      %v1836 = vrot.slane %v1835, 4
      %v1837 = vadd.f32 %v1835, %v1836
      %v1838 = vrot.slane %v1837, 2
      %v1839 = vadd.f32 %v1837, %v1838
      %v1840 = vrot.slane %v1839, 1
      %v1841 = vadd.f32 %v1839, %v1840
      %v1842 = vadd.f32 %v1841, 0.0
      %v1843 = vmul.f32 %v1789, %v1789
      %v1844 = vmul.f32 %v1790, %v1790
      %v1845 = vmul.f32 %v1791, %v1791
      %v1846 = vmul.f32 %v1792, %v1792
      %v1847 = vmul.f32 %v1793, %v1793
      %v1848 = vmul.f32 %v1794, %v1794
      %v1849 = vmul.f32 %v1795, %v1795
      %v1850 = vmul.f32 %v1796, %v1796
      %v1851 = vmul.f32 %v1797, %v1797
      %v1852 = vmul.f32 %v1798, %v1798
      %v1853 = vmul.f32 %v1799, %v1799
      %v1854 = vmul.f32 %v1800, %v1800
      %v1855 = vmul.f32 %v1801, %v1801
      %v1856 = vmul.f32 %v1802, %v1802
      %v1857 = vmul.f32 %v1803, %v1803
      %v1858 = vmul.f32 %v1804, %v1804
      %v1859 = vadd.f32 %v1843, %v1844
      %v1860 = vadd.f32 %v1859, %v1845
      %v1861 = vadd.f32 %v1860, %v1846
      %v1862 = vadd.f32 %v1861, %v1847
      %v1863 = vadd.f32 %v1862, %v1848
      %v1864 = vadd.f32 %v1863, %v1849
      %v1865 = vadd.f32 %v1864, %v1850
      %v1866 = vadd.f32 %v1865, %v1851
      %v1867 = vadd.f32 %v1866, %v1852
      %v1868 = vadd.f32 %v1867, %v1853
      %v1869 = vadd.f32 %v1868, %v1854
      %v1870 = vadd.f32 %v1869, %v1855
      %v1871 = vadd.f32 %v1870, %v1856
      %v1872 = vadd.f32 %v1871, %v1857
      %v1873 = vadd.f32 %v1872, %v1858
      %v1874 = vrot.slane %v1873, 4
      %v1875 = vadd.f32 %v1873, %v1874
      %v1876 = vrot.slane %v1875, 2
      %v1877 = vadd.f32 %v1875, %v1876
      %v1878 = vrot.slane %v1877, 1
      %v1879 = vadd.f32 %v1877, %v1878
      %v1880 = vadd.f32 %v1879, 0.0
      %s1881 = scalar_lea.vmem [#allocation2], 192
      %v1882 = vld [vmem:[%s1881] sm:$0xff]
      %v1883 = vld [vmem:[%s1881 + $0x8] sm:$0xff]
      %v1884 = vld [vmem:[%s1881 + $0x10] sm:$0x3]
      %v1885 = vld [vmem:[%s1881 + $0x18] sm:$0xff]
      %v1886 = vld [vmem:[%s1881 + $0x20] sm:$0xff]
      %v1887 = vld [vmem:[%s1881 + $0x28] sm:$0x3]
      %v1888 = vld [vmem:[%s1881 + $0x30] sm:$0xff]
      %v1889 = vld [vmem:[%s1881 + $0x38] sm:$0xff]
      %v1890 = vld [vmem:[%s1881 + $0x40] sm:$0x3]
      %v1891 = vld [vmem:[%s1881 + $0x48] sm:$0xff]
      %v1892 = vld [vmem:[%s1881 + $0x50] sm:$0xff]
      %v1893 = vld [vmem:[%s1881 + $0x58] sm:$0x3]
      %v1894 = vld [vmem:[%s1881 + $0x60] sm:$0xff]
      %v1895 = vld [vmem:[%s1881 + $0x68] sm:$0xff]
      %v1896 = vld [vmem:[%s1881 + $0x70] sm:$0x3]
      %v1897 = vld [vmem:[%s1881 + $0x78] sm:$0xff]
      %v1898 = vld [vmem:[%s1881 + $0x80] sm:$0xff]
      %v1899 = vld [vmem:[%s1881 + $0x88] sm:$0x3]
      %v1900 = vld [vmem:[%s1881 + $0x90] sm:$0xff]
      %v1901 = vld [vmem:[%s1881 + $0x98] sm:$0xff]
      %v1902 = vld [vmem:[%s1881 + $0xa0] sm:$0x3]
      %v1903 = vld [vmem:[%s1881 + $0xa8] sm:$0xff]
      %v1904 = vld [vmem:[%s1881 + $0xb0] sm:$0xff]
      %v1905 = vld [vmem:[%s1881 + $0xb8] sm:$0x3]
      %v1930 = vrot.slane %v1882, 1
      %v1931 = vrot.slane %v1883, 1
      %v1932 = vsel %vm340, %v1930, %v1931
      %v1933 = vrot.slane %v1884, 1
      %v1934 = vsel %vm340, %v1931, %v1933
      %v1935 = vrot.slane %v1885, 1
      %v1936 = vrot.slane %v1886, 1
      %v1937 = vsel %vm340, %v1935, %v1936
      %v1938 = vrot.slane %v1887, 1
      %v1939 = vsel %vm340, %v1936, %v1938
      %v1940 = vrot.slane %v1888, 1
      %v1941 = vrot.slane %v1889, 1
      %v1942 = vsel %vm340, %v1940, %v1941
      %v1943 = vrot.slane %v1890, 1
      %v1944 = vsel %vm340, %v1941, %v1943
      %v1945 = vrot.slane %v1891, 1
      %v1946 = vrot.slane %v1892, 1
      %v1947 = vsel %vm340, %v1945, %v1946
      %v1948 = vrot.slane %v1893, 1
      %v1949 = vsel %vm340, %v1946, %v1948
      %v1950 = vrot.slane %v1894, 1
      %v1951 = vrot.slane %v1895, 1
      %v1952 = vsel %vm340, %v1950, %v1951
      %v1953 = vrot.slane %v1896, 1
      %v1954 = vsel %vm340, %v1951, %v1953
      %v1955 = vrot.slane %v1897, 1
      %v1956 = vrot.slane %v1898, 1
      %v1957 = vsel %vm340, %v1955, %v1956
      %v1958 = vrot.slane %v1899, 1
      %v1959 = vsel %vm340, %v1956, %v1958
      %v1960 = vrot.slane %v1900, 1
      %v1961 = vrot.slane %v1901, 1
      %v1962 = vsel %vm340, %v1960, %v1961
      %v1963 = vrot.slane %v1902, 1
      %v1964 = vsel %vm340, %v1961, %v1963
      %v1965 = vrot.slane %v1903, 1
      %v1966 = vrot.slane %v1904, 1
      %v1967 = vsel %vm340, %v1965, %v1966
      %v1968 = vrot.slane %v1905, 1
      %v1969 = vsel %vm340, %v1966, %v1968
      %v1986 = vrot.slane %v1882, 2
      %v1987 = vrot.slane %v1883, 2
      %v1988 = vsel %vm397, %v1986, %v1987
      %v1989 = vrot.slane %v1884, 2
      %v1990 = vsel %vm397, %v1987, %v1989
      %v1991 = vrot.slane %v1885, 2
      %v1992 = vrot.slane %v1886, 2
      %v1993 = vsel %vm397, %v1991, %v1992
      %v1994 = vrot.slane %v1887, 2
      %v1995 = vsel %vm397, %v1992, %v1994
      %v1996 = vrot.slane %v1888, 2
      %v1997 = vrot.slane %v1889, 2
      %v1998 = vsel %vm397, %v1996, %v1997
      %v1999 = vrot.slane %v1890, 2
      %v2000 = vsel %vm397, %v1997, %v1999
      %v2001 = vrot.slane %v1891, 2
      %v2002 = vrot.slane %v1892, 2
      %v2003 = vsel %vm397, %v2001, %v2002
      %v2004 = vrot.slane %v1893, 2
      %v2005 = vsel %vm397, %v2002, %v2004
      %v2006 = vrot.slane %v1894, 2
      %v2007 = vrot.slane %v1895, 2
      %v2008 = vsel %vm397, %v2006, %v2007
      %v2009 = vrot.slane %v1896, 2
      %v2010 = vsel %vm397, %v2007, %v2009
      %v2011 = vrot.slane %v1897, 2
      %v2012 = vrot.slane %v1898, 2
      %v2013 = vsel %vm397, %v2011, %v2012
      %v2014 = vrot.slane %v1899, 2
      %v2015 = vsel %vm397, %v2012, %v2014
      %v2016 = vrot.slane %v1900, 2
      %v2017 = vrot.slane %v1901, 2
      %v2018 = vsel %vm397, %v2016, %v2017
      %v2019 = vrot.slane %v1902, 2
      %v2020 = vsel %vm397, %v2017, %v2019
      %v2021 = vrot.slane %v1903, 2
      %v2022 = vrot.slane %v1904, 2
      %v2023 = vsel %vm397, %v2021, %v2022
      %v2024 = vrot.slane %v1905, 2
      %v2025 = vsel %vm397, %v2022, %v2024
      %v2042 = vld [vmem:[%s1] sm:$0xff]
      %v2043 = vld [vmem:[%s1 + $0x8] sm:$0xff]
      %v2044 = vld [vmem:[%s1 + $0x10] sm:$0xff]
      %v2045 = vld [vmem:[%s1 + $0x18] sm:$0xff]
      %v2046 = vld [vmem:[%s1 + $0x20] sm:$0xff]
      %v2047 = vld [vmem:[%s1 + $0x28] sm:$0xff]
      %v2048 = vld [vmem:[%s1 + $0x30] sm:$0xff]
      %v2049 = vld [vmem:[%s1 + $0x38] sm:$0xff]
      %v2050 = vld [vmem:[%s1 + $0x40] sm:$0xff]
      %v2051 = vld [vmem:[%s1 + $0x48] sm:$0xff]
      %v2052 = vld [vmem:[%s1 + $0x50] sm:$0xff]
      %v2053 = vld [vmem:[%s1 + $0x58] sm:$0xff]
      %v2054 = vld [vmem:[%s1 + $0x60] sm:$0xff]
      %v2055 = vld [vmem:[%s1 + $0x68] sm:$0xff]
      %v2056 = vld [vmem:[%s1 + $0x70] sm:$0xff]
      %v2057 = vld [vmem:[%s1 + $0x78] sm:$0xff]
      %v2058 = vld [vmem:[%s1 + $0x80] sm:$0xff]
      %v2059 = vld [vmem:[%s1 + $0x88] sm:$0xff]
      %v2060 = vld [vmem:[%s1 + $0x90] sm:$0xff]
      %v2061 = vld [vmem:[%s1 + $0x98] sm:$0xff]
      %v2062 = vld [vmem:[%s1 + $0xa0] sm:$0xff]
      %v2063 = vld [vmem:[%s1 + $0xa8] sm:$0xff]
      %v2064 = vld [vmem:[%s1 + $0xb0] sm:$0xff]
      %v2065 = vld [vmem:[%s1 + $0xb8] sm:$0xff]
      %v2066 = vld [vmem:[%s1 + $0xc0] sm:$0xff]
      %v2067 = vld [vmem:[%s1 + $0xc8] sm:$0xff]
      %v2068 = vld [vmem:[%s1 + $0xd0] sm:$0xff]
      %v2069 = vld [vmem:[%s1 + $0xd8] sm:$0xff]
      %v2070 = vld [vmem:[%s1 + $0xe0] sm:$0xff]
      %v2071 = vld [vmem:[%s1 + $0xe8] sm:$0xff]
      %v2072 = vld [vmem:[%s1 + $0xf0] sm:$0xff]
      %v2073 = vld [vmem:[%s1 + $0xf8] sm:$0xff]
      %v2074 = vld [vmem:[%s1 + $0x100] sm:$0xff]
      %v2075 = vld [vmem:[%s1 + $0x108] sm:$0xff]
      %v2076 = vld [vmem:[%s1 + $0x110] sm:$0xff]
      %v2077 = vld [vmem:[%s1 + $0x118] sm:$0xff]
      %v2078 = vld [vmem:[%s1 + $0x120] sm:$0xff]
      %v2079 = vld [vmem:[%s1 + $0x128] sm:$0xff]
      %v2080 = vld [vmem:[%s1 + $0x130] sm:$0xff]
      %v2081 = vld [vmem:[%s1 + $0x138] sm:$0xff]
      %v2082 = vld [vmem:[%s1 + $0x140] sm:$0xff]
      %v2083 = vld [vmem:[%s1 + $0x148] sm:$0xff]
      %v2084 = vld [vmem:[%s1 + $0x150] sm:$0xff]
      %v2085 = vld [vmem:[%s1 + $0x158] sm:$0xff]
      %v2086 = vld [vmem:[%s1 + $0x160] sm:$0xff]
      %v2087 = vld [vmem:[%s1 + $0x168] sm:$0xff]
      %v2088 = vld [vmem:[%s1 + $0x170] sm:$0xff]
      %v2089 = vld [vmem:[%s1 + $0x178] sm:$0xff]
      %v2090 = vld [vmem:[%s275] sm:$0xff]
      %v2091 = vld [vmem:[%s275 + $0x8] sm:$0xff]
      %v2092 = vld [vmem:[%s275 + $0x10] sm:$0x3]
      %v2093 = vld [vmem:[%s275 + $0x18] sm:$0xff]
      %v2094 = vld [vmem:[%s275 + $0x20] sm:$0xff]
      %v2095 = vld [vmem:[%s275 + $0x28] sm:$0x3]
      %v2096 = vld [vmem:[%s275 + $0x30] sm:$0xff]
      %v2097 = vld [vmem:[%s275 + $0x38] sm:$0xff]
      %v2098 = vld [vmem:[%s275 + $0x40] sm:$0x3]
      %v2099 = vld [vmem:[%s275 + $0x48] sm:$0xff]
      %v2100 = vld [vmem:[%s275 + $0x50] sm:$0xff]
      %v2101 = vld [vmem:[%s275 + $0x58] sm:$0x3]
      %v2102 = vld [vmem:[%s275 + $0x60] sm:$0xff]
      %v2103 = vld [vmem:[%s275 + $0x68] sm:$0xff]
      %v2104 = vld [vmem:[%s275 + $0x70] sm:$0x3]
      %v2105 = vld [vmem:[%s275 + $0x78] sm:$0xff]
      %v2106 = vld [vmem:[%s275 + $0x80] sm:$0xff]
      %v2107 = vld [vmem:[%s275 + $0x88] sm:$0x3]
      %v2108 = vld [vmem:[%s275 + $0x90] sm:$0xff]
      %v2109 = vld [vmem:[%s275 + $0x98] sm:$0xff]
      %v2110 = vld [vmem:[%s275 + $0xa0] sm:$0x3]
      %v2111 = vld [vmem:[%s275 + $0xa8] sm:$0xff]
      %v2112 = vld [vmem:[%s275 + $0xb0] sm:$0xff]
      %v2113 = vld [vmem:[%s275 + $0xb8] sm:$0x3]
      %v2138 = vrot.slane %v2090, 1
      %v2139 = vrot.slane %v2091, 1
      %v2140 = vsel %vm340, %v2138, %v2139
      %v2141 = vrot.slane %v2092, 1
      %v2142 = vsel %vm340, %v2139, %v2141
      %v2143 = vrot.slane %v2093, 1
      %v2144 = vrot.slane %v2094, 1
      %v2145 = vsel %vm340, %v2143, %v2144
      %v2146 = vrot.slane %v2095, 1
      %v2147 = vsel %vm340, %v2144, %v2146
      %v2148 = vrot.slane %v2096, 1
      %v2149 = vrot.slane %v2097, 1
      %v2150 = vsel %vm340, %v2148, %v2149
      %v2151 = vrot.slane %v2098, 1
      %v2152 = vsel %vm340, %v2149, %v2151
      %v2153 = vrot.slane %v2099, 1
      %v2154 = vrot.slane %v2100, 1
      %v2155 = vsel %vm340, %v2153, %v2154
      %v2156 = vrot.slane %v2101, 1
      %v2157 = vsel %vm340, %v2154, %v2156
      %v2158 = vrot.slane %v2102, 1
      %v2159 = vrot.slane %v2103, 1
      %v2160 = vsel %vm340, %v2158, %v2159
      %v2161 = vrot.slane %v2104, 1
      %v2162 = vsel %vm340, %v2159, %v2161
      %v2163 = vrot.slane %v2105, 1
      %v2164 = vrot.slane %v2106, 1
      %v2165 = vsel %vm340, %v2163, %v2164
      %v2166 = vrot.slane %v2107, 1
      %v2167 = vsel %vm340, %v2164, %v2166
      %v2168 = vrot.slane %v2108, 1
      %v2169 = vrot.slane %v2109, 1
      %v2170 = vsel %vm340, %v2168, %v2169
      %v2171 = vrot.slane %v2110, 1
      %v2172 = vsel %vm340, %v2169, %v2171
      %v2173 = vrot.slane %v2111, 1
      %v2174 = vrot.slane %v2112, 1
      %v2175 = vsel %vm340, %v2173, %v2174
      %v2176 = vrot.slane %v2113, 1
      %v2177 = vsel %vm340, %v2174, %v2176
      %v2194 = vrot.slane %v2090, 2
      %v2195 = vrot.slane %v2091, 2
      %v2196 = vsel %vm397, %v2194, %v2195
      %v2197 = vrot.slane %v2092, 2
      %v2198 = vsel %vm397, %v2195, %v2197
      %v2199 = vrot.slane %v2093, 2
      %v2200 = vrot.slane %v2094, 2
      %v2201 = vsel %vm397, %v2199, %v2200
      %v2202 = vrot.slane %v2095, 2
      %v2203 = vsel %vm397, %v2200, %v2202
      %v2204 = vrot.slane %v2096, 2
      %v2205 = vrot.slane %v2097, 2
      %v2206 = vsel %vm397, %v2204, %v2205
      %v2207 = vrot.slane %v2098, 2
      %v2208 = vsel %vm397, %v2205, %v2207
      %v2209 = vrot.slane %v2099, 2
      %v2210 = vrot.slane %v2100, 2
      %v2211 = vsel %vm397, %v2209, %v2210
      %v2212 = vrot.slane %v2101, 2
      %v2213 = vsel %vm397, %v2210, %v2212
      %v2214 = vrot.slane %v2102, 2
      %v2215 = vrot.slane %v2103, 2
      %v2216 = vsel %vm397, %v2214, %v2215
      %v2217 = vrot.slane %v2104, 2
      %v2218 = vsel %vm397, %v2215, %v2217
      %v2219 = vrot.slane %v2105, 2
      %v2220 = vrot.slane %v2106, 2
      %v2221 = vsel %vm397, %v2219, %v2220
      %v2222 = vrot.slane %v2107, 2
      %v2223 = vsel %vm397, %v2220, %v2222
      %v2224 = vrot.slane %v2108, 2
      %v2225 = vrot.slane %v2109, 2
      %v2226 = vsel %vm397, %v2224, %v2225
      %v2227 = vrot.slane %v2110, 2
      %v2228 = vsel %vm397, %v2225, %v2227
      %v2229 = vrot.slane %v2111, 2
      %v2230 = vrot.slane %v2112, 2
      %v2231 = vsel %vm397, %v2229, %v2230
      %v2232 = vrot.slane %v2113, 2
      %v2233 = vsel %vm397, %v2230, %v2232
      %v2250 = vld [vmem:[%s1 + $0x180] sm:$0xff]
      %v2251 = vld [vmem:[%s1 + $0x188] sm:$0xff]
      %v2252 = vld [vmem:[%s1 + $0x190] sm:$0xff]
      %v2253 = vld [vmem:[%s1 + $0x198] sm:$0xff]
      %v2254 = vld [vmem:[%s1 + $0x1a0] sm:$0xff]
      %v2255 = vld [vmem:[%s1 + $0x1a8] sm:$0xff]
      %v2256 = vld [vmem:[%s1 + $0x1b0] sm:$0xff]
      %v2257 = vld [vmem:[%s1 + $0x1b8] sm:$0xff]
      %v2258 = vld [vmem:[%s1 + $0x1c0] sm:$0xff]
      %v2259 = vld [vmem:[%s1 + $0x1c8] sm:$0xff]
      %v2260 = vld [vmem:[%s1 + $0x1d0] sm:$0xff]
      %v2261 = vld [vmem:[%s1 + $0x1d8] sm:$0xff]
      %v2262 = vld [vmem:[%s1 + $0x1e0] sm:$0xff]
      %v2263 = vld [vmem:[%s1 + $0x1e8] sm:$0xff]
      %v2264 = vld [vmem:[%s1 + $0x1f0] sm:$0xff]
      %v2265 = vld [vmem:[%s1 + $0x1f8] sm:$0xff]
      %v2266 = vld [vmem:[%s1 + $0x200] sm:$0xff]
      %v2267 = vld [vmem:[%s1 + $0x208] sm:$0xff]
      %v2268 = vld [vmem:[%s1 + $0x210] sm:$0xff]
      %v2269 = vld [vmem:[%s1 + $0x218] sm:$0xff]
      %v2270 = vld [vmem:[%s1 + $0x220] sm:$0xff]
      %v2271 = vld [vmem:[%s1 + $0x228] sm:$0xff]
      %v2272 = vld [vmem:[%s1 + $0x230] sm:$0xff]
      %v2273 = vld [vmem:[%s1 + $0x238] sm:$0xff]
      %v2274 = vld [vmem:[%s1 + $0x240] sm:$0xff]
      %v2275 = vld [vmem:[%s1 + $0x248] sm:$0xff]
      %v2276 = vld [vmem:[%s1 + $0x250] sm:$0xff]
      %v2277 = vld [vmem:[%s1 + $0x258] sm:$0xff]
      %v2278 = vld [vmem:[%s1 + $0x260] sm:$0xff]
      %v2279 = vld [vmem:[%s1 + $0x268] sm:$0xff]
      %v2280 = vld [vmem:[%s1 + $0x270] sm:$0xff]
      %v2281 = vld [vmem:[%s1 + $0x278] sm:$0xff]
      %v2282 = vld [vmem:[%s1 + $0x280] sm:$0xff]
      %v2283 = vld [vmem:[%s1 + $0x288] sm:$0xff]
      %v2284 = vld [vmem:[%s1 + $0x290] sm:$0xff]
      %v2285 = vld [vmem:[%s1 + $0x298] sm:$0xff]
      %v2286 = vld [vmem:[%s1 + $0x2a0] sm:$0xff]
      %v2287 = vld [vmem:[%s1 + $0x2a8] sm:$0xff]
      %v2288 = vld [vmem:[%s1 + $0x2b0] sm:$0xff]
      %v2289 = vld [vmem:[%s1 + $0x2b8] sm:$0xff]
      %v2290 = vld [vmem:[%s1 + $0x2c0] sm:$0xff]
      %v2291 = vld [vmem:[%s1 + $0x2c8] sm:$0xff]
      %v2292 = vld [vmem:[%s1 + $0x2d0] sm:$0xff]
      %v2293 = vld [vmem:[%s1 + $0x2d8] sm:$0xff]
      %v2294 = vld [vmem:[%s1 + $0x2e0] sm:$0xff]
      %v2295 = vld [vmem:[%s1 + $0x2e8] sm:$0xff]
      %v2296 = vld [vmem:[%s1 + $0x2f0] sm:$0xff]
      %v2297 = vld [vmem:[%s1 + $0x2f8] sm:$0xff]
      %2298 = vmatprep.subr.mxu0 0.0
      %2299 = vmatpush1.msra.mxu0 %v2265
      %2300 = vmatprep.subr.mxu0 0.0
      %2301 = vmatpush1.msra.mxu0 %v2264
      %2302 = vmatprep.subr.mxu0 0.0
      %2303 = vmatpush1.msra.mxu0 %v2263
      %2304 = vmatprep.subr.mxu0 0.0
      %2305 = vmatpush1.msra.mxu0 %v2262
      %2306 = vmatprep.subr.mxu0 0.0
      %2307 = vmatpush1.msra.mxu0 %v2261
      %2308 = vmatprep.subr.mxu0 0.0
      %2309 = vmatpush1.msra.mxu0 %v2260
      %2310 = vmatprep.subr.mxu0 0.0
      %2311 = vmatpush1.msra.mxu0 %v2259
      %2312 = vmatprep.subr.mxu0 0.0
      %2313 = vmatpush1.msra.mxu0 %v2258
      %2314 = vmatprep.subr.mxu0 0.0
      %2315 = vmatpush1.msra.mxu0 %v2257
      %2316 = vmatprep.subr.mxu0 0.0
      %2317 = vmatpush1.msra.mxu0 %v2256
      %2318 = vmatprep.subr.mxu0 0.0
      %2319 = vmatpush1.msra.mxu0 %v2255
      %2320 = vmatprep.subr.mxu0 0.0
      %2321 = vmatpush1.msra.mxu0 %v2254
      %2322 = vmatprep.subr.mxu0 0.0
      %2323 = vmatpush1.msra.mxu0 %v2253
      %2324 = vmatprep.subr.mxu0 0.0
      %2325 = vmatpush1.msra.mxu0 %v2252
      %2326 = vmatprep.subr.mxu0 0.0
      %2327 = vmatpush1.msra.mxu0 %v2251
      %2328 = vmatprep.subr.mxu0 0.0
      %2329 = vmatpush1.msra.mxu0 %v2250
      %2330 = vmatprep.subr.mxu0 0.0
      %2331 = vmatpush2.msra.mxu0 %v2281
      %2332 = vmatprep.subr.mxu0 0.0
      %2333 = vmatpush2.msra.mxu0 %v2280
      %2334 = vmatprep.subr.mxu0 0.0
      %2335 = vmatpush2.msra.mxu0 %v2279
      %2336 = vmatprep.subr.mxu0 0.0
      %2337 = vmatpush2.msra.mxu0 %v2278
      %2338 = vmatprep.subr.mxu0 0.0
      %2339 = vmatpush2.msra.mxu0 %v2277
      %2340 = vmatprep.subr.mxu0 0.0
      %2341 = vmatpush2.msra.mxu0 %v2276
      %2342 = vmatprep.subr.mxu0 0.0
      %2343 = vmatpush2.msra.mxu0 %v2275
      %2344 = vmatprep.subr.mxu0 0.0
      %2345 = vmatpush2.msra.mxu0 %v2274
      %2346 = vmatprep.subr.mxu0 0.0
      %2347 = vmatpush2.msra.mxu0 %v2273
      %2348 = vmatprep.subr.mxu0 0.0
      %2349 = vmatpush2.msra.mxu0 %v2272
      %2350 = vmatprep.subr.mxu0 0.0
      %2351 = vmatpush2.msra.mxu0 %v2271
      %2352 = vmatprep.subr.mxu0 0.0
      %2353 = vmatpush2.msra.mxu0 %v2270
      %2354 = vmatprep.subr.mxu0 0.0
      %2355 = vmatpush2.msra.mxu0 %v2269
      %2356 = vmatprep.subr.mxu0 0.0
      %2357 = vmatpush2.msra.mxu0 %v2268
      %2358 = vmatprep.subr.mxu0 0.0
      %2359 = vmatpush2.msra.mxu0 %v2267
      %2360 = vmatprep.subr.mxu0 0.0
      %2361 = vmatpush2.msra.mxu0 %v2266
      %2362 = vmatprep.mubr.f32.mxu0 %v2140
      %2363 = vmatmul.mubr.f32.gmra.mxu0 %v2090
      %v2364 = vpop.f32.mrf.mxu0
      %v2365 = vadd.f32 0.0, %v2364
      %v2366 = vpop.f32.mrf.mxu0
      %2367 = vmatprep.mubr.f32.mxu0 %v2142
      %2368 = vmatmul.mubr.f32.gmra.mxu0 %v2091
      %v2369 = vpop.f32.mrf.mxu0
      %v2370 = vadd.f32 0.0, %v2369
      %v2371 = vpop.f32.mrf.mxu0
      %2372 = vmatprep.mubr.f32.mxu0 %v2145
      %2373 = vmatmul.mubr.f32.gmra.mxu0 %v2093
      %v2374 = vpop.f32.mrf.mxu0
      %v2375 = vadd.f32 0.0, %v2374
      %v2376 = vpop.f32.mrf.mxu0
      %2377 = vmatprep.mubr.f32.mxu0 %v2147
      %2378 = vmatmul.mubr.f32.gmra.mxu0 %v2094
      %v2379 = vpop.f32.mrf.mxu0
      %v2380 = vadd.f32 0.0, %v2379
      %v2381 = vpop.f32.mrf.mxu0
      %2382 = vmatprep.mubr.f32.mxu0 %v2150
      %2383 = vmatmul.mubr.f32.gmra.mxu0 %v2096
      %v2384 = vpop.f32.mrf.mxu0
      %v2385 = vadd.f32 0.0, %v2384
      %v2386 = vpop.f32.mrf.mxu0
      %2387 = vmatprep.mubr.f32.mxu0 %v2152
      %2388 = vmatmul.mubr.f32.gmra.mxu0 %v2097
      %v2389 = vpop.f32.mrf.mxu0
      %v2390 = vadd.f32 0.0, %v2389
      %v2391 = vpop.f32.mrf.mxu0
      %2392 = vmatprep.mubr.f32.mxu0 %v2155
      %2393 = vmatmul.mubr.f32.gmra.mxu0 %v2099
      %v2394 = vpop.f32.mrf.mxu0
      %v2395 = vadd.f32 0.0, %v2394
      %v2396 = vpop.f32.mrf.mxu0
      %2397 = vmatprep.mubr.f32.mxu0 %v2157
      %2398 = vmatmul.mubr.f32.gmra.mxu0 %v2100
      %v2399 = vpop.f32.mrf.mxu0
      %v2400 = vadd.f32 0.0, %v2399
      %v2401 = vpop.f32.mrf.mxu0
      %2402 = vmatprep.mubr.f32.mxu0 %v2160
      %2403 = vmatmul.mubr.f32.gmra.mxu0 %v2102
      %v2404 = vpop.f32.mrf.mxu0
      %v2405 = vadd.f32 0.0, %v2404
      %v2406 = vpop.f32.mrf.mxu0
      %2407 = vmatprep.mubr.f32.mxu0 %v2162
      %2408 = vmatmul.mubr.f32.gmra.mxu0 %v2103
      %v2409 = vpop.f32.mrf.mxu0
      %v2410 = vadd.f32 0.0, %v2409
      %v2411 = vpop.f32.mrf.mxu0
      %2412 = vmatprep.mubr.f32.mxu0 %v2165
      %2413 = vmatmul.mubr.f32.gmra.mxu0 %v2105
      %v2414 = vpop.f32.mrf.mxu0
      %v2415 = vadd.f32 0.0, %v2414
      %v2416 = vpop.f32.mrf.mxu0
      %2417 = vmatprep.mubr.f32.mxu0 %v2167
      %2418 = vmatmul.mubr.f32.gmra.mxu0 %v2106
      %v2419 = vpop.f32.mrf.mxu0
      %v2420 = vadd.f32 0.0, %v2419
      %v2421 = vpop.f32.mrf.mxu0
      %2422 = vmatprep.mubr.f32.mxu0 %v2170
      %2423 = vmatmul.mubr.f32.gmra.mxu0 %v2108
      %v2424 = vpop.f32.mrf.mxu0
      %v2425 = vadd.f32 0.0, %v2424
      %v2426 = vpop.f32.mrf.mxu0
      %2427 = vmatprep.mubr.f32.mxu0 %v2172
      %2428 = vmatmul.mubr.f32.gmra.mxu0 %v2109
      %v2429 = vpop.f32.mrf.mxu0
      %v2430 = vadd.f32 0.0, %v2429
      %v2431 = vpop.f32.mrf.mxu0
      %2432 = vmatprep.mubr.f32.mxu0 %v2175
      %2433 = vmatmul.mubr.f32.gmra.mxu0 %v2111
      %v2434 = vpop.f32.mrf.mxu0
      %v2435 = vadd.f32 0.0, %v2434
      %v2436 = vpop.f32.mrf.mxu0
      %2437 = vmatprep.mubr.f32.mxu0 %v2177
      %2438 = vmatmul.mubr.f32.gmra.mxu0 %v2112
      %v2439 = vpop.f32.mrf.mxu0
      %v2440 = vadd.f32 0.0, %v2439
      %v2441 = vpop.f32.mrf.mxu0
      %2442 = vdwg.mxu0
      %2443 = vmatprep.subr.mxu0 0.0
      %2444 = vmatpush1.msra.mxu0 %v2297
      %2445 = vmatprep.subr.mxu0 0.0
      %2446 = vmatpush1.msra.mxu0 %v2296
      %2447 = vmatprep.subr.mxu0 0.0
      %2448 = vmatpush1.msra.mxu0 %v2295
      %2449 = vmatprep.subr.mxu0 0.0
      %2450 = vmatpush1.msra.mxu0 %v2294
      %2451 = vmatprep.subr.mxu0 0.0
      %2452 = vmatpush1.msra.mxu0 %v2293
      %2453 = vmatprep.subr.mxu0 0.0
      %2454 = vmatpush1.msra.mxu0 %v2292
      %2455 = vmatprep.subr.mxu0 0.0
      %2456 = vmatpush1.msra.mxu0 %v2291
      %2457 = vmatprep.subr.mxu0 0.0
      %2458 = vmatpush1.msra.mxu0 %v2290
      %2459 = vmatprep.subr.mxu0 0.0
      %2460 = vmatpush1.msra.mxu0 %v2289
      %2461 = vmatprep.subr.mxu0 0.0
      %2462 = vmatpush1.msra.mxu0 %v2288
      %2463 = vmatprep.subr.mxu0 0.0
      %2464 = vmatpush1.msra.mxu0 %v2287
      %2465 = vmatprep.subr.mxu0 0.0
      %2466 = vmatpush1.msra.mxu0 %v2286
      %2467 = vmatprep.subr.mxu0 0.0
      %2468 = vmatpush1.msra.mxu0 %v2285
      %2469 = vmatprep.subr.mxu0 0.0
      %2470 = vmatpush1.msra.mxu0 %v2284
      %2471 = vmatprep.subr.mxu0 0.0
      %2472 = vmatpush1.msra.mxu0 %v2283
      %2473 = vmatprep.subr.mxu0 0.0
      %2474 = vmatpush1.msra.mxu0 %v2282
      %2475 = vmatprep.subr.mxu0 0.0
      %2476 = vmatpush2.msra.mxu0 0.0
      %2477 = vmatprep.subr.mxu0 0.0
      %2478 = vmatpush2.msra.mxu0 0.0
      %2479 = vmatprep.subr.mxu0 0.0
      %2480 = vmatpush2.msra.mxu0 0.0
      %2481 = vmatprep.subr.mxu0 0.0
      %2482 = vmatpush2.msra.mxu0 0.0
      %2483 = vmatprep.subr.mxu0 0.0
      %2484 = vmatpush2.msra.mxu0 0.0
      %2485 = vmatprep.subr.mxu0 0.0
      %2486 = vmatpush2.msra.mxu0 0.0
      %2487 = vmatprep.subr.mxu0 0.0
      %2488 = vmatpush2.msra.mxu0 0.0
      %2489 = vmatprep.subr.mxu0 0.0
      %2490 = vmatpush2.msra.mxu0 0.0
      %2491 = vmatprep.subr.mxu0 0.0
      %2492 = vmatpush2.msra.mxu0 0.0
      %2493 = vmatprep.subr.mxu0 0.0
      %2494 = vmatpush2.msra.mxu0 0.0
      %2495 = vmatprep.subr.mxu0 0.0
      %2496 = vmatpush2.msra.mxu0 0.0
      %2497 = vmatprep.subr.mxu0 0.0
      %2498 = vmatpush2.msra.mxu0 0.0
      %2499 = vmatprep.subr.mxu0 0.0
      %2500 = vmatpush2.msra.mxu0 0.0
      %2501 = vmatprep.subr.mxu0 0.0
      %2502 = vmatpush2.msra.mxu0 0.0
      %2503 = vmatprep.subr.mxu0 0.0
      %2504 = vmatpush2.msra.mxu0 0.0
      %2505 = vmatprep.subr.mxu0 0.0
      %2506 = vmatpush2.msra.mxu0 0.0
      %2507 = vmatprep.mubr.f32.mxu0 0.0
      %2508 = vmatmul.mubr.f32.gmra.mxu0 %v2196
      %v2509 = vpop.f32.mrf.mxu0
      %v2510 = vadd.f32 %v2365, %v2509
      %v2511 = vpop.f32.mrf.mxu0
      %2512 = vmatprep.mubr.f32.mxu0 0.0
      %2513 = vmatmul.mubr.f32.gmra.mxu0 %v2198
      %v2514 = vpop.f32.mrf.mxu0
      %v2515 = vadd.f32 %v2370, %v2514
      %v2516 = vpop.f32.mrf.mxu0
      %2517 = vmatprep.mubr.f32.mxu0 0.0
      %2518 = vmatmul.mubr.f32.gmra.mxu0 %v2201
      %v2519 = vpop.f32.mrf.mxu0
      %v2520 = vadd.f32 %v2375, %v2519
      %v2521 = vpop.f32.mrf.mxu0
      %2522 = vmatprep.mubr.f32.mxu0 0.0
      %2523 = vmatmul.mubr.f32.gmra.mxu0 %v2203
      %v2524 = vpop.f32.mrf.mxu0
      %v2525 = vadd.f32 %v2380, %v2524
      %v2526 = vpop.f32.mrf.mxu0
      %2527 = vmatprep.mubr.f32.mxu0 0.0
      %2528 = vmatmul.mubr.f32.gmra.mxu0 %v2206
      %v2529 = vpop.f32.mrf.mxu0
      %v2530 = vadd.f32 %v2385, %v2529
      %v2531 = vpop.f32.mrf.mxu0
      %2532 = vmatprep.mubr.f32.mxu0 0.0
      %2533 = vmatmul.mubr.f32.gmra.mxu0 %v2208
      %v2534 = vpop.f32.mrf.mxu0
      %v2535 = vadd.f32 %v2390, %v2534
      %v2536 = vpop.f32.mrf.mxu0
      %2537 = vmatprep.mubr.f32.mxu0 0.0
      %2538 = vmatmul.mubr.f32.gmra.mxu0 %v2211
      %v2539 = vpop.f32.mrf.mxu0
      %v2540 = vadd.f32 %v2395, %v2539
      %v2541 = vpop.f32.mrf.mxu0
      %2542 = vmatprep.mubr.f32.mxu0 0.0
      %2543 = vmatmul.mubr.f32.gmra.mxu0 %v2213
      %v2544 = vpop.f32.mrf.mxu0
      %v2545 = vadd.f32 %v2400, %v2544
      %v2546 = vpop.f32.mrf.mxu0
      %2547 = vmatprep.mubr.f32.mxu0 0.0
      %2548 = vmatmul.mubr.f32.gmra.mxu0 %v2216
      %v2549 = vpop.f32.mrf.mxu0
      %v2550 = vadd.f32 %v2405, %v2549
      %v2551 = vpop.f32.mrf.mxu0
      %2552 = vmatprep.mubr.f32.mxu0 0.0
      %2553 = vmatmul.mubr.f32.gmra.mxu0 %v2218
      %v2554 = vpop.f32.mrf.mxu0
      %v2555 = vadd.f32 %v2410, %v2554
      %v2556 = vpop.f32.mrf.mxu0
      %2557 = vmatprep.mubr.f32.mxu0 0.0
      %2558 = vmatmul.mubr.f32.gmra.mxu0 %v2221
      %v2559 = vpop.f32.mrf.mxu0
      %v2560 = vadd.f32 %v2415, %v2559
      %v2561 = vpop.f32.mrf.mxu0
      %2562 = vmatprep.mubr.f32.mxu0 0.0
      %2563 = vmatmul.mubr.f32.gmra.mxu0 %v2223
      %v2564 = vpop.f32.mrf.mxu0
      %v2565 = vadd.f32 %v2420, %v2564
      %v2566 = vpop.f32.mrf.mxu0
      %2567 = vmatprep.mubr.f32.mxu0 0.0
      %2568 = vmatmul.mubr.f32.gmra.mxu0 %v2226
      %v2569 = vpop.f32.mrf.mxu0
      %v2570 = vadd.f32 %v2425, %v2569
      %v2571 = vpop.f32.mrf.mxu0
      %2572 = vmatprep.mubr.f32.mxu0 0.0
      %2573 = vmatmul.mubr.f32.gmra.mxu0 %v2228
      %v2574 = vpop.f32.mrf.mxu0
      %v2575 = vadd.f32 %v2430, %v2574
      %v2576 = vpop.f32.mrf.mxu0
      %2577 = vmatprep.mubr.f32.mxu0 0.0
      %2578 = vmatmul.mubr.f32.gmra.mxu0 %v2231
      %v2579 = vpop.f32.mrf.mxu0
      %v2580 = vadd.f32 %v2435, %v2579
      %v2581 = vpop.f32.mrf.mxu0
      %2582 = vmatprep.mubr.f32.mxu0 0.0
      %2583 = vmatmul.mubr.f32.gmra.mxu0 %v2233
      %v2584 = vpop.f32.mrf.mxu0
      %v2585 = vadd.f32 %v2440, %v2584
      %v2586 = vpop.f32.mrf.mxu0
      %2587 = vdwg.mxu0
      %2588 = vmatprep.subr.mxu0 0.0
      %2589 = vmatpush1.msra.mxu0 %v2057
      %2590 = vmatprep.subr.mxu0 0.0
      %2591 = vmatpush1.msra.mxu0 %v2056
      %2592 = vmatprep.subr.mxu0 0.0
      %2593 = vmatpush1.msra.mxu0 %v2055
      %2594 = vmatprep.subr.mxu0 0.0
      %2595 = vmatpush1.msra.mxu0 %v2054
      %2596 = vmatprep.subr.mxu0 0.0
      %2597 = vmatpush1.msra.mxu0 %v2053
      %2598 = vmatprep.subr.mxu0 0.0
      %2599 = vmatpush1.msra.mxu0 %v2052
      %2600 = vmatprep.subr.mxu0 0.0
      %2601 = vmatpush1.msra.mxu0 %v2051
      %2602 = vmatprep.subr.mxu0 0.0
      %2603 = vmatpush1.msra.mxu0 %v2050
      %2604 = vmatprep.subr.mxu0 0.0
      %2605 = vmatpush1.msra.mxu0 %v2049
      %2606 = vmatprep.subr.mxu0 0.0
      %2607 = vmatpush1.msra.mxu0 %v2048
      %2608 = vmatprep.subr.mxu0 0.0
      %2609 = vmatpush1.msra.mxu0 %v2047
      %2610 = vmatprep.subr.mxu0 0.0
      %2611 = vmatpush1.msra.mxu0 %v2046
      %2612 = vmatprep.subr.mxu0 0.0
      %2613 = vmatpush1.msra.mxu0 %v2045
      %2614 = vmatprep.subr.mxu0 0.0
      %2615 = vmatpush1.msra.mxu0 %v2044
      %2616 = vmatprep.subr.mxu0 0.0
      %2617 = vmatpush1.msra.mxu0 %v2043
      %2618 = vmatprep.subr.mxu0 0.0
      %2619 = vmatpush1.msra.mxu0 %v2042
      %2620 = vmatprep.subr.mxu0 0.0
      %2621 = vmatpush2.msra.mxu0 %v2073
      %2622 = vmatprep.subr.mxu0 0.0
      %2623 = vmatpush2.msra.mxu0 %v2072
      %2624 = vmatprep.subr.mxu0 0.0
      %2625 = vmatpush2.msra.mxu0 %v2071
      %2626 = vmatprep.subr.mxu0 0.0
      %2627 = vmatpush2.msra.mxu0 %v2070
      %2628 = vmatprep.subr.mxu0 0.0
      %2629 = vmatpush2.msra.mxu0 %v2069
      %2630 = vmatprep.subr.mxu0 0.0
      %2631 = vmatpush2.msra.mxu0 %v2068
      %2632 = vmatprep.subr.mxu0 0.0
      %2633 = vmatpush2.msra.mxu0 %v2067
      %2634 = vmatprep.subr.mxu0 0.0
      %2635 = vmatpush2.msra.mxu0 %v2066
      %2636 = vmatprep.subr.mxu0 0.0
      %2637 = vmatpush2.msra.mxu0 %v2065
      %2638 = vmatprep.subr.mxu0 0.0
      %2639 = vmatpush2.msra.mxu0 %v2064
      %2640 = vmatprep.subr.mxu0 0.0
      %2641 = vmatpush2.msra.mxu0 %v2063
      %2642 = vmatprep.subr.mxu0 0.0
      %2643 = vmatpush2.msra.mxu0 %v2062
      %2644 = vmatprep.subr.mxu0 0.0
      %2645 = vmatpush2.msra.mxu0 %v2061
      %2646 = vmatprep.subr.mxu0 0.0
      %2647 = vmatpush2.msra.mxu0 %v2060
      %2648 = vmatprep.subr.mxu0 0.0
      %2649 = vmatpush2.msra.mxu0 %v2059
      %2650 = vmatprep.subr.mxu0 0.0
      %2651 = vmatpush2.msra.mxu0 %v2058
      %2652 = vmatprep.mubr.f32.mxu0 %v1932
      %2653 = vmatmul.mubr.f32.gmra.mxu0 %v1882
      %v2654 = vpop.f32.mrf.mxu0
      %v2655 = vadd.f32 %v2510, %v2654
      %v2656 = vpop.f32.mrf.mxu0
      %2657 = vmatprep.mubr.f32.mxu0 %v1934
      %2658 = vmatmul.mubr.f32.gmra.mxu0 %v1883
      %v2659 = vpop.f32.mrf.mxu0
      %v2660 = vadd.f32 %v2515, %v2659
      %v2661 = vpop.f32.mrf.mxu0
      %2662 = vmatprep.mubr.f32.mxu0 %v1937
      %2663 = vmatmul.mubr.f32.gmra.mxu0 %v1885
      %v2664 = vpop.f32.mrf.mxu0
      %v2665 = vadd.f32 %v2520, %v2664
      %v2666 = vpop.f32.mrf.mxu0
      %2667 = vmatprep.mubr.f32.mxu0 %v1939
      %2668 = vmatmul.mubr.f32.gmra.mxu0 %v1886
      %v2669 = vpop.f32.mrf.mxu0
      %v2670 = vadd.f32 %v2525, %v2669
      %v2671 = vpop.f32.mrf.mxu0
      %2672 = vmatprep.mubr.f32.mxu0 %v1942
      %2673 = vmatmul.mubr.f32.gmra.mxu0 %v1888
      %v2674 = vpop.f32.mrf.mxu0
      %v2675 = vadd.f32 %v2530, %v2674
      %v2676 = vpop.f32.mrf.mxu0
      %2677 = vmatprep.mubr.f32.mxu0 %v1944
      %2678 = vmatmul.mubr.f32.gmra.mxu0 %v1889
      %v2679 = vpop.f32.mrf.mxu0
      %v2680 = vadd.f32 %v2535, %v2679
      %v2681 = vpop.f32.mrf.mxu0
      %2682 = vmatprep.mubr.f32.mxu0 %v1947
      %2683 = vmatmul.mubr.f32.gmra.mxu0 %v1891
      %v2684 = vpop.f32.mrf.mxu0
      %v2685 = vadd.f32 %v2540, %v2684
      %v2686 = vpop.f32.mrf.mxu0
      %2687 = vmatprep.mubr.f32.mxu0 %v1949
      %2688 = vmatmul.mubr.f32.gmra.mxu0 %v1892
      %v2689 = vpop.f32.mrf.mxu0
      %v2690 = vadd.f32 %v2545, %v2689
      %v2691 = vpop.f32.mrf.mxu0
      %2692 = vmatprep.mubr.f32.mxu0 %v1952
      %2693 = vmatmul.mubr.f32.gmra.mxu0 %v1894
      %v2694 = vpop.f32.mrf.mxu0
      %v2695 = vadd.f32 %v2550, %v2694
      %v2696 = vpop.f32.mrf.mxu0
      %2697 = vmatprep.mubr.f32.mxu0 %v1954
      %2698 = vmatmul.mubr.f32.gmra.mxu0 %v1895
      %v2699 = vpop.f32.mrf.mxu0
      %v2700 = vadd.f32 %v2555, %v2699
      %v2701 = vpop.f32.mrf.mxu0
      %2702 = vmatprep.mubr.f32.mxu0 %v1957
      %2703 = vmatmul.mubr.f32.gmra.mxu0 %v1897
      %v2704 = vpop.f32.mrf.mxu0
      %v2705 = vadd.f32 %v2560, %v2704
      %v2706 = vpop.f32.mrf.mxu0
      %2707 = vmatprep.mubr.f32.mxu0 %v1959
      %2708 = vmatmul.mubr.f32.gmra.mxu0 %v1898
      %v2709 = vpop.f32.mrf.mxu0
      %v2710 = vadd.f32 %v2565, %v2709
      %v2711 = vpop.f32.mrf.mxu0
      %2712 = vmatprep.mubr.f32.mxu0 %v1962
      %2713 = vmatmul.mubr.f32.gmra.mxu0 %v1900
      %v2714 = vpop.f32.mrf.mxu0
      %v2715 = vadd.f32 %v2570, %v2714
      %v2716 = vpop.f32.mrf.mxu0
      %2717 = vmatprep.mubr.f32.mxu0 %v1964
      %2718 = vmatmul.mubr.f32.gmra.mxu0 %v1901
      %v2719 = vpop.f32.mrf.mxu0
      %v2720 = vadd.f32 %v2575, %v2719
      %v2721 = vpop.f32.mrf.mxu0
      %2722 = vmatprep.mubr.f32.mxu0 %v1967
      %2723 = vmatmul.mubr.f32.gmra.mxu0 %v1903
      %v2724 = vpop.f32.mrf.mxu0
      %v2725 = vadd.f32 %v2580, %v2724
      %v2726 = vpop.f32.mrf.mxu0
      %2727 = vmatprep.mubr.f32.mxu0 %v1969
      %2728 = vmatmul.mubr.f32.gmra.mxu0 %v1904
      %v2729 = vpop.f32.mrf.mxu0
      %v2730 = vadd.f32 %v2585, %v2729
      %v2731 = vpop.f32.mrf.mxu0
      %2732 = vdwg.mxu0
      %2733 = vmatprep.subr.mxu0 0.0
      %2734 = vmatpush1.msra.mxu0 %v2089
      %2735 = vmatprep.subr.mxu0 0.0
      %2736 = vmatpush1.msra.mxu0 %v2088
      %2737 = vmatprep.subr.mxu0 0.0
      %2738 = vmatpush1.msra.mxu0 %v2087
      %2739 = vmatprep.subr.mxu0 0.0
      %2740 = vmatpush1.msra.mxu0 %v2086
      %2741 = vmatprep.subr.mxu0 0.0
      %2742 = vmatpush1.msra.mxu0 %v2085
      %2743 = vmatprep.subr.mxu0 0.0
      %2744 = vmatpush1.msra.mxu0 %v2084
      %2745 = vmatprep.subr.mxu0 0.0
      %2746 = vmatpush1.msra.mxu0 %v2083
      %2747 = vmatprep.subr.mxu0 0.0
      %2748 = vmatpush1.msra.mxu0 %v2082
      %2749 = vmatprep.subr.mxu0 0.0
      %2750 = vmatpush1.msra.mxu0 %v2081
      %2751 = vmatprep.subr.mxu0 0.0
      %2752 = vmatpush1.msra.mxu0 %v2080
      %2753 = vmatprep.subr.mxu0 0.0
      %2754 = vmatpush1.msra.mxu0 %v2079
      %2755 = vmatprep.subr.mxu0 0.0
      %2756 = vmatpush1.msra.mxu0 %v2078
      %2757 = vmatprep.subr.mxu0 0.0
      %2758 = vmatpush1.msra.mxu0 %v2077
      %2759 = vmatprep.subr.mxu0 0.0
      %2760 = vmatpush1.msra.mxu0 %v2076
      %2761 = vmatprep.subr.mxu0 0.0
      %2762 = vmatpush1.msra.mxu0 %v2075
      %2763 = vmatprep.subr.mxu0 0.0
      %2764 = vmatpush1.msra.mxu0 %v2074
      %2765 = vmatprep.subr.mxu0 0.0
      %2766 = vmatpush2.msra.mxu0 0.0
      %2767 = vmatprep.subr.mxu0 0.0
      %2768 = vmatpush2.msra.mxu0 0.0
      %2769 = vmatprep.subr.mxu0 0.0
      %2770 = vmatpush2.msra.mxu0 0.0
      %2771 = vmatprep.subr.mxu0 0.0
      %2772 = vmatpush2.msra.mxu0 0.0
      %2773 = vmatprep.subr.mxu0 0.0
      %2774 = vmatpush2.msra.mxu0 0.0
      %2775 = vmatprep.subr.mxu0 0.0
      %2776 = vmatpush2.msra.mxu0 0.0
      %2777 = vmatprep.subr.mxu0 0.0
      %2778 = vmatpush2.msra.mxu0 0.0
      %2779 = vmatprep.subr.mxu0 0.0
      %2780 = vmatpush2.msra.mxu0 0.0
      %2781 = vmatprep.subr.mxu0 0.0
      %2782 = vmatpush2.msra.mxu0 0.0
      %2783 = vmatprep.subr.mxu0 0.0
      %2784 = vmatpush2.msra.mxu0 0.0
      %2785 = vmatprep.subr.mxu0 0.0
      %2786 = vmatpush2.msra.mxu0 0.0
      %2787 = vmatprep.subr.mxu0 0.0
      %2788 = vmatpush2.msra.mxu0 0.0
      %2789 = vmatprep.subr.mxu0 0.0
      %2790 = vmatpush2.msra.mxu0 0.0
      %2791 = vmatprep.subr.mxu0 0.0
      %2792 = vmatpush2.msra.mxu0 0.0
      %2793 = vmatprep.subr.mxu0 0.0
      %2794 = vmatpush2.msra.mxu0 0.0
      %2795 = vmatprep.subr.mxu0 0.0
      %2796 = vmatpush2.msra.mxu0 0.0
      %2797 = vmatprep.mubr.f32.mxu0 0.0
      %2798 = vmatmul.mubr.f32.gmra.mxu0 %v1988
      %v2799 = vpop.f32.mrf.mxu0
      %v2800 = vadd.f32 %v2655, %v2799
      %v2801 = vpop.f32.mrf.mxu0
      %2802 = vmatprep.mubr.f32.mxu0 0.0
      %2803 = vmatmul.mubr.f32.gmra.mxu0 %v1990
      %v2804 = vpop.f32.mrf.mxu0
      %v2805 = vadd.f32 %v2660, %v2804
      %v2806 = vpop.f32.mrf.mxu0
      %2807 = vmatprep.mubr.f32.mxu0 0.0
      %2808 = vmatmul.mubr.f32.gmra.mxu0 %v1993
      %v2809 = vpop.f32.mrf.mxu0
      %v2810 = vadd.f32 %v2665, %v2809
      %v2811 = vpop.f32.mrf.mxu0
      %2812 = vmatprep.mubr.f32.mxu0 0.0
      %2813 = vmatmul.mubr.f32.gmra.mxu0 %v1995
      %v2814 = vpop.f32.mrf.mxu0
      %v2815 = vadd.f32 %v2670, %v2814
      %v2816 = vpop.f32.mrf.mxu0
      %2817 = vmatprep.mubr.f32.mxu0 0.0
      %2818 = vmatmul.mubr.f32.gmra.mxu0 %v1998
      %v2819 = vpop.f32.mrf.mxu0
      %v2820 = vadd.f32 %v2675, %v2819
      %v2821 = vpop.f32.mrf.mxu0
      %2822 = vmatprep.mubr.f32.mxu0 0.0
      %2823 = vmatmul.mubr.f32.gmra.mxu0 %v2000
      %v2824 = vpop.f32.mrf.mxu0
      %v2825 = vadd.f32 %v2680, %v2824
      %v2826 = vpop.f32.mrf.mxu0
      %2827 = vmatprep.mubr.f32.mxu0 0.0
      %2828 = vmatmul.mubr.f32.gmra.mxu0 %v2003
      %v2829 = vpop.f32.mrf.mxu0
      %v2830 = vadd.f32 %v2685, %v2829
      %v2831 = vpop.f32.mrf.mxu0
      %2832 = vmatprep.mubr.f32.mxu0 0.0
      %2833 = vmatmul.mubr.f32.gmra.mxu0 %v2005
      %v2834 = vpop.f32.mrf.mxu0
      %v2835 = vadd.f32 %v2690, %v2834
      %v2836 = vpop.f32.mrf.mxu0
      %2837 = vmatprep.mubr.f32.mxu0 0.0
      %2838 = vmatmul.mubr.f32.gmra.mxu0 %v2008
      %v2839 = vpop.f32.mrf.mxu0
      %v2840 = vadd.f32 %v2695, %v2839
      %v2841 = vpop.f32.mrf.mxu0
      %2842 = vmatprep.mubr.f32.mxu0 0.0
      %2843 = vmatmul.mubr.f32.gmra.mxu0 %v2010
      %v2844 = vpop.f32.mrf.mxu0
      %v2845 = vadd.f32 %v2700, %v2844
      %v2846 = vpop.f32.mrf.mxu0
      %2847 = vmatprep.mubr.f32.mxu0 0.0
      %2848 = vmatmul.mubr.f32.gmra.mxu0 %v2013
      %v2849 = vpop.f32.mrf.mxu0
      %v2850 = vadd.f32 %v2705, %v2849
      %v2851 = vpop.f32.mrf.mxu0
      %2852 = vmatprep.mubr.f32.mxu0 0.0
      %2853 = vmatmul.mubr.f32.gmra.mxu0 %v2015
      %v2854 = vpop.f32.mrf.mxu0
      %v2855 = vadd.f32 %v2710, %v2854
      %v2856 = vpop.f32.mrf.mxu0
      %2857 = vmatprep.mubr.f32.mxu0 0.0
      %2858 = vmatmul.mubr.f32.gmra.mxu0 %v2018
      %v2859 = vpop.f32.mrf.mxu0
      %v2860 = vadd.f32 %v2715, %v2859
      %v2861 = vpop.f32.mrf.mxu0
      %2862 = vmatprep.mubr.f32.mxu0 0.0
      %2863 = vmatmul.mubr.f32.gmra.mxu0 %v2020
      %v2864 = vpop.f32.mrf.mxu0
      %v2865 = vadd.f32 %v2720, %v2864
      %v2866 = vpop.f32.mrf.mxu0
      %2867 = vmatprep.mubr.f32.mxu0 0.0
      %2868 = vmatmul.mubr.f32.gmra.mxu0 %v2023
      %v2869 = vpop.f32.mrf.mxu0
      %v2870 = vadd.f32 %v2725, %v2869
      %v2871 = vpop.f32.mrf.mxu0
      %2872 = vmatprep.mubr.f32.mxu0 0.0
      %2873 = vmatmul.mubr.f32.gmra.mxu0 %v2025
      %v2874 = vpop.f32.mrf.mxu0
      %v2875 = vadd.f32 %v2730, %v2874
      %v2876 = vpop.f32.mrf.mxu0
      %2877 = vdwg.mxu0
      %s2878 = scalar_lea.vmem [#allocation2], 240
      %v2879 = vld [vmem:[%s2878] sm:$0xff]
      %v2880 = vld [vmem:[%s2878 + $0x8] sm:$0xff]
      %v2881 = vld [vmem:[%s2878 + $0x10] sm:$0x3]
      %v2882 = vld [vmem:[%s2878 + $0x18] sm:$0xff]
      %v2883 = vld [vmem:[%s2878 + $0x20] sm:$0xff]
      %v2884 = vld [vmem:[%s2878 + $0x28] sm:$0x3]
      %v2885 = vld [vmem:[%s2878 + $0x30] sm:$0xff]
      %v2886 = vld [vmem:[%s2878 + $0x38] sm:$0xff]
      %v2887 = vld [vmem:[%s2878 + $0x40] sm:$0x3]
      %v2888 = vld [vmem:[%s2878 + $0x48] sm:$0xff]
      %v2889 = vld [vmem:[%s2878 + $0x50] sm:$0xff]
      %v2890 = vld [vmem:[%s2878 + $0x58] sm:$0x3]
      %v2891 = vld [vmem:[%s2878 + $0x60] sm:$0xff]
      %v2892 = vld [vmem:[%s2878 + $0x68] sm:$0xff]
      %v2893 = vld [vmem:[%s2878 + $0x70] sm:$0x3]
      %v2894 = vld [vmem:[%s2878 + $0x78] sm:$0xff]
      %v2895 = vld [vmem:[%s2878 + $0x80] sm:$0xff]
      %v2896 = vld [vmem:[%s2878 + $0x88] sm:$0x3]
      %v2897 = vld [vmem:[%s2878 + $0x90] sm:$0xff]
      %v2898 = vld [vmem:[%s2878 + $0x98] sm:$0xff]
      %v2899 = vld [vmem:[%s2878 + $0xa0] sm:$0x3]
      %v2900 = vld [vmem:[%s2878 + $0xa8] sm:$0xff]
      %v2901 = vld [vmem:[%s2878 + $0xb0] sm:$0xff]
      %v2902 = vld [vmem:[%s2878 + $0xb8] sm:$0x3]
      %v2927 = vrot.slane %v2879, 1
      %v2928 = vrot.slane %v2880, 1
      %v2929 = vsel %vm340, %v2927, %v2928
      %v2930 = vrot.slane %v2881, 1
      %v2931 = vsel %vm340, %v2928, %v2930
      %v2932 = vrot.slane %v2882, 1
      %v2933 = vrot.slane %v2883, 1
      %v2934 = vsel %vm340, %v2932, %v2933
      %v2935 = vrot.slane %v2884, 1
      %v2936 = vsel %vm340, %v2933, %v2935
      %v2937 = vrot.slane %v2885, 1
      %v2938 = vrot.slane %v2886, 1
      %v2939 = vsel %vm340, %v2937, %v2938
      %v2940 = vrot.slane %v2887, 1
      %v2941 = vsel %vm340, %v2938, %v2940
      %v2942 = vrot.slane %v2888, 1
      %v2943 = vrot.slane %v2889, 1
      %v2944 = vsel %vm340, %v2942, %v2943
      %v2945 = vrot.slane %v2890, 1
      %v2946 = vsel %vm340, %v2943, %v2945
      %v2947 = vrot.slane %v2891, 1
      %v2948 = vrot.slane %v2892, 1
      %v2949 = vsel %vm340, %v2947, %v2948
      %v2950 = vrot.slane %v2893, 1
      %v2951 = vsel %vm340, %v2948, %v2950
      %v2952 = vrot.slane %v2894, 1
      %v2953 = vrot.slane %v2895, 1
      %v2954 = vsel %vm340, %v2952, %v2953
      %v2955 = vrot.slane %v2896, 1
      %v2956 = vsel %vm340, %v2953, %v2955
      %v2957 = vrot.slane %v2897, 1
      %v2958 = vrot.slane %v2898, 1
      %v2959 = vsel %vm340, %v2957, %v2958
      %v2960 = vrot.slane %v2899, 1
      %v2961 = vsel %vm340, %v2958, %v2960
      %v2962 = vrot.slane %v2900, 1
      %v2963 = vrot.slane %v2901, 1
      %v2964 = vsel %vm340, %v2962, %v2963
      %v2965 = vrot.slane %v2902, 1
      %v2966 = vsel %vm340, %v2963, %v2965
      %v2983 = vrot.slane %v2879, 2
      %v2984 = vrot.slane %v2880, 2
      %v2985 = vsel %vm397, %v2983, %v2984
      %v2986 = vrot.slane %v2881, 2
      %v2987 = vsel %vm397, %v2984, %v2986
      %v2988 = vrot.slane %v2882, 2
      %v2989 = vrot.slane %v2883, 2
      %v2990 = vsel %vm397, %v2988, %v2989
      %v2991 = vrot.slane %v2884, 2
      %v2992 = vsel %vm397, %v2989, %v2991
      %v2993 = vrot.slane %v2885, 2
      %v2994 = vrot.slane %v2886, 2
      %v2995 = vsel %vm397, %v2993, %v2994
      %v2996 = vrot.slane %v2887, 2
      %v2997 = vsel %vm397, %v2994, %v2996
      %v2998 = vrot.slane %v2888, 2
      %v2999 = vrot.slane %v2889, 2
      %v3000 = vsel %vm397, %v2998, %v2999
      %v3001 = vrot.slane %v2890, 2
      %v3002 = vsel %vm397, %v2999, %v3001
      %v3003 = vrot.slane %v2891, 2
      %v3004 = vrot.slane %v2892, 2
      %v3005 = vsel %vm397, %v3003, %v3004
      %v3006 = vrot.slane %v2893, 2
      %v3007 = vsel %vm397, %v3004, %v3006
      %v3008 = vrot.slane %v2894, 2
      %v3009 = vrot.slane %v2895, 2
      %v3010 = vsel %vm397, %v3008, %v3009
      %v3011 = vrot.slane %v2896, 2
      %v3012 = vsel %vm397, %v3009, %v3011
      %v3013 = vrot.slane %v2897, 2
      %v3014 = vrot.slane %v2898, 2
      %v3015 = vsel %vm397, %v3013, %v3014
      %v3016 = vrot.slane %v2899, 2
      %v3017 = vsel %vm397, %v3014, %v3016
      %v3018 = vrot.slane %v2900, 2
      %v3019 = vrot.slane %v2901, 2
      %v3020 = vsel %vm397, %v3018, %v3019
      %v3021 = vrot.slane %v2902, 2
      %v3022 = vsel %vm397, %v3019, %v3021
      %v3039 = vld [vmem:[%s1 + $0x300] sm:$0xff]
      %v3040 = vld [vmem:[%s1 + $0x308] sm:$0xff]
      %v3041 = vld [vmem:[%s1 + $0x310] sm:$0xff]
      %v3042 = vld [vmem:[%s1 + $0x318] sm:$0xff]
      %v3043 = vld [vmem:[%s1 + $0x320] sm:$0xff]
      %v3044 = vld [vmem:[%s1 + $0x328] sm:$0xff]
      %v3045 = vld [vmem:[%s1 + $0x330] sm:$0xff]
      %v3046 = vld [vmem:[%s1 + $0x338] sm:$0xff]
      %v3047 = vld [vmem:[%s1 + $0x340] sm:$0xff]
      %v3048 = vld [vmem:[%s1 + $0x348] sm:$0xff]
      %v3049 = vld [vmem:[%s1 + $0x350] sm:$0xff]
      %v3050 = vld [vmem:[%s1 + $0x358] sm:$0xff]
      %v3051 = vld [vmem:[%s1 + $0x360] sm:$0xff]
      %v3052 = vld [vmem:[%s1 + $0x368] sm:$0xff]
      %v3053 = vld [vmem:[%s1 + $0x370] sm:$0xff]
      %v3054 = vld [vmem:[%s1 + $0x378] sm:$0xff]
      %v3055 = vld [vmem:[%s1 + $0x380] sm:$0xff]
      %v3056 = vld [vmem:[%s1 + $0x388] sm:$0xff]
      %v3057 = vld [vmem:[%s1 + $0x390] sm:$0xff]
      %v3058 = vld [vmem:[%s1 + $0x398] sm:$0xff]
      %v3059 = vld [vmem:[%s1 + $0x3a0] sm:$0xff]
      %v3060 = vld [vmem:[%s1 + $0x3a8] sm:$0xff]
      %v3061 = vld [vmem:[%s1 + $0x3b0] sm:$0xff]
      %v3062 = vld [vmem:[%s1 + $0x3b8] sm:$0xff]
      %v3063 = vld [vmem:[%s1 + $0x3c0] sm:$0xff]
      %v3064 = vld [vmem:[%s1 + $0x3c8] sm:$0xff]
      %v3065 = vld [vmem:[%s1 + $0x3d0] sm:$0xff]
      %v3066 = vld [vmem:[%s1 + $0x3d8] sm:$0xff]
      %v3067 = vld [vmem:[%s1 + $0x3e0] sm:$0xff]
      %v3068 = vld [vmem:[%s1 + $0x3e8] sm:$0xff]
      %v3069 = vld [vmem:[%s1 + $0x3f0] sm:$0xff]
      %v3070 = vld [vmem:[%s1 + $0x3f8] sm:$0xff]
      %v3071 = vld [vmem:[%s1 + $0x400] sm:$0xff]
      %v3072 = vld [vmem:[%s1 + $0x408] sm:$0xff]
      %v3073 = vld [vmem:[%s1 + $0x410] sm:$0xff]
      %v3074 = vld [vmem:[%s1 + $0x418] sm:$0xff]
      %v3075 = vld [vmem:[%s1 + $0x420] sm:$0xff]
      %v3076 = vld [vmem:[%s1 + $0x428] sm:$0xff]
      %v3077 = vld [vmem:[%s1 + $0x430] sm:$0xff]
      %v3078 = vld [vmem:[%s1 + $0x438] sm:$0xff]
      %v3079 = vld [vmem:[%s1 + $0x440] sm:$0xff]
      %v3080 = vld [vmem:[%s1 + $0x448] sm:$0xff]
      %v3081 = vld [vmem:[%s1 + $0x450] sm:$0xff]
      %v3082 = vld [vmem:[%s1 + $0x458] sm:$0xff]
      %v3083 = vld [vmem:[%s1 + $0x460] sm:$0xff]
      %v3084 = vld [vmem:[%s1 + $0x468] sm:$0xff]
      %v3085 = vld [vmem:[%s1 + $0x470] sm:$0xff]
      %v3086 = vld [vmem:[%s1 + $0x478] sm:$0xff]
      %3087 = vmatprep.subr.mxu0 0.0
      %3088 = vmatpush1.msra.mxu0 %v3054
      %3089 = vmatprep.subr.mxu0 0.0
      %3090 = vmatpush1.msra.mxu0 %v3053
      %3091 = vmatprep.subr.mxu0 0.0
      %3092 = vmatpush1.msra.mxu0 %v3052
      %3093 = vmatprep.subr.mxu0 0.0
      %3094 = vmatpush1.msra.mxu0 %v3051
      %3095 = vmatprep.subr.mxu0 0.0
      %3096 = vmatpush1.msra.mxu0 %v3050
      %3097 = vmatprep.subr.mxu0 0.0
      %3098 = vmatpush1.msra.mxu0 %v3049
      %3099 = vmatprep.subr.mxu0 0.0
      %3100 = vmatpush1.msra.mxu0 %v3048
      %3101 = vmatprep.subr.mxu0 0.0
      %3102 = vmatpush1.msra.mxu0 %v3047
      %3103 = vmatprep.subr.mxu0 0.0
      %3104 = vmatpush1.msra.mxu0 %v3046
      %3105 = vmatprep.subr.mxu0 0.0
      %3106 = vmatpush1.msra.mxu0 %v3045
      %3107 = vmatprep.subr.mxu0 0.0
      %3108 = vmatpush1.msra.mxu0 %v3044
      %3109 = vmatprep.subr.mxu0 0.0
      %3110 = vmatpush1.msra.mxu0 %v3043
      %3111 = vmatprep.subr.mxu0 0.0
      %3112 = vmatpush1.msra.mxu0 %v3042
      %3113 = vmatprep.subr.mxu0 0.0
      %3114 = vmatpush1.msra.mxu0 %v3041
      %3115 = vmatprep.subr.mxu0 0.0
      %3116 = vmatpush1.msra.mxu0 %v3040
      %3117 = vmatprep.subr.mxu0 0.0
      %3118 = vmatpush1.msra.mxu0 %v3039
      %3119 = vmatprep.subr.mxu0 0.0
      %3120 = vmatpush2.msra.mxu0 %v3070
      %3121 = vmatprep.subr.mxu0 0.0
      %3122 = vmatpush2.msra.mxu0 %v3069
      %3123 = vmatprep.subr.mxu0 0.0
      %3124 = vmatpush2.msra.mxu0 %v3068
      %3125 = vmatprep.subr.mxu0 0.0
      %3126 = vmatpush2.msra.mxu0 %v3067
      %3127 = vmatprep.subr.mxu0 0.0
      %3128 = vmatpush2.msra.mxu0 %v3066
      %3129 = vmatprep.subr.mxu0 0.0
      %3130 = vmatpush2.msra.mxu0 %v3065
      %3131 = vmatprep.subr.mxu0 0.0
      %3132 = vmatpush2.msra.mxu0 %v3064
      %3133 = vmatprep.subr.mxu0 0.0
      %3134 = vmatpush2.msra.mxu0 %v3063
      %3135 = vmatprep.subr.mxu0 0.0
      %3136 = vmatpush2.msra.mxu0 %v3062
      %3137 = vmatprep.subr.mxu0 0.0
      %3138 = vmatpush2.msra.mxu0 %v3061
      %3139 = vmatprep.subr.mxu0 0.0
      %3140 = vmatpush2.msra.mxu0 %v3060
      %3141 = vmatprep.subr.mxu0 0.0
      %3142 = vmatpush2.msra.mxu0 %v3059
      %3143 = vmatprep.subr.mxu0 0.0
      %3144 = vmatpush2.msra.mxu0 %v3058
      %3145 = vmatprep.subr.mxu0 0.0
      %3146 = vmatpush2.msra.mxu0 %v3057
      %3147 = vmatprep.subr.mxu0 0.0
      %3148 = vmatpush2.msra.mxu0 %v3056
      %3149 = vmatprep.subr.mxu0 0.0
      %3150 = vmatpush2.msra.mxu0 %v3055
      %3151 = vmatprep.mubr.f32.mxu0 %v2929
      %3152 = vmatmul.mubr.f32.gmra.mxu0 %v2879
      %v3153 = vpop.f32.mrf.mxu0
      %v3154 = vadd.f32 0.0, %v3153
      %v3155 = vpop.f32.mrf.mxu0
      %3156 = vmatprep.mubr.f32.mxu0 %v2931
      %3157 = vmatmul.mubr.f32.gmra.mxu0 %v2880
      %v3158 = vpop.f32.mrf.mxu0
      %v3159 = vadd.f32 0.0, %v3158
      %v3160 = vpop.f32.mrf.mxu0
      %3161 = vmatprep.mubr.f32.mxu0 %v2934
      %3162 = vmatmul.mubr.f32.gmra.mxu0 %v2882
      %v3163 = vpop.f32.mrf.mxu0
      %v3164 = vadd.f32 0.0, %v3163
      %v3165 = vpop.f32.mrf.mxu0
      %3166 = vmatprep.mubr.f32.mxu0 %v2936
      %3167 = vmatmul.mubr.f32.gmra.mxu0 %v2883
      %v3168 = vpop.f32.mrf.mxu0
      %v3169 = vadd.f32 0.0, %v3168
      %v3170 = vpop.f32.mrf.mxu0
      %3171 = vmatprep.mubr.f32.mxu0 %v2939
      %3172 = vmatmul.mubr.f32.gmra.mxu0 %v2885
      %v3173 = vpop.f32.mrf.mxu0
      %v3174 = vadd.f32 0.0, %v3173
      %v3175 = vpop.f32.mrf.mxu0
      %3176 = vmatprep.mubr.f32.mxu0 %v2941
      %3177 = vmatmul.mubr.f32.gmra.mxu0 %v2886
      %v3178 = vpop.f32.mrf.mxu0
      %v3179 = vadd.f32 0.0, %v3178
      %v3180 = vpop.f32.mrf.mxu0
      %3181 = vmatprep.mubr.f32.mxu0 %v2944
      %3182 = vmatmul.mubr.f32.gmra.mxu0 %v2888
      %v3183 = vpop.f32.mrf.mxu0
      %v3184 = vadd.f32 0.0, %v3183
      %v3185 = vpop.f32.mrf.mxu0
      %3186 = vmatprep.mubr.f32.mxu0 %v2946
      %3187 = vmatmul.mubr.f32.gmra.mxu0 %v2889
      %v3188 = vpop.f32.mrf.mxu0
      %v3189 = vadd.f32 0.0, %v3188
      %v3190 = vpop.f32.mrf.mxu0
      %3191 = vmatprep.mubr.f32.mxu0 %v2949
      %3192 = vmatmul.mubr.f32.gmra.mxu0 %v2891
      %v3193 = vpop.f32.mrf.mxu0
      %v3194 = vadd.f32 0.0, %v3193
      %v3195 = vpop.f32.mrf.mxu0
      %3196 = vmatprep.mubr.f32.mxu0 %v2951
      %3197 = vmatmul.mubr.f32.gmra.mxu0 %v2892
      %v3198 = vpop.f32.mrf.mxu0
      %v3199 = vadd.f32 0.0, %v3198
      %v3200 = vpop.f32.mrf.mxu0
      %3201 = vmatprep.mubr.f32.mxu0 %v2954
      %3202 = vmatmul.mubr.f32.gmra.mxu0 %v2894
      %v3203 = vpop.f32.mrf.mxu0
      %v3204 = vadd.f32 0.0, %v3203
      %v3205 = vpop.f32.mrf.mxu0
      %3206 = vmatprep.mubr.f32.mxu0 %v2956
      %3207 = vmatmul.mubr.f32.gmra.mxu0 %v2895
      %v3208 = vpop.f32.mrf.mxu0
      %v3209 = vadd.f32 0.0, %v3208
      %v3210 = vpop.f32.mrf.mxu0
      %3211 = vmatprep.mubr.f32.mxu0 %v2959
      %3212 = vmatmul.mubr.f32.gmra.mxu0 %v2897
      %v3213 = vpop.f32.mrf.mxu0
      %v3214 = vadd.f32 0.0, %v3213
      %v3215 = vpop.f32.mrf.mxu0
      %3216 = vmatprep.mubr.f32.mxu0 %v2961
      %3217 = vmatmul.mubr.f32.gmra.mxu0 %v2898
      %v3218 = vpop.f32.mrf.mxu0
      %v3219 = vadd.f32 0.0, %v3218
      %v3220 = vpop.f32.mrf.mxu0
      %3221 = vmatprep.mubr.f32.mxu0 %v2964
      %3222 = vmatmul.mubr.f32.gmra.mxu0 %v2900
      %v3223 = vpop.f32.mrf.mxu0
      %v3224 = vadd.f32 0.0, %v3223
      %v3225 = vpop.f32.mrf.mxu0
      %3226 = vmatprep.mubr.f32.mxu0 %v2966
      %3227 = vmatmul.mubr.f32.gmra.mxu0 %v2901
      %v3228 = vpop.f32.mrf.mxu0
      %v3229 = vadd.f32 0.0, %v3228
      %v3230 = vpop.f32.mrf.mxu0
      %3231 = vdwg.mxu0
      %3232 = vmatprep.subr.mxu0 0.0
      %3233 = vmatpush1.msra.mxu0 %v3086
      %3234 = vmatprep.subr.mxu0 0.0
      %3235 = vmatpush1.msra.mxu0 %v3085
      %3236 = vmatprep.subr.mxu0 0.0
      %3237 = vmatpush1.msra.mxu0 %v3084
      %3238 = vmatprep.subr.mxu0 0.0
      %3239 = vmatpush1.msra.mxu0 %v3083
      %3240 = vmatprep.subr.mxu0 0.0
      %3241 = vmatpush1.msra.mxu0 %v3082
      %3242 = vmatprep.subr.mxu0 0.0
      %3243 = vmatpush1.msra.mxu0 %v3081
      %3244 = vmatprep.subr.mxu0 0.0
      %3245 = vmatpush1.msra.mxu0 %v3080
      %3246 = vmatprep.subr.mxu0 0.0
      %3247 = vmatpush1.msra.mxu0 %v3079
      %3248 = vmatprep.subr.mxu0 0.0
      %3249 = vmatpush1.msra.mxu0 %v3078
      %3250 = vmatprep.subr.mxu0 0.0
      %3251 = vmatpush1.msra.mxu0 %v3077
      %3252 = vmatprep.subr.mxu0 0.0
      %3253 = vmatpush1.msra.mxu0 %v3076
      %3254 = vmatprep.subr.mxu0 0.0
      %3255 = vmatpush1.msra.mxu0 %v3075
      %3256 = vmatprep.subr.mxu0 0.0
      %3257 = vmatpush1.msra.mxu0 %v3074
      %3258 = vmatprep.subr.mxu0 0.0
      %3259 = vmatpush1.msra.mxu0 %v3073
      %3260 = vmatprep.subr.mxu0 0.0
      %3261 = vmatpush1.msra.mxu0 %v3072
      %3262 = vmatprep.subr.mxu0 0.0
      %3263 = vmatpush1.msra.mxu0 %v3071
      %3264 = vmatprep.subr.mxu0 0.0
      %3265 = vmatpush2.msra.mxu0 0.0
      %3266 = vmatprep.subr.mxu0 0.0
      %3267 = vmatpush2.msra.mxu0 0.0
      %3268 = vmatprep.subr.mxu0 0.0
      %3269 = vmatpush2.msra.mxu0 0.0
      %3270 = vmatprep.subr.mxu0 0.0
      %3271 = vmatpush2.msra.mxu0 0.0
      %3272 = vmatprep.subr.mxu0 0.0
      %3273 = vmatpush2.msra.mxu0 0.0
      %3274 = vmatprep.subr.mxu0 0.0
      %3275 = vmatpush2.msra.mxu0 0.0
      %3276 = vmatprep.subr.mxu0 0.0
      %3277 = vmatpush2.msra.mxu0 0.0
      %3278 = vmatprep.subr.mxu0 0.0
      %3279 = vmatpush2.msra.mxu0 0.0
      %3280 = vmatprep.subr.mxu0 0.0
      %3281 = vmatpush2.msra.mxu0 0.0
      %3282 = vmatprep.subr.mxu0 0.0
      %3283 = vmatpush2.msra.mxu0 0.0
      %3284 = vmatprep.subr.mxu0 0.0
      %3285 = vmatpush2.msra.mxu0 0.0
      %3286 = vmatprep.subr.mxu0 0.0
      %3287 = vmatpush2.msra.mxu0 0.0
      %3288 = vmatprep.subr.mxu0 0.0
      %3289 = vmatpush2.msra.mxu0 0.0
      %3290 = vmatprep.subr.mxu0 0.0
      %3291 = vmatpush2.msra.mxu0 0.0
      %3292 = vmatprep.subr.mxu0 0.0
      %3293 = vmatpush2.msra.mxu0 0.0
      %3294 = vmatprep.subr.mxu0 0.0
      %3295 = vmatpush2.msra.mxu0 0.0
      %3296 = vmatprep.mubr.f32.mxu0 0.0
      %3297 = vmatmul.mubr.f32.gmra.mxu0 %v2985
      %v3298 = vpop.f32.mrf.mxu0
      %v3299 = vadd.f32 %v3154, %v3298
      %v3300 = vpop.f32.mrf.mxu0
      %3301 = vmatprep.mubr.f32.mxu0 0.0
      %3302 = vmatmul.mubr.f32.gmra.mxu0 %v2987
      %v3303 = vpop.f32.mrf.mxu0
      %v3304 = vadd.f32 %v3159, %v3303
      %v3305 = vpop.f32.mrf.mxu0
      %3306 = vmatprep.mubr.f32.mxu0 0.0
      %3307 = vmatmul.mubr.f32.gmra.mxu0 %v2990
      %v3308 = vpop.f32.mrf.mxu0
      %v3309 = vadd.f32 %v3164, %v3308
      %v3310 = vpop.f32.mrf.mxu0
      %3311 = vmatprep.mubr.f32.mxu0 0.0
      %3312 = vmatmul.mubr.f32.gmra.mxu0 %v2992
      %v3313 = vpop.f32.mrf.mxu0
      %v3314 = vadd.f32 %v3169, %v3313
      %v3315 = vpop.f32.mrf.mxu0
      %3316 = vmatprep.mubr.f32.mxu0 0.0
      %3317 = vmatmul.mubr.f32.gmra.mxu0 %v2995
      %v3318 = vpop.f32.mrf.mxu0
      %v3319 = vadd.f32 %v3174, %v3318
      %v3320 = vpop.f32.mrf.mxu0
      %3321 = vmatprep.mubr.f32.mxu0 0.0
      %3322 = vmatmul.mubr.f32.gmra.mxu0 %v2997
      %v3323 = vpop.f32.mrf.mxu0
      %v3324 = vadd.f32 %v3179, %v3323
      %v3325 = vpop.f32.mrf.mxu0
      %3326 = vmatprep.mubr.f32.mxu0 0.0
      %3327 = vmatmul.mubr.f32.gmra.mxu0 %v3000
      %v3328 = vpop.f32.mrf.mxu0
      %v3329 = vadd.f32 %v3184, %v3328
      %v3330 = vpop.f32.mrf.mxu0
      %3331 = vmatprep.mubr.f32.mxu0 0.0
      %3332 = vmatmul.mubr.f32.gmra.mxu0 %v3002
      %v3333 = vpop.f32.mrf.mxu0
      %v3334 = vadd.f32 %v3189, %v3333
      %v3335 = vpop.f32.mrf.mxu0
      %3336 = vmatprep.mubr.f32.mxu0 0.0
      %3337 = vmatmul.mubr.f32.gmra.mxu0 %v3005
      %v3338 = vpop.f32.mrf.mxu0
      %v3339 = vadd.f32 %v3194, %v3338
      %v3340 = vpop.f32.mrf.mxu0
      %3341 = vmatprep.mubr.f32.mxu0 0.0
      %3342 = vmatmul.mubr.f32.gmra.mxu0 %v3007
      %v3343 = vpop.f32.mrf.mxu0
      %v3344 = vadd.f32 %v3199, %v3343
      %v3345 = vpop.f32.mrf.mxu0
      %3346 = vmatprep.mubr.f32.mxu0 0.0
      %3347 = vmatmul.mubr.f32.gmra.mxu0 %v3010
      %v3348 = vpop.f32.mrf.mxu0
      %v3349 = vadd.f32 %v3204, %v3348
      %v3350 = vpop.f32.mrf.mxu0
      %3351 = vmatprep.mubr.f32.mxu0 0.0
      %3352 = vmatmul.mubr.f32.gmra.mxu0 %v3012
      %v3353 = vpop.f32.mrf.mxu0
      %v3354 = vadd.f32 %v3209, %v3353
      %v3355 = vpop.f32.mrf.mxu0
      %3356 = vmatprep.mubr.f32.mxu0 0.0
      %3357 = vmatmul.mubr.f32.gmra.mxu0 %v3015
      %v3358 = vpop.f32.mrf.mxu0
      %v3359 = vadd.f32 %v3214, %v3358
      %v3360 = vpop.f32.mrf.mxu0
      %3361 = vmatprep.mubr.f32.mxu0 0.0
      %3362 = vmatmul.mubr.f32.gmra.mxu0 %v3017
      %v3363 = vpop.f32.mrf.mxu0
      %v3364 = vadd.f32 %v3219, %v3363
      %v3365 = vpop.f32.mrf.mxu0
      %3366 = vmatprep.mubr.f32.mxu0 0.0
      %3367 = vmatmul.mubr.f32.gmra.mxu0 %v3020
      %v3368 = vpop.f32.mrf.mxu0
      %v3369 = vadd.f32 %v3224, %v3368
      %v3370 = vpop.f32.mrf.mxu0
      %3371 = vmatprep.mubr.f32.mxu0 0.0
      %3372 = vmatmul.mubr.f32.gmra.mxu0 %v3022
      %v3373 = vpop.f32.mrf.mxu0
      %v3374 = vadd.f32 %v3229, %v3373
      %v3375 = vpop.f32.mrf.mxu0
      %3376 = vdwg.mxu0
      %v3377 = vadd.f32 %v2800, %v3299
      %v3378 = vadd.f32 %v2805, %v3304
      %v3379 = vadd.f32 %v2810, %v3309
      %v3380 = vadd.f32 %v2815, %v3314
      %v3381 = vadd.f32 %v2820, %v3319
      %v3382 = vadd.f32 %v2825, %v3324
      %v3383 = vadd.f32 %v2830, %v3329
      %v3384 = vadd.f32 %v2835, %v3334
      %v3385 = vadd.f32 %v2840, %v3339
      %v3386 = vadd.f32 %v2845, %v3344
      %v3387 = vadd.f32 %v2850, %v3349
      %v3388 = vadd.f32 %v2855, %v3354
      %v3389 = vadd.f32 %v2860, %v3359
      %v3390 = vadd.f32 %v2865, %v3364
      %v3391 = vadd.f32 %v2870, %v3369
      %v3392 = vadd.f32 %v2875, %v3374
      %s3393 = scalar_lea.vmem %s177, 128
      %3394 = vst [vmem:[%s3393] sm:$0xff] %v3377
      %3395 = vst [vmem:[%s3393 + $0x8] sm:$0xff] %v3378
      %3396 = vst [vmem:[%s3393 + $0x10] sm:$0xff] %v3379
      %3397 = vst [vmem:[%s3393 + $0x18] sm:$0xff] %v3380
      %3398 = vst [vmem:[%s3393 + $0x20] sm:$0xff] %v3381
      %3399 = vst [vmem:[%s3393 + $0x28] sm:$0xff] %v3382
      %3400 = vst [vmem:[%s3393 + $0x30] sm:$0xff] %v3383
      %3401 = vst [vmem:[%s3393 + $0x38] sm:$0xff] %v3384
      %3402 = vst [vmem:[%s3393 + $0x40] sm:$0xff] %v3385
      %3403 = vst [vmem:[%s3393 + $0x48] sm:$0xff] %v3386
      %3404 = vst [vmem:[%s3393 + $0x50] sm:$0xff] %v3387
      %3405 = vst [vmem:[%s3393 + $0x58] sm:$0xff] %v3388
      %3406 = vst [vmem:[%s3393 + $0x60] sm:$0xff] %v3389
      %3407 = vst [vmem:[%s3393 + $0x68] sm:$0xff] %v3390
      %3408 = vst [vmem:[%s3393 + $0x70] sm:$0xff] %v3391
      %3409 = vst [vmem:[%s3393 + $0x78] sm:$0xff] %v3392
      %v3410 = vadd.f32 %v3377, %v3378
      %v3411 = vadd.f32 %v3410, %v3379
      %v3412 = vadd.f32 %v3411, %v3380
      %v3413 = vadd.f32 %v3412, %v3381
      %v3414 = vadd.f32 %v3413, %v3382
      %v3415 = vadd.f32 %v3414, %v3383
      %v3416 = vadd.f32 %v3415, %v3384
      %v3417 = vadd.f32 %v3416, %v3385
      %v3418 = vadd.f32 %v3417, %v3386
      %v3419 = vadd.f32 %v3418, %v3387
      %v3420 = vadd.f32 %v3419, %v3388
      %v3421 = vadd.f32 %v3420, %v3389
      %v3422 = vadd.f32 %v3421, %v3390
      %v3423 = vadd.f32 %v3422, %v3391
      %v3424 = vadd.f32 %v3423, %v3392
      %v3425 = vrot.slane %v3424, 4
      %v3426 = vadd.f32 %v3424, %v3425
      %v3427 = vrot.slane %v3426, 2
      %v3428 = vadd.f32 %v3426, %v3427
      %v3429 = vrot.slane %v3428, 1
      %v3430 = vadd.f32 %v3428, %v3429
      %v3431 = vadd.f32 %v1842, %v3430
      %v3432 = vmul.f32 %v3377, %v3377
      %v3433 = vmul.f32 %v3378, %v3378
      %v3434 = vmul.f32 %v3379, %v3379
      %v3435 = vmul.f32 %v3380, %v3380
      %v3436 = vmul.f32 %v3381, %v3381
      %v3437 = vmul.f32 %v3382, %v3382
      %v3438 = vmul.f32 %v3383, %v3383
      %v3439 = vmul.f32 %v3384, %v3384
      %v3440 = vmul.f32 %v3385, %v3385
      %v3441 = vmul.f32 %v3386, %v3386
      %v3442 = vmul.f32 %v3387, %v3387
      %v3443 = vmul.f32 %v3388, %v3388
      %v3444 = vmul.f32 %v3389, %v3389
      %v3445 = vmul.f32 %v3390, %v3390
      %v3446 = vmul.f32 %v3391, %v3391
      %v3447 = vmul.f32 %v3392, %v3392
      %v3448 = vadd.f32 %v3432, %v3433
      %v3449 = vadd.f32 %v3448, %v3434
      %v3450 = vadd.f32 %v3449, %v3435
      %v3451 = vadd.f32 %v3450, %v3436
      %v3452 = vadd.f32 %v3451, %v3437
      %v3453 = vadd.f32 %v3452, %v3438
      %v3454 = vadd.f32 %v3453, %v3439
      %v3455 = vadd.f32 %v3454, %v3440
      %v3456 = vadd.f32 %v3455, %v3441
      %v3457 = vadd.f32 %v3456, %v3442
      %v3458 = vadd.f32 %v3457, %v3443
      %v3459 = vadd.f32 %v3458, %v3444
      %v3460 = vadd.f32 %v3459, %v3445
      %v3461 = vadd.f32 %v3460, %v3446
      %v3462 = vadd.f32 %v3461, %v3447
      %v3463 = vrot.slane %v3462, 4
      %v3464 = vadd.f32 %v3462, %v3463
      %v3465 = vrot.slane %v3464, 2
      %v3466 = vadd.f32 %v3464, %v3465
      %v3467 = vrot.slane %v3466, 1
      %v3468 = vadd.f32 %v3466, %v3467
      %v3469 = vadd.f32 %v1880, %v3468
      %vm3470 = vcmask 1040384
      %v3471 = vsel %vm3470, %v3431, %v3469
      %3472 = vst [vmem:[%s181] sm:$0x3] %v3471
      %p3473 = scmp.lt.s32.totalorder %s15, 1
      %s3474 = scalar_select %p3473, %s15, 1
      %s3475 = smul.addr %s3474, 32
      %s3476 = smul.addr %s3475, 8
      %s3477 = scalar_lea.vmem %s2, %s3476
      %p3478 = scmp.lt.s32.totalorder %s15, 1
      %s3479 = scalar_select %p3478, %s15, 1
      %s3480 = smul.addr %s3479, 2
      %s3481 = scalar_lea.vmem %s3, %s3480
      // Predicated region
      $region29: #{residual_block_forward.3} parent=27 // pred_check
        %p3482 = pneg %p80
      $region30: #{residual_block_forward.3} parent=27 // pred_check_branch
        %3484 = sbr.rel (%p3482) target = $region32
      $region31: #{residual_block_forward.3} parent=27 // pred_region
        _
      $region32: #{residual_block_forward.3} parent=27 // pred_fallthru
        _
      // Predicated region
      $region33: #{residual_block_forward.3} parent=27 // pred_check
        %p3485 = pneg %p106
      $region34: #{residual_block_forward.3} parent=27 // pred_check_branch
        %3487 = sbr.rel (%p3485) target = $region36
      $region35: #{residual_block_forward.3} parent=27 // pred_region
        _
      $region36: #{residual_block_forward.3} parent=27 // pred_fallthru
        _
    $region28: #{residual_block_forward.3} parent=5 // pred_fallthru
      _
    %p3488 = scmp.le.s32.totalorder 2, %s10
    // Predicated region
    $region37: #{residual_block_forward.3} parent=5 // pred_check
      %p3489 = pneg %p3488
    $region38: #{residual_block_forward.3} parent=5 // pred_check_branch
      %3491 = sbr.rel (%p3489) target = $region40
    $region39: #{residual_block_forward.3} parent=5 // pred_region
      %s3492 = ssub.s32 %s10, 2
      // Predicated region
      $region41: #{residual_block_forward.3} parent=39 // pred_check
        %p3493 = pneg %p86
      $region42: #{residual_block_forward.3} parent=39 // pred_check_branch
        %3495 = sbr.rel (%p3493) target = $region44
      $region43: #{residual_block_forward.3} parent=39 // pred_region
        %p3496 = scmp.lt.s32.totalorder %s16, 1
        %s3497 = scalar_select %p3496, %s16, 1
        %s3498 = smul.addr %s3497, 32
        %s3499 = smul.addr %s3498, 8
        %s3500 = scalar_lea.vmem %s2, %s3499
      $region44: #{residual_block_forward.3} parent=39 // pred_fallthru
        _
      // Predicated region
      $region45: #{residual_block_forward.3} parent=39 // pred_check
        %p3501 = pneg %p112
      $region46: #{residual_block_forward.3} parent=39 // pred_check_branch
        %3503 = sbr.rel (%p3501) target = $region48
      $region47: #{residual_block_forward.3} parent=39 // pred_region
        %p3504 = scmp.lt.s32.totalorder %s16, 1
        %s3505 = scalar_select %p3504, %s16, 1
        %s3506 = smul.addr %s3505, 2
        %s3507 = scalar_lea.vmem %s3, %s3506
      $region48: #{residual_block_forward.3} parent=39 // pred_fallthru
        _
    $region40: #{residual_block_forward.3} parent=5 // pred_fallthru
      _
  $region6: #{residual_block_forward.3} parent=0 // loop_footer
    %s14 = sadd.s32 1, %s10
  $region7: #{residual_block_forward.3} parent=0 // loop_footer_branch
    %9 = sbr.rel target = $region3
  $region8: #{residual_block_forward.3} parent=0 // loop_exit
    _

// kernel: residual_block_forward.4
$region0: #{residual_block_forward.4}
  #allocation0 [shape = 'u32[]', space=smem, size = 0x4, offset = 0x4, fixed_abs, tag = 'smem constant byte address 0x4 - core index']
  #allocation1 [shape = 'u32[144,128]{1,0:T(1,128)}', space=vmem, size = 0x12000, scoped, tag = 'internal scratch']
  #allocation2 [shape = 'f32[18,18,128]{2,1,0:T(8,128)}', space=vmem, size = 0x36000, scoped, tag = 'scratch operand']
  %s0 = inlined_call_operand.vmem [shape: f32[2,16,16,128], index: 0, kind: input, shape index: {}]
  %s1 = inlined_call_operand.vmem [shape: f32[1152,128], index: 1, kind: input, shape index: {}]
  %s2 = inlined_call_operand.vmem [shape: f32[1,128], index: 2, kind: input, shape index: {}]
  %s3 = inlined_call_operand.vmem [shape: f32[1,128], index: 3, kind: input, shape index: {}]
  %s4 = inlined_call_operand.vmem [shape: f32[2,16,16,128], index: 4, kind: output, shape index: {0}]
  %s5 = inlined_call_operand.vmem [shape: f32[2,2,128], index: 5, kind: output, shape index: {1}]
  %6 = xla_tuple %s4, %s5
  %s7 = sld [smem:[#allocation0]]
  $region57: #{residual_block_forward.4} parent=0
    _
  %s9 = ssub.s32 1, %s7
  %s10 = scalar_select 0, %s9, %s7
  loop: start=0, step=1, limit=4
  $region2: #{residual_block_forward.4} parent=0 // loop_pre_header
    _
  $region3: #{residual_block_forward.4} parent=0 // loop_header
    %s12 = sphi 0, %s16
    %p13 = scmp.ge.s32.totalorder %s12, 4
    %s22 = sphi 0, %s24
    %s25 = sphi 0, %s22
    %s26 = sphi 0, %s25
    %s42 = sphi 0, %s26
    %s46 = sphi 0, %s46
    %s48 = sphi 0, %s46
    %s49 = sphi 0, %s48
    %s63 = sphi 0, %s49
    %s67 = sphi 0, %s67
    %s69 = sphi 0, %s67
    %s70 = sphi 0, %s69
    %s84 = sphi 0, %s70
    %s88 = sphi 0, %s88
    %s90 = sphi 0, %s88
    %s91 = sphi 0, %s90
    %s105 = sphi 0, %s91
    %s111 = sphi 0, %s113
    %s114 = sphi 0, %s111
    %s115 = sphi 0, %s114
    %s131 = sphi 0, %s115
    %s137 = sphi 0, %s139
    %s140 = sphi 0, %s137
    %s141 = sphi 0, %s140
    %s157 = sphi 0, %s141
  $region4: #{residual_block_forward.4} parent=0 // loop_header_branch
    %15 = sbr.rel (%p13) target = $region8
  $region5: #{residual_block_forward.4} parent=0 // loop_body
    %s17 = ssub.s32 %s12, 1
    %s18 = ssub.s32 %s12, 2
    %s19 = sadd.s32 %s12, 1
    %s20 = ssub.s32 %s12, %s19
    %p21 = scmp.eq.s32.totalorder %s20, 0
    %s23 = sadd.s32 %s22, 1
    %s24 = scalar_select %p21, %s22, %s23
    %p27 = pneg %p21
    %p28 = scmp.eq.s32.totalorder %s12, 1
    %p29 = por %p27, %p28
    %p30 = scmp.ne.s32.totalorder %s22, %s25
    %p31 = scmp.eq.s32.totalorder %s12, 0
    %p32 = por %p30, %p31
    %p33 = scmp.ne.s32.totalorder %s22, %s25
    %p34 = scmp.eq.s32.totalorder %s17, 1
    %p35 = por %p33, %p34
    %p36 = scmp.ne.s32.totalorder %s25, %s26
    %p37 = scmp.eq.s32.totalorder %s17, 0
    %p38 = por %p36, %p37
    %p39 = scmp.ne.s32.totalorder %s25, %s26
    %p40 = scmp.eq.s32.totalorder %s18, 1
    %p41 = por %p39, %p40
    %p43 = scmp.ne.s32.totalorder %s26, %s42
    %p44 = scmp.eq.s32.totalorder %s18, 0
    %p45 = por %p43, %p44
    %s47 = sadd.s32 %s46, 1
    %p50 = scmp.eq.s32.totalorder %s12, 1
    %p51 = scmp.ne.s32.totalorder %s46, %s48
    %p52 = scmp.eq.s32.totalorder %s12, 0
    %p53 = por %p51, %p52
    %p54 = scmp.ne.s32.totalorder %s46, %s48
    %p55 = scmp.eq.s32.totalorder %s17, 1
    %p56 = por %p54, %p55
    %p57 = scmp.ne.s32.totalorder %s48, %s49
    %p58 = scmp.eq.s32.totalorder %s17, 0
    %p59 = por %p57, %p58
    %p60 = scmp.ne.s32.totalorder %s48, %s49
    %p61 = scmp.eq.s32.totalorder %s18, 1
    %p62 = por %p60, %p61
    %p64 = scmp.ne.s32.totalorder %s49, %s63
    %p65 = scmp.eq.s32.totalorder %s18, 0
    %p66 = por %p64, %p65
    %s68 = sadd.s32 %s67, 1
    %p71 = scmp.eq.s32.totalorder %s12, 1
    %p72 = scmp.ne.s32.totalorder %s67, %s69
    %p73 = scmp.eq.s32.totalorder %s12, 0
    %p74 = por %p72, %p73
    %p75 = scmp.ne.s32.totalorder %s67, %s69
    %p76 = scmp.eq.s32.totalorder %s17, 1
    %p77 = por %p75, %p76
    %p78 = scmp.ne.s32.totalorder %s69, %s70
    %p79 = scmp.eq.s32.totalorder %s17, 0
    %p80 = por %p78, %p79
    %p81 = scmp.ne.s32.totalorder %s69, %s70
    %p82 = scmp.eq.s32.totalorder %s18, 1
    %p83 = por %p81, %p82
    %p85 = scmp.ne.s32.totalorder %s70, %s84
    %p86 = scmp.eq.s32.totalorder %s18, 0
    %p87 = por %p85, %p86
    %s89 = sadd.s32 %s88, 1
    %p92 = scmp.eq.s32.totalorder %s12, 1
    %p93 = scmp.ne.s32.totalorder %s88, %s90
    %p94 = scmp.eq.s32.totalorder %s12, 0
    %p95 = por %p93, %p94
    %p96 = scmp.ne.s32.totalorder %s88, %s90
    %p97 = scmp.eq.s32.totalorder %s17, 1
    %p98 = por %p96, %p97
    %p99 = scmp.ne.s32.totalorder %s90, %s91
    %p100 = scmp.eq.s32.totalorder %s17, 0
    %p101 = por %p99, %p100
    %p102 = scmp.ne.s32.totalorder %s90, %s91
    %p103 = scmp.eq.s32.totalorder %s18, 1
    %p104 = por %p102, %p103
    %p106 = scmp.ne.s32.totalorder %s91, %s105
    %p107 = scmp.eq.s32.totalorder %s18, 0
    %p108 = por %p106, %p107
    %s109 = ssub.s32 %s12, %s19
    %p110 = scmp.eq.s32.totalorder %s109, 0
    %s112 = sadd.s32 %s111, 1
    %s113 = scalar_select %p110, %s111, %s112
    %p116 = pneg %p110
    %p117 = scmp.eq.s32.totalorder %s12, 1
    %p118 = por %p116, %p117
    %p119 = scmp.ne.s32.totalorder %s111, %s114
    %p120 = scmp.eq.s32.totalorder %s12, 0
    %p121 = por %p119, %p120
    %p122 = scmp.ne.s32.totalorder %s111, %s114
    %p123 = scmp.eq.s32.totalorder %s17, 1
    %p124 = por %p122, %p123
    %p125 = scmp.ne.s32.totalorder %s114, %s115
    %p126 = scmp.eq.s32.totalorder %s17, 0
    %p127 = por %p125, %p126
    %p128 = scmp.ne.s32.totalorder %s114, %s115
    %p129 = scmp.eq.s32.totalorder %s18, 1
    %p130 = por %p128, %p129
    %p132 = scmp.ne.s32.totalorder %s115, %s131
    %p133 = scmp.eq.s32.totalorder %s18, 0
    %p134 = por %p132, %p133
    %s135 = ssub.s32 %s12, %s19
    %p136 = scmp.eq.s32.totalorder %s135, 0
    %s138 = sadd.s32 %s137, 1
    %s139 = scalar_select %p136, %s137, %s138
    %p142 = pneg %p136
    %p143 = scmp.eq.s32.totalorder %s12, 1
    %p144 = por %p142, %p143
    %p145 = scmp.ne.s32.totalorder %s137, %s140
    %p146 = scmp.eq.s32.totalorder %s12, 0
    %p147 = por %p145, %p146
    %p148 = scmp.ne.s32.totalorder %s137, %s140
    %p149 = scmp.eq.s32.totalorder %s17, 1
    %p150 = por %p148, %p149
    %p151 = scmp.ne.s32.totalorder %s140, %s141
    %p152 = scmp.eq.s32.totalorder %s17, 0
    %p153 = por %p151, %p152
    %p154 = scmp.ne.s32.totalorder %s140, %s141
    %p155 = scmp.eq.s32.totalorder %s18, 1
    %p156 = por %p154, %p155
    %p158 = scmp.ne.s32.totalorder %s141, %s157
    %p159 = scmp.eq.s32.totalorder %s18, 0
    %p160 = por %p158, %p159
    %p161 = scmp.le.s32.totalorder 1, %s12
    %p162 = scmp.lt.s32.totalorder %s12, 3
    %p163 = pnand %p161, %p162
    %p164 = pneg %p163
    // Predicated region
    $region9: #{residual_block_forward.4} parent=5 // pred_check
      _
    $region10: #{residual_block_forward.4} parent=5 // pred_check_branch
      %166 = sbr.rel (%p163) target = $region12
    $region11: #{residual_block_forward.4} parent=5 // pred_region
      %s167 = ssub.s32 %s12, 1
      // Predicated region
      $region13: #{residual_block_forward.4} parent=11 // pred_check
        %p168 = pneg %p59
      $region14: #{residual_block_forward.4} parent=11 // pred_check_branch
        %170 = sbr.rel (%p168) target = $region16
      $region15: #{residual_block_forward.4} parent=11 // pred_region
        _
      $region16: #{residual_block_forward.4} parent=11 // pred_fallthru
        _
      // Predicated region
      $region17: #{residual_block_forward.4} parent=11 // pred_check
        %p171 = pneg %p80
      $region18: #{residual_block_forward.4} parent=11 // pred_check_branch
        %173 = sbr.rel (%p171) target = $region20
      $region19: #{residual_block_forward.4} parent=11 // pred_region
        _
      $region20: #{residual_block_forward.4} parent=11 // pred_fallthru
        _
      // Predicated region
      $region21: #{residual_block_forward.4} parent=11 // pred_check
        %p174 = pneg %p101
      $region22: #{residual_block_forward.4} parent=11 // pred_check_branch
        %176 = sbr.rel (%p174) target = $region24
      $region23: #{residual_block_forward.4} parent=11 // pred_region
        _
      $region24: #{residual_block_forward.4} parent=11 // pred_fallthru
        _
    $region12: #{residual_block_forward.4} parent=5 // pred_fallthru
      _
    %p177 = scmp.lt.s32.totalorder %s12, 2
    // Predicated region
    $region25: #{residual_block_forward.4} parent=5 // pred_check
      %p178 = pneg %p177
    $region26: #{residual_block_forward.4} parent=5 // pred_check_branch
      %180 = sbr.rel (%p178) target = $region28
    $region27: #{residual_block_forward.4} parent=5 // pred_region
      // Predicated region
      $region29: #{residual_block_forward.4} parent=27 // pred_check
        %p181 = pneg %p32
      $region30: #{residual_block_forward.4} parent=27 // pred_check_branch
        %183 = sbr.rel (%p181) target = $region32
      $region31: #{residual_block_forward.4} parent=27 // pred_region
        %p184 = scmp.lt.s32.totalorder %s12, 1
        %s185 = scalar_select %p184, %s12, 1
        %s186 = smul.addr %s185, 32
        %s187 = smul.addr %s186, 8
        %s188 = scalar_lea.vmem %s0, %s187
      $region32: #{residual_block_forward.4} parent=27 // pred_fallthru
        _
    $region28: #{residual_block_forward.4} parent=5 // pred_fallthru
      _
    %p189 = scmp.le.s32.totalorder 1, %s12
    %p190 = scmp.lt.s32.totalorder %s12, 3
    %p191 = pnand %p189, %p190
    %p192 = pneg %p191
    // Predicated region
    $region33: #{residual_block_forward.4} parent=5 // pred_check
      _
    $region34: #{residual_block_forward.4} parent=5 // pred_check_branch
      %194 = sbr.rel (%p191) target = $region36
    $region35: #{residual_block_forward.4} parent=5 // pred_region
      %s195 = ssub.s32 %s12, 1
      %p196 = scmp.lt.s32.totalorder %s17, 1
      %s197 = scalar_select %p196, %s17, 1
      %s198 = smul.addr %s197, 32
      %s199 = smul.addr %s198, 8
      %s200 = scalar_lea.vmem %s0, %s199
      %p201 = pneg %p38
      %p202 = pneg %p35
      %p203 = pneg %p59
      %p204 = pneg %p56
      %p205 = pneg %p80
      %p206 = pneg %p77
      %p207 = pneg %p101
      %p208 = pneg %p98
      %p209 = pneg %p127
      %p210 = pneg %p124
      %p211 = scmp.lt.s32.totalorder %s17, 1
      %s212 = scalar_select %p211, %s17, 1
      %s213 = smul.addr %s212, 32
      %s214 = smul.addr %s213, 8
      %s215 = scalar_lea.vmem %s4, %s214
      %p216 = pneg %p153
      %p217 = pneg %p150
      %p218 = scmp.lt.s32.totalorder %s17, 1
      %s219 = scalar_select %p218, %s17, 1
      %s220 = smul.addr %s219, 2
      %s221 = scalar_lea.vmem %s5, %s220
      %p222 = scmp.lt.s32.totalorder %s17, 1
      %s223 = scalar_select %p222, %s17, 1
      %s224 = smul.addr %s223, 32
      %s225 = smul.addr %s224, 8
      %s226 = scalar_lea.vmem %s0, %s225
      %p227 = scmp.lt.s32.totalorder %s17, 1
      %s228 = scalar_select %p227, %s17, 1
      %s229 = smul.addr %s228, 32
      %s230 = smul.addr %s229, 8
      %s231 = scalar_lea.vmem %s4, %s230
      %p232 = scmp.lt.s32.totalorder %s17, 1
      %s233 = scalar_select %p232, %s17, 1
      %s234 = smul.addr %s233, 2
      %s235 = scalar_lea.vmem %s5, %s234
      %236 = vst [vmem:[#allocation2] sm:$0xff] 0.0
      %237 = vst [vmem:[#allocation2 + $0x8] sm:$0xff] 0.0
      %238 = vst [vmem:[#allocation2 + $0x10] sm:$0x3] 0.0
      %s239 = scalar_lea.vmem [#allocation2], 408
      %240 = vst [vmem:[%s239] sm:$0xff] 0.0
      %241 = vst [vmem:[%s239 + $0x8] sm:$0xff] 0.0
      %242 = vst [vmem:[%s239 + $0x10] sm:$0x3] 0.0
      %243 = vst [vmem:[#allocation2] sm:$0x1] 0.0
      %244 = vst [vmem:[#allocation2 + $0x18] sm:$0x1] 0.0
      %245 = vst [vmem:[#allocation2 + $0x30] sm:$0x1] 0.0
      %246 = vst [vmem:[#allocation2 + $0x48] sm:$0x1] 0.0
      %247 = vst [vmem:[#allocation2 + $0x60] sm:$0x1] 0.0
      %248 = vst [vmem:[#allocation2 + $0x78] sm:$0x1] 0.0
      %249 = vst [vmem:[#allocation2 + $0x90] sm:$0x1] 0.0
      %250 = vst [vmem:[#allocation2 + $0xa8] sm:$0x1] 0.0
      %251 = vst [vmem:[#allocation2 + $0xc0] sm:$0x1] 0.0
      %252 = vst [vmem:[#allocation2 + $0xd8] sm:$0x1] 0.0
      %253 = vst [vmem:[#allocation2 + $0xf0] sm:$0x1] 0.0
      %254 = vst [vmem:[#allocation2 + $0x108] sm:$0x1] 0.0
      %255 = vst [vmem:[#allocation2 + $0x120] sm:$0x1] 0.0
      %256 = vst [vmem:[#allocation2 + $0x138] sm:$0x1] 0.0
      %257 = vst [vmem:[#allocation2 + $0x150] sm:$0x1] 0.0
      %258 = vst [vmem:[#allocation2 + $0x168] sm:$0x1] 0.0
      %259 = vst [vmem:[#allocation2 + $0x180] sm:$0x1] 0.0
      %260 = vst [vmem:[#allocation2 + $0x198] sm:$0x1] 0.0
      %261 = vst [vmem:[#allocation2 + $0x11] sm:$0x1] 0.0
      %262 = vst [vmem:[#allocation2 + $0x29] sm:$0x1] 0.0
      %263 = vst [vmem:[#allocation2 + $0x41] sm:$0x1] 0.0
      %264 = vst [vmem:[#allocation2 + $0x59] sm:$0x1] 0.0
      %265 = vst [vmem:[#allocation2 + $0x71] sm:$0x1] 0.0
      %266 = vst [vmem:[#allocation2 + $0x89] sm:$0x1] 0.0
      %267 = vst [vmem:[#allocation2 + $0xa1] sm:$0x1] 0.0
      %268 = vst [vmem:[#allocation2 + $0xb9] sm:$0x1] 0.0
      %269 = vst [vmem:[#allocation2 + $0xd1] sm:$0x1] 0.0
      %270 = vst [vmem:[#allocation2 + $0xe9] sm:$0x1] 0.0
      %271 = vst [vmem:[#allocation2 + $0x101] sm:$0x1] 0.0
      %272 = vst [vmem:[#allocation2 + $0x119] sm:$0x1] 0.0
      %273 = vst [vmem:[#allocation2 + $0x131] sm:$0x1] 0.0
      %274 = vst [vmem:[#allocation2 + $0x149] sm:$0x1] 0.0
      %275 = vst [vmem:[#allocation2 + $0x161] sm:$0x1] 0.0
      %276 = vst [vmem:[#allocation2 + $0x179] sm:$0x1] 0.0
      %277 = vst [vmem:[#allocation2 + $0x191] sm:$0x1] 0.0
      %278 = vst [vmem:[#allocation2 + $0x1a9] sm:$0x1] 0.0
      %v279 = vld [vmem:[%s2] sm:$0x1]
      %v280 = vld [vmem:[%s3] sm:$0x1]
      %v281 = vld [vmem:[%s226] sm:$0xff]
      %v282 = vld [vmem:[%s226 + $0x8] sm:$0xff]
      %v283 = vld [vmem:[%s226 + $0x10] sm:$0xff]
      %v284 = vld [vmem:[%s226 + $0x18] sm:$0xff]
      %v285 = vld [vmem:[%s226 + $0x20] sm:$0xff]
      %v286 = vld [vmem:[%s226 + $0x28] sm:$0xff]
      %v287 = vld [vmem:[%s226 + $0x30] sm:$0xff]
      %v288 = vld [vmem:[%s226 + $0x38] sm:$0xff]
      %v289 = vld [vmem:[%s226 + $0x40] sm:$0xff]
      %v290 = vld [vmem:[%s226 + $0x48] sm:$0xff]
      %v291 = vld [vmem:[%s226 + $0x50] sm:$0xff]
      %v292 = vld [vmem:[%s226 + $0x58] sm:$0xff]
      %v293 = vld [vmem:[%s226 + $0x60] sm:$0xff]
      %v294 = vld [vmem:[%s226 + $0x68] sm:$0xff]
      %v295 = vld [vmem:[%s226 + $0x70] sm:$0xff]
      %v296 = vld [vmem:[%s226 + $0x78] sm:$0xff]
      %v298 = vlaneseq
      %v299 = vshrl.u32 %v298, 7
      %v300 = vsub.s32 0, %v299
      %v301 = vrot.slane %v279, %v300
      %v303 = vmul.f32 %v281, %v301
      %v304 = vmul.f32 %v282, %v301
      %v305 = vmul.f32 %v283, %v301
      %v306 = vmul.f32 %v284, %v301
      %v307 = vmul.f32 %v285, %v301
      %v308 = vmul.f32 %v286, %v301
      %v309 = vmul.f32 %v287, %v301
      %v310 = vmul.f32 %v288, %v301
      %v311 = vmul.f32 %v289, %v301
      %v312 = vmul.f32 %v290, %v301
      %v313 = vmul.f32 %v291, %v301
      %v314 = vmul.f32 %v292, %v301
      %v315 = vmul.f32 %v293, %v301
      %v316 = vmul.f32 %v294, %v301
      %v317 = vmul.f32 %v295, %v301
      %v318 = vmul.f32 %v296, %v301
      %v320 = vlaneseq
      %v321 = vshrl.u32 %v320, 7
      %v322 = vsub.s32 0, %v321
      %v323 = vrot.slane %v280, %v322
      %v325 = vadd.f32 %v303, %v323
      %v326 = vadd.f32 %v304, %v323
      %v327 = vadd.f32 %v305, %v323
      %v328 = vadd.f32 %v306, %v323
      %v329 = vadd.f32 %v307, %v323
      %v330 = vadd.f32 %v308, %v323
      %v331 = vadd.f32 %v309, %v323
      %v332 = vadd.f32 %v310, %v323
      %v333 = vadd.f32 %v311, %v323
      %v334 = vadd.f32 %v312, %v323
      %v335 = vadd.f32 %v313, %v323
      %v336 = vadd.f32 %v314, %v323
      %v337 = vadd.f32 %v315, %v323
      %v338 = vadd.f32 %v316, %v323
      %v339 = vadd.f32 %v317, %v323
      %v340 = vadd.f32 %v318, %v323
      %v341 = vmax.f32 %v325, 0.0
      %v342 = vmax.f32 %v326, 0.0
      %v343 = vmax.f32 %v327, 0.0
      %v344 = vmax.f32 %v328, 0.0
      %v345 = vmax.f32 %v329, 0.0
      %v346 = vmax.f32 %v330, 0.0
      %v347 = vmax.f32 %v331, 0.0
      %v348 = vmax.f32 %v332, 0.0
      %v349 = vmax.f32 %v333, 0.0
      %v350 = vmax.f32 %v334, 0.0
      %v351 = vmax.f32 %v335, 0.0
      %v352 = vmax.f32 %v336, 0.0
      %v353 = vmax.f32 %v337, 0.0
      %v354 = vmax.f32 %v338, 0.0
      %v355 = vmax.f32 %v339, 0.0
      %v356 = vmax.f32 %v340, 0.0
      %s357 = scalar_lea.vmem [#allocation2], 24
      %358 = vst [vmem:[%s357 + $0x1] sm:$0xff] %v341
      %359 = vst [vmem:[%s357 + $0x9] sm:$0xff] %v342
      %360 = vst [vmem:[%s357 + $0x19] sm:$0xff] %v343
      %361 = vst [vmem:[%s357 + $0x21] sm:$0xff] %v344
      %362 = vst [vmem:[%s357 + $0x31] sm:$0xff] %v345
      %363 = vst [vmem:[%s357 + $0x39] sm:$0xff] %v346
      %364 = vst [vmem:[%s357 + $0x49] sm:$0xff] %v347
      %365 = vst [vmem:[%s357 + $0x51] sm:$0xff] %v348
      %366 = vst [vmem:[%s357 + $0x61] sm:$0xff] %v349
      %367 = vst [vmem:[%s357 + $0x69] sm:$0xff] %v350
      %368 = vst [vmem:[%s357 + $0x79] sm:$0xff] %v351
      %369 = vst [vmem:[%s357 + $0x81] sm:$0xff] %v352
      %370 = vst [vmem:[%s357 + $0x91] sm:$0xff] %v353
      %371 = vst [vmem:[%s357 + $0x99] sm:$0xff] %v354
      %372 = vst [vmem:[%s357 + $0xa9] sm:$0xff] %v355
      %373 = vst [vmem:[%s357 + $0xb1] sm:$0xff] %v356
      %s374 = scalar_lea.vmem %s226, 128
      %v375 = vld [vmem:[%s374] sm:$0xff]
      %v376 = vld [vmem:[%s374 + $0x8] sm:$0xff]
      %v377 = vld [vmem:[%s374 + $0x10] sm:$0xff]
      %v378 = vld [vmem:[%s374 + $0x18] sm:$0xff]
      %v379 = vld [vmem:[%s374 + $0x20] sm:$0xff]
      %v380 = vld [vmem:[%s374 + $0x28] sm:$0xff]
      %v381 = vld [vmem:[%s374 + $0x30] sm:$0xff]
      %v382 = vld [vmem:[%s374 + $0x38] sm:$0xff]
      %v383 = vld [vmem:[%s374 + $0x40] sm:$0xff]
      %v384 = vld [vmem:[%s374 + $0x48] sm:$0xff]
      %v385 = vld [vmem:[%s374 + $0x50] sm:$0xff]
      %v386 = vld [vmem:[%s374 + $0x58] sm:$0xff]
      %v387 = vld [vmem:[%s374 + $0x60] sm:$0xff]
      %v388 = vld [vmem:[%s374 + $0x68] sm:$0xff]
      %v389 = vld [vmem:[%s374 + $0x70] sm:$0xff]
      %v390 = vld [vmem:[%s374 + $0x78] sm:$0xff]
      %v391 = vmul.f32 %v375, %v301
      %v392 = vmul.f32 %v376, %v301
      %v393 = vmul.f32 %v377, %v301
      %v394 = vmul.f32 %v378, %v301
      %v395 = vmul.f32 %v379, %v301
      %v396 = vmul.f32 %v380, %v301
      %v397 = vmul.f32 %v381, %v301
      %v398 = vmul.f32 %v382, %v301
      %v399 = vmul.f32 %v383, %v301
      %v400 = vmul.f32 %v384, %v301
      %v401 = vmul.f32 %v385, %v301
      %v402 = vmul.f32 %v386, %v301
      %v403 = vmul.f32 %v387, %v301
      %v404 = vmul.f32 %v388, %v301
      %v405 = vmul.f32 %v389, %v301
      %v406 = vmul.f32 %v390, %v301
      %v407 = vadd.f32 %v391, %v323
      %v408 = vadd.f32 %v392, %v323
      %v409 = vadd.f32 %v393, %v323
      %v410 = vadd.f32 %v394, %v323
      %v411 = vadd.f32 %v395, %v323
      %v412 = vadd.f32 %v396, %v323
      %v413 = vadd.f32 %v397, %v323
      %v414 = vadd.f32 %v398, %v323
      %v415 = vadd.f32 %v399, %v323
      %v416 = vadd.f32 %v400, %v323
      %v417 = vadd.f32 %v401, %v323
      %v418 = vadd.f32 %v402, %v323
      %v419 = vadd.f32 %v403, %v323
      %v420 = vadd.f32 %v404, %v323
      %v421 = vadd.f32 %v405, %v323
      %v422 = vadd.f32 %v406, %v323
      %v423 = vmax.f32 %v407, 0.0
      %v424 = vmax.f32 %v408, 0.0
      %v425 = vmax.f32 %v409, 0.0
      %v426 = vmax.f32 %v410, 0.0
      %v427 = vmax.f32 %v411, 0.0
      %v428 = vmax.f32 %v412, 0.0
      %v429 = vmax.f32 %v413, 0.0
      %v430 = vmax.f32 %v414, 0.0
      %v431 = vmax.f32 %v415, 0.0
      %v432 = vmax.f32 %v416, 0.0
      %v433 = vmax.f32 %v417, 0.0
      %v434 = vmax.f32 %v418, 0.0
      %v435 = vmax.f32 %v419, 0.0
      %v436 = vmax.f32 %v420, 0.0
      %v437 = vmax.f32 %v421, 0.0
      %v438 = vmax.f32 %v422, 0.0
      %s439 = scalar_lea.vmem [#allocation2], 216
      %440 = vst [vmem:[%s439 + $0x1] sm:$0xff] %v423
      %441 = vst [vmem:[%s439 + $0x9] sm:$0xff] %v424
      %442 = vst [vmem:[%s439 + $0x19] sm:$0xff] %v425
      %443 = vst [vmem:[%s439 + $0x21] sm:$0xff] %v426
      %444 = vst [vmem:[%s439 + $0x31] sm:$0xff] %v427
      %445 = vst [vmem:[%s439 + $0x39] sm:$0xff] %v428
      %446 = vst [vmem:[%s439 + $0x49] sm:$0xff] %v429
      %447 = vst [vmem:[%s439 + $0x51] sm:$0xff] %v430
      %448 = vst [vmem:[%s439 + $0x61] sm:$0xff] %v431
      %449 = vst [vmem:[%s439 + $0x69] sm:$0xff] %v432
      %450 = vst [vmem:[%s439 + $0x79] sm:$0xff] %v433
      %451 = vst [vmem:[%s439 + $0x81] sm:$0xff] %v434
      %452 = vst [vmem:[%s439 + $0x91] sm:$0xff] %v435
      %453 = vst [vmem:[%s439 + $0x99] sm:$0xff] %v436
      %454 = vst [vmem:[%s439 + $0xa9] sm:$0xff] %v437
      %455 = vst [vmem:[%s439 + $0xb1] sm:$0xff] %v438
      %v456 = vld [vmem:[#allocation2] sm:$0xff]
      %v457 = vld [vmem:[#allocation2 + $0x8] sm:$0xff]
      %v458 = vld [vmem:[#allocation2 + $0x10] sm:$0x3]
      %v459 = vld [vmem:[#allocation2 + $0x18] sm:$0xff]
      %v460 = vld [vmem:[#allocation2 + $0x20] sm:$0xff]
      %v461 = vld [vmem:[#allocation2 + $0x28] sm:$0x3]
      %v462 = vld [vmem:[#allocation2 + $0x30] sm:$0xff]
      %v463 = vld [vmem:[#allocation2 + $0x38] sm:$0xff]
      %v464 = vld [vmem:[#allocation2 + $0x40] sm:$0x3]
      %v465 = vld [vmem:[#allocation2 + $0x48] sm:$0xff]
      %v466 = vld [vmem:[#allocation2 + $0x50] sm:$0xff]
      %v467 = vld [vmem:[#allocation2 + $0x58] sm:$0x3]
      %v468 = vld [vmem:[#allocation2 + $0x60] sm:$0xff]
      %v469 = vld [vmem:[#allocation2 + $0x68] sm:$0xff]
      %v470 = vld [vmem:[#allocation2 + $0x70] sm:$0x3]
      %v471 = vld [vmem:[#allocation2 + $0x78] sm:$0xff]
      %v472 = vld [vmem:[#allocation2 + $0x80] sm:$0xff]
      %v473 = vld [vmem:[#allocation2 + $0x88] sm:$0x3]
      %v474 = vld [vmem:[#allocation2 + $0x90] sm:$0xff]
      %v475 = vld [vmem:[#allocation2 + $0x98] sm:$0xff]
      %v476 = vld [vmem:[#allocation2 + $0xa0] sm:$0x3]
      %v477 = vld [vmem:[#allocation2 + $0xa8] sm:$0xff]
      %v478 = vld [vmem:[#allocation2 + $0xb0] sm:$0xff]
      %v479 = vld [vmem:[#allocation2 + $0xb8] sm:$0x3]
      %vm504 = vcmask 1046528
      %v505 = vrot.slane %v456, 1
      %v506 = vrot.slane %v457, 1
      %v507 = vsel %vm504, %v505, %v506
      %v508 = vrot.slane %v458, 1
      %v509 = vsel %vm504, %v506, %v508
      %v510 = vrot.slane %v459, 1
      %v511 = vrot.slane %v460, 1
      %v512 = vsel %vm504, %v510, %v511
      %v513 = vrot.slane %v461, 1
      %v514 = vsel %vm504, %v511, %v513
      %v515 = vrot.slane %v462, 1
      %v516 = vrot.slane %v463, 1
      %v517 = vsel %vm504, %v515, %v516
      %v518 = vrot.slane %v464, 1
      %v519 = vsel %vm504, %v516, %v518
      %v520 = vrot.slane %v465, 1
      %v521 = vrot.slane %v466, 1
      %v522 = vsel %vm504, %v520, %v521
      %v523 = vrot.slane %v467, 1
      %v524 = vsel %vm504, %v521, %v523
      %v525 = vrot.slane %v468, 1
      %v526 = vrot.slane %v469, 1
      %v527 = vsel %vm504, %v525, %v526
      %v528 = vrot.slane %v470, 1
      %v529 = vsel %vm504, %v526, %v528
      %v530 = vrot.slane %v471, 1
      %v531 = vrot.slane %v472, 1
      %v532 = vsel %vm504, %v530, %v531
      %v533 = vrot.slane %v473, 1
      %v534 = vsel %vm504, %v531, %v533
      %v535 = vrot.slane %v474, 1
      %v536 = vrot.slane %v475, 1
      %v537 = vsel %vm504, %v535, %v536
      %v538 = vrot.slane %v476, 1
      %v539 = vsel %vm504, %v536, %v538
      %v540 = vrot.slane %v477, 1
      %v541 = vrot.slane %v478, 1
      %v542 = vsel %vm504, %v540, %v541
      %v543 = vrot.slane %v479, 1
      %v544 = vsel %vm504, %v541, %v543
      %vm561 = vcmask 1045504
      %v562 = vrot.slane %v456, 2
      %v563 = vrot.slane %v457, 2
      %v564 = vsel %vm561, %v562, %v563
      %v565 = vrot.slane %v458, 2
      %v566 = vsel %vm561, %v563, %v565
      %v567 = vrot.slane %v459, 2
      %v568 = vrot.slane %v460, 2
      %v569 = vsel %vm561, %v567, %v568
      %v570 = vrot.slane %v461, 2
      %v571 = vsel %vm561, %v568, %v570
      %v572 = vrot.slane %v462, 2
      %v573 = vrot.slane %v463, 2
      %v574 = vsel %vm561, %v572, %v573
      %v575 = vrot.slane %v464, 2
      %v576 = vsel %vm561, %v573, %v575
      %v577 = vrot.slane %v465, 2
      %v578 = vrot.slane %v466, 2
      %v579 = vsel %vm561, %v577, %v578
      %v580 = vrot.slane %v467, 2
      %v581 = vsel %vm561, %v578, %v580
      %v582 = vrot.slane %v468, 2
      %v583 = vrot.slane %v469, 2
      %v584 = vsel %vm561, %v582, %v583
      %v585 = vrot.slane %v470, 2
      %v586 = vsel %vm561, %v583, %v585
      %v587 = vrot.slane %v471, 2
      %v588 = vrot.slane %v472, 2
      %v589 = vsel %vm561, %v587, %v588
      %v590 = vrot.slane %v473, 2
      %v591 = vsel %vm561, %v588, %v590
      %v592 = vrot.slane %v474, 2
      %v593 = vrot.slane %v475, 2
      %v594 = vsel %vm561, %v592, %v593
      %v595 = vrot.slane %v476, 2
      %v596 = vsel %vm561, %v593, %v595
      %v597 = vrot.slane %v477, 2
      %v598 = vrot.slane %v478, 2
      %v599 = vsel %vm561, %v597, %v598
      %v600 = vrot.slane %v479, 2
      %v601 = vsel %vm561, %v598, %v600
      %v618 = vld [vmem:[%s1] sm:$0xff]
      %v619 = vld [vmem:[%s1 + $0x8] sm:$0xff]
      %v620 = vld [vmem:[%s1 + $0x10] sm:$0xff]
      %v621 = vld [vmem:[%s1 + $0x18] sm:$0xff]
      %v622 = vld [vmem:[%s1 + $0x20] sm:$0xff]
      %v623 = vld [vmem:[%s1 + $0x28] sm:$0xff]
      %v624 = vld [vmem:[%s1 + $0x30] sm:$0xff]
      %v625 = vld [vmem:[%s1 + $0x38] sm:$0xff]
      %v626 = vld [vmem:[%s1 + $0x40] sm:$0xff]
      %v627 = vld [vmem:[%s1 + $0x48] sm:$0xff]
      %v628 = vld [vmem:[%s1 + $0x50] sm:$0xff]
      %v629 = vld [vmem:[%s1 + $0x58] sm:$0xff]
      %v630 = vld [vmem:[%s1 + $0x60] sm:$0xff]
      %v631 = vld [vmem:[%s1 + $0x68] sm:$0xff]
      %v632 = vld [vmem:[%s1 + $0x70] sm:$0xff]
      %v633 = vld [vmem:[%s1 + $0x78] sm:$0xff]
      %v634 = vld [vmem:[%s1 + $0x80] sm:$0xff]
      %v635 = vld [vmem:[%s1 + $0x88] sm:$0xff]
      %v636 = vld [vmem:[%s1 + $0x90] sm:$0xff]
      %v637 = vld [vmem:[%s1 + $0x98] sm:$0xff]
      %v638 = vld [vmem:[%s1 + $0xa0] sm:$0xff]
      %v639 = vld [vmem:[%s1 + $0xa8] sm:$0xff]
      %v640 = vld [vmem:[%s1 + $0xb0] sm:$0xff]
      %v641 = vld [vmem:[%s1 + $0xb8] sm:$0xff]
      %v642 = vld [vmem:[%s1 + $0xc0] sm:$0xff]
      %v643 = vld [vmem:[%s1 + $0xc8] sm:$0xff]
      %v644 = vld [vmem:[%s1 + $0xd0] sm:$0xff]
      %v645 = vld [vmem:[%s1 + $0xd8] sm:$0xff]
      %v646 = vld [vmem:[%s1 + $0xe0] sm:$0xff]
      %v647 = vld [vmem:[%s1 + $0xe8] sm:$0xff]
      %v648 = vld [vmem:[%s1 + $0xf0] sm:$0xff]
      %v649 = vld [vmem:[%s1 + $0xf8] sm:$0xff]
      %v650 = vld [vmem:[%s1 + $0x100] sm:$0xff]
      %v651 = vld [vmem:[%s1 + $0x108] sm:$0xff]
      %v652 = vld [vmem:[%s1 + $0x110] sm:$0xff]
      %v653 = vld [vmem:[%s1 + $0x118] sm:$0xff]
      %v654 = vld [vmem:[%s1 + $0x120] sm:$0xff]
      %v655 = vld [vmem:[%s1 + $0x128] sm:$0xff]
      %v656 = vld [vmem:[%s1 + $0x130] sm:$0xff]
      %v657 = vld [vmem:[%s1 + $0x138] sm:$0xff]
      %v658 = vld [vmem:[%s1 + $0x140] sm:$0xff]
      %v659 = vld [vmem:[%s1 + $0x148] sm:$0xff]
      %v660 = vld [vmem:[%s1 + $0x150] sm:$0xff]
      %v661 = vld [vmem:[%s1 + $0x158] sm:$0xff]
      %v662 = vld [vmem:[%s1 + $0x160] sm:$0xff]
      %v663 = vld [vmem:[%s1 + $0x168] sm:$0xff]
      %v664 = vld [vmem:[%s1 + $0x170] sm:$0xff]
      %v665 = vld [vmem:[%s1 + $0x178] sm:$0xff]
      %v666 = vld [vmem:[%s357] sm:$0xff]
      %v667 = vld [vmem:[%s357 + $0x8] sm:$0xff]
      %v668 = vld [vmem:[%s357 + $0x10] sm:$0x3]
      %v669 = vld [vmem:[%s357 + $0x18] sm:$0xff]
      %v670 = vld [vmem:[%s357 + $0x20] sm:$0xff]
      %v671 = vld [vmem:[%s357 + $0x28] sm:$0x3]
      %v672 = vld [vmem:[%s357 + $0x30] sm:$0xff]
      %v673 = vld [vmem:[%s357 + $0x38] sm:$0xff]
      %v674 = vld [vmem:[%s357 + $0x40] sm:$0x3]
      %v675 = vld [vmem:[%s357 + $0x48] sm:$0xff]
      %v676 = vld [vmem:[%s357 + $0x50] sm:$0xff]
      %v677 = vld [vmem:[%s357 + $0x58] sm:$0x3]
      %v678 = vld [vmem:[%s357 + $0x60] sm:$0xff]
      %v679 = vld [vmem:[%s357 + $0x68] sm:$0xff]
      %v680 = vld [vmem:[%s357 + $0x70] sm:$0x3]
      %v681 = vld [vmem:[%s357 + $0x78] sm:$0xff]
      %v682 = vld [vmem:[%s357 + $0x80] sm:$0xff]
      %v683 = vld [vmem:[%s357 + $0x88] sm:$0x3]
      %v684 = vld [vmem:[%s357 + $0x90] sm:$0xff]
      %v685 = vld [vmem:[%s357 + $0x98] sm:$0xff]
      %v686 = vld [vmem:[%s357 + $0xa0] sm:$0x3]
      %v687 = vld [vmem:[%s357 + $0xa8] sm:$0xff]
      %v688 = vld [vmem:[%s357 + $0xb0] sm:$0xff]
      %v689 = vld [vmem:[%s357 + $0xb8] sm:$0x3]
      %v714 = vrot.slane %v666, 1
      %v715 = vrot.slane %v667, 1
      %v716 = vsel %vm504, %v714, %v715
      %v717 = vrot.slane %v668, 1
      %v718 = vsel %vm504, %v715, %v717
      %v719 = vrot.slane %v669, 1
      %v720 = vrot.slane %v670, 1
      %v721 = vsel %vm504, %v719, %v720
      %v722 = vrot.slane %v671, 1
      %v723 = vsel %vm504, %v720, %v722
      %v724 = vrot.slane %v672, 1
      %v725 = vrot.slane %v673, 1
      %v726 = vsel %vm504, %v724, %v725
      %v727 = vrot.slane %v674, 1
      %v728 = vsel %vm504, %v725, %v727
      %v729 = vrot.slane %v675, 1
      %v730 = vrot.slane %v676, 1
      %v731 = vsel %vm504, %v729, %v730
      %v732 = vrot.slane %v677, 1
      %v733 = vsel %vm504, %v730, %v732
      %v734 = vrot.slane %v678, 1
      %v735 = vrot.slane %v679, 1
      %v736 = vsel %vm504, %v734, %v735
      %v737 = vrot.slane %v680, 1
      %v738 = vsel %vm504, %v735, %v737
      %v739 = vrot.slane %v681, 1
      %v740 = vrot.slane %v682, 1
      %v741 = vsel %vm504, %v739, %v740
      %v742 = vrot.slane %v683, 1
      %v743 = vsel %vm504, %v740, %v742
      %v744 = vrot.slane %v684, 1
      %v745 = vrot.slane %v685, 1
      %v746 = vsel %vm504, %v744, %v745
      %v747 = vrot.slane %v686, 1
      %v748 = vsel %vm504, %v745, %v747
      %v749 = vrot.slane %v687, 1
      %v750 = vrot.slane %v688, 1
      %v751 = vsel %vm504, %v749, %v750
      %v752 = vrot.slane %v689, 1
      %v753 = vsel %vm504, %v750, %v752
      %v770 = vrot.slane %v666, 2
      %v771 = vrot.slane %v667, 2
      %v772 = vsel %vm561, %v770, %v771
      %v773 = vrot.slane %v668, 2
      %v774 = vsel %vm561, %v771, %v773
      %v775 = vrot.slane %v669, 2
      %v776 = vrot.slane %v670, 2
      %v777 = vsel %vm561, %v775, %v776
      %v778 = vrot.slane %v671, 2
      %v779 = vsel %vm561, %v776, %v778
      %v780 = vrot.slane %v672, 2
      %v781 = vrot.slane %v673, 2
      %v782 = vsel %vm561, %v780, %v781
      %v783 = vrot.slane %v674, 2
      %v784 = vsel %vm561, %v781, %v783
      %v785 = vrot.slane %v675, 2
      %v786 = vrot.slane %v676, 2
      %v787 = vsel %vm561, %v785, %v786
      %v788 = vrot.slane %v677, 2
      %v789 = vsel %vm561, %v786, %v788
      %v790 = vrot.slane %v678, 2
      %v791 = vrot.slane %v679, 2
      %v792 = vsel %vm561, %v790, %v791
      %v793 = vrot.slane %v680, 2
      %v794 = vsel %vm561, %v791, %v793
      %v795 = vrot.slane %v681, 2
      %v796 = vrot.slane %v682, 2
      %v797 = vsel %vm561, %v795, %v796
      %v798 = vrot.slane %v683, 2
      %v799 = vsel %vm561, %v796, %v798
      %v800 = vrot.slane %v684, 2
      %v801 = vrot.slane %v685, 2
      %v802 = vsel %vm561, %v800, %v801
      %v803 = vrot.slane %v686, 2
      %v804 = vsel %vm561, %v801, %v803
      %v805 = vrot.slane %v687, 2
      %v806 = vrot.slane %v688, 2
      %v807 = vsel %vm561, %v805, %v806
      %v808 = vrot.slane %v689, 2
      %v809 = vsel %vm561, %v806, %v808
      %v826 = vld [vmem:[%s1 + $0x180] sm:$0xff]
      %v827 = vld [vmem:[%s1 + $0x188] sm:$0xff]
      %v828 = vld [vmem:[%s1 + $0x190] sm:$0xff]
      %v829 = vld [vmem:[%s1 + $0x198] sm:$0xff]
      %v830 = vld [vmem:[%s1 + $0x1a0] sm:$0xff]
      %v831 = vld [vmem:[%s1 + $0x1a8] sm:$0xff]
      %v832 = vld [vmem:[%s1 + $0x1b0] sm:$0xff]
      %v833 = vld [vmem:[%s1 + $0x1b8] sm:$0xff]
      %v834 = vld [vmem:[%s1 + $0x1c0] sm:$0xff]
      %v835 = vld [vmem:[%s1 + $0x1c8] sm:$0xff]
      %v836 = vld [vmem:[%s1 + $0x1d0] sm:$0xff]
      %v837 = vld [vmem:[%s1 + $0x1d8] sm:$0xff]
      %v838 = vld [vmem:[%s1 + $0x1e0] sm:$0xff]
      %v839 = vld [vmem:[%s1 + $0x1e8] sm:$0xff]
      %v840 = vld [vmem:[%s1 + $0x1f0] sm:$0xff]
      %v841 = vld [vmem:[%s1 + $0x1f8] sm:$0xff]
      %v842 = vld [vmem:[%s1 + $0x200] sm:$0xff]
      %v843 = vld [vmem:[%s1 + $0x208] sm:$0xff]
      %v844 = vld [vmem:[%s1 + $0x210] sm:$0xff]
      %v845 = vld [vmem:[%s1 + $0x218] sm:$0xff]
      %v846 = vld [vmem:[%s1 + $0x220] sm:$0xff]
      %v847 = vld [vmem:[%s1 + $0x228] sm:$0xff]
      %v848 = vld [vmem:[%s1 + $0x230] sm:$0xff]
      %v849 = vld [vmem:[%s1 + $0x238] sm:$0xff]
      %v850 = vld [vmem:[%s1 + $0x240] sm:$0xff]
      %v851 = vld [vmem:[%s1 + $0x248] sm:$0xff]
      %v852 = vld [vmem:[%s1 + $0x250] sm:$0xff]
      %v853 = vld [vmem:[%s1 + $0x258] sm:$0xff]
      %v854 = vld [vmem:[%s1 + $0x260] sm:$0xff]
      %v855 = vld [vmem:[%s1 + $0x268] sm:$0xff]
      %v856 = vld [vmem:[%s1 + $0x270] sm:$0xff]
      %v857 = vld [vmem:[%s1 + $0x278] sm:$0xff]
      %v858 = vld [vmem:[%s1 + $0x280] sm:$0xff]
      %v859 = vld [vmem:[%s1 + $0x288] sm:$0xff]
      %v860 = vld [vmem:[%s1 + $0x290] sm:$0xff]
      %v861 = vld [vmem:[%s1 + $0x298] sm:$0xff]
      %v862 = vld [vmem:[%s1 + $0x2a0] sm:$0xff]
      %v863 = vld [vmem:[%s1 + $0x2a8] sm:$0xff]
      %v864 = vld [vmem:[%s1 + $0x2b0] sm:$0xff]
      %v865 = vld [vmem:[%s1 + $0x2b8] sm:$0xff]
      %v866 = vld [vmem:[%s1 + $0x2c0] sm:$0xff]
      %v867 = vld [vmem:[%s1 + $0x2c8] sm:$0xff]
      %v868 = vld [vmem:[%s1 + $0x2d0] sm:$0xff]
      %v869 = vld [vmem:[%s1 + $0x2d8] sm:$0xff]
      %v870 = vld [vmem:[%s1 + $0x2e0] sm:$0xff]
      %v871 = vld [vmem:[%s1 + $0x2e8] sm:$0xff]
      %v872 = vld [vmem:[%s1 + $0x2f0] sm:$0xff]
      %v873 = vld [vmem:[%s1 + $0x2f8] sm:$0xff]
      %874 = vmatprep.subr.mxu0 0.0
      %875 = vmatpush1.msra.mxu0 %v841
      %876 = vmatprep.subr.mxu0 0.0
      %877 = vmatpush1.msra.mxu0 %v840
      %878 = vmatprep.subr.mxu0 0.0
      %879 = vmatpush1.msra.mxu0 %v839
      %880 = vmatprep.subr.mxu0 0.0
      %881 = vmatpush1.msra.mxu0 %v838
      %882 = vmatprep.subr.mxu0 0.0
      %883 = vmatpush1.msra.mxu0 %v837
      %884 = vmatprep.subr.mxu0 0.0
      %885 = vmatpush1.msra.mxu0 %v836
      %886 = vmatprep.subr.mxu0 0.0
      %887 = vmatpush1.msra.mxu0 %v835
      %888 = vmatprep.subr.mxu0 0.0
      %889 = vmatpush1.msra.mxu0 %v834
      %890 = vmatprep.subr.mxu0 0.0
      %891 = vmatpush1.msra.mxu0 %v833
      %892 = vmatprep.subr.mxu0 0.0
      %893 = vmatpush1.msra.mxu0 %v832
      %894 = vmatprep.subr.mxu0 0.0
      %895 = vmatpush1.msra.mxu0 %v831
      %896 = vmatprep.subr.mxu0 0.0
      %897 = vmatpush1.msra.mxu0 %v830
      %898 = vmatprep.subr.mxu0 0.0
      %899 = vmatpush1.msra.mxu0 %v829
      %900 = vmatprep.subr.mxu0 0.0
      %901 = vmatpush1.msra.mxu0 %v828
      %902 = vmatprep.subr.mxu0 0.0
      %903 = vmatpush1.msra.mxu0 %v827
      %904 = vmatprep.subr.mxu0 0.0
      %905 = vmatpush1.msra.mxu0 %v826
      %906 = vmatprep.subr.mxu0 0.0
      %907 = vmatpush2.msra.mxu0 %v857
      %908 = vmatprep.subr.mxu0 0.0
      %909 = vmatpush2.msra.mxu0 %v856
      %910 = vmatprep.subr.mxu0 0.0
      %911 = vmatpush2.msra.mxu0 %v855
      %912 = vmatprep.subr.mxu0 0.0
      %913 = vmatpush2.msra.mxu0 %v854
      %914 = vmatprep.subr.mxu0 0.0
      %915 = vmatpush2.msra.mxu0 %v853
      %916 = vmatprep.subr.mxu0 0.0
      %917 = vmatpush2.msra.mxu0 %v852
      %918 = vmatprep.subr.mxu0 0.0
      %919 = vmatpush2.msra.mxu0 %v851
      %920 = vmatprep.subr.mxu0 0.0
      %921 = vmatpush2.msra.mxu0 %v850
      %922 = vmatprep.subr.mxu0 0.0
      %923 = vmatpush2.msra.mxu0 %v849
      %924 = vmatprep.subr.mxu0 0.0
      %925 = vmatpush2.msra.mxu0 %v848
      %926 = vmatprep.subr.mxu0 0.0
      %927 = vmatpush2.msra.mxu0 %v847
      %928 = vmatprep.subr.mxu0 0.0
      %929 = vmatpush2.msra.mxu0 %v846
      %930 = vmatprep.subr.mxu0 0.0
      %931 = vmatpush2.msra.mxu0 %v845
      %932 = vmatprep.subr.mxu0 0.0
      %933 = vmatpush2.msra.mxu0 %v844
      %934 = vmatprep.subr.mxu0 0.0
      %935 = vmatpush2.msra.mxu0 %v843
      %936 = vmatprep.subr.mxu0 0.0
      %937 = vmatpush2.msra.mxu0 %v842
      %938 = vmatprep.mubr.f32.mxu0 %v716
      %939 = vmatmul.mubr.f32.gmra.mxu0 %v666
      %v940 = vpop.f32.mrf.mxu0
      %v941 = vadd.f32 0.0, %v940
      %v942 = vpop.f32.mrf.mxu0
      %943 = vmatprep.mubr.f32.mxu0 %v718
      %944 = vmatmul.mubr.f32.gmra.mxu0 %v667
      %v945 = vpop.f32.mrf.mxu0
      %v946 = vadd.f32 0.0, %v945
      %v947 = vpop.f32.mrf.mxu0
      %948 = vmatprep.mubr.f32.mxu0 %v721
      %949 = vmatmul.mubr.f32.gmra.mxu0 %v669
      %v950 = vpop.f32.mrf.mxu0
      %v951 = vadd.f32 0.0, %v950
      %v952 = vpop.f32.mrf.mxu0
      %953 = vmatprep.mubr.f32.mxu0 %v723
      %954 = vmatmul.mubr.f32.gmra.mxu0 %v670
      %v955 = vpop.f32.mrf.mxu0
      %v956 = vadd.f32 0.0, %v955
      %v957 = vpop.f32.mrf.mxu0
      %958 = vmatprep.mubr.f32.mxu0 %v726
      %959 = vmatmul.mubr.f32.gmra.mxu0 %v672
      %v960 = vpop.f32.mrf.mxu0
      %v961 = vadd.f32 0.0, %v960
      %v962 = vpop.f32.mrf.mxu0
      %963 = vmatprep.mubr.f32.mxu0 %v728
      %964 = vmatmul.mubr.f32.gmra.mxu0 %v673
      %v965 = vpop.f32.mrf.mxu0
      %v966 = vadd.f32 0.0, %v965
      %v967 = vpop.f32.mrf.mxu0
      %968 = vmatprep.mubr.f32.mxu0 %v731
      %969 = vmatmul.mubr.f32.gmra.mxu0 %v675
      %v970 = vpop.f32.mrf.mxu0
      %v971 = vadd.f32 0.0, %v970
      %v972 = vpop.f32.mrf.mxu0
      %973 = vmatprep.mubr.f32.mxu0 %v733
      %974 = vmatmul.mubr.f32.gmra.mxu0 %v676
      %v975 = vpop.f32.mrf.mxu0
      %v976 = vadd.f32 0.0, %v975
      %v977 = vpop.f32.mrf.mxu0
      %978 = vmatprep.mubr.f32.mxu0 %v736
      %979 = vmatmul.mubr.f32.gmra.mxu0 %v678
      %v980 = vpop.f32.mrf.mxu0
      %v981 = vadd.f32 0.0, %v980
      %v982 = vpop.f32.mrf.mxu0
      %983 = vmatprep.mubr.f32.mxu0 %v738
      %984 = vmatmul.mubr.f32.gmra.mxu0 %v679
      %v985 = vpop.f32.mrf.mxu0
      %v986 = vadd.f32 0.0, %v985
      %v987 = vpop.f32.mrf.mxu0
      %988 = vmatprep.mubr.f32.mxu0 %v741
      %989 = vmatmul.mubr.f32.gmra.mxu0 %v681
      %v990 = vpop.f32.mrf.mxu0
      %v991 = vadd.f32 0.0, %v990
      %v992 = vpop.f32.mrf.mxu0
      %993 = vmatprep.mubr.f32.mxu0 %v743
      %994 = vmatmul.mubr.f32.gmra.mxu0 %v682
      %v995 = vpop.f32.mrf.mxu0
      %v996 = vadd.f32 0.0, %v995
      %v997 = vpop.f32.mrf.mxu0
      %998 = vmatprep.mubr.f32.mxu0 %v746
      %999 = vmatmul.mubr.f32.gmra.mxu0 %v684
      %v1000 = vpop.f32.mrf.mxu0
      %v1001 = vadd.f32 0.0, %v1000
      %v1002 = vpop.f32.mrf.mxu0
      %1003 = vmatprep.mubr.f32.mxu0 %v748
      %1004 = vmatmul.mubr.f32.gmra.mxu0 %v685
      %v1005 = vpop.f32.mrf.mxu0
      %v1006 = vadd.f32 0.0, %v1005
      %v1007 = vpop.f32.mrf.mxu0
      %1008 = vmatprep.mubr.f32.mxu0 %v751
      %1009 = vmatmul.mubr.f32.gmra.mxu0 %v687
      %v1010 = vpop.f32.mrf.mxu0
      %v1011 = vadd.f32 0.0, %v1010
      %v1012 = vpop.f32.mrf.mxu0
      %1013 = vmatprep.mubr.f32.mxu0 %v753
      %1014 = vmatmul.mubr.f32.gmra.mxu0 %v688
      %v1015 = vpop.f32.mrf.mxu0
      %v1016 = vadd.f32 0.0, %v1015
      %v1017 = vpop.f32.mrf.mxu0
      %1018 = vdwg.mxu0
      %1019 = vmatprep.subr.mxu0 0.0
      %1020 = vmatpush1.msra.mxu0 %v873
      %1021 = vmatprep.subr.mxu0 0.0
      %1022 = vmatpush1.msra.mxu0 %v872
      %1023 = vmatprep.subr.mxu0 0.0
      %1024 = vmatpush1.msra.mxu0 %v871
      %1025 = vmatprep.subr.mxu0 0.0
      %1026 = vmatpush1.msra.mxu0 %v870
      %1027 = vmatprep.subr.mxu0 0.0
      %1028 = vmatpush1.msra.mxu0 %v869
      %1029 = vmatprep.subr.mxu0 0.0
      %1030 = vmatpush1.msra.mxu0 %v868
      %1031 = vmatprep.subr.mxu0 0.0
      %1032 = vmatpush1.msra.mxu0 %v867
      %1033 = vmatprep.subr.mxu0 0.0
      %1034 = vmatpush1.msra.mxu0 %v866
      %1035 = vmatprep.subr.mxu0 0.0
      %1036 = vmatpush1.msra.mxu0 %v865
      %1037 = vmatprep.subr.mxu0 0.0
      %1038 = vmatpush1.msra.mxu0 %v864
      %1039 = vmatprep.subr.mxu0 0.0
      %1040 = vmatpush1.msra.mxu0 %v863
      %1041 = vmatprep.subr.mxu0 0.0
      %1042 = vmatpush1.msra.mxu0 %v862
      %1043 = vmatprep.subr.mxu0 0.0
      %1044 = vmatpush1.msra.mxu0 %v861
      %1045 = vmatprep.subr.mxu0 0.0
      %1046 = vmatpush1.msra.mxu0 %v860
      %1047 = vmatprep.subr.mxu0 0.0
      %1048 = vmatpush1.msra.mxu0 %v859
      %1049 = vmatprep.subr.mxu0 0.0
      %1050 = vmatpush1.msra.mxu0 %v858
      %1051 = vmatprep.subr.mxu0 0.0
      %1052 = vmatpush2.msra.mxu0 0.0
      %1053 = vmatprep.subr.mxu0 0.0
      %1054 = vmatpush2.msra.mxu0 0.0
      %1055 = vmatprep.subr.mxu0 0.0
      %1056 = vmatpush2.msra.mxu0 0.0
      %1057 = vmatprep.subr.mxu0 0.0
      %1058 = vmatpush2.msra.mxu0 0.0
      %1059 = vmatprep.subr.mxu0 0.0
      %1060 = vmatpush2.msra.mxu0 0.0
      %1061 = vmatprep.subr.mxu0 0.0
      %1062 = vmatpush2.msra.mxu0 0.0
      %1063 = vmatprep.subr.mxu0 0.0
      %1064 = vmatpush2.msra.mxu0 0.0
      %1065 = vmatprep.subr.mxu0 0.0
      %1066 = vmatpush2.msra.mxu0 0.0
      %1067 = vmatprep.subr.mxu0 0.0
      %1068 = vmatpush2.msra.mxu0 0.0
      %1069 = vmatprep.subr.mxu0 0.0
      %1070 = vmatpush2.msra.mxu0 0.0
      %1071 = vmatprep.subr.mxu0 0.0
      %1072 = vmatpush2.msra.mxu0 0.0
      %1073 = vmatprep.subr.mxu0 0.0
      %1074 = vmatpush2.msra.mxu0 0.0
      %1075 = vmatprep.subr.mxu0 0.0
      %1076 = vmatpush2.msra.mxu0 0.0
      %1077 = vmatprep.subr.mxu0 0.0
      %1078 = vmatpush2.msra.mxu0 0.0
      %1079 = vmatprep.subr.mxu0 0.0
      %1080 = vmatpush2.msra.mxu0 0.0
      %1081 = vmatprep.subr.mxu0 0.0
      %1082 = vmatpush2.msra.mxu0 0.0
      %1083 = vmatprep.mubr.f32.mxu0 0.0
      %1084 = vmatmul.mubr.f32.gmra.mxu0 %v772
      %v1085 = vpop.f32.mrf.mxu0
      %v1086 = vadd.f32 %v941, %v1085
      %v1087 = vpop.f32.mrf.mxu0
      %1088 = vmatprep.mubr.f32.mxu0 0.0
      %1089 = vmatmul.mubr.f32.gmra.mxu0 %v774
      %v1090 = vpop.f32.mrf.mxu0
      %v1091 = vadd.f32 %v946, %v1090
      %v1092 = vpop.f32.mrf.mxu0
      %1093 = vmatprep.mubr.f32.mxu0 0.0
      %1094 = vmatmul.mubr.f32.gmra.mxu0 %v777
      %v1095 = vpop.f32.mrf.mxu0
      %v1096 = vadd.f32 %v951, %v1095
      %v1097 = vpop.f32.mrf.mxu0
      %1098 = vmatprep.mubr.f32.mxu0 0.0
      %1099 = vmatmul.mubr.f32.gmra.mxu0 %v779
      %v1100 = vpop.f32.mrf.mxu0
      %v1101 = vadd.f32 %v956, %v1100
      %v1102 = vpop.f32.mrf.mxu0
      %1103 = vmatprep.mubr.f32.mxu0 0.0
      %1104 = vmatmul.mubr.f32.gmra.mxu0 %v782
      %v1105 = vpop.f32.mrf.mxu0
      %v1106 = vadd.f32 %v961, %v1105
      %v1107 = vpop.f32.mrf.mxu0
      %1108 = vmatprep.mubr.f32.mxu0 0.0
      %1109 = vmatmul.mubr.f32.gmra.mxu0 %v784
      %v1110 = vpop.f32.mrf.mxu0
      %v1111 = vadd.f32 %v966, %v1110
      %v1112 = vpop.f32.mrf.mxu0
      %1113 = vmatprep.mubr.f32.mxu0 0.0
      %1114 = vmatmul.mubr.f32.gmra.mxu0 %v787
      %v1115 = vpop.f32.mrf.mxu0
      %v1116 = vadd.f32 %v971, %v1115
      %v1117 = vpop.f32.mrf.mxu0
      %1118 = vmatprep.mubr.f32.mxu0 0.0
      %1119 = vmatmul.mubr.f32.gmra.mxu0 %v789
      %v1120 = vpop.f32.mrf.mxu0
      %v1121 = vadd.f32 %v976, %v1120
      %v1122 = vpop.f32.mrf.mxu0
      %1123 = vmatprep.mubr.f32.mxu0 0.0
      %1124 = vmatmul.mubr.f32.gmra.mxu0 %v792
      %v1125 = vpop.f32.mrf.mxu0
      %v1126 = vadd.f32 %v981, %v1125
      %v1127 = vpop.f32.mrf.mxu0
      %1128 = vmatprep.mubr.f32.mxu0 0.0
      %1129 = vmatmul.mubr.f32.gmra.mxu0 %v794
      %v1130 = vpop.f32.mrf.mxu0
      %v1131 = vadd.f32 %v986, %v1130
      %v1132 = vpop.f32.mrf.mxu0
      %1133 = vmatprep.mubr.f32.mxu0 0.0
      %1134 = vmatmul.mubr.f32.gmra.mxu0 %v797
      %v1135 = vpop.f32.mrf.mxu0
      %v1136 = vadd.f32 %v991, %v1135
      %v1137 = vpop.f32.mrf.mxu0
      %1138 = vmatprep.mubr.f32.mxu0 0.0
      %1139 = vmatmul.mubr.f32.gmra.mxu0 %v799
      %v1140 = vpop.f32.mrf.mxu0
      %v1141 = vadd.f32 %v996, %v1140
      %v1142 = vpop.f32.mrf.mxu0
      %1143 = vmatprep.mubr.f32.mxu0 0.0
      %1144 = vmatmul.mubr.f32.gmra.mxu0 %v802
      %v1145 = vpop.f32.mrf.mxu0
      %v1146 = vadd.f32 %v1001, %v1145
      %v1147 = vpop.f32.mrf.mxu0
      %1148 = vmatprep.mubr.f32.mxu0 0.0
      %1149 = vmatmul.mubr.f32.gmra.mxu0 %v804
      %v1150 = vpop.f32.mrf.mxu0
      %v1151 = vadd.f32 %v1006, %v1150
      %v1152 = vpop.f32.mrf.mxu0
      %1153 = vmatprep.mubr.f32.mxu0 0.0
      %1154 = vmatmul.mubr.f32.gmra.mxu0 %v807
      %v1155 = vpop.f32.mrf.mxu0
      %v1156 = vadd.f32 %v1011, %v1155
      %v1157 = vpop.f32.mrf.mxu0
      %1158 = vmatprep.mubr.f32.mxu0 0.0
      %1159 = vmatmul.mubr.f32.gmra.mxu0 %v809
      %v1160 = vpop.f32.mrf.mxu0
      %v1161 = vadd.f32 %v1016, %v1160
      %v1162 = vpop.f32.mrf.mxu0
      %1163 = vdwg.mxu0
      %1164 = vmatprep.subr.mxu0 0.0
      %1165 = vmatpush1.msra.mxu0 %v633
      %1166 = vmatprep.subr.mxu0 0.0
      %1167 = vmatpush1.msra.mxu0 %v632
      %1168 = vmatprep.subr.mxu0 0.0
      %1169 = vmatpush1.msra.mxu0 %v631
      %1170 = vmatprep.subr.mxu0 0.0
      %1171 = vmatpush1.msra.mxu0 %v630
      %1172 = vmatprep.subr.mxu0 0.0
      %1173 = vmatpush1.msra.mxu0 %v629
      %1174 = vmatprep.subr.mxu0 0.0
      %1175 = vmatpush1.msra.mxu0 %v628
      %1176 = vmatprep.subr.mxu0 0.0
      %1177 = vmatpush1.msra.mxu0 %v627
      %1178 = vmatprep.subr.mxu0 0.0
      %1179 = vmatpush1.msra.mxu0 %v626
      %1180 = vmatprep.subr.mxu0 0.0
      %1181 = vmatpush1.msra.mxu0 %v625
      %1182 = vmatprep.subr.mxu0 0.0
      %1183 = vmatpush1.msra.mxu0 %v624
      %1184 = vmatprep.subr.mxu0 0.0
      %1185 = vmatpush1.msra.mxu0 %v623
      %1186 = vmatprep.subr.mxu0 0.0
      %1187 = vmatpush1.msra.mxu0 %v622
      %1188 = vmatprep.subr.mxu0 0.0
      %1189 = vmatpush1.msra.mxu0 %v621
      %1190 = vmatprep.subr.mxu0 0.0
      %1191 = vmatpush1.msra.mxu0 %v620
      %1192 = vmatprep.subr.mxu0 0.0
      %1193 = vmatpush1.msra.mxu0 %v619
      %1194 = vmatprep.subr.mxu0 0.0
      %1195 = vmatpush1.msra.mxu0 %v618
      %1196 = vmatprep.subr.mxu0 0.0
      %1197 = vmatpush2.msra.mxu0 %v649
      %1198 = vmatprep.subr.mxu0 0.0
      %1199 = vmatpush2.msra.mxu0 %v648
      %1200 = vmatprep.subr.mxu0 0.0
      %1201 = vmatpush2.msra.mxu0 %v647
      %1202 = vmatprep.subr.mxu0 0.0
      %1203 = vmatpush2.msra.mxu0 %v646
      %1204 = vmatprep.subr.mxu0 0.0
      %1205 = vmatpush2.msra.mxu0 %v645
      %1206 = vmatprep.subr.mxu0 0.0
      %1207 = vmatpush2.msra.mxu0 %v644
      %1208 = vmatprep.subr.mxu0 0.0
      %1209 = vmatpush2.msra.mxu0 %v643
      %1210 = vmatprep.subr.mxu0 0.0
      %1211 = vmatpush2.msra.mxu0 %v642
      %1212 = vmatprep.subr.mxu0 0.0
      %1213 = vmatpush2.msra.mxu0 %v641
      %1214 = vmatprep.subr.mxu0 0.0
      %1215 = vmatpush2.msra.mxu0 %v640
      %1216 = vmatprep.subr.mxu0 0.0
      %1217 = vmatpush2.msra.mxu0 %v639
      %1218 = vmatprep.subr.mxu0 0.0
      %1219 = vmatpush2.msra.mxu0 %v638
      %1220 = vmatprep.subr.mxu0 0.0
      %1221 = vmatpush2.msra.mxu0 %v637
      %1222 = vmatprep.subr.mxu0 0.0
      %1223 = vmatpush2.msra.mxu0 %v636
      %1224 = vmatprep.subr.mxu0 0.0
      %1225 = vmatpush2.msra.mxu0 %v635
      %1226 = vmatprep.subr.mxu0 0.0
      %1227 = vmatpush2.msra.mxu0 %v634
      %1228 = vmatprep.mubr.f32.mxu0 %v507
      %1229 = vmatmul.mubr.f32.gmra.mxu0 %v456
      %v1230 = vpop.f32.mrf.mxu0
      %v1231 = vadd.f32 %v1086, %v1230
      %v1232 = vpop.f32.mrf.mxu0
      %1233 = vmatprep.mubr.f32.mxu0 %v509
      %1234 = vmatmul.mubr.f32.gmra.mxu0 %v457
      %v1235 = vpop.f32.mrf.mxu0
      %v1236 = vadd.f32 %v1091, %v1235
      %v1237 = vpop.f32.mrf.mxu0
      %1238 = vmatprep.mubr.f32.mxu0 %v512
      %1239 = vmatmul.mubr.f32.gmra.mxu0 %v459
      %v1240 = vpop.f32.mrf.mxu0
      %v1241 = vadd.f32 %v1096, %v1240
      %v1242 = vpop.f32.mrf.mxu0
      %1243 = vmatprep.mubr.f32.mxu0 %v514
      %1244 = vmatmul.mubr.f32.gmra.mxu0 %v460
      %v1245 = vpop.f32.mrf.mxu0
      %v1246 = vadd.f32 %v1101, %v1245
      %v1247 = vpop.f32.mrf.mxu0
      %1248 = vmatprep.mubr.f32.mxu0 %v517
      %1249 = vmatmul.mubr.f32.gmra.mxu0 %v462
      %v1250 = vpop.f32.mrf.mxu0
      %v1251 = vadd.f32 %v1106, %v1250
      %v1252 = vpop.f32.mrf.mxu0
      %1253 = vmatprep.mubr.f32.mxu0 %v519
      %1254 = vmatmul.mubr.f32.gmra.mxu0 %v463
      %v1255 = vpop.f32.mrf.mxu0
      %v1256 = vadd.f32 %v1111, %v1255
      %v1257 = vpop.f32.mrf.mxu0
      %1258 = vmatprep.mubr.f32.mxu0 %v522
      %1259 = vmatmul.mubr.f32.gmra.mxu0 %v465
      %v1260 = vpop.f32.mrf.mxu0
      %v1261 = vadd.f32 %v1116, %v1260
      %v1262 = vpop.f32.mrf.mxu0
      %1263 = vmatprep.mubr.f32.mxu0 %v524
      %1264 = vmatmul.mubr.f32.gmra.mxu0 %v466
      %v1265 = vpop.f32.mrf.mxu0
      %v1266 = vadd.f32 %v1121, %v1265
      %v1267 = vpop.f32.mrf.mxu0
      %1268 = vmatprep.mubr.f32.mxu0 %v527
      %1269 = vmatmul.mubr.f32.gmra.mxu0 %v468
      %v1270 = vpop.f32.mrf.mxu0
      %v1271 = vadd.f32 %v1126, %v1270
      %v1272 = vpop.f32.mrf.mxu0
      %1273 = vmatprep.mubr.f32.mxu0 %v529
      %1274 = vmatmul.mubr.f32.gmra.mxu0 %v469
      %v1275 = vpop.f32.mrf.mxu0
      %v1276 = vadd.f32 %v1131, %v1275
      %v1277 = vpop.f32.mrf.mxu0
      %1278 = vmatprep.mubr.f32.mxu0 %v532
      %1279 = vmatmul.mubr.f32.gmra.mxu0 %v471
      %v1280 = vpop.f32.mrf.mxu0
      %v1281 = vadd.f32 %v1136, %v1280
      %v1282 = vpop.f32.mrf.mxu0
      %1283 = vmatprep.mubr.f32.mxu0 %v534
      %1284 = vmatmul.mubr.f32.gmra.mxu0 %v472
      %v1285 = vpop.f32.mrf.mxu0
      %v1286 = vadd.f32 %v1141, %v1285
      %v1287 = vpop.f32.mrf.mxu0
      %1288 = vmatprep.mubr.f32.mxu0 %v537
      %1289 = vmatmul.mubr.f32.gmra.mxu0 %v474
      %v1290 = vpop.f32.mrf.mxu0
      %v1291 = vadd.f32 %v1146, %v1290
      %v1292 = vpop.f32.mrf.mxu0
      %1293 = vmatprep.mubr.f32.mxu0 %v539
      %1294 = vmatmul.mubr.f32.gmra.mxu0 %v475
      %v1295 = vpop.f32.mrf.mxu0
      %v1296 = vadd.f32 %v1151, %v1295
      %v1297 = vpop.f32.mrf.mxu0
      %1298 = vmatprep.mubr.f32.mxu0 %v542
      %1299 = vmatmul.mubr.f32.gmra.mxu0 %v477
      %v1300 = vpop.f32.mrf.mxu0
      %v1301 = vadd.f32 %v1156, %v1300
      %v1302 = vpop.f32.mrf.mxu0
      %1303 = vmatprep.mubr.f32.mxu0 %v544
      %1304 = vmatmul.mubr.f32.gmra.mxu0 %v478
      %v1305 = vpop.f32.mrf.mxu0
      %v1306 = vadd.f32 %v1161, %v1305
      %v1307 = vpop.f32.mrf.mxu0
      %1308 = vdwg.mxu0
      %1309 = vmatprep.subr.mxu0 0.0
      %1310 = vmatpush1.msra.mxu0 %v665
      %1311 = vmatprep.subr.mxu0 0.0
      %1312 = vmatpush1.msra.mxu0 %v664
      %1313 = vmatprep.subr.mxu0 0.0
      %1314 = vmatpush1.msra.mxu0 %v663
      %1315 = vmatprep.subr.mxu0 0.0
      %1316 = vmatpush1.msra.mxu0 %v662
      %1317 = vmatprep.subr.mxu0 0.0
      %1318 = vmatpush1.msra.mxu0 %v661
      %1319 = vmatprep.subr.mxu0 0.0
      %1320 = vmatpush1.msra.mxu0 %v660
      %1321 = vmatprep.subr.mxu0 0.0
      %1322 = vmatpush1.msra.mxu0 %v659
      %1323 = vmatprep.subr.mxu0 0.0
      %1324 = vmatpush1.msra.mxu0 %v658
      %1325 = vmatprep.subr.mxu0 0.0
      %1326 = vmatpush1.msra.mxu0 %v657
      %1327 = vmatprep.subr.mxu0 0.0
      %1328 = vmatpush1.msra.mxu0 %v656
      %1329 = vmatprep.subr.mxu0 0.0
      %1330 = vmatpush1.msra.mxu0 %v655
      %1331 = vmatprep.subr.mxu0 0.0
      %1332 = vmatpush1.msra.mxu0 %v654
      %1333 = vmatprep.subr.mxu0 0.0
      %1334 = vmatpush1.msra.mxu0 %v653
      %1335 = vmatprep.subr.mxu0 0.0
      %1336 = vmatpush1.msra.mxu0 %v652
      %1337 = vmatprep.subr.mxu0 0.0
      %1338 = vmatpush1.msra.mxu0 %v651
      %1339 = vmatprep.subr.mxu0 0.0
      %1340 = vmatpush1.msra.mxu0 %v650
      %1341 = vmatprep.subr.mxu0 0.0
      %1342 = vmatpush2.msra.mxu0 0.0
      %1343 = vmatprep.subr.mxu0 0.0
      %1344 = vmatpush2.msra.mxu0 0.0
      %1345 = vmatprep.subr.mxu0 0.0
      %1346 = vmatpush2.msra.mxu0 0.0
      %1347 = vmatprep.subr.mxu0 0.0
      %1348 = vmatpush2.msra.mxu0 0.0
      %1349 = vmatprep.subr.mxu0 0.0
      %1350 = vmatpush2.msra.mxu0 0.0
      %1351 = vmatprep.subr.mxu0 0.0
      %1352 = vmatpush2.msra.mxu0 0.0
      %1353 = vmatprep.subr.mxu0 0.0
      %1354 = vmatpush2.msra.mxu0 0.0
      %1355 = vmatprep.subr.mxu0 0.0
      %1356 = vmatpush2.msra.mxu0 0.0
      %1357 = vmatprep.subr.mxu0 0.0
      %1358 = vmatpush2.msra.mxu0 0.0
      %1359 = vmatprep.subr.mxu0 0.0
      %1360 = vmatpush2.msra.mxu0 0.0
      %1361 = vmatprep.subr.mxu0 0.0
      %1362 = vmatpush2.msra.mxu0 0.0
      %1363 = vmatprep.subr.mxu0 0.0
      %1364 = vmatpush2.msra.mxu0 0.0
      %1365 = vmatprep.subr.mxu0 0.0
      %1366 = vmatpush2.msra.mxu0 0.0
      %1367 = vmatprep.subr.mxu0 0.0
      %1368 = vmatpush2.msra.mxu0 0.0
      %1369 = vmatprep.subr.mxu0 0.0
      %1370 = vmatpush2.msra.mxu0 0.0
      %1371 = vmatprep.subr.mxu0 0.0
      %1372 = vmatpush2.msra.mxu0 0.0
      %1373 = vmatprep.mubr.f32.mxu0 0.0
      %1374 = vmatmul.mubr.f32.gmra.mxu0 %v564
      %v1375 = vpop.f32.mrf.mxu0
      %v1376 = vadd.f32 %v1231, %v1375
      %v1377 = vpop.f32.mrf.mxu0
      %1378 = vmatprep.mubr.f32.mxu0 0.0
      %1379 = vmatmul.mubr.f32.gmra.mxu0 %v566
      %v1380 = vpop.f32.mrf.mxu0
      %v1381 = vadd.f32 %v1236, %v1380
      %v1382 = vpop.f32.mrf.mxu0
      %1383 = vmatprep.mubr.f32.mxu0 0.0
      %1384 = vmatmul.mubr.f32.gmra.mxu0 %v569
      %v1385 = vpop.f32.mrf.mxu0
      %v1386 = vadd.f32 %v1241, %v1385
      %v1387 = vpop.f32.mrf.mxu0
      %1388 = vmatprep.mubr.f32.mxu0 0.0
      %1389 = vmatmul.mubr.f32.gmra.mxu0 %v571
      %v1390 = vpop.f32.mrf.mxu0
      %v1391 = vadd.f32 %v1246, %v1390
      %v1392 = vpop.f32.mrf.mxu0
      %1393 = vmatprep.mubr.f32.mxu0 0.0
      %1394 = vmatmul.mubr.f32.gmra.mxu0 %v574
      %v1395 = vpop.f32.mrf.mxu0
      %v1396 = vadd.f32 %v1251, %v1395
      %v1397 = vpop.f32.mrf.mxu0
      %1398 = vmatprep.mubr.f32.mxu0 0.0
      %1399 = vmatmul.mubr.f32.gmra.mxu0 %v576
      %v1400 = vpop.f32.mrf.mxu0
      %v1401 = vadd.f32 %v1256, %v1400
      %v1402 = vpop.f32.mrf.mxu0
      %1403 = vmatprep.mubr.f32.mxu0 0.0
      %1404 = vmatmul.mubr.f32.gmra.mxu0 %v579
      %v1405 = vpop.f32.mrf.mxu0
      %v1406 = vadd.f32 %v1261, %v1405
      %v1407 = vpop.f32.mrf.mxu0
      %1408 = vmatprep.mubr.f32.mxu0 0.0
      %1409 = vmatmul.mubr.f32.gmra.mxu0 %v581
      %v1410 = vpop.f32.mrf.mxu0
      %v1411 = vadd.f32 %v1266, %v1410
      %v1412 = vpop.f32.mrf.mxu0
      %1413 = vmatprep.mubr.f32.mxu0 0.0
      %1414 = vmatmul.mubr.f32.gmra.mxu0 %v584
      %v1415 = vpop.f32.mrf.mxu0
      %v1416 = vadd.f32 %v1271, %v1415
      %v1417 = vpop.f32.mrf.mxu0
      %1418 = vmatprep.mubr.f32.mxu0 0.0
      %1419 = vmatmul.mubr.f32.gmra.mxu0 %v586
      %v1420 = vpop.f32.mrf.mxu0
      %v1421 = vadd.f32 %v1276, %v1420
      %v1422 = vpop.f32.mrf.mxu0
      %1423 = vmatprep.mubr.f32.mxu0 0.0
      %1424 = vmatmul.mubr.f32.gmra.mxu0 %v589
      %v1425 = vpop.f32.mrf.mxu0
      %v1426 = vadd.f32 %v1281, %v1425
      %v1427 = vpop.f32.mrf.mxu0
      %1428 = vmatprep.mubr.f32.mxu0 0.0
      %1429 = vmatmul.mubr.f32.gmra.mxu0 %v591
      %v1430 = vpop.f32.mrf.mxu0
      %v1431 = vadd.f32 %v1286, %v1430
      %v1432 = vpop.f32.mrf.mxu0
      %1433 = vmatprep.mubr.f32.mxu0 0.0
      %1434 = vmatmul.mubr.f32.gmra.mxu0 %v594
      %v1435 = vpop.f32.mrf.mxu0
      %v1436 = vadd.f32 %v1291, %v1435
      %v1437 = vpop.f32.mrf.mxu0
      %1438 = vmatprep.mubr.f32.mxu0 0.0
      %1439 = vmatmul.mubr.f32.gmra.mxu0 %v596
      %v1440 = vpop.f32.mrf.mxu0
      %v1441 = vadd.f32 %v1296, %v1440
      %v1442 = vpop.f32.mrf.mxu0
      %1443 = vmatprep.mubr.f32.mxu0 0.0
      %1444 = vmatmul.mubr.f32.gmra.mxu0 %v599
      %v1445 = vpop.f32.mrf.mxu0
      %v1446 = vadd.f32 %v1301, %v1445
      %v1447 = vpop.f32.mrf.mxu0
      %1448 = vmatprep.mubr.f32.mxu0 0.0
      %1449 = vmatmul.mubr.f32.gmra.mxu0 %v601
      %v1450 = vpop.f32.mrf.mxu0
      %v1451 = vadd.f32 %v1306, %v1450
      %v1452 = vpop.f32.mrf.mxu0
      %1453 = vdwg.mxu0
      %s1454 = scalar_lea.vmem [#allocation2], 48
      %v1455 = vld [vmem:[%s1454] sm:$0xff]
      %v1456 = vld [vmem:[%s1454 + $0x8] sm:$0xff]
      %v1457 = vld [vmem:[%s1454 + $0x10] sm:$0x3]
      %v1458 = vld [vmem:[%s1454 + $0x18] sm:$0xff]
      %v1459 = vld [vmem:[%s1454 + $0x20] sm:$0xff]
      %v1460 = vld [vmem:[%s1454 + $0x28] sm:$0x3]
      %v1461 = vld [vmem:[%s1454 + $0x30] sm:$0xff]
      %v1462 = vld [vmem:[%s1454 + $0x38] sm:$0xff]
      %v1463 = vld [vmem:[%s1454 + $0x40] sm:$0x3]
      %v1464 = vld [vmem:[%s1454 + $0x48] sm:$0xff]
      %v1465 = vld [vmem:[%s1454 + $0x50] sm:$0xff]
      %v1466 = vld [vmem:[%s1454 + $0x58] sm:$0x3]
      %v1467 = vld [vmem:[%s1454 + $0x60] sm:$0xff]
      %v1468 = vld [vmem:[%s1454 + $0x68] sm:$0xff]
      %v1469 = vld [vmem:[%s1454 + $0x70] sm:$0x3]
      %v1470 = vld [vmem:[%s1454 + $0x78] sm:$0xff]
      %v1471 = vld [vmem:[%s1454 + $0x80] sm:$0xff]
      %v1472 = vld [vmem:[%s1454 + $0x88] sm:$0x3]
      %v1473 = vld [vmem:[%s1454 + $0x90] sm:$0xff]
      %v1474 = vld [vmem:[%s1454 + $0x98] sm:$0xff]
      %v1475 = vld [vmem:[%s1454 + $0xa0] sm:$0x3]
      %v1476 = vld [vmem:[%s1454 + $0xa8] sm:$0xff]
      %v1477 = vld [vmem:[%s1454 + $0xb0] sm:$0xff]
      %v1478 = vld [vmem:[%s1454 + $0xb8] sm:$0x3]
      %v1503 = vrot.slane %v1455, 1
      %v1504 = vrot.slane %v1456, 1
      %v1505 = vsel %vm504, %v1503, %v1504
      %v1506 = vrot.slane %v1457, 1
      %v1507 = vsel %vm504, %v1504, %v1506
      %v1508 = vrot.slane %v1458, 1
      %v1509 = vrot.slane %v1459, 1
      %v1510 = vsel %vm504, %v1508, %v1509
      %v1511 = vrot.slane %v1460, 1
      %v1512 = vsel %vm504, %v1509, %v1511
      %v1513 = vrot.slane %v1461, 1
      %v1514 = vrot.slane %v1462, 1
      %v1515 = vsel %vm504, %v1513, %v1514
      %v1516 = vrot.slane %v1463, 1
      %v1517 = vsel %vm504, %v1514, %v1516
      %v1518 = vrot.slane %v1464, 1
      %v1519 = vrot.slane %v1465, 1
      %v1520 = vsel %vm504, %v1518, %v1519
      %v1521 = vrot.slane %v1466, 1
      %v1522 = vsel %vm504, %v1519, %v1521
      %v1523 = vrot.slane %v1467, 1
      %v1524 = vrot.slane %v1468, 1
      %v1525 = vsel %vm504, %v1523, %v1524
      %v1526 = vrot.slane %v1469, 1
      %v1527 = vsel %vm504, %v1524, %v1526
      %v1528 = vrot.slane %v1470, 1
      %v1529 = vrot.slane %v1471, 1
      %v1530 = vsel %vm504, %v1528, %v1529
      %v1531 = vrot.slane %v1472, 1
      %v1532 = vsel %vm504, %v1529, %v1531
      %v1533 = vrot.slane %v1473, 1
      %v1534 = vrot.slane %v1474, 1
      %v1535 = vsel %vm504, %v1533, %v1534
      %v1536 = vrot.slane %v1475, 1
      %v1537 = vsel %vm504, %v1534, %v1536
      %v1538 = vrot.slane %v1476, 1
      %v1539 = vrot.slane %v1477, 1
      %v1540 = vsel %vm504, %v1538, %v1539
      %v1541 = vrot.slane %v1478, 1
      %v1542 = vsel %vm504, %v1539, %v1541
      %v1559 = vrot.slane %v1455, 2
      %v1560 = vrot.slane %v1456, 2
      %v1561 = vsel %vm561, %v1559, %v1560
      %v1562 = vrot.slane %v1457, 2
      %v1563 = vsel %vm561, %v1560, %v1562
      %v1564 = vrot.slane %v1458, 2
      %v1565 = vrot.slane %v1459, 2
      %v1566 = vsel %vm561, %v1564, %v1565
      %v1567 = vrot.slane %v1460, 2
      %v1568 = vsel %vm561, %v1565, %v1567
      %v1569 = vrot.slane %v1461, 2
      %v1570 = vrot.slane %v1462, 2
      %v1571 = vsel %vm561, %v1569, %v1570
      %v1572 = vrot.slane %v1463, 2
      %v1573 = vsel %vm561, %v1570, %v1572
      %v1574 = vrot.slane %v1464, 2
      %v1575 = vrot.slane %v1465, 2
      %v1576 = vsel %vm561, %v1574, %v1575
      %v1577 = vrot.slane %v1466, 2
      %v1578 = vsel %vm561, %v1575, %v1577
      %v1579 = vrot.slane %v1467, 2
      %v1580 = vrot.slane %v1468, 2
      %v1581 = vsel %vm561, %v1579, %v1580
      %v1582 = vrot.slane %v1469, 2
      %v1583 = vsel %vm561, %v1580, %v1582
      %v1584 = vrot.slane %v1470, 2
      %v1585 = vrot.slane %v1471, 2
      %v1586 = vsel %vm561, %v1584, %v1585
      %v1587 = vrot.slane %v1472, 2
      %v1588 = vsel %vm561, %v1585, %v1587
      %v1589 = vrot.slane %v1473, 2
      %v1590 = vrot.slane %v1474, 2
      %v1591 = vsel %vm561, %v1589, %v1590
      %v1592 = vrot.slane %v1475, 2
      %v1593 = vsel %vm561, %v1590, %v1592
      %v1594 = vrot.slane %v1476, 2
      %v1595 = vrot.slane %v1477, 2
      %v1596 = vsel %vm561, %v1594, %v1595
      %v1597 = vrot.slane %v1478, 2
      %v1598 = vsel %vm561, %v1595, %v1597
      %v1615 = vld [vmem:[%s1 + $0x300] sm:$0xff]
      %v1616 = vld [vmem:[%s1 + $0x308] sm:$0xff]
      %v1617 = vld [vmem:[%s1 + $0x310] sm:$0xff]
      %v1618 = vld [vmem:[%s1 + $0x318] sm:$0xff]
      %v1619 = vld [vmem:[%s1 + $0x320] sm:$0xff]
      %v1620 = vld [vmem:[%s1 + $0x328] sm:$0xff]
      %v1621 = vld [vmem:[%s1 + $0x330] sm:$0xff]
      %v1622 = vld [vmem:[%s1 + $0x338] sm:$0xff]
      %v1623 = vld [vmem:[%s1 + $0x340] sm:$0xff]
      %v1624 = vld [vmem:[%s1 + $0x348] sm:$0xff]
      %v1625 = vld [vmem:[%s1 + $0x350] sm:$0xff]
      %v1626 = vld [vmem:[%s1 + $0x358] sm:$0xff]
      %v1627 = vld [vmem:[%s1 + $0x360] sm:$0xff]
      %v1628 = vld [vmem:[%s1 + $0x368] sm:$0xff]
      %v1629 = vld [vmem:[%s1 + $0x370] sm:$0xff]
      %v1630 = vld [vmem:[%s1 + $0x378] sm:$0xff]
      %v1631 = vld [vmem:[%s1 + $0x380] sm:$0xff]
      %v1632 = vld [vmem:[%s1 + $0x388] sm:$0xff]
      %v1633 = vld [vmem:[%s1 + $0x390] sm:$0xff]
      %v1634 = vld [vmem:[%s1 + $0x398] sm:$0xff]
      %v1635 = vld [vmem:[%s1 + $0x3a0] sm:$0xff]
      %v1636 = vld [vmem:[%s1 + $0x3a8] sm:$0xff]
      %v1637 = vld [vmem:[%s1 + $0x3b0] sm:$0xff]
      %v1638 = vld [vmem:[%s1 + $0x3b8] sm:$0xff]
      %v1639 = vld [vmem:[%s1 + $0x3c0] sm:$0xff]
      %v1640 = vld [vmem:[%s1 + $0x3c8] sm:$0xff]
      %v1641 = vld [vmem:[%s1 + $0x3d0] sm:$0xff]
      %v1642 = vld [vmem:[%s1 + $0x3d8] sm:$0xff]
      %v1643 = vld [vmem:[%s1 + $0x3e0] sm:$0xff]
      %v1644 = vld [vmem:[%s1 + $0x3e8] sm:$0xff]
      %v1645 = vld [vmem:[%s1 + $0x3f0] sm:$0xff]
      %v1646 = vld [vmem:[%s1 + $0x3f8] sm:$0xff]
      %v1647 = vld [vmem:[%s1 + $0x400] sm:$0xff]
      %v1648 = vld [vmem:[%s1 + $0x408] sm:$0xff]
      %v1649 = vld [vmem:[%s1 + $0x410] sm:$0xff]
      %v1650 = vld [vmem:[%s1 + $0x418] sm:$0xff]
      %v1651 = vld [vmem:[%s1 + $0x420] sm:$0xff]
      %v1652 = vld [vmem:[%s1 + $0x428] sm:$0xff]
      %v1653 = vld [vmem:[%s1 + $0x430] sm:$0xff]
      %v1654 = vld [vmem:[%s1 + $0x438] sm:$0xff]
      %v1655 = vld [vmem:[%s1 + $0x440] sm:$0xff]
      %v1656 = vld [vmem:[%s1 + $0x448] sm:$0xff]
      %v1657 = vld [vmem:[%s1 + $0x450] sm:$0xff]
      %v1658 = vld [vmem:[%s1 + $0x458] sm:$0xff]
      %v1659 = vld [vmem:[%s1 + $0x460] sm:$0xff]
      %v1660 = vld [vmem:[%s1 + $0x468] sm:$0xff]
      %v1661 = vld [vmem:[%s1 + $0x470] sm:$0xff]
      %v1662 = vld [vmem:[%s1 + $0x478] sm:$0xff]
      %1663 = vmatprep.subr.mxu0 0.0
      %1664 = vmatpush1.msra.mxu0 %v1630
      %1665 = vmatprep.subr.mxu0 0.0
      %1666 = vmatpush1.msra.mxu0 %v1629
      %1667 = vmatprep.subr.mxu0 0.0
      %1668 = vmatpush1.msra.mxu0 %v1628
      %1669 = vmatprep.subr.mxu0 0.0
      %1670 = vmatpush1.msra.mxu0 %v1627
      %1671 = vmatprep.subr.mxu0 0.0
      %1672 = vmatpush1.msra.mxu0 %v1626
      %1673 = vmatprep.subr.mxu0 0.0
      %1674 = vmatpush1.msra.mxu0 %v1625
      %1675 = vmatprep.subr.mxu0 0.0
      %1676 = vmatpush1.msra.mxu0 %v1624
      %1677 = vmatprep.subr.mxu0 0.0
      %1678 = vmatpush1.msra.mxu0 %v1623
      %1679 = vmatprep.subr.mxu0 0.0
      %1680 = vmatpush1.msra.mxu0 %v1622
      %1681 = vmatprep.subr.mxu0 0.0
      %1682 = vmatpush1.msra.mxu0 %v1621
      %1683 = vmatprep.subr.mxu0 0.0
      %1684 = vmatpush1.msra.mxu0 %v1620
      %1685 = vmatprep.subr.mxu0 0.0
      %1686 = vmatpush1.msra.mxu0 %v1619
      %1687 = vmatprep.subr.mxu0 0.0
      %1688 = vmatpush1.msra.mxu0 %v1618
      %1689 = vmatprep.subr.mxu0 0.0
      %1690 = vmatpush1.msra.mxu0 %v1617
      %1691 = vmatprep.subr.mxu0 0.0
      %1692 = vmatpush1.msra.mxu0 %v1616
      %1693 = vmatprep.subr.mxu0 0.0
      %1694 = vmatpush1.msra.mxu0 %v1615
      %1695 = vmatprep.subr.mxu0 0.0
      %1696 = vmatpush2.msra.mxu0 %v1646
      %1697 = vmatprep.subr.mxu0 0.0
      %1698 = vmatpush2.msra.mxu0 %v1645
      %1699 = vmatprep.subr.mxu0 0.0
      %1700 = vmatpush2.msra.mxu0 %v1644
      %1701 = vmatprep.subr.mxu0 0.0
      %1702 = vmatpush2.msra.mxu0 %v1643
      %1703 = vmatprep.subr.mxu0 0.0
      %1704 = vmatpush2.msra.mxu0 %v1642
      %1705 = vmatprep.subr.mxu0 0.0
      %1706 = vmatpush2.msra.mxu0 %v1641
      %1707 = vmatprep.subr.mxu0 0.0
      %1708 = vmatpush2.msra.mxu0 %v1640
      %1709 = vmatprep.subr.mxu0 0.0
      %1710 = vmatpush2.msra.mxu0 %v1639
      %1711 = vmatprep.subr.mxu0 0.0
      %1712 = vmatpush2.msra.mxu0 %v1638
      %1713 = vmatprep.subr.mxu0 0.0
      %1714 = vmatpush2.msra.mxu0 %v1637
      %1715 = vmatprep.subr.mxu0 0.0
      %1716 = vmatpush2.msra.mxu0 %v1636
      %1717 = vmatprep.subr.mxu0 0.0
      %1718 = vmatpush2.msra.mxu0 %v1635
      %1719 = vmatprep.subr.mxu0 0.0
      %1720 = vmatpush2.msra.mxu0 %v1634
      %1721 = vmatprep.subr.mxu0 0.0
      %1722 = vmatpush2.msra.mxu0 %v1633
      %1723 = vmatprep.subr.mxu0 0.0
      %1724 = vmatpush2.msra.mxu0 %v1632
      %1725 = vmatprep.subr.mxu0 0.0
      %1726 = vmatpush2.msra.mxu0 %v1631
      %1727 = vmatprep.mubr.f32.mxu0 %v1505
      %1728 = vmatmul.mubr.f32.gmra.mxu0 %v1455
      %v1729 = vpop.f32.mrf.mxu0
      %v1730 = vadd.f32 0.0, %v1729
      %v1731 = vpop.f32.mrf.mxu0
      %1732 = vmatprep.mubr.f32.mxu0 %v1507
      %1733 = vmatmul.mubr.f32.gmra.mxu0 %v1456
      %v1734 = vpop.f32.mrf.mxu0
      %v1735 = vadd.f32 0.0, %v1734
      %v1736 = vpop.f32.mrf.mxu0
      %1737 = vmatprep.mubr.f32.mxu0 %v1510
      %1738 = vmatmul.mubr.f32.gmra.mxu0 %v1458
      %v1739 = vpop.f32.mrf.mxu0
      %v1740 = vadd.f32 0.0, %v1739
      %v1741 = vpop.f32.mrf.mxu0
      %1742 = vmatprep.mubr.f32.mxu0 %v1512
      %1743 = vmatmul.mubr.f32.gmra.mxu0 %v1459
      %v1744 = vpop.f32.mrf.mxu0
      %v1745 = vadd.f32 0.0, %v1744
      %v1746 = vpop.f32.mrf.mxu0
      %1747 = vmatprep.mubr.f32.mxu0 %v1515
      %1748 = vmatmul.mubr.f32.gmra.mxu0 %v1461
      %v1749 = vpop.f32.mrf.mxu0
      %v1750 = vadd.f32 0.0, %v1749
      %v1751 = vpop.f32.mrf.mxu0
      %1752 = vmatprep.mubr.f32.mxu0 %v1517
      %1753 = vmatmul.mubr.f32.gmra.mxu0 %v1462
      %v1754 = vpop.f32.mrf.mxu0
      %v1755 = vadd.f32 0.0, %v1754
      %v1756 = vpop.f32.mrf.mxu0
      %1757 = vmatprep.mubr.f32.mxu0 %v1520
      %1758 = vmatmul.mubr.f32.gmra.mxu0 %v1464
      %v1759 = vpop.f32.mrf.mxu0
      %v1760 = vadd.f32 0.0, %v1759
      %v1761 = vpop.f32.mrf.mxu0
      %1762 = vmatprep.mubr.f32.mxu0 %v1522
      %1763 = vmatmul.mubr.f32.gmra.mxu0 %v1465
      %v1764 = vpop.f32.mrf.mxu0
      %v1765 = vadd.f32 0.0, %v1764
      %v1766 = vpop.f32.mrf.mxu0
      %1767 = vmatprep.mubr.f32.mxu0 %v1525
      %1768 = vmatmul.mubr.f32.gmra.mxu0 %v1467
      %v1769 = vpop.f32.mrf.mxu0
      %v1770 = vadd.f32 0.0, %v1769
      %v1771 = vpop.f32.mrf.mxu0
      %1772 = vmatprep.mubr.f32.mxu0 %v1527
      %1773 = vmatmul.mubr.f32.gmra.mxu0 %v1468
      %v1774 = vpop.f32.mrf.mxu0
      %v1775 = vadd.f32 0.0, %v1774
      %v1776 = vpop.f32.mrf.mxu0
      %1777 = vmatprep.mubr.f32.mxu0 %v1530
      %1778 = vmatmul.mubr.f32.gmra.mxu0 %v1470
      %v1779 = vpop.f32.mrf.mxu0
      %v1780 = vadd.f32 0.0, %v1779
      %v1781 = vpop.f32.mrf.mxu0
      %1782 = vmatprep.mubr.f32.mxu0 %v1532
      %1783 = vmatmul.mubr.f32.gmra.mxu0 %v1471
      %v1784 = vpop.f32.mrf.mxu0
      %v1785 = vadd.f32 0.0, %v1784
      %v1786 = vpop.f32.mrf.mxu0
      %1787 = vmatprep.mubr.f32.mxu0 %v1535
      %1788 = vmatmul.mubr.f32.gmra.mxu0 %v1473
      %v1789 = vpop.f32.mrf.mxu0
      %v1790 = vadd.f32 0.0, %v1789
      %v1791 = vpop.f32.mrf.mxu0
      %1792 = vmatprep.mubr.f32.mxu0 %v1537
      %1793 = vmatmul.mubr.f32.gmra.mxu0 %v1474
      %v1794 = vpop.f32.mrf.mxu0
      %v1795 = vadd.f32 0.0, %v1794
      %v1796 = vpop.f32.mrf.mxu0
      %1797 = vmatprep.mubr.f32.mxu0 %v1540
      %1798 = vmatmul.mubr.f32.gmra.mxu0 %v1476
      %v1799 = vpop.f32.mrf.mxu0
      %v1800 = vadd.f32 0.0, %v1799
      %v1801 = vpop.f32.mrf.mxu0
      %1802 = vmatprep.mubr.f32.mxu0 %v1542
      %1803 = vmatmul.mubr.f32.gmra.mxu0 %v1477
      %v1804 = vpop.f32.mrf.mxu0
      %v1805 = vadd.f32 0.0, %v1804
      %v1806 = vpop.f32.mrf.mxu0
      %1807 = vdwg.mxu0
      %1808 = vmatprep.subr.mxu0 0.0
      %1809 = vmatpush1.msra.mxu0 %v1662
      %1810 = vmatprep.subr.mxu0 0.0
      %1811 = vmatpush1.msra.mxu0 %v1661
      %1812 = vmatprep.subr.mxu0 0.0
      %1813 = vmatpush1.msra.mxu0 %v1660
      %1814 = vmatprep.subr.mxu0 0.0
      %1815 = vmatpush1.msra.mxu0 %v1659
      %1816 = vmatprep.subr.mxu0 0.0
      %1817 = vmatpush1.msra.mxu0 %v1658
      %1818 = vmatprep.subr.mxu0 0.0
      %1819 = vmatpush1.msra.mxu0 %v1657
      %1820 = vmatprep.subr.mxu0 0.0
      %1821 = vmatpush1.msra.mxu0 %v1656
      %1822 = vmatprep.subr.mxu0 0.0
      %1823 = vmatpush1.msra.mxu0 %v1655
      %1824 = vmatprep.subr.mxu0 0.0
      %1825 = vmatpush1.msra.mxu0 %v1654
      %1826 = vmatprep.subr.mxu0 0.0
      %1827 = vmatpush1.msra.mxu0 %v1653
      %1828 = vmatprep.subr.mxu0 0.0
      %1829 = vmatpush1.msra.mxu0 %v1652
      %1830 = vmatprep.subr.mxu0 0.0
      %1831 = vmatpush1.msra.mxu0 %v1651
      %1832 = vmatprep.subr.mxu0 0.0
      %1833 = vmatpush1.msra.mxu0 %v1650
      %1834 = vmatprep.subr.mxu0 0.0
      %1835 = vmatpush1.msra.mxu0 %v1649
      %1836 = vmatprep.subr.mxu0 0.0
      %1837 = vmatpush1.msra.mxu0 %v1648
      %1838 = vmatprep.subr.mxu0 0.0
      %1839 = vmatpush1.msra.mxu0 %v1647
      %1840 = vmatprep.subr.mxu0 0.0
      %1841 = vmatpush2.msra.mxu0 0.0
      %1842 = vmatprep.subr.mxu0 0.0
      %1843 = vmatpush2.msra.mxu0 0.0
      %1844 = vmatprep.subr.mxu0 0.0
      %1845 = vmatpush2.msra.mxu0 0.0
      %1846 = vmatprep.subr.mxu0 0.0
      %1847 = vmatpush2.msra.mxu0 0.0
      %1848 = vmatprep.subr.mxu0 0.0
      %1849 = vmatpush2.msra.mxu0 0.0
      %1850 = vmatprep.subr.mxu0 0.0
      %1851 = vmatpush2.msra.mxu0 0.0
      %1852 = vmatprep.subr.mxu0 0.0
      %1853 = vmatpush2.msra.mxu0 0.0
      %1854 = vmatprep.subr.mxu0 0.0
      %1855 = vmatpush2.msra.mxu0 0.0
      %1856 = vmatprep.subr.mxu0 0.0
      %1857 = vmatpush2.msra.mxu0 0.0
      %1858 = vmatprep.subr.mxu0 0.0
      %1859 = vmatpush2.msra.mxu0 0.0
      %1860 = vmatprep.subr.mxu0 0.0
      %1861 = vmatpush2.msra.mxu0 0.0
      %1862 = vmatprep.subr.mxu0 0.0
      %1863 = vmatpush2.msra.mxu0 0.0
      %1864 = vmatprep.subr.mxu0 0.0
      %1865 = vmatpush2.msra.mxu0 0.0
      %1866 = vmatprep.subr.mxu0 0.0
      %1867 = vmatpush2.msra.mxu0 0.0
      %1868 = vmatprep.subr.mxu0 0.0
      %1869 = vmatpush2.msra.mxu0 0.0
      %1870 = vmatprep.subr.mxu0 0.0
      %1871 = vmatpush2.msra.mxu0 0.0
      %1872 = vmatprep.mubr.f32.mxu0 0.0
      %1873 = vmatmul.mubr.f32.gmra.mxu0 %v1561
      %v1874 = vpop.f32.mrf.mxu0
      %v1875 = vadd.f32 %v1730, %v1874
      %v1876 = vpop.f32.mrf.mxu0
      %1877 = vmatprep.mubr.f32.mxu0 0.0
      %1878 = vmatmul.mubr.f32.gmra.mxu0 %v1563
      %v1879 = vpop.f32.mrf.mxu0
      %v1880 = vadd.f32 %v1735, %v1879
      %v1881 = vpop.f32.mrf.mxu0
      %1882 = vmatprep.mubr.f32.mxu0 0.0
      %1883 = vmatmul.mubr.f32.gmra.mxu0 %v1566
      %v1884 = vpop.f32.mrf.mxu0
      %v1885 = vadd.f32 %v1740, %v1884
      %v1886 = vpop.f32.mrf.mxu0
      %1887 = vmatprep.mubr.f32.mxu0 0.0
      %1888 = vmatmul.mubr.f32.gmra.mxu0 %v1568
      %v1889 = vpop.f32.mrf.mxu0
      %v1890 = vadd.f32 %v1745, %v1889
      %v1891 = vpop.f32.mrf.mxu0
      %1892 = vmatprep.mubr.f32.mxu0 0.0
      %1893 = vmatmul.mubr.f32.gmra.mxu0 %v1571
      %v1894 = vpop.f32.mrf.mxu0
      %v1895 = vadd.f32 %v1750, %v1894
      %v1896 = vpop.f32.mrf.mxu0
      %1897 = vmatprep.mubr.f32.mxu0 0.0
      %1898 = vmatmul.mubr.f32.gmra.mxu0 %v1573
      %v1899 = vpop.f32.mrf.mxu0
      %v1900 = vadd.f32 %v1755, %v1899
      %v1901 = vpop.f32.mrf.mxu0
      %1902 = vmatprep.mubr.f32.mxu0 0.0
      %1903 = vmatmul.mubr.f32.gmra.mxu0 %v1576
      %v1904 = vpop.f32.mrf.mxu0
      %v1905 = vadd.f32 %v1760, %v1904
      %v1906 = vpop.f32.mrf.mxu0
      %1907 = vmatprep.mubr.f32.mxu0 0.0
      %1908 = vmatmul.mubr.f32.gmra.mxu0 %v1578
      %v1909 = vpop.f32.mrf.mxu0
      %v1910 = vadd.f32 %v1765, %v1909
      %v1911 = vpop.f32.mrf.mxu0
      %1912 = vmatprep.mubr.f32.mxu0 0.0
      %1913 = vmatmul.mubr.f32.gmra.mxu0 %v1581
      %v1914 = vpop.f32.mrf.mxu0
      %v1915 = vadd.f32 %v1770, %v1914
      %v1916 = vpop.f32.mrf.mxu0
      %1917 = vmatprep.mubr.f32.mxu0 0.0
      %1918 = vmatmul.mubr.f32.gmra.mxu0 %v1583
      %v1919 = vpop.f32.mrf.mxu0
      %v1920 = vadd.f32 %v1775, %v1919
      %v1921 = vpop.f32.mrf.mxu0
      %1922 = vmatprep.mubr.f32.mxu0 0.0
      %1923 = vmatmul.mubr.f32.gmra.mxu0 %v1586
      %v1924 = vpop.f32.mrf.mxu0
      %v1925 = vadd.f32 %v1780, %v1924
      %v1926 = vpop.f32.mrf.mxu0
      %1927 = vmatprep.mubr.f32.mxu0 0.0
      %1928 = vmatmul.mubr.f32.gmra.mxu0 %v1588
      %v1929 = vpop.f32.mrf.mxu0
      %v1930 = vadd.f32 %v1785, %v1929
      %v1931 = vpop.f32.mrf.mxu0
      %1932 = vmatprep.mubr.f32.mxu0 0.0
      %1933 = vmatmul.mubr.f32.gmra.mxu0 %v1591
      %v1934 = vpop.f32.mrf.mxu0
      %v1935 = vadd.f32 %v1790, %v1934
      %v1936 = vpop.f32.mrf.mxu0
      %1937 = vmatprep.mubr.f32.mxu0 0.0
      %1938 = vmatmul.mubr.f32.gmra.mxu0 %v1593
      %v1939 = vpop.f32.mrf.mxu0
      %v1940 = vadd.f32 %v1795, %v1939
      %v1941 = vpop.f32.mrf.mxu0
      %1942 = vmatprep.mubr.f32.mxu0 0.0
      %1943 = vmatmul.mubr.f32.gmra.mxu0 %v1596
      %v1944 = vpop.f32.mrf.mxu0
      %v1945 = vadd.f32 %v1800, %v1944
      %v1946 = vpop.f32.mrf.mxu0
      %1947 = vmatprep.mubr.f32.mxu0 0.0
      %1948 = vmatmul.mubr.f32.gmra.mxu0 %v1598
      %v1949 = vpop.f32.mrf.mxu0
      %v1950 = vadd.f32 %v1805, %v1949
      %v1951 = vpop.f32.mrf.mxu0
      %1952 = vdwg.mxu0
      %v1953 = vadd.f32 %v1376, %v1875
      %v1954 = vadd.f32 %v1381, %v1880
      %v1955 = vadd.f32 %v1386, %v1885
      %v1956 = vadd.f32 %v1391, %v1890
      %v1957 = vadd.f32 %v1396, %v1895
      %v1958 = vadd.f32 %v1401, %v1900
      %v1959 = vadd.f32 %v1406, %v1905
      %v1960 = vadd.f32 %v1411, %v1910
      %v1961 = vadd.f32 %v1416, %v1915
      %v1962 = vadd.f32 %v1421, %v1920
      %v1963 = vadd.f32 %v1426, %v1925
      %v1964 = vadd.f32 %v1431, %v1930
      %v1965 = vadd.f32 %v1436, %v1935
      %v1966 = vadd.f32 %v1441, %v1940
      %v1967 = vadd.f32 %v1446, %v1945
      %v1968 = vadd.f32 %v1451, %v1950
      %1969 = vst [vmem:[%s231] sm:$0xff] %v1953
      %1970 = vst [vmem:[%s231 + $0x8] sm:$0xff] %v1954
      %1971 = vst [vmem:[%s231 + $0x10] sm:$0xff] %v1955
      %1972 = vst [vmem:[%s231 + $0x18] sm:$0xff] %v1956
      %1973 = vst [vmem:[%s231 + $0x20] sm:$0xff] %v1957
      %1974 = vst [vmem:[%s231 + $0x28] sm:$0xff] %v1958
      %1975 = vst [vmem:[%s231 + $0x30] sm:$0xff] %v1959
      %1976 = vst [vmem:[%s231 + $0x38] sm:$0xff] %v1960
      %1977 = vst [vmem:[%s231 + $0x40] sm:$0xff] %v1961
      %1978 = vst [vmem:[%s231 + $0x48] sm:$0xff] %v1962
      %1979 = vst [vmem:[%s231 + $0x50] sm:$0xff] %v1963
      %1980 = vst [vmem:[%s231 + $0x58] sm:$0xff] %v1964
      %1981 = vst [vmem:[%s231 + $0x60] sm:$0xff] %v1965
      %1982 = vst [vmem:[%s231 + $0x68] sm:$0xff] %v1966
      %1983 = vst [vmem:[%s231 + $0x70] sm:$0xff] %v1967
      %1984 = vst [vmem:[%s231 + $0x78] sm:$0xff] %v1968
      %v1985 = vadd.f32 %v1953, %v1954
      %v1986 = vadd.f32 %v1985, %v1955
      %v1987 = vadd.f32 %v1986, %v1956
      %v1988 = vadd.f32 %v1987, %v1957
      %v1989 = vadd.f32 %v1988, %v1958
      %v1990 = vadd.f32 %v1989, %v1959
      %v1991 = vadd.f32 %v1990, %v1960
      %v1992 = vadd.f32 %v1991, %v1961
      %v1993 = vadd.f32 %v1992, %v1962
      %v1994 = vadd.f32 %v1993, %v1963
      %v1995 = vadd.f32 %v1994, %v1964
      %v1996 = vadd.f32 %v1995, %v1965
      %v1997 = vadd.f32 %v1996, %v1966
      %v1998 = vadd.f32 %v1997, %v1967
      %v1999 = vadd.f32 %v1998, %v1968
      %v2000 = vrot.slane %v1999, 4
      %v2001 = vadd.f32 %v1999, %v2000
      %v2002 = vrot.slane %v2001, 2
      %v2003 = vadd.f32 %v2001, %v2002
      %v2004 = vrot.slane %v2003, 1
      %v2005 = vadd.f32 %v2003, %v2004
      %v2006 = vadd.f32 %v2005, 0.0
      %v2007 = vmul.f32 %v1953, %v1953
      %v2008 = vmul.f32 %v1954, %v1954
      %v2009 = vmul.f32 %v1955, %v1955
      %v2010 = vmul.f32 %v1956, %v1956
      %v2011 = vmul.f32 %v1957, %v1957
      %v2012 = vmul.f32 %v1958, %v1958
      %v2013 = vmul.f32 %v1959, %v1959
      %v2014 = vmul.f32 %v1960, %v1960
      %v2015 = vmul.f32 %v1961, %v1961
      %v2016 = vmul.f32 %v1962, %v1962
      %v2017 = vmul.f32 %v1963, %v1963
      %v2018 = vmul.f32 %v1964, %v1964
      %v2019 = vmul.f32 %v1965, %v1965
      %v2020 = vmul.f32 %v1966, %v1966
      %v2021 = vmul.f32 %v1967, %v1967
      %v2022 = vmul.f32 %v1968, %v1968
      %v2023 = vadd.f32 %v2007, %v2008
      %v2024 = vadd.f32 %v2023, %v2009
      %v2025 = vadd.f32 %v2024, %v2010
      %v2026 = vadd.f32 %v2025, %v2011
      %v2027 = vadd.f32 %v2026, %v2012
      %v2028 = vadd.f32 %v2027, %v2013
      %v2029 = vadd.f32 %v2028, %v2014
      %v2030 = vadd.f32 %v2029, %v2015
      %v2031 = vadd.f32 %v2030, %v2016
      %v2032 = vadd.f32 %v2031, %v2017
      %v2033 = vadd.f32 %v2032, %v2018
      %v2034 = vadd.f32 %v2033, %v2019
      %v2035 = vadd.f32 %v2034, %v2020
      %v2036 = vadd.f32 %v2035, %v2021
      %v2037 = vadd.f32 %v2036, %v2022
      %v2038 = vrot.slane %v2037, 4
      %v2039 = vadd.f32 %v2037, %v2038
      %v2040 = vrot.slane %v2039, 2
      %v2041 = vadd.f32 %v2039, %v2040
      %v2042 = vrot.slane %v2041, 1
      %v2043 = vadd.f32 %v2041, %v2042
      %v2044 = vadd.f32 %v2043, 0.0
      %s2045 = scalar_lea.vmem [#allocation2], 192
      %v2046 = vld [vmem:[%s2045] sm:$0xff]
      %v2047 = vld [vmem:[%s2045 + $0x8] sm:$0xff]
      %v2048 = vld [vmem:[%s2045 + $0x10] sm:$0x3]
      %v2049 = vld [vmem:[%s2045 + $0x18] sm:$0xff]
      %v2050 = vld [vmem:[%s2045 + $0x20] sm:$0xff]
      %v2051 = vld [vmem:[%s2045 + $0x28] sm:$0x3]
      %v2052 = vld [vmem:[%s2045 + $0x30] sm:$0xff]
      %v2053 = vld [vmem:[%s2045 + $0x38] sm:$0xff]
      %v2054 = vld [vmem:[%s2045 + $0x40] sm:$0x3]
      %v2055 = vld [vmem:[%s2045 + $0x48] sm:$0xff]
      %v2056 = vld [vmem:[%s2045 + $0x50] sm:$0xff]
      %v2057 = vld [vmem:[%s2045 + $0x58] sm:$0x3]
      %v2058 = vld [vmem:[%s2045 + $0x60] sm:$0xff]
      %v2059 = vld [vmem:[%s2045 + $0x68] sm:$0xff]
      %v2060 = vld [vmem:[%s2045 + $0x70] sm:$0x3]
      %v2061 = vld [vmem:[%s2045 + $0x78] sm:$0xff]
      %v2062 = vld [vmem:[%s2045 + $0x80] sm:$0xff]
      %v2063 = vld [vmem:[%s2045 + $0x88] sm:$0x3]
      %v2064 = vld [vmem:[%s2045 + $0x90] sm:$0xff]
      %v2065 = vld [vmem:[%s2045 + $0x98] sm:$0xff]
      %v2066 = vld [vmem:[%s2045 + $0xa0] sm:$0x3]
      %v2067 = vld [vmem:[%s2045 + $0xa8] sm:$0xff]
      %v2068 = vld [vmem:[%s2045 + $0xb0] sm:$0xff]
      %v2069 = vld [vmem:[%s2045 + $0xb8] sm:$0x3]
      %v2094 = vrot.slane %v2046, 1
      %v2095 = vrot.slane %v2047, 1
      %v2096 = vsel %vm504, %v2094, %v2095
      %v2097 = vrot.slane %v2048, 1
      %v2098 = vsel %vm504, %v2095, %v2097
      %v2099 = vrot.slane %v2049, 1
      %v2100 = vrot.slane %v2050, 1
      %v2101 = vsel %vm504, %v2099, %v2100
      %v2102 = vrot.slane %v2051, 1
      %v2103 = vsel %vm504, %v2100, %v2102
      %v2104 = vrot.slane %v2052, 1
      %v2105 = vrot.slane %v2053, 1
      %v2106 = vsel %vm504, %v2104, %v2105
      %v2107 = vrot.slane %v2054, 1
      %v2108 = vsel %vm504, %v2105, %v2107
      %v2109 = vrot.slane %v2055, 1
      %v2110 = vrot.slane %v2056, 1
      %v2111 = vsel %vm504, %v2109, %v2110
      %v2112 = vrot.slane %v2057, 1
      %v2113 = vsel %vm504, %v2110, %v2112
      %v2114 = vrot.slane %v2058, 1
      %v2115 = vrot.slane %v2059, 1
      %v2116 = vsel %vm504, %v2114, %v2115
      %v2117 = vrot.slane %v2060, 1
      %v2118 = vsel %vm504, %v2115, %v2117
      %v2119 = vrot.slane %v2061, 1
      %v2120 = vrot.slane %v2062, 1
      %v2121 = vsel %vm504, %v2119, %v2120
      %v2122 = vrot.slane %v2063, 1
      %v2123 = vsel %vm504, %v2120, %v2122
      %v2124 = vrot.slane %v2064, 1
      %v2125 = vrot.slane %v2065, 1
      %v2126 = vsel %vm504, %v2124, %v2125
      %v2127 = vrot.slane %v2066, 1
      %v2128 = vsel %vm504, %v2125, %v2127
      %v2129 = vrot.slane %v2067, 1
      %v2130 = vrot.slane %v2068, 1
      %v2131 = vsel %vm504, %v2129, %v2130
      %v2132 = vrot.slane %v2069, 1
      %v2133 = vsel %vm504, %v2130, %v2132
      %v2150 = vrot.slane %v2046, 2
      %v2151 = vrot.slane %v2047, 2
      %v2152 = vsel %vm561, %v2150, %v2151
      %v2153 = vrot.slane %v2048, 2
      %v2154 = vsel %vm561, %v2151, %v2153
      %v2155 = vrot.slane %v2049, 2
      %v2156 = vrot.slane %v2050, 2
      %v2157 = vsel %vm561, %v2155, %v2156
      %v2158 = vrot.slane %v2051, 2
      %v2159 = vsel %vm561, %v2156, %v2158
      %v2160 = vrot.slane %v2052, 2
      %v2161 = vrot.slane %v2053, 2
      %v2162 = vsel %vm561, %v2160, %v2161
      %v2163 = vrot.slane %v2054, 2
      %v2164 = vsel %vm561, %v2161, %v2163
      %v2165 = vrot.slane %v2055, 2
      %v2166 = vrot.slane %v2056, 2
      %v2167 = vsel %vm561, %v2165, %v2166
      %v2168 = vrot.slane %v2057, 2
      %v2169 = vsel %vm561, %v2166, %v2168
      %v2170 = vrot.slane %v2058, 2
      %v2171 = vrot.slane %v2059, 2
      %v2172 = vsel %vm561, %v2170, %v2171
      %v2173 = vrot.slane %v2060, 2
      %v2174 = vsel %vm561, %v2171, %v2173
      %v2175 = vrot.slane %v2061, 2
      %v2176 = vrot.slane %v2062, 2
      %v2177 = vsel %vm561, %v2175, %v2176
      %v2178 = vrot.slane %v2063, 2
      %v2179 = vsel %vm561, %v2176, %v2178
      %v2180 = vrot.slane %v2064, 2
      %v2181 = vrot.slane %v2065, 2
      %v2182 = vsel %vm561, %v2180, %v2181
      %v2183 = vrot.slane %v2066, 2
      %v2184 = vsel %vm561, %v2181, %v2183
      %v2185 = vrot.slane %v2067, 2
      %v2186 = vrot.slane %v2068, 2
      %v2187 = vsel %vm561, %v2185, %v2186
      %v2188 = vrot.slane %v2069, 2
      %v2189 = vsel %vm561, %v2186, %v2188
      %v2206 = vld [vmem:[%s1] sm:$0xff]
      %v2207 = vld [vmem:[%s1 + $0x8] sm:$0xff]
      %v2208 = vld [vmem:[%s1 + $0x10] sm:$0xff]
      %v2209 = vld [vmem:[%s1 + $0x18] sm:$0xff]
      %v2210 = vld [vmem:[%s1 + $0x20] sm:$0xff]
      %v2211 = vld [vmem:[%s1 + $0x28] sm:$0xff]
      %v2212 = vld [vmem:[%s1 + $0x30] sm:$0xff]
      %v2213 = vld [vmem:[%s1 + $0x38] sm:$0xff]
      %v2214 = vld [vmem:[%s1 + $0x40] sm:$0xff]
      %v2215 = vld [vmem:[%s1 + $0x48] sm:$0xff]
      %v2216 = vld [vmem:[%s1 + $0x50] sm:$0xff]
      %v2217 = vld [vmem:[%s1 + $0x58] sm:$0xff]
      %v2218 = vld [vmem:[%s1 + $0x60] sm:$0xff]
      %v2219 = vld [vmem:[%s1 + $0x68] sm:$0xff]
      %v2220 = vld [vmem:[%s1 + $0x70] sm:$0xff]
      %v2221 = vld [vmem:[%s1 + $0x78] sm:$0xff]
      %v2222 = vld [vmem:[%s1 + $0x80] sm:$0xff]
      %v2223 = vld [vmem:[%s1 + $0x88] sm:$0xff]
      %v2224 = vld [vmem:[%s1 + $0x90] sm:$0xff]
      %v2225 = vld [vmem:[%s1 + $0x98] sm:$0xff]
      %v2226 = vld [vmem:[%s1 + $0xa0] sm:$0xff]
      %v2227 = vld [vmem:[%s1 + $0xa8] sm:$0xff]
      %v2228 = vld [vmem:[%s1 + $0xb0] sm:$0xff]
      %v2229 = vld [vmem:[%s1 + $0xb8] sm:$0xff]
      %v2230 = vld [vmem:[%s1 + $0xc0] sm:$0xff]
      %v2231 = vld [vmem:[%s1 + $0xc8] sm:$0xff]
      %v2232 = vld [vmem:[%s1 + $0xd0] sm:$0xff]
      %v2233 = vld [vmem:[%s1 + $0xd8] sm:$0xff]
      %v2234 = vld [vmem:[%s1 + $0xe0] sm:$0xff]
      %v2235 = vld [vmem:[%s1 + $0xe8] sm:$0xff]
      %v2236 = vld [vmem:[%s1 + $0xf0] sm:$0xff]
      %v2237 = vld [vmem:[%s1 + $0xf8] sm:$0xff]
      %v2238 = vld [vmem:[%s1 + $0x100] sm:$0xff]
      %v2239 = vld [vmem:[%s1 + $0x108] sm:$0xff]
      %v2240 = vld [vmem:[%s1 + $0x110] sm:$0xff]
      %v2241 = vld [vmem:[%s1 + $0x118] sm:$0xff]
      %v2242 = vld [vmem:[%s1 + $0x120] sm:$0xff]
      %v2243 = vld [vmem:[%s1 + $0x128] sm:$0xff]
      %v2244 = vld [vmem:[%s1 + $0x130] sm:$0xff]
      %v2245 = vld [vmem:[%s1 + $0x138] sm:$0xff]
      %v2246 = vld [vmem:[%s1 + $0x140] sm:$0xff]
      %v2247 = vld [vmem:[%s1 + $0x148] sm:$0xff]
      %v2248 = vld [vmem:[%s1 + $0x150] sm:$0xff]
      %v2249 = vld [vmem:[%s1 + $0x158] sm:$0xff]
      %v2250 = vld [vmem:[%s1 + $0x160] sm:$0xff]
      %v2251 = vld [vmem:[%s1 + $0x168] sm:$0xff]
      %v2252 = vld [vmem:[%s1 + $0x170] sm:$0xff]
      %v2253 = vld [vmem:[%s1 + $0x178] sm:$0xff]
      %v2254 = vld [vmem:[%s439] sm:$0xff]
      %v2255 = vld [vmem:[%s439 + $0x8] sm:$0xff]
      %v2256 = vld [vmem:[%s439 + $0x10] sm:$0x3]
      %v2257 = vld [vmem:[%s439 + $0x18] sm:$0xff]
      %v2258 = vld [vmem:[%s439 + $0x20] sm:$0xff]
      %v2259 = vld [vmem:[%s439 + $0x28] sm:$0x3]
      %v2260 = vld [vmem:[%s439 + $0x30] sm:$0xff]
      %v2261 = vld [vmem:[%s439 + $0x38] sm:$0xff]
      %v2262 = vld [vmem:[%s439 + $0x40] sm:$0x3]
      %v2263 = vld [vmem:[%s439 + $0x48] sm:$0xff]
      %v2264 = vld [vmem:[%s439 + $0x50] sm:$0xff]
      %v2265 = vld [vmem:[%s439 + $0x58] sm:$0x3]
      %v2266 = vld [vmem:[%s439 + $0x60] sm:$0xff]
      %v2267 = vld [vmem:[%s439 + $0x68] sm:$0xff]
      %v2268 = vld [vmem:[%s439 + $0x70] sm:$0x3]
      %v2269 = vld [vmem:[%s439 + $0x78] sm:$0xff]
      %v2270 = vld [vmem:[%s439 + $0x80] sm:$0xff]
      %v2271 = vld [vmem:[%s439 + $0x88] sm:$0x3]
      %v2272 = vld [vmem:[%s439 + $0x90] sm:$0xff]
      %v2273 = vld [vmem:[%s439 + $0x98] sm:$0xff]
      %v2274 = vld [vmem:[%s439 + $0xa0] sm:$0x3]
      %v2275 = vld [vmem:[%s439 + $0xa8] sm:$0xff]
      %v2276 = vld [vmem:[%s439 + $0xb0] sm:$0xff]
      %v2277 = vld [vmem:[%s439 + $0xb8] sm:$0x3]
      %v2302 = vrot.slane %v2254, 1
      %v2303 = vrot.slane %v2255, 1
      %v2304 = vsel %vm504, %v2302, %v2303
      %v2305 = vrot.slane %v2256, 1
      %v2306 = vsel %vm504, %v2303, %v2305
      %v2307 = vrot.slane %v2257, 1
      %v2308 = vrot.slane %v2258, 1
      %v2309 = vsel %vm504, %v2307, %v2308
      %v2310 = vrot.slane %v2259, 1
      %v2311 = vsel %vm504, %v2308, %v2310
      %v2312 = vrot.slane %v2260, 1
      %v2313 = vrot.slane %v2261, 1
      %v2314 = vsel %vm504, %v2312, %v2313
      %v2315 = vrot.slane %v2262, 1
      %v2316 = vsel %vm504, %v2313, %v2315
      %v2317 = vrot.slane %v2263, 1
      %v2318 = vrot.slane %v2264, 1
      %v2319 = vsel %vm504, %v2317, %v2318
      %v2320 = vrot.slane %v2265, 1
      %v2321 = vsel %vm504, %v2318, %v2320
      %v2322 = vrot.slane %v2266, 1
      %v2323 = vrot.slane %v2267, 1
      %v2324 = vsel %vm504, %v2322, %v2323
      %v2325 = vrot.slane %v2268, 1
      %v2326 = vsel %vm504, %v2323, %v2325
      %v2327 = vrot.slane %v2269, 1
      %v2328 = vrot.slane %v2270, 1
      %v2329 = vsel %vm504, %v2327, %v2328
      %v2330 = vrot.slane %v2271, 1
      %v2331 = vsel %vm504, %v2328, %v2330
      %v2332 = vrot.slane %v2272, 1
      %v2333 = vrot.slane %v2273, 1
      %v2334 = vsel %vm504, %v2332, %v2333
      %v2335 = vrot.slane %v2274, 1
      %v2336 = vsel %vm504, %v2333, %v2335
      %v2337 = vrot.slane %v2275, 1
      %v2338 = vrot.slane %v2276, 1
      %v2339 = vsel %vm504, %v2337, %v2338
      %v2340 = vrot.slane %v2277, 1
      %v2341 = vsel %vm504, %v2338, %v2340
      %v2358 = vrot.slane %v2254, 2
      %v2359 = vrot.slane %v2255, 2
      %v2360 = vsel %vm561, %v2358, %v2359
      %v2361 = vrot.slane %v2256, 2
      %v2362 = vsel %vm561, %v2359, %v2361
      %v2363 = vrot.slane %v2257, 2
      %v2364 = vrot.slane %v2258, 2
      %v2365 = vsel %vm561, %v2363, %v2364
      %v2366 = vrot.slane %v2259, 2
      %v2367 = vsel %vm561, %v2364, %v2366
      %v2368 = vrot.slane %v2260, 2
      %v2369 = vrot.slane %v2261, 2
      %v2370 = vsel %vm561, %v2368, %v2369
      %v2371 = vrot.slane %v2262, 2
      %v2372 = vsel %vm561, %v2369, %v2371
      %v2373 = vrot.slane %v2263, 2
      %v2374 = vrot.slane %v2264, 2
      %v2375 = vsel %vm561, %v2373, %v2374
      %v2376 = vrot.slane %v2265, 2
      %v2377 = vsel %vm561, %v2374, %v2376
      %v2378 = vrot.slane %v2266, 2
      %v2379 = vrot.slane %v2267, 2
      %v2380 = vsel %vm561, %v2378, %v2379
      %v2381 = vrot.slane %v2268, 2
      %v2382 = vsel %vm561, %v2379, %v2381
      %v2383 = vrot.slane %v2269, 2
      %v2384 = vrot.slane %v2270, 2
      %v2385 = vsel %vm561, %v2383, %v2384
      %v2386 = vrot.slane %v2271, 2
      %v2387 = vsel %vm561, %v2384, %v2386
      %v2388 = vrot.slane %v2272, 2
      %v2389 = vrot.slane %v2273, 2
      %v2390 = vsel %vm561, %v2388, %v2389
      %v2391 = vrot.slane %v2274, 2
      %v2392 = vsel %vm561, %v2389, %v2391
      %v2393 = vrot.slane %v2275, 2
      %v2394 = vrot.slane %v2276, 2
      %v2395 = vsel %vm561, %v2393, %v2394
      %v2396 = vrot.slane %v2277, 2
      %v2397 = vsel %vm561, %v2394, %v2396
      %v2414 = vld [vmem:[%s1 + $0x180] sm:$0xff]
      %v2415 = vld [vmem:[%s1 + $0x188] sm:$0xff]
      %v2416 = vld [vmem:[%s1 + $0x190] sm:$0xff]
      %v2417 = vld [vmem:[%s1 + $0x198] sm:$0xff]
      %v2418 = vld [vmem:[%s1 + $0x1a0] sm:$0xff]
      %v2419 = vld [vmem:[%s1 + $0x1a8] sm:$0xff]
      %v2420 = vld [vmem:[%s1 + $0x1b0] sm:$0xff]
      %v2421 = vld [vmem:[%s1 + $0x1b8] sm:$0xff]
      %v2422 = vld [vmem:[%s1 + $0x1c0] sm:$0xff]
      %v2423 = vld [vmem:[%s1 + $0x1c8] sm:$0xff]
      %v2424 = vld [vmem:[%s1 + $0x1d0] sm:$0xff]
      %v2425 = vld [vmem:[%s1 + $0x1d8] sm:$0xff]
      %v2426 = vld [vmem:[%s1 + $0x1e0] sm:$0xff]
      %v2427 = vld [vmem:[%s1 + $0x1e8] sm:$0xff]
      %v2428 = vld [vmem:[%s1 + $0x1f0] sm:$0xff]
      %v2429 = vld [vmem:[%s1 + $0x1f8] sm:$0xff]
      %v2430 = vld [vmem:[%s1 + $0x200] sm:$0xff]
      %v2431 = vld [vmem:[%s1 + $0x208] sm:$0xff]
      %v2432 = vld [vmem:[%s1 + $0x210] sm:$0xff]
      %v2433 = vld [vmem:[%s1 + $0x218] sm:$0xff]
      %v2434 = vld [vmem:[%s1 + $0x220] sm:$0xff]
      %v2435 = vld [vmem:[%s1 + $0x228] sm:$0xff]
      %v2436 = vld [vmem:[%s1 + $0x230] sm:$0xff]
      %v2437 = vld [vmem:[%s1 + $0x238] sm:$0xff]
      %v2438 = vld [vmem:[%s1 + $0x240] sm:$0xff]
      %v2439 = vld [vmem:[%s1 + $0x248] sm:$0xff]
      %v2440 = vld [vmem:[%s1 + $0x250] sm:$0xff]
      %v2441 = vld [vmem:[%s1 + $0x258] sm:$0xff]
      %v2442 = vld [vmem:[%s1 + $0x260] sm:$0xff]
      %v2443 = vld [vmem:[%s1 + $0x268] sm:$0xff]
      %v2444 = vld [vmem:[%s1 + $0x270] sm:$0xff]
      %v2445 = vld [vmem:[%s1 + $0x278] sm:$0xff]
      %v2446 = vld [vmem:[%s1 + $0x280] sm:$0xff]
      %v2447 = vld [vmem:[%s1 + $0x288] sm:$0xff]
      %v2448 = vld [vmem:[%s1 + $0x290] sm:$0xff]
      %v2449 = vld [vmem:[%s1 + $0x298] sm:$0xff]
      %v2450 = vld [vmem:[%s1 + $0x2a0] sm:$0xff]
      %v2451 = vld [vmem:[%s1 + $0x2a8] sm:$0xff]
      %v2452 = vld [vmem:[%s1 + $0x2b0] sm:$0xff]
      %v2453 = vld [vmem:[%s1 + $0x2b8] sm:$0xff]
      %v2454 = vld [vmem:[%s1 + $0x2c0] sm:$0xff]
      %v2455 = vld [vmem:[%s1 + $0x2c8] sm:$0xff]
      %v2456 = vld [vmem:[%s1 + $0x2d0] sm:$0xff]
      %v2457 = vld [vmem:[%s1 + $0x2d8] sm:$0xff]
      %v2458 = vld [vmem:[%s1 + $0x2e0] sm:$0xff]
      %v2459 = vld [vmem:[%s1 + $0x2e8] sm:$0xff]
      %v2460 = vld [vmem:[%s1 + $0x2f0] sm:$0xff]
      %v2461 = vld [vmem:[%s1 + $0x2f8] sm:$0xff]
      %2462 = vmatprep.subr.mxu0 0.0
      %2463 = vmatpush1.msra.mxu0 %v2429
      %2464 = vmatprep.subr.mxu0 0.0
      %2465 = vmatpush1.msra.mxu0 %v2428
      %2466 = vmatprep.subr.mxu0 0.0
      %2467 = vmatpush1.msra.mxu0 %v2427
      %2468 = vmatprep.subr.mxu0 0.0
      %2469 = vmatpush1.msra.mxu0 %v2426
      %2470 = vmatprep.subr.mxu0 0.0
      %2471 = vmatpush1.msra.mxu0 %v2425
      %2472 = vmatprep.subr.mxu0 0.0
      %2473 = vmatpush1.msra.mxu0 %v2424
      %2474 = vmatprep.subr.mxu0 0.0
      %2475 = vmatpush1.msra.mxu0 %v2423
      %2476 = vmatprep.subr.mxu0 0.0
      %2477 = vmatpush1.msra.mxu0 %v2422
      %2478 = vmatprep.subr.mxu0 0.0
      %2479 = vmatpush1.msra.mxu0 %v2421
      %2480 = vmatprep.subr.mxu0 0.0
      %2481 = vmatpush1.msra.mxu0 %v2420
      %2482 = vmatprep.subr.mxu0 0.0
      %2483 = vmatpush1.msra.mxu0 %v2419
      %2484 = vmatprep.subr.mxu0 0.0
      %2485 = vmatpush1.msra.mxu0 %v2418
      %2486 = vmatprep.subr.mxu0 0.0
      %2487 = vmatpush1.msra.mxu0 %v2417
      %2488 = vmatprep.subr.mxu0 0.0
      %2489 = vmatpush1.msra.mxu0 %v2416
      %2490 = vmatprep.subr.mxu0 0.0
      %2491 = vmatpush1.msra.mxu0 %v2415
      %2492 = vmatprep.subr.mxu0 0.0
      %2493 = vmatpush1.msra.mxu0 %v2414
      %2494 = vmatprep.subr.mxu0 0.0
      %2495 = vmatpush2.msra.mxu0 %v2445
      %2496 = vmatprep.subr.mxu0 0.0
      %2497 = vmatpush2.msra.mxu0 %v2444
      %2498 = vmatprep.subr.mxu0 0.0
      %2499 = vmatpush2.msra.mxu0 %v2443
      %2500 = vmatprep.subr.mxu0 0.0
      %2501 = vmatpush2.msra.mxu0 %v2442
      %2502 = vmatprep.subr.mxu0 0.0
      %2503 = vmatpush2.msra.mxu0 %v2441
      %2504 = vmatprep.subr.mxu0 0.0
      %2505 = vmatpush2.msra.mxu0 %v2440
      %2506 = vmatprep.subr.mxu0 0.0
      %2507 = vmatpush2.msra.mxu0 %v2439
      %2508 = vmatprep.subr.mxu0 0.0
      %2509 = vmatpush2.msra.mxu0 %v2438
      %2510 = vmatprep.subr.mxu0 0.0
      %2511 = vmatpush2.msra.mxu0 %v2437
      %2512 = vmatprep.subr.mxu0 0.0
      %2513 = vmatpush2.msra.mxu0 %v2436
      %2514 = vmatprep.subr.mxu0 0.0
      %2515 = vmatpush2.msra.mxu0 %v2435
      %2516 = vmatprep.subr.mxu0 0.0
      %2517 = vmatpush2.msra.mxu0 %v2434
      %2518 = vmatprep.subr.mxu0 0.0
      %2519 = vmatpush2.msra.mxu0 %v2433
      %2520 = vmatprep.subr.mxu0 0.0
      %2521 = vmatpush2.msra.mxu0 %v2432
      %2522 = vmatprep.subr.mxu0 0.0
      %2523 = vmatpush2.msra.mxu0 %v2431
      %2524 = vmatprep.subr.mxu0 0.0
      %2525 = vmatpush2.msra.mxu0 %v2430
      %2526 = vmatprep.mubr.f32.mxu0 %v2304
      %2527 = vmatmul.mubr.f32.gmra.mxu0 %v2254
      %v2528 = vpop.f32.mrf.mxu0
      %v2529 = vadd.f32 0.0, %v2528
      %v2530 = vpop.f32.mrf.mxu0
      %2531 = vmatprep.mubr.f32.mxu0 %v2306
      %2532 = vmatmul.mubr.f32.gmra.mxu0 %v2255
      %v2533 = vpop.f32.mrf.mxu0
      %v2534 = vadd.f32 0.0, %v2533
      %v2535 = vpop.f32.mrf.mxu0
      %2536 = vmatprep.mubr.f32.mxu0 %v2309
      %2537 = vmatmul.mubr.f32.gmra.mxu0 %v2257
      %v2538 = vpop.f32.mrf.mxu0
      %v2539 = vadd.f32 0.0, %v2538
      %v2540 = vpop.f32.mrf.mxu0
      %2541 = vmatprep.mubr.f32.mxu0 %v2311
      %2542 = vmatmul.mubr.f32.gmra.mxu0 %v2258
      %v2543 = vpop.f32.mrf.mxu0
      %v2544 = vadd.f32 0.0, %v2543
      %v2545 = vpop.f32.mrf.mxu0
      %2546 = vmatprep.mubr.f32.mxu0 %v2314
      %2547 = vmatmul.mubr.f32.gmra.mxu0 %v2260
      %v2548 = vpop.f32.mrf.mxu0
      %v2549 = vadd.f32 0.0, %v2548
      %v2550 = vpop.f32.mrf.mxu0
      %2551 = vmatprep.mubr.f32.mxu0 %v2316
      %2552 = vmatmul.mubr.f32.gmra.mxu0 %v2261
      %v2553 = vpop.f32.mrf.mxu0
      %v2554 = vadd.f32 0.0, %v2553
      %v2555 = vpop.f32.mrf.mxu0
      %2556 = vmatprep.mubr.f32.mxu0 %v2319
      %2557 = vmatmul.mubr.f32.gmra.mxu0 %v2263
      %v2558 = vpop.f32.mrf.mxu0
      %v2559 = vadd.f32 0.0, %v2558
      %v2560 = vpop.f32.mrf.mxu0
      %2561 = vmatprep.mubr.f32.mxu0 %v2321
      %2562 = vmatmul.mubr.f32.gmra.mxu0 %v2264
      %v2563 = vpop.f32.mrf.mxu0
      %v2564 = vadd.f32 0.0, %v2563
      %v2565 = vpop.f32.mrf.mxu0
      %2566 = vmatprep.mubr.f32.mxu0 %v2324
      %2567 = vmatmul.mubr.f32.gmra.mxu0 %v2266
      %v2568 = vpop.f32.mrf.mxu0
      %v2569 = vadd.f32 0.0, %v2568
      %v2570 = vpop.f32.mrf.mxu0
      %2571 = vmatprep.mubr.f32.mxu0 %v2326
      %2572 = vmatmul.mubr.f32.gmra.mxu0 %v2267
      %v2573 = vpop.f32.mrf.mxu0
      %v2574 = vadd.f32 0.0, %v2573
      %v2575 = vpop.f32.mrf.mxu0
      %2576 = vmatprep.mubr.f32.mxu0 %v2329
      %2577 = vmatmul.mubr.f32.gmra.mxu0 %v2269
      %v2578 = vpop.f32.mrf.mxu0
      %v2579 = vadd.f32 0.0, %v2578
      %v2580 = vpop.f32.mrf.mxu0
      %2581 = vmatprep.mubr.f32.mxu0 %v2331
      %2582 = vmatmul.mubr.f32.gmra.mxu0 %v2270
      %v2583 = vpop.f32.mrf.mxu0
      %v2584 = vadd.f32 0.0, %v2583
      %v2585 = vpop.f32.mrf.mxu0
      %2586 = vmatprep.mubr.f32.mxu0 %v2334
      %2587 = vmatmul.mubr.f32.gmra.mxu0 %v2272
      %v2588 = vpop.f32.mrf.mxu0
      %v2589 = vadd.f32 0.0, %v2588
      %v2590 = vpop.f32.mrf.mxu0
      %2591 = vmatprep.mubr.f32.mxu0 %v2336
      %2592 = vmatmul.mubr.f32.gmra.mxu0 %v2273
      %v2593 = vpop.f32.mrf.mxu0
      %v2594 = vadd.f32 0.0, %v2593
      %v2595 = vpop.f32.mrf.mxu0
      %2596 = vmatprep.mubr.f32.mxu0 %v2339
      %2597 = vmatmul.mubr.f32.gmra.mxu0 %v2275
      %v2598 = vpop.f32.mrf.mxu0
      %v2599 = vadd.f32 0.0, %v2598
      %v2600 = vpop.f32.mrf.mxu0
      %2601 = vmatprep.mubr.f32.mxu0 %v2341
      %2602 = vmatmul.mubr.f32.gmra.mxu0 %v2276
      %v2603 = vpop.f32.mrf.mxu0
      %v2604 = vadd.f32 0.0, %v2603
      %v2605 = vpop.f32.mrf.mxu0
      %2606 = vdwg.mxu0
      %2607 = vmatprep.subr.mxu0 0.0
      %2608 = vmatpush1.msra.mxu0 %v2461
      %2609 = vmatprep.subr.mxu0 0.0
      %2610 = vmatpush1.msra.mxu0 %v2460
      %2611 = vmatprep.subr.mxu0 0.0
      %2612 = vmatpush1.msra.mxu0 %v2459
      %2613 = vmatprep.subr.mxu0 0.0
      %2614 = vmatpush1.msra.mxu0 %v2458
      %2615 = vmatprep.subr.mxu0 0.0
      %2616 = vmatpush1.msra.mxu0 %v2457
      %2617 = vmatprep.subr.mxu0 0.0
      %2618 = vmatpush1.msra.mxu0 %v2456
      %2619 = vmatprep.subr.mxu0 0.0
      %2620 = vmatpush1.msra.mxu0 %v2455
      %2621 = vmatprep.subr.mxu0 0.0
      %2622 = vmatpush1.msra.mxu0 %v2454
      %2623 = vmatprep.subr.mxu0 0.0
      %2624 = vmatpush1.msra.mxu0 %v2453
      %2625 = vmatprep.subr.mxu0 0.0
      %2626 = vmatpush1.msra.mxu0 %v2452
      %2627 = vmatprep.subr.mxu0 0.0
      %2628 = vmatpush1.msra.mxu0 %v2451
      %2629 = vmatprep.subr.mxu0 0.0
      %2630 = vmatpush1.msra.mxu0 %v2450
      %2631 = vmatprep.subr.mxu0 0.0
      %2632 = vmatpush1.msra.mxu0 %v2449
      %2633 = vmatprep.subr.mxu0 0.0
      %2634 = vmatpush1.msra.mxu0 %v2448
      %2635 = vmatprep.subr.mxu0 0.0
      %2636 = vmatpush1.msra.mxu0 %v2447
      %2637 = vmatprep.subr.mxu0 0.0
      %2638 = vmatpush1.msra.mxu0 %v2446
      %2639 = vmatprep.subr.mxu0 0.0
      %2640 = vmatpush2.msra.mxu0 0.0
      %2641 = vmatprep.subr.mxu0 0.0
      %2642 = vmatpush2.msra.mxu0 0.0
      %2643 = vmatprep.subr.mxu0 0.0
      %2644 = vmatpush2.msra.mxu0 0.0
      %2645 = vmatprep.subr.mxu0 0.0
      %2646 = vmatpush2.msra.mxu0 0.0
      %2647 = vmatprep.subr.mxu0 0.0
      %2648 = vmatpush2.msra.mxu0 0.0
      %2649 = vmatprep.subr.mxu0 0.0
      %2650 = vmatpush2.msra.mxu0 0.0
      %2651 = vmatprep.subr.mxu0 0.0
      %2652 = vmatpush2.msra.mxu0 0.0
      %2653 = vmatprep.subr.mxu0 0.0
      %2654 = vmatpush2.msra.mxu0 0.0
      %2655 = vmatprep.subr.mxu0 0.0
      %2656 = vmatpush2.msra.mxu0 0.0
      %2657 = vmatprep.subr.mxu0 0.0
      %2658 = vmatpush2.msra.mxu0 0.0
      %2659 = vmatprep.subr.mxu0 0.0
      %2660 = vmatpush2.msra.mxu0 0.0
      %2661 = vmatprep.subr.mxu0 0.0
      %2662 = vmatpush2.msra.mxu0 0.0
      %2663 = vmatprep.subr.mxu0 0.0
      %2664 = vmatpush2.msra.mxu0 0.0
      %2665 = vmatprep.subr.mxu0 0.0
      %2666 = vmatpush2.msra.mxu0 0.0
      %2667 = vmatprep.subr.mxu0 0.0
      %2668 = vmatpush2.msra.mxu0 0.0
      %2669 = vmatprep.subr.mxu0 0.0
      %2670 = vmatpush2.msra.mxu0 0.0
      %2671 = vmatprep.mubr.f32.mxu0 0.0
      %2672 = vmatmul.mubr.f32.gmra.mxu0 %v2360
      %v2673 = vpop.f32.mrf.mxu0
      %v2674 = vadd.f32 %v2529, %v2673
      %v2675 = vpop.f32.mrf.mxu0
      %2676 = vmatprep.mubr.f32.mxu0 0.0
      %2677 = vmatmul.mubr.f32.gmra.mxu0 %v2362
      %v2678 = vpop.f32.mrf.mxu0
      %v2679 = vadd.f32 %v2534, %v2678
      %v2680 = vpop.f32.mrf.mxu0
      %2681 = vmatprep.mubr.f32.mxu0 0.0
      %2682 = vmatmul.mubr.f32.gmra.mxu0 %v2365
      %v2683 = vpop.f32.mrf.mxu0
      %v2684 = vadd.f32 %v2539, %v2683
      %v2685 = vpop.f32.mrf.mxu0
      %2686 = vmatprep.mubr.f32.mxu0 0.0
      %2687 = vmatmul.mubr.f32.gmra.mxu0 %v2367
      %v2688 = vpop.f32.mrf.mxu0
      %v2689 = vadd.f32 %v2544, %v2688
      %v2690 = vpop.f32.mrf.mxu0
      %2691 = vmatprep.mubr.f32.mxu0 0.0
      %2692 = vmatmul.mubr.f32.gmra.mxu0 %v2370
      %v2693 = vpop.f32.mrf.mxu0
      %v2694 = vadd.f32 %v2549, %v2693
      %v2695 = vpop.f32.mrf.mxu0
      %2696 = vmatprep.mubr.f32.mxu0 0.0
      %2697 = vmatmul.mubr.f32.gmra.mxu0 %v2372
      %v2698 = vpop.f32.mrf.mxu0
      %v2699 = vadd.f32 %v2554, %v2698
      %v2700 = vpop.f32.mrf.mxu0
      %2701 = vmatprep.mubr.f32.mxu0 0.0
      %2702 = vmatmul.mubr.f32.gmra.mxu0 %v2375
      %v2703 = vpop.f32.mrf.mxu0
      %v2704 = vadd.f32 %v2559, %v2703
      %v2705 = vpop.f32.mrf.mxu0
      %2706 = vmatprep.mubr.f32.mxu0 0.0
      %2707 = vmatmul.mubr.f32.gmra.mxu0 %v2377
      %v2708 = vpop.f32.mrf.mxu0
      %v2709 = vadd.f32 %v2564, %v2708
      %v2710 = vpop.f32.mrf.mxu0
      %2711 = vmatprep.mubr.f32.mxu0 0.0
      %2712 = vmatmul.mubr.f32.gmra.mxu0 %v2380
      %v2713 = vpop.f32.mrf.mxu0
      %v2714 = vadd.f32 %v2569, %v2713
      %v2715 = vpop.f32.mrf.mxu0
      %2716 = vmatprep.mubr.f32.mxu0 0.0
      %2717 = vmatmul.mubr.f32.gmra.mxu0 %v2382
      %v2718 = vpop.f32.mrf.mxu0
      %v2719 = vadd.f32 %v2574, %v2718
      %v2720 = vpop.f32.mrf.mxu0
      %2721 = vmatprep.mubr.f32.mxu0 0.0
      %2722 = vmatmul.mubr.f32.gmra.mxu0 %v2385
      %v2723 = vpop.f32.mrf.mxu0
      %v2724 = vadd.f32 %v2579, %v2723
      %v2725 = vpop.f32.mrf.mxu0
      %2726 = vmatprep.mubr.f32.mxu0 0.0
      %2727 = vmatmul.mubr.f32.gmra.mxu0 %v2387
      %v2728 = vpop.f32.mrf.mxu0
      %v2729 = vadd.f32 %v2584, %v2728
      %v2730 = vpop.f32.mrf.mxu0
      %2731 = vmatprep.mubr.f32.mxu0 0.0
      %2732 = vmatmul.mubr.f32.gmra.mxu0 %v2390
      %v2733 = vpop.f32.mrf.mxu0
      %v2734 = vadd.f32 %v2589, %v2733
      %v2735 = vpop.f32.mrf.mxu0
      %2736 = vmatprep.mubr.f32.mxu0 0.0
      %2737 = vmatmul.mubr.f32.gmra.mxu0 %v2392
      %v2738 = vpop.f32.mrf.mxu0
      %v2739 = vadd.f32 %v2594, %v2738
      %v2740 = vpop.f32.mrf.mxu0
      %2741 = vmatprep.mubr.f32.mxu0 0.0
      %2742 = vmatmul.mubr.f32.gmra.mxu0 %v2395
      %v2743 = vpop.f32.mrf.mxu0
      %v2744 = vadd.f32 %v2599, %v2743
      %v2745 = vpop.f32.mrf.mxu0
      %2746 = vmatprep.mubr.f32.mxu0 0.0
      %2747 = vmatmul.mubr.f32.gmra.mxu0 %v2397
      %v2748 = vpop.f32.mrf.mxu0
      %v2749 = vadd.f32 %v2604, %v2748
      %v2750 = vpop.f32.mrf.mxu0
      %2751 = vdwg.mxu0
      %2752 = vmatprep.subr.mxu0 0.0
      %2753 = vmatpush1.msra.mxu0 %v2221
      %2754 = vmatprep.subr.mxu0 0.0
      %2755 = vmatpush1.msra.mxu0 %v2220
      %2756 = vmatprep.subr.mxu0 0.0
      %2757 = vmatpush1.msra.mxu0 %v2219
      %2758 = vmatprep.subr.mxu0 0.0
      %2759 = vmatpush1.msra.mxu0 %v2218
      %2760 = vmatprep.subr.mxu0 0.0
      %2761 = vmatpush1.msra.mxu0 %v2217
      %2762 = vmatprep.subr.mxu0 0.0
      %2763 = vmatpush1.msra.mxu0 %v2216
      %2764 = vmatprep.subr.mxu0 0.0
      %2765 = vmatpush1.msra.mxu0 %v2215
      %2766 = vmatprep.subr.mxu0 0.0
      %2767 = vmatpush1.msra.mxu0 %v2214
      %2768 = vmatprep.subr.mxu0 0.0
      %2769 = vmatpush1.msra.mxu0 %v2213
      %2770 = vmatprep.subr.mxu0 0.0
      %2771 = vmatpush1.msra.mxu0 %v2212
      %2772 = vmatprep.subr.mxu0 0.0
      %2773 = vmatpush1.msra.mxu0 %v2211
      %2774 = vmatprep.subr.mxu0 0.0
      %2775 = vmatpush1.msra.mxu0 %v2210
      %2776 = vmatprep.subr.mxu0 0.0
      %2777 = vmatpush1.msra.mxu0 %v2209
      %2778 = vmatprep.subr.mxu0 0.0
      %2779 = vmatpush1.msra.mxu0 %v2208
      %2780 = vmatprep.subr.mxu0 0.0
      %2781 = vmatpush1.msra.mxu0 %v2207
      %2782 = vmatprep.subr.mxu0 0.0
      %2783 = vmatpush1.msra.mxu0 %v2206
      %2784 = vmatprep.subr.mxu0 0.0
      %2785 = vmatpush2.msra.mxu0 %v2237
      %2786 = vmatprep.subr.mxu0 0.0
      %2787 = vmatpush2.msra.mxu0 %v2236
      %2788 = vmatprep.subr.mxu0 0.0
      %2789 = vmatpush2.msra.mxu0 %v2235
      %2790 = vmatprep.subr.mxu0 0.0
      %2791 = vmatpush2.msra.mxu0 %v2234
      %2792 = vmatprep.subr.mxu0 0.0
      %2793 = vmatpush2.msra.mxu0 %v2233
      %2794 = vmatprep.subr.mxu0 0.0
      %2795 = vmatpush2.msra.mxu0 %v2232
      %2796 = vmatprep.subr.mxu0 0.0
      %2797 = vmatpush2.msra.mxu0 %v2231
      %2798 = vmatprep.subr.mxu0 0.0
      %2799 = vmatpush2.msra.mxu0 %v2230
      %2800 = vmatprep.subr.mxu0 0.0
      %2801 = vmatpush2.msra.mxu0 %v2229
      %2802 = vmatprep.subr.mxu0 0.0
      %2803 = vmatpush2.msra.mxu0 %v2228
      %2804 = vmatprep.subr.mxu0 0.0
      %2805 = vmatpush2.msra.mxu0 %v2227
      %2806 = vmatprep.subr.mxu0 0.0
      %2807 = vmatpush2.msra.mxu0 %v2226
      %2808 = vmatprep.subr.mxu0 0.0
      %2809 = vmatpush2.msra.mxu0 %v2225
      %2810 = vmatprep.subr.mxu0 0.0
      %2811 = vmatpush2.msra.mxu0 %v2224
      %2812 = vmatprep.subr.mxu0 0.0
      %2813 = vmatpush2.msra.mxu0 %v2223
      %2814 = vmatprep.subr.mxu0 0.0
      %2815 = vmatpush2.msra.mxu0 %v2222
      %2816 = vmatprep.mubr.f32.mxu0 %v2096
      %2817 = vmatmul.mubr.f32.gmra.mxu0 %v2046
      %v2818 = vpop.f32.mrf.mxu0
      %v2819 = vadd.f32 %v2674, %v2818
      %v2820 = vpop.f32.mrf.mxu0
      %2821 = vmatprep.mubr.f32.mxu0 %v2098
      %2822 = vmatmul.mubr.f32.gmra.mxu0 %v2047
      %v2823 = vpop.f32.mrf.mxu0
      %v2824 = vadd.f32 %v2679, %v2823
      %v2825 = vpop.f32.mrf.mxu0
      %2826 = vmatprep.mubr.f32.mxu0 %v2101
      %2827 = vmatmul.mubr.f32.gmra.mxu0 %v2049
      %v2828 = vpop.f32.mrf.mxu0
      %v2829 = vadd.f32 %v2684, %v2828
      %v2830 = vpop.f32.mrf.mxu0
      %2831 = vmatprep.mubr.f32.mxu0 %v2103
      %2832 = vmatmul.mubr.f32.gmra.mxu0 %v2050
      %v2833 = vpop.f32.mrf.mxu0
      %v2834 = vadd.f32 %v2689, %v2833
      %v2835 = vpop.f32.mrf.mxu0
      %2836 = vmatprep.mubr.f32.mxu0 %v2106
      %2837 = vmatmul.mubr.f32.gmra.mxu0 %v2052
      %v2838 = vpop.f32.mrf.mxu0
      %v2839 = vadd.f32 %v2694, %v2838
      %v2840 = vpop.f32.mrf.mxu0
      %2841 = vmatprep.mubr.f32.mxu0 %v2108
      %2842 = vmatmul.mubr.f32.gmra.mxu0 %v2053
      %v2843 = vpop.f32.mrf.mxu0
      %v2844 = vadd.f32 %v2699, %v2843
      %v2845 = vpop.f32.mrf.mxu0
      %2846 = vmatprep.mubr.f32.mxu0 %v2111
      %2847 = vmatmul.mubr.f32.gmra.mxu0 %v2055
      %v2848 = vpop.f32.mrf.mxu0
      %v2849 = vadd.f32 %v2704, %v2848
      %v2850 = vpop.f32.mrf.mxu0
      %2851 = vmatprep.mubr.f32.mxu0 %v2113
      %2852 = vmatmul.mubr.f32.gmra.mxu0 %v2056
      %v2853 = vpop.f32.mrf.mxu0
      %v2854 = vadd.f32 %v2709, %v2853
      %v2855 = vpop.f32.mrf.mxu0
      %2856 = vmatprep.mubr.f32.mxu0 %v2116
      %2857 = vmatmul.mubr.f32.gmra.mxu0 %v2058
      %v2858 = vpop.f32.mrf.mxu0
      %v2859 = vadd.f32 %v2714, %v2858
      %v2860 = vpop.f32.mrf.mxu0
      %2861 = vmatprep.mubr.f32.mxu0 %v2118
      %2862 = vmatmul.mubr.f32.gmra.mxu0 %v2059
      %v2863 = vpop.f32.mrf.mxu0
      %v2864 = vadd.f32 %v2719, %v2863
      %v2865 = vpop.f32.mrf.mxu0
      %2866 = vmatprep.mubr.f32.mxu0 %v2121
      %2867 = vmatmul.mubr.f32.gmra.mxu0 %v2061
      %v2868 = vpop.f32.mrf.mxu0
      %v2869 = vadd.f32 %v2724, %v2868
      %v2870 = vpop.f32.mrf.mxu0
      %2871 = vmatprep.mubr.f32.mxu0 %v2123
      %2872 = vmatmul.mubr.f32.gmra.mxu0 %v2062
      %v2873 = vpop.f32.mrf.mxu0
      %v2874 = vadd.f32 %v2729, %v2873
      %v2875 = vpop.f32.mrf.mxu0
      %2876 = vmatprep.mubr.f32.mxu0 %v2126
      %2877 = vmatmul.mubr.f32.gmra.mxu0 %v2064
      %v2878 = vpop.f32.mrf.mxu0
      %v2879 = vadd.f32 %v2734, %v2878
      %v2880 = vpop.f32.mrf.mxu0
      %2881 = vmatprep.mubr.f32.mxu0 %v2128
      %2882 = vmatmul.mubr.f32.gmra.mxu0 %v2065
      %v2883 = vpop.f32.mrf.mxu0
      %v2884 = vadd.f32 %v2739, %v2883
      %v2885 = vpop.f32.mrf.mxu0
      %2886 = vmatprep.mubr.f32.mxu0 %v2131
      %2887 = vmatmul.mubr.f32.gmra.mxu0 %v2067
      %v2888 = vpop.f32.mrf.mxu0
      %v2889 = vadd.f32 %v2744, %v2888
      %v2890 = vpop.f32.mrf.mxu0
      %2891 = vmatprep.mubr.f32.mxu0 %v2133
      %2892 = vmatmul.mubr.f32.gmra.mxu0 %v2068
      %v2893 = vpop.f32.mrf.mxu0
      %v2894 = vadd.f32 %v2749, %v2893
      %v2895 = vpop.f32.mrf.mxu0
      %2896 = vdwg.mxu0
      %2897 = vmatprep.subr.mxu0 0.0
      %2898 = vmatpush1.msra.mxu0 %v2253
      %2899 = vmatprep.subr.mxu0 0.0
      %2900 = vmatpush1.msra.mxu0 %v2252
      %2901 = vmatprep.subr.mxu0 0.0
      %2902 = vmatpush1.msra.mxu0 %v2251
      %2903 = vmatprep.subr.mxu0 0.0
      %2904 = vmatpush1.msra.mxu0 %v2250
      %2905 = vmatprep.subr.mxu0 0.0
      %2906 = vmatpush1.msra.mxu0 %v2249
      %2907 = vmatprep.subr.mxu0 0.0
      %2908 = vmatpush1.msra.mxu0 %v2248
      %2909 = vmatprep.subr.mxu0 0.0
      %2910 = vmatpush1.msra.mxu0 %v2247
      %2911 = vmatprep.subr.mxu0 0.0
      %2912 = vmatpush1.msra.mxu0 %v2246
      %2913 = vmatprep.subr.mxu0 0.0
      %2914 = vmatpush1.msra.mxu0 %v2245
      %2915 = vmatprep.subr.mxu0 0.0
      %2916 = vmatpush1.msra.mxu0 %v2244
      %2917 = vmatprep.subr.mxu0 0.0
      %2918 = vmatpush1.msra.mxu0 %v2243
      %2919 = vmatprep.subr.mxu0 0.0
      %2920 = vmatpush1.msra.mxu0 %v2242
      %2921 = vmatprep.subr.mxu0 0.0
      %2922 = vmatpush1.msra.mxu0 %v2241
      %2923 = vmatprep.subr.mxu0 0.0
      %2924 = vmatpush1.msra.mxu0 %v2240
      %2925 = vmatprep.subr.mxu0 0.0
      %2926 = vmatpush1.msra.mxu0 %v2239
      %2927 = vmatprep.subr.mxu0 0.0
      %2928 = vmatpush1.msra.mxu0 %v2238
      %2929 = vmatprep.subr.mxu0 0.0
      %2930 = vmatpush2.msra.mxu0 0.0
      %2931 = vmatprep.subr.mxu0 0.0
      %2932 = vmatpush2.msra.mxu0 0.0
      %2933 = vmatprep.subr.mxu0 0.0
      %2934 = vmatpush2.msra.mxu0 0.0
      %2935 = vmatprep.subr.mxu0 0.0
      %2936 = vmatpush2.msra.mxu0 0.0
      %2937 = vmatprep.subr.mxu0 0.0
      %2938 = vmatpush2.msra.mxu0 0.0
      %2939 = vmatprep.subr.mxu0 0.0
      %2940 = vmatpush2.msra.mxu0 0.0
      %2941 = vmatprep.subr.mxu0 0.0
      %2942 = vmatpush2.msra.mxu0 0.0
      %2943 = vmatprep.subr.mxu0 0.0
      %2944 = vmatpush2.msra.mxu0 0.0
      %2945 = vmatprep.subr.mxu0 0.0
      %2946 = vmatpush2.msra.mxu0 0.0
      %2947 = vmatprep.subr.mxu0 0.0
      %2948 = vmatpush2.msra.mxu0 0.0
      %2949 = vmatprep.subr.mxu0 0.0
      %2950 = vmatpush2.msra.mxu0 0.0
      %2951 = vmatprep.subr.mxu0 0.0
      %2952 = vmatpush2.msra.mxu0 0.0
      %2953 = vmatprep.subr.mxu0 0.0
      %2954 = vmatpush2.msra.mxu0 0.0
      %2955 = vmatprep.subr.mxu0 0.0
      %2956 = vmatpush2.msra.mxu0 0.0
      %2957 = vmatprep.subr.mxu0 0.0
      %2958 = vmatpush2.msra.mxu0 0.0
      %2959 = vmatprep.subr.mxu0 0.0
      %2960 = vmatpush2.msra.mxu0 0.0
      %2961 = vmatprep.mubr.f32.mxu0 0.0
      %2962 = vmatmul.mubr.f32.gmra.mxu0 %v2152
      %v2963 = vpop.f32.mrf.mxu0
      %v2964 = vadd.f32 %v2819, %v2963
      %v2965 = vpop.f32.mrf.mxu0
      %2966 = vmatprep.mubr.f32.mxu0 0.0
      %2967 = vmatmul.mubr.f32.gmra.mxu0 %v2154
      %v2968 = vpop.f32.mrf.mxu0
      %v2969 = vadd.f32 %v2824, %v2968
      %v2970 = vpop.f32.mrf.mxu0
      %2971 = vmatprep.mubr.f32.mxu0 0.0
      %2972 = vmatmul.mubr.f32.gmra.mxu0 %v2157
      %v2973 = vpop.f32.mrf.mxu0
      %v2974 = vadd.f32 %v2829, %v2973
      %v2975 = vpop.f32.mrf.mxu0
      %2976 = vmatprep.mubr.f32.mxu0 0.0
      %2977 = vmatmul.mubr.f32.gmra.mxu0 %v2159
      %v2978 = vpop.f32.mrf.mxu0
      %v2979 = vadd.f32 %v2834, %v2978
      %v2980 = vpop.f32.mrf.mxu0
      %2981 = vmatprep.mubr.f32.mxu0 0.0
      %2982 = vmatmul.mubr.f32.gmra.mxu0 %v2162
      %v2983 = vpop.f32.mrf.mxu0
      %v2984 = vadd.f32 %v2839, %v2983
      %v2985 = vpop.f32.mrf.mxu0
      %2986 = vmatprep.mubr.f32.mxu0 0.0
      %2987 = vmatmul.mubr.f32.gmra.mxu0 %v2164
      %v2988 = vpop.f32.mrf.mxu0
      %v2989 = vadd.f32 %v2844, %v2988
      %v2990 = vpop.f32.mrf.mxu0
      %2991 = vmatprep.mubr.f32.mxu0 0.0
      %2992 = vmatmul.mubr.f32.gmra.mxu0 %v2167
      %v2993 = vpop.f32.mrf.mxu0
      %v2994 = vadd.f32 %v2849, %v2993
      %v2995 = vpop.f32.mrf.mxu0
      %2996 = vmatprep.mubr.f32.mxu0 0.0
      %2997 = vmatmul.mubr.f32.gmra.mxu0 %v2169
      %v2998 = vpop.f32.mrf.mxu0
      %v2999 = vadd.f32 %v2854, %v2998
      %v3000 = vpop.f32.mrf.mxu0
      %3001 = vmatprep.mubr.f32.mxu0 0.0
      %3002 = vmatmul.mubr.f32.gmra.mxu0 %v2172
      %v3003 = vpop.f32.mrf.mxu0
      %v3004 = vadd.f32 %v2859, %v3003
      %v3005 = vpop.f32.mrf.mxu0
      %3006 = vmatprep.mubr.f32.mxu0 0.0
      %3007 = vmatmul.mubr.f32.gmra.mxu0 %v2174
      %v3008 = vpop.f32.mrf.mxu0
      %v3009 = vadd.f32 %v2864, %v3008
      %v3010 = vpop.f32.mrf.mxu0
      %3011 = vmatprep.mubr.f32.mxu0 0.0
      %3012 = vmatmul.mubr.f32.gmra.mxu0 %v2177
      %v3013 = vpop.f32.mrf.mxu0
      %v3014 = vadd.f32 %v2869, %v3013
      %v3015 = vpop.f32.mrf.mxu0
      %3016 = vmatprep.mubr.f32.mxu0 0.0
      %3017 = vmatmul.mubr.f32.gmra.mxu0 %v2179
      %v3018 = vpop.f32.mrf.mxu0
      %v3019 = vadd.f32 %v2874, %v3018
      %v3020 = vpop.f32.mrf.mxu0
      %3021 = vmatprep.mubr.f32.mxu0 0.0
      %3022 = vmatmul.mubr.f32.gmra.mxu0 %v2182
      %v3023 = vpop.f32.mrf.mxu0
      %v3024 = vadd.f32 %v2879, %v3023
      %v3025 = vpop.f32.mrf.mxu0
      %3026 = vmatprep.mubr.f32.mxu0 0.0
      %3027 = vmatmul.mubr.f32.gmra.mxu0 %v2184
      %v3028 = vpop.f32.mrf.mxu0
      %v3029 = vadd.f32 %v2884, %v3028
      %v3030 = vpop.f32.mrf.mxu0
      %3031 = vmatprep.mubr.f32.mxu0 0.0
      %3032 = vmatmul.mubr.f32.gmra.mxu0 %v2187
      %v3033 = vpop.f32.mrf.mxu0
      %v3034 = vadd.f32 %v2889, %v3033
      %v3035 = vpop.f32.mrf.mxu0
      %3036 = vmatprep.mubr.f32.mxu0 0.0
      %3037 = vmatmul.mubr.f32.gmra.mxu0 %v2189
      %v3038 = vpop.f32.mrf.mxu0
      %v3039 = vadd.f32 %v2894, %v3038
      %v3040 = vpop.f32.mrf.mxu0
      %3041 = vdwg.mxu0
      %s3042 = scalar_lea.vmem [#allocation2], 240
      %v3043 = vld [vmem:[%s3042] sm:$0xff]
      %v3044 = vld [vmem:[%s3042 + $0x8] sm:$0xff]
      %v3045 = vld [vmem:[%s3042 + $0x10] sm:$0x3]
      %v3046 = vld [vmem:[%s3042 + $0x18] sm:$0xff]
      %v3047 = vld [vmem:[%s3042 + $0x20] sm:$0xff]
      %v3048 = vld [vmem:[%s3042 + $0x28] sm:$0x3]
      %v3049 = vld [vmem:[%s3042 + $0x30] sm:$0xff]
      %v3050 = vld [vmem:[%s3042 + $0x38] sm:$0xff]
      %v3051 = vld [vmem:[%s3042 + $0x40] sm:$0x3]
      %v3052 = vld [vmem:[%s3042 + $0x48] sm:$0xff]
      %v3053 = vld [vmem:[%s3042 + $0x50] sm:$0xff]
      %v3054 = vld [vmem:[%s3042 + $0x58] sm:$0x3]
      %v3055 = vld [vmem:[%s3042 + $0x60] sm:$0xff]
      %v3056 = vld [vmem:[%s3042 + $0x68] sm:$0xff]
      %v3057 = vld [vmem:[%s3042 + $0x70] sm:$0x3]
      %v3058 = vld [vmem:[%s3042 + $0x78] sm:$0xff]
      %v3059 = vld [vmem:[%s3042 + $0x80] sm:$0xff]
      %v3060 = vld [vmem:[%s3042 + $0x88] sm:$0x3]
      %v3061 = vld [vmem:[%s3042 + $0x90] sm:$0xff]
      %v3062 = vld [vmem:[%s3042 + $0x98] sm:$0xff]
      %v3063 = vld [vmem:[%s3042 + $0xa0] sm:$0x3]
      %v3064 = vld [vmem:[%s3042 + $0xa8] sm:$0xff]
      %v3065 = vld [vmem:[%s3042 + $0xb0] sm:$0xff]
      %v3066 = vld [vmem:[%s3042 + $0xb8] sm:$0x3]
      %v3091 = vrot.slane %v3043, 1
      %v3092 = vrot.slane %v3044, 1
      %v3093 = vsel %vm504, %v3091, %v3092
      %v3094 = vrot.slane %v3045, 1
      %v3095 = vsel %vm504, %v3092, %v3094
      %v3096 = vrot.slane %v3046, 1
      %v3097 = vrot.slane %v3047, 1
      %v3098 = vsel %vm504, %v3096, %v3097
      %v3099 = vrot.slane %v3048, 1
      %v3100 = vsel %vm504, %v3097, %v3099
      %v3101 = vrot.slane %v3049, 1
      %v3102 = vrot.slane %v3050, 1
      %v3103 = vsel %vm504, %v3101, %v3102
      %v3104 = vrot.slane %v3051, 1
      %v3105 = vsel %vm504, %v3102, %v3104
      %v3106 = vrot.slane %v3052, 1
      %v3107 = vrot.slane %v3053, 1
      %v3108 = vsel %vm504, %v3106, %v3107
      %v3109 = vrot.slane %v3054, 1
      %v3110 = vsel %vm504, %v3107, %v3109
      %v3111 = vrot.slane %v3055, 1
      %v3112 = vrot.slane %v3056, 1
      %v3113 = vsel %vm504, %v3111, %v3112
      %v3114 = vrot.slane %v3057, 1
      %v3115 = vsel %vm504, %v3112, %v3114
      %v3116 = vrot.slane %v3058, 1
      %v3117 = vrot.slane %v3059, 1
      %v3118 = vsel %vm504, %v3116, %v3117
      %v3119 = vrot.slane %v3060, 1
      %v3120 = vsel %vm504, %v3117, %v3119
      %v3121 = vrot.slane %v3061, 1
      %v3122 = vrot.slane %v3062, 1
      %v3123 = vsel %vm504, %v3121, %v3122
      %v3124 = vrot.slane %v3063, 1
      %v3125 = vsel %vm504, %v3122, %v3124
      %v3126 = vrot.slane %v3064, 1
      %v3127 = vrot.slane %v3065, 1
      %v3128 = vsel %vm504, %v3126, %v3127
      %v3129 = vrot.slane %v3066, 1
      %v3130 = vsel %vm504, %v3127, %v3129
      %v3147 = vrot.slane %v3043, 2
      %v3148 = vrot.slane %v3044, 2
      %v3149 = vsel %vm561, %v3147, %v3148
      %v3150 = vrot.slane %v3045, 2
      %v3151 = vsel %vm561, %v3148, %v3150
      %v3152 = vrot.slane %v3046, 2
      %v3153 = vrot.slane %v3047, 2
      %v3154 = vsel %vm561, %v3152, %v3153
      %v3155 = vrot.slane %v3048, 2
      %v3156 = vsel %vm561, %v3153, %v3155
      %v3157 = vrot.slane %v3049, 2
      %v3158 = vrot.slane %v3050, 2
      %v3159 = vsel %vm561, %v3157, %v3158
      %v3160 = vrot.slane %v3051, 2
      %v3161 = vsel %vm561, %v3158, %v3160
      %v3162 = vrot.slane %v3052, 2
      %v3163 = vrot.slane %v3053, 2
      %v3164 = vsel %vm561, %v3162, %v3163
      %v3165 = vrot.slane %v3054, 2
      %v3166 = vsel %vm561, %v3163, %v3165
      %v3167 = vrot.slane %v3055, 2
      %v3168 = vrot.slane %v3056, 2
      %v3169 = vsel %vm561, %v3167, %v3168
      %v3170 = vrot.slane %v3057, 2
      %v3171 = vsel %vm561, %v3168, %v3170
      %v3172 = vrot.slane %v3058, 2
      %v3173 = vrot.slane %v3059, 2
      %v3174 = vsel %vm561, %v3172, %v3173
      %v3175 = vrot.slane %v3060, 2
      %v3176 = vsel %vm561, %v3173, %v3175
      %v3177 = vrot.slane %v3061, 2
      %v3178 = vrot.slane %v3062, 2
      %v3179 = vsel %vm561, %v3177, %v3178
      %v3180 = vrot.slane %v3063, 2
      %v3181 = vsel %vm561, %v3178, %v3180
      %v3182 = vrot.slane %v3064, 2
      %v3183 = vrot.slane %v3065, 2
      %v3184 = vsel %vm561, %v3182, %v3183
      %v3185 = vrot.slane %v3066, 2
      %v3186 = vsel %vm561, %v3183, %v3185
      %v3203 = vld [vmem:[%s1 + $0x300] sm:$0xff]
      %v3204 = vld [vmem:[%s1 + $0x308] sm:$0xff]
      %v3205 = vld [vmem:[%s1 + $0x310] sm:$0xff]
      %v3206 = vld [vmem:[%s1 + $0x318] sm:$0xff]
      %v3207 = vld [vmem:[%s1 + $0x320] sm:$0xff]
      %v3208 = vld [vmem:[%s1 + $0x328] sm:$0xff]
      %v3209 = vld [vmem:[%s1 + $0x330] sm:$0xff]
      %v3210 = vld [vmem:[%s1 + $0x338] sm:$0xff]
      %v3211 = vld [vmem:[%s1 + $0x340] sm:$0xff]
      %v3212 = vld [vmem:[%s1 + $0x348] sm:$0xff]
      %v3213 = vld [vmem:[%s1 + $0x350] sm:$0xff]
      %v3214 = vld [vmem:[%s1 + $0x358] sm:$0xff]
      %v3215 = vld [vmem:[%s1 + $0x360] sm:$0xff]
      %v3216 = vld [vmem:[%s1 + $0x368] sm:$0xff]
      %v3217 = vld [vmem:[%s1 + $0x370] sm:$0xff]
      %v3218 = vld [vmem:[%s1 + $0x378] sm:$0xff]
      %v3219 = vld [vmem:[%s1 + $0x380] sm:$0xff]
      %v3220 = vld [vmem:[%s1 + $0x388] sm:$0xff]
      %v3221 = vld [vmem:[%s1 + $0x390] sm:$0xff]
      %v3222 = vld [vmem:[%s1 + $0x398] sm:$0xff]
      %v3223 = vld [vmem:[%s1 + $0x3a0] sm:$0xff]
      %v3224 = vld [vmem:[%s1 + $0x3a8] sm:$0xff]
      %v3225 = vld [vmem:[%s1 + $0x3b0] sm:$0xff]
      %v3226 = vld [vmem:[%s1 + $0x3b8] sm:$0xff]
      %v3227 = vld [vmem:[%s1 + $0x3c0] sm:$0xff]
      %v3228 = vld [vmem:[%s1 + $0x3c8] sm:$0xff]
      %v3229 = vld [vmem:[%s1 + $0x3d0] sm:$0xff]
      %v3230 = vld [vmem:[%s1 + $0x3d8] sm:$0xff]
      %v3231 = vld [vmem:[%s1 + $0x3e0] sm:$0xff]
      %v3232 = vld [vmem:[%s1 + $0x3e8] sm:$0xff]
      %v3233 = vld [vmem:[%s1 + $0x3f0] sm:$0xff]
      %v3234 = vld [vmem:[%s1 + $0x3f8] sm:$0xff]
      %v3235 = vld [vmem:[%s1 + $0x400] sm:$0xff]
      %v3236 = vld [vmem:[%s1 + $0x408] sm:$0xff]
      %v3237 = vld [vmem:[%s1 + $0x410] sm:$0xff]
      %v3238 = vld [vmem:[%s1 + $0x418] sm:$0xff]
      %v3239 = vld [vmem:[%s1 + $0x420] sm:$0xff]
      %v3240 = vld [vmem:[%s1 + $0x428] sm:$0xff]
      %v3241 = vld [vmem:[%s1 + $0x430] sm:$0xff]
      %v3242 = vld [vmem:[%s1 + $0x438] sm:$0xff]
      %v3243 = vld [vmem:[%s1 + $0x440] sm:$0xff]
      %v3244 = vld [vmem:[%s1 + $0x448] sm:$0xff]
      %v3245 = vld [vmem:[%s1 + $0x450] sm:$0xff]
      %v3246 = vld [vmem:[%s1 + $0x458] sm:$0xff]
      %v3247 = vld [vmem:[%s1 + $0x460] sm:$0xff]
      %v3248 = vld [vmem:[%s1 + $0x468] sm:$0xff]
      %v3249 = vld [vmem:[%s1 + $0x470] sm:$0xff]
      %v3250 = vld [vmem:[%s1 + $0x478] sm:$0xff]
      %3251 = vmatprep.subr.mxu0 0.0
      %3252 = vmatpush1.msra.mxu0 %v3218
      %3253 = vmatprep.subr.mxu0 0.0
      %3254 = vmatpush1.msra.mxu0 %v3217
      %3255 = vmatprep.subr.mxu0 0.0
      %3256 = vmatpush1.msra.mxu0 %v3216
      %3257 = vmatprep.subr.mxu0 0.0
      %3258 = vmatpush1.msra.mxu0 %v3215
      %3259 = vmatprep.subr.mxu0 0.0
      %3260 = vmatpush1.msra.mxu0 %v3214
      %3261 = vmatprep.subr.mxu0 0.0
      %3262 = vmatpush1.msra.mxu0 %v3213
      %3263 = vmatprep.subr.mxu0 0.0
      %3264 = vmatpush1.msra.mxu0 %v3212
      %3265 = vmatprep.subr.mxu0 0.0
      %3266 = vmatpush1.msra.mxu0 %v3211
      %3267 = vmatprep.subr.mxu0 0.0
      %3268 = vmatpush1.msra.mxu0 %v3210
      %3269 = vmatprep.subr.mxu0 0.0
      %3270 = vmatpush1.msra.mxu0 %v3209
      %3271 = vmatprep.subr.mxu0 0.0
      %3272 = vmatpush1.msra.mxu0 %v3208
      %3273 = vmatprep.subr.mxu0 0.0
      %3274 = vmatpush1.msra.mxu0 %v3207
      %3275 = vmatprep.subr.mxu0 0.0
      %3276 = vmatpush1.msra.mxu0 %v3206
      %3277 = vmatprep.subr.mxu0 0.0
      %3278 = vmatpush1.msra.mxu0 %v3205
      %3279 = vmatprep.subr.mxu0 0.0
      %3280 = vmatpush1.msra.mxu0 %v3204
      %3281 = vmatprep.subr.mxu0 0.0
      %3282 = vmatpush1.msra.mxu0 %v3203
      %3283 = vmatprep.subr.mxu0 0.0
      %3284 = vmatpush2.msra.mxu0 %v3234
      %3285 = vmatprep.subr.mxu0 0.0
      %3286 = vmatpush2.msra.mxu0 %v3233
      %3287 = vmatprep.subr.mxu0 0.0
      %3288 = vmatpush2.msra.mxu0 %v3232
      %3289 = vmatprep.subr.mxu0 0.0
      %3290 = vmatpush2.msra.mxu0 %v3231
      %3291 = vmatprep.subr.mxu0 0.0
      %3292 = vmatpush2.msra.mxu0 %v3230
      %3293 = vmatprep.subr.mxu0 0.0
      %3294 = vmatpush2.msra.mxu0 %v3229
      %3295 = vmatprep.subr.mxu0 0.0
      %3296 = vmatpush2.msra.mxu0 %v3228
      %3297 = vmatprep.subr.mxu0 0.0
      %3298 = vmatpush2.msra.mxu0 %v3227
      %3299 = vmatprep.subr.mxu0 0.0
      %3300 = vmatpush2.msra.mxu0 %v3226
      %3301 = vmatprep.subr.mxu0 0.0
      %3302 = vmatpush2.msra.mxu0 %v3225
      %3303 = vmatprep.subr.mxu0 0.0
      %3304 = vmatpush2.msra.mxu0 %v3224
      %3305 = vmatprep.subr.mxu0 0.0
      %3306 = vmatpush2.msra.mxu0 %v3223
      %3307 = vmatprep.subr.mxu0 0.0
      %3308 = vmatpush2.msra.mxu0 %v3222
      %3309 = vmatprep.subr.mxu0 0.0
      %3310 = vmatpush2.msra.mxu0 %v3221
      %3311 = vmatprep.subr.mxu0 0.0
      %3312 = vmatpush2.msra.mxu0 %v3220
      %3313 = vmatprep.subr.mxu0 0.0
      %3314 = vmatpush2.msra.mxu0 %v3219
      %3315 = vmatprep.mubr.f32.mxu0 %v3093
      %3316 = vmatmul.mubr.f32.gmra.mxu0 %v3043
      %v3317 = vpop.f32.mrf.mxu0
      %v3318 = vadd.f32 0.0, %v3317
      %v3319 = vpop.f32.mrf.mxu0
      %3320 = vmatprep.mubr.f32.mxu0 %v3095
      %3321 = vmatmul.mubr.f32.gmra.mxu0 %v3044
      %v3322 = vpop.f32.mrf.mxu0
      %v3323 = vadd.f32 0.0, %v3322
      %v3324 = vpop.f32.mrf.mxu0
      %3325 = vmatprep.mubr.f32.mxu0 %v3098
      %3326 = vmatmul.mubr.f32.gmra.mxu0 %v3046
      %v3327 = vpop.f32.mrf.mxu0
      %v3328 = vadd.f32 0.0, %v3327
      %v3329 = vpop.f32.mrf.mxu0
      %3330 = vmatprep.mubr.f32.mxu0 %v3100
      %3331 = vmatmul.mubr.f32.gmra.mxu0 %v3047
      %v3332 = vpop.f32.mrf.mxu0
      %v3333 = vadd.f32 0.0, %v3332
      %v3334 = vpop.f32.mrf.mxu0
      %3335 = vmatprep.mubr.f32.mxu0 %v3103
      %3336 = vmatmul.mubr.f32.gmra.mxu0 %v3049
      %v3337 = vpop.f32.mrf.mxu0
      %v3338 = vadd.f32 0.0, %v3337
      %v3339 = vpop.f32.mrf.mxu0
      %3340 = vmatprep.mubr.f32.mxu0 %v3105
      %3341 = vmatmul.mubr.f32.gmra.mxu0 %v3050
      %v3342 = vpop.f32.mrf.mxu0
      %v3343 = vadd.f32 0.0, %v3342
      %v3344 = vpop.f32.mrf.mxu0
      %3345 = vmatprep.mubr.f32.mxu0 %v3108
      %3346 = vmatmul.mubr.f32.gmra.mxu0 %v3052
      %v3347 = vpop.f32.mrf.mxu0
      %v3348 = vadd.f32 0.0, %v3347
      %v3349 = vpop.f32.mrf.mxu0
      %3350 = vmatprep.mubr.f32.mxu0 %v3110
      %3351 = vmatmul.mubr.f32.gmra.mxu0 %v3053
      %v3352 = vpop.f32.mrf.mxu0
      %v3353 = vadd.f32 0.0, %v3352
      %v3354 = vpop.f32.mrf.mxu0
      %3355 = vmatprep.mubr.f32.mxu0 %v3113
      %3356 = vmatmul.mubr.f32.gmra.mxu0 %v3055
      %v3357 = vpop.f32.mrf.mxu0
      %v3358 = vadd.f32 0.0, %v3357
      %v3359 = vpop.f32.mrf.mxu0
      %3360 = vmatprep.mubr.f32.mxu0 %v3115
      %3361 = vmatmul.mubr.f32.gmra.mxu0 %v3056
      %v3362 = vpop.f32.mrf.mxu0
      %v3363 = vadd.f32 0.0, %v3362
      %v3364 = vpop.f32.mrf.mxu0
      %3365 = vmatprep.mubr.f32.mxu0 %v3118
      %3366 = vmatmul.mubr.f32.gmra.mxu0 %v3058
      %v3367 = vpop.f32.mrf.mxu0
      %v3368 = vadd.f32 0.0, %v3367
      %v3369 = vpop.f32.mrf.mxu0
      %3370 = vmatprep.mubr.f32.mxu0 %v3120
      %3371 = vmatmul.mubr.f32.gmra.mxu0 %v3059
      %v3372 = vpop.f32.mrf.mxu0
      %v3373 = vadd.f32 0.0, %v3372
      %v3374 = vpop.f32.mrf.mxu0
      %3375 = vmatprep.mubr.f32.mxu0 %v3123
      %3376 = vmatmul.mubr.f32.gmra.mxu0 %v3061
      %v3377 = vpop.f32.mrf.mxu0
      %v3378 = vadd.f32 0.0, %v3377
      %v3379 = vpop.f32.mrf.mxu0
      %3380 = vmatprep.mubr.f32.mxu0 %v3125
      %3381 = vmatmul.mubr.f32.gmra.mxu0 %v3062
      %v3382 = vpop.f32.mrf.mxu0
      %v3383 = vadd.f32 0.0, %v3382
      %v3384 = vpop.f32.mrf.mxu0
      %3385 = vmatprep.mubr.f32.mxu0 %v3128
      %3386 = vmatmul.mubr.f32.gmra.mxu0 %v3064
      %v3387 = vpop.f32.mrf.mxu0
      %v3388 = vadd.f32 0.0, %v3387
      %v3389 = vpop.f32.mrf.mxu0
      %3390 = vmatprep.mubr.f32.mxu0 %v3130
      %3391 = vmatmul.mubr.f32.gmra.mxu0 %v3065
      %v3392 = vpop.f32.mrf.mxu0
      %v3393 = vadd.f32 0.0, %v3392
      %v3394 = vpop.f32.mrf.mxu0
      %3395 = vdwg.mxu0
      %3396 = vmatprep.subr.mxu0 0.0
      %3397 = vmatpush1.msra.mxu0 %v3250
      %3398 = vmatprep.subr.mxu0 0.0
      %3399 = vmatpush1.msra.mxu0 %v3249
      %3400 = vmatprep.subr.mxu0 0.0
      %3401 = vmatpush1.msra.mxu0 %v3248
      %3402 = vmatprep.subr.mxu0 0.0
      %3403 = vmatpush1.msra.mxu0 %v3247
      %3404 = vmatprep.subr.mxu0 0.0
      %3405 = vmatpush1.msra.mxu0 %v3246
      %3406 = vmatprep.subr.mxu0 0.0
      %3407 = vmatpush1.msra.mxu0 %v3245
      %3408 = vmatprep.subr.mxu0 0.0
      %3409 = vmatpush1.msra.mxu0 %v3244
      %3410 = vmatprep.subr.mxu0 0.0
      %3411 = vmatpush1.msra.mxu0 %v3243
      %3412 = vmatprep.subr.mxu0 0.0
      %3413 = vmatpush1.msra.mxu0 %v3242
      %3414 = vmatprep.subr.mxu0 0.0
      %3415 = vmatpush1.msra.mxu0 %v3241
      %3416 = vmatprep.subr.mxu0 0.0
      %3417 = vmatpush1.msra.mxu0 %v3240
      %3418 = vmatprep.subr.mxu0 0.0
      %3419 = vmatpush1.msra.mxu0 %v3239
      %3420 = vmatprep.subr.mxu0 0.0
      %3421 = vmatpush1.msra.mxu0 %v3238
      %3422 = vmatprep.subr.mxu0 0.0
      %3423 = vmatpush1.msra.mxu0 %v3237
      %3424 = vmatprep.subr.mxu0 0.0
      %3425 = vmatpush1.msra.mxu0 %v3236
      %3426 = vmatprep.subr.mxu0 0.0
      %3427 = vmatpush1.msra.mxu0 %v3235
      %3428 = vmatprep.subr.mxu0 0.0
      %3429 = vmatpush2.msra.mxu0 0.0
      %3430 = vmatprep.subr.mxu0 0.0
      %3431 = vmatpush2.msra.mxu0 0.0
      %3432 = vmatprep.subr.mxu0 0.0
      %3433 = vmatpush2.msra.mxu0 0.0
      %3434 = vmatprep.subr.mxu0 0.0
      %3435 = vmatpush2.msra.mxu0 0.0
      %3436 = vmatprep.subr.mxu0 0.0
      %3437 = vmatpush2.msra.mxu0 0.0
      %3438 = vmatprep.subr.mxu0 0.0
      %3439 = vmatpush2.msra.mxu0 0.0
      %3440 = vmatprep.subr.mxu0 0.0
      %3441 = vmatpush2.msra.mxu0 0.0
      %3442 = vmatprep.subr.mxu0 0.0
      %3443 = vmatpush2.msra.mxu0 0.0
      %3444 = vmatprep.subr.mxu0 0.0
      %3445 = vmatpush2.msra.mxu0 0.0
      %3446 = vmatprep.subr.mxu0 0.0
      %3447 = vmatpush2.msra.mxu0 0.0
      %3448 = vmatprep.subr.mxu0 0.0
      %3449 = vmatpush2.msra.mxu0 0.0
      %3450 = vmatprep.subr.mxu0 0.0
      %3451 = vmatpush2.msra.mxu0 0.0
      %3452 = vmatprep.subr.mxu0 0.0
      %3453 = vmatpush2.msra.mxu0 0.0
      %3454 = vmatprep.subr.mxu0 0.0
      %3455 = vmatpush2.msra.mxu0 0.0
      %3456 = vmatprep.subr.mxu0 0.0
      %3457 = vmatpush2.msra.mxu0 0.0
      %3458 = vmatprep.subr.mxu0 0.0
      %3459 = vmatpush2.msra.mxu0 0.0
      %3460 = vmatprep.mubr.f32.mxu0 0.0
      %3461 = vmatmul.mubr.f32.gmra.mxu0 %v3149
      %v3462 = vpop.f32.mrf.mxu0
      %v3463 = vadd.f32 %v3318, %v3462
      %v3464 = vpop.f32.mrf.mxu0
      %3465 = vmatprep.mubr.f32.mxu0 0.0
      %3466 = vmatmul.mubr.f32.gmra.mxu0 %v3151
      %v3467 = vpop.f32.mrf.mxu0
      %v3468 = vadd.f32 %v3323, %v3467
      %v3469 = vpop.f32.mrf.mxu0
      %3470 = vmatprep.mubr.f32.mxu0 0.0
      %3471 = vmatmul.mubr.f32.gmra.mxu0 %v3154
      %v3472 = vpop.f32.mrf.mxu0
      %v3473 = vadd.f32 %v3328, %v3472
      %v3474 = vpop.f32.mrf.mxu0
      %3475 = vmatprep.mubr.f32.mxu0 0.0
      %3476 = vmatmul.mubr.f32.gmra.mxu0 %v3156
      %v3477 = vpop.f32.mrf.mxu0
      %v3478 = vadd.f32 %v3333, %v3477
      %v3479 = vpop.f32.mrf.mxu0
      %3480 = vmatprep.mubr.f32.mxu0 0.0
      %3481 = vmatmul.mubr.f32.gmra.mxu0 %v3159
      %v3482 = vpop.f32.mrf.mxu0
      %v3483 = vadd.f32 %v3338, %v3482
      %v3484 = vpop.f32.mrf.mxu0
      %3485 = vmatprep.mubr.f32.mxu0 0.0
      %3486 = vmatmul.mubr.f32.gmra.mxu0 %v3161
      %v3487 = vpop.f32.mrf.mxu0
      %v3488 = vadd.f32 %v3343, %v3487
      %v3489 = vpop.f32.mrf.mxu0
      %3490 = vmatprep.mubr.f32.mxu0 0.0
      %3491 = vmatmul.mubr.f32.gmra.mxu0 %v3164
      %v3492 = vpop.f32.mrf.mxu0
      %v3493 = vadd.f32 %v3348, %v3492
      %v3494 = vpop.f32.mrf.mxu0
      %3495 = vmatprep.mubr.f32.mxu0 0.0
      %3496 = vmatmul.mubr.f32.gmra.mxu0 %v3166
      %v3497 = vpop.f32.mrf.mxu0
      %v3498 = vadd.f32 %v3353, %v3497
      %v3499 = vpop.f32.mrf.mxu0
      %3500 = vmatprep.mubr.f32.mxu0 0.0
      %3501 = vmatmul.mubr.f32.gmra.mxu0 %v3169
      %v3502 = vpop.f32.mrf.mxu0
      %v3503 = vadd.f32 %v3358, %v3502
      %v3504 = vpop.f32.mrf.mxu0
      %3505 = vmatprep.mubr.f32.mxu0 0.0
      %3506 = vmatmul.mubr.f32.gmra.mxu0 %v3171
      %v3507 = vpop.f32.mrf.mxu0
      %v3508 = vadd.f32 %v3363, %v3507
      %v3509 = vpop.f32.mrf.mxu0
      %3510 = vmatprep.mubr.f32.mxu0 0.0
      %3511 = vmatmul.mubr.f32.gmra.mxu0 %v3174
      %v3512 = vpop.f32.mrf.mxu0
      %v3513 = vadd.f32 %v3368, %v3512
      %v3514 = vpop.f32.mrf.mxu0
      %3515 = vmatprep.mubr.f32.mxu0 0.0
      %3516 = vmatmul.mubr.f32.gmra.mxu0 %v3176
      %v3517 = vpop.f32.mrf.mxu0
      %v3518 = vadd.f32 %v3373, %v3517
      %v3519 = vpop.f32.mrf.mxu0
      %3520 = vmatprep.mubr.f32.mxu0 0.0
      %3521 = vmatmul.mubr.f32.gmra.mxu0 %v3179
      %v3522 = vpop.f32.mrf.mxu0
      %v3523 = vadd.f32 %v3378, %v3522
      %v3524 = vpop.f32.mrf.mxu0
      %3525 = vmatprep.mubr.f32.mxu0 0.0
      %3526 = vmatmul.mubr.f32.gmra.mxu0 %v3181
      %v3527 = vpop.f32.mrf.mxu0
      %v3528 = vadd.f32 %v3383, %v3527
      %v3529 = vpop.f32.mrf.mxu0
      %3530 = vmatprep.mubr.f32.mxu0 0.0
      %3531 = vmatmul.mubr.f32.gmra.mxu0 %v3184
      %v3532 = vpop.f32.mrf.mxu0
      %v3533 = vadd.f32 %v3388, %v3532
      %v3534 = vpop.f32.mrf.mxu0
      %3535 = vmatprep.mubr.f32.mxu0 0.0
      %3536 = vmatmul.mubr.f32.gmra.mxu0 %v3186
      %v3537 = vpop.f32.mrf.mxu0
      %v3538 = vadd.f32 %v3393, %v3537
      %v3539 = vpop.f32.mrf.mxu0
      %3540 = vdwg.mxu0
      %v3541 = vadd.f32 %v2964, %v3463
      %v3542 = vadd.f32 %v2969, %v3468
      %v3543 = vadd.f32 %v2974, %v3473
      %v3544 = vadd.f32 %v2979, %v3478
      %v3545 = vadd.f32 %v2984, %v3483
      %v3546 = vadd.f32 %v2989, %v3488
      %v3547 = vadd.f32 %v2994, %v3493
      %v3548 = vadd.f32 %v2999, %v3498
      %v3549 = vadd.f32 %v3004, %v3503
      %v3550 = vadd.f32 %v3009, %v3508
      %v3551 = vadd.f32 %v3014, %v3513
      %v3552 = vadd.f32 %v3019, %v3518
      %v3553 = vadd.f32 %v3024, %v3523
      %v3554 = vadd.f32 %v3029, %v3528
      %v3555 = vadd.f32 %v3034, %v3533
      %v3556 = vadd.f32 %v3039, %v3538
      %s3557 = scalar_lea.vmem %s231, 128
      %3558 = vst [vmem:[%s3557] sm:$0xff] %v3541
      %3559 = vst [vmem:[%s3557 + $0x8] sm:$0xff] %v3542
      %3560 = vst [vmem:[%s3557 + $0x10] sm:$0xff] %v3543
      %3561 = vst [vmem:[%s3557 + $0x18] sm:$0xff] %v3544
      %3562 = vst [vmem:[%s3557 + $0x20] sm:$0xff] %v3545
      %3563 = vst [vmem:[%s3557 + $0x28] sm:$0xff] %v3546
      %3564 = vst [vmem:[%s3557 + $0x30] sm:$0xff] %v3547
      %3565 = vst [vmem:[%s3557 + $0x38] sm:$0xff] %v3548
      %3566 = vst [vmem:[%s3557 + $0x40] sm:$0xff] %v3549
      %3567 = vst [vmem:[%s3557 + $0x48] sm:$0xff] %v3550
      %3568 = vst [vmem:[%s3557 + $0x50] sm:$0xff] %v3551
      %3569 = vst [vmem:[%s3557 + $0x58] sm:$0xff] %v3552
      %3570 = vst [vmem:[%s3557 + $0x60] sm:$0xff] %v3553
      %3571 = vst [vmem:[%s3557 + $0x68] sm:$0xff] %v3554
      %3572 = vst [vmem:[%s3557 + $0x70] sm:$0xff] %v3555
      %3573 = vst [vmem:[%s3557 + $0x78] sm:$0xff] %v3556
      %v3574 = vadd.f32 %v3541, %v3542
      %v3575 = vadd.f32 %v3574, %v3543
      %v3576 = vadd.f32 %v3575, %v3544
      %v3577 = vadd.f32 %v3576, %v3545
      %v3578 = vadd.f32 %v3577, %v3546
      %v3579 = vadd.f32 %v3578, %v3547
      %v3580 = vadd.f32 %v3579, %v3548
      %v3581 = vadd.f32 %v3580, %v3549
      %v3582 = vadd.f32 %v3581, %v3550
      %v3583 = vadd.f32 %v3582, %v3551
      %v3584 = vadd.f32 %v3583, %v3552
      %v3585 = vadd.f32 %v3584, %v3553
      %v3586 = vadd.f32 %v3585, %v3554
      %v3587 = vadd.f32 %v3586, %v3555
      %v3588 = vadd.f32 %v3587, %v3556
      %v3589 = vrot.slane %v3588, 4
      %v3590 = vadd.f32 %v3588, %v3589
      %v3591 = vrot.slane %v3590, 2
      %v3592 = vadd.f32 %v3590, %v3591
      %v3593 = vrot.slane %v3592, 1
      %v3594 = vadd.f32 %v3592, %v3593
      %v3595 = vadd.f32 %v2006, %v3594
      %v3596 = vmul.f32 %v3541, %v3541
      %v3597 = vmul.f32 %v3542, %v3542
      %v3598 = vmul.f32 %v3543, %v3543
      %v3599 = vmul.f32 %v3544, %v3544
      %v3600 = vmul.f32 %v3545, %v3545
      %v3601 = vmul.f32 %v3546, %v3546
      %v3602 = vmul.f32 %v3547, %v3547
      %v3603 = vmul.f32 %v3548, %v3548
      %v3604 = vmul.f32 %v3549, %v3549
      %v3605 = vmul.f32 %v3550, %v3550
      %v3606 = vmul.f32 %v3551, %v3551
      %v3607 = vmul.f32 %v3552, %v3552
      %v3608 = vmul.f32 %v3553, %v3553
      %v3609 = vmul.f32 %v3554, %v3554
      %v3610 = vmul.f32 %v3555, %v3555
      %v3611 = vmul.f32 %v3556, %v3556
      %v3612 = vadd.f32 %v3596, %v3597
      %v3613 = vadd.f32 %v3612, %v3598
      %v3614 = vadd.f32 %v3613, %v3599
      %v3615 = vadd.f32 %v3614, %v3600
      %v3616 = vadd.f32 %v3615, %v3601
      %v3617 = vadd.f32 %v3616, %v3602
      %v3618 = vadd.f32 %v3617, %v3603
      %v3619 = vadd.f32 %v3618, %v3604
      %v3620 = vadd.f32 %v3619, %v3605
      %v3621 = vadd.f32 %v3620, %v3606
      %v3622 = vadd.f32 %v3621, %v3607
      %v3623 = vadd.f32 %v3622, %v3608
      %v3624 = vadd.f32 %v3623, %v3609
      %v3625 = vadd.f32 %v3624, %v3610
      %v3626 = vadd.f32 %v3625, %v3611
      %v3627 = vrot.slane %v3626, 4
      %v3628 = vadd.f32 %v3626, %v3627
      %v3629 = vrot.slane %v3628, 2
      %v3630 = vadd.f32 %v3628, %v3629
      %v3631 = vrot.slane %v3630, 1
      %v3632 = vadd.f32 %v3630, %v3631
      %v3633 = vadd.f32 %v2044, %v3632
      %vm3634 = vcmask 1040384
      %v3635 = vsel %vm3634, %v3595, %v3633
      %3636 = vst [vmem:[%s235] sm:$0x3] %v3635
      %p3637 = scmp.lt.s32.totalorder %s17, 1
      %s3638 = scalar_select %p3637, %s17, 1
      %s3639 = smul.addr %s3638, 32
      %s3640 = smul.addr %s3639, 8
      %s3641 = scalar_lea.vmem %s4, %s3640
      %p3642 = scmp.lt.s32.totalorder %s17, 1
      %s3643 = scalar_select %p3642, %s17, 1
      %s3644 = smul.addr %s3643, 2
      %s3645 = scalar_lea.vmem %s5, %s3644
      // Predicated region
      $region37: #{residual_block_forward.4} parent=35 // pred_check
        %p3646 = pneg %p124
      $region38: #{residual_block_forward.4} parent=35 // pred_check_branch
        %3648 = sbr.rel (%p3646) target = $region40
      $region39: #{residual_block_forward.4} parent=35 // pred_region
        _
      $region40: #{residual_block_forward.4} parent=35 // pred_fallthru
        _
      // Predicated region
      $region41: #{residual_block_forward.4} parent=35 // pred_check
        %p3649 = pneg %p150
      $region42: #{residual_block_forward.4} parent=35 // pred_check_branch
        %3651 = sbr.rel (%p3649) target = $region44
      $region43: #{residual_block_forward.4} parent=35 // pred_region
        _
      $region44: #{residual_block_forward.4} parent=35 // pred_fallthru
        _
    $region36: #{residual_block_forward.4} parent=5 // pred_fallthru
      _
    %p3652 = scmp.le.s32.totalorder 2, %s12
    // Predicated region
    $region45: #{residual_block_forward.4} parent=5 // pred_check
      %p3653 = pneg %p3652
    $region46: #{residual_block_forward.4} parent=5 // pred_check_branch
      %3655 = sbr.rel (%p3653) target = $region48
    $region47: #{residual_block_forward.4} parent=5 // pred_region
      %s3656 = ssub.s32 %s12, 2
      // Predicated region
      $region49: #{residual_block_forward.4} parent=47 // pred_check
        %p3657 = pneg %p130
      $region50: #{residual_block_forward.4} parent=47 // pred_check_branch
        %3659 = sbr.rel (%p3657) target = $region52
      $region51: #{residual_block_forward.4} parent=47 // pred_region
        %p3660 = scmp.lt.s32.totalorder %s18, 1
        %s3661 = scalar_select %p3660, %s18, 1
        %s3662 = smul.addr %s3661, 32
        %s3663 = smul.addr %s3662, 8
        %s3664 = scalar_lea.vmem %s4, %s3663
      $region52: #{residual_block_forward.4} parent=47 // pred_fallthru
        _
      // Predicated region
      $region53: #{residual_block_forward.4} parent=47 // pred_check
        %p3665 = pneg %p156
      $region54: #{residual_block_forward.4} parent=47 // pred_check_branch
        %3667 = sbr.rel (%p3665) target = $region56
      $region55: #{residual_block_forward.4} parent=47 // pred_region
        %p3668 = scmp.lt.s32.totalorder %s18, 1
        %s3669 = scalar_select %p3668, %s18, 1
        %s3670 = smul.addr %s3669, 2
        %s3671 = scalar_lea.vmem %s5, %s3670
      $region56: #{residual_block_forward.4} parent=47 // pred_fallthru
        _
    $region48: #{residual_block_forward.4} parent=5 // pred_fallthru
      _
  $region6: #{residual_block_forward.4} parent=0 // loop_footer
    %s16 = sadd.s32 1, %s12
  $region7: #{residual_block_forward.4} parent=0 // loop_footer_branch
    %11 = sbr.rel target = $region3
  $region8: #{residual_block_forward.4} parent=0 // loop_exit
    _

</llo_original>
